<compile_context>
chip_gen: v5e
topology: v5e:2x2
jax: 0.10.0
libtpu: 0.0.40
codegen_flags: <defaults>
</compile_context>

<pallas_src>
import functools

import numpy as np
import jax
import jax.numpy as jnp
from jax.experimental import pallas as pl
from jax.experimental.pallas import tpu as pltpu

EPS = 1e-5          # PyTorch BatchNorm default eps
_K, _P, _POOL = 5, 2, 2   # Conv2d(kernel=5, pad=2), MaxPool2d(2,2) -- plan math relies on these


# ------------------------------ static plan ---------------------------------

def _round_up(v, m):
    return (v + m - 1) // m * m


def _make_plan(H, W):
    # Flat "padded-image" coordinate system per stage: position p = row*Wp + col.
    # NOTE: the lane-flat conv trick relies on kernel=5 / pad=2 / pool=2 exactly:
    # the 2*pad = 4 zero columns between rows absorb the cross-row wrap of the
    # 5-wide window.  Changing those constants silently breaks the math.
    assert _K == 5 and _P == 2 and _POOL == 2
    assert H % 4 == 0 and W % 4 == 0, "image sides must be divisible by 4"
    Wp = W + 4                      # stage-1 padded row stride
    H2, W2 = H // 2, W // 2
    W2p = W2 + 4                    # stage-2 padded row stride
    H4, W4 = H2 // 2, W2 // 2
    M1 = _round_up((H - 2) * Wp + (W - 2) + 1, 8)     # pool-1 window width
    A1 = _round_up(M1 + Wp + 1, 128)                  # conv-1 output width
    X = _round_up(A1 + 4 * Wp + 4, 128)               # flattened padded input width
    M2 = _round_up((H2 - 2) * W2p + (W2 - 2) + 1, 8)  # pool-2 window width
    A2 = _round_up(M2 + W2p + 1, 128)                 # conv-2 output width
    Q1 = _round_up(A2 + 4 * W2p + 4, 128)             # pooled+re-padded stage-2 width
    F2 = H4 * W4                                      # spatial features per channel
    return dict(Wp=Wp, W2p=W2p, H2=H2, W2=W2, H4=H4, W4=W4,
                M1=M1, A1=A1, X=X, M2=M2, A2=A2, Q1=Q1, F2=F2)


def _selection_matrices(plan):
    # Exact 0/1 gather matrices:
    #  g1: pooled stage-1 positions (stride-2 lanes) -> stage-2 padded flat layout
    #      (bf16 -- exact because columns are one-hot).
    #  g2: pooled stage-2 positions -> (i4*W4 + j4) feature index (kept f32: H is
    #      a returned output).
    # NOTE (v7x): g1 is O((H*W)^2/4); fine at small images (~150 KB bf16 at 16x16)
    # but for ~64x64 images replace it with roll-based compaction.
    Wp, W2p = plan['Wp'], plan['W2p']
    g1 = np.zeros((plan['M1'], plan['Q1']), np.float32)
    for i2 in range(plan['H2']):
        for j2 in range(plan['W2']):
            g1[2 * i2 * Wp + 2 * j2, (i2 + 2) * W2p + (j2 + 2)] = 1.0
    g2 = np.zeros((plan['M2'], plan['F2']), np.float32)
    for i4 in range(plan['H4']):
        for j4 in range(plan['W4']):
            g2[2 * i4 * W2p + 2 * j4, i4 * plan['W4'] + j4] = 1.0
    return jnp.asarray(g1, dtype=jnp.bfloat16), jnp.asarray(g2)


# ------------------------------ Pallas kernel --------------------------------

def _mil_fused_kernel(x_ref, w1_ref, b1_ref, g1_ref, w2_ref, b2_ref, g2_ref,
                      h_ref, win1_ref, win2_ref, *, plan, batch):
    Wp, W2p = plan['Wp'], plan['W2p']
    A1, M1, A2, M2 = plan['A1'], plan['M1'], plan['A2'], plan['M2']

    xf = x_ref[...]            # (B, 1, X) f32
    w1 = w1_ref[...]           # (20, 25)  bf16 (BN scale folded)
    b1 = b1_ref[...]           # (20, 1)   f32  (BN shift)
    g1 = g1_ref[...]           # (M1, Q1)  bf16 one-hot pool-1 selection
    w2 = w2_ref[...]           # (50, 500) bf16 (25 taps x 20 channels on K)
    b2 = b2_ref[...]           # (50, 1)   f32
    g2 = g2_ref[...]           # (M2, F2)  f32 one-hot pool-2 selection

    for b in range(batch):
        xrow = xf[b]                                            # (1, X) f32

        # Conv2d(1,20,5,pad=2) + folded BN + ReLU on the MXU:
        # stack 25 lane-shifted copies of the padded image into (25, A1) and
        # contract once (K=25) instead of 25 VPU multiply-accumulates.
        for t in range(25):
            off = (t // 5) * Wp + (t % 5)
            win1_ref[pl.ds(t, 1), :] = xrow[:, off:off + A1]
        a1 = jnp.dot(w1, win1_ref[...].astype(jnp.bfloat16),
                     preferred_element_type=jnp.float32)        # (20, A1) f32
        a1 = jnp.maximum(a1 + b1, 0.0)

        # MaxPool2d(2,2): max of 4 shifted windows, then an exact one-hot
        # selection matmul (bf16, exact) that compacts the stride-2 lanes and
        # re-inserts the zero padding needed by conv2.
        m1 = jnp.maximum(jnp.maximum(a1[:, 0:M1], a1[:, 1:M1 + 1]),
                         jnp.maximum(a1[:, Wp:Wp + M1], a1[:, Wp + 1:Wp + 1 + M1]))
        p1 = jnp.dot(m1.astype(jnp.bfloat16), g1,
                     preferred_element_type=jnp.float32)        # (20, Q1) f32 (bf16-valued)

        # Conv2d(20,50,5,pad=2) + folded BN + ReLU as ONE big-K MXU matmul:
        # stack the 25 shifted (20, A2) windows into (500, A2) and contract
        # against the pre-arranged (50, 500) weight slab with f32 accumulation.
        for t in range(25):
            off = (t // 5) * W2p + (t % 5)
            win2_ref[pl.ds(t * 20, 20), :] = p1[:, off:off + A2]
        a2 = jnp.dot(w2, win2_ref[...].astype(jnp.bfloat16),
                     preferred_element_type=jnp.float32)        # (50, A2) f32
        a2 = jnp.maximum(a2 + b2, 0.0)

        # MaxPool2d(2,2) + channel-major flatten via selection matmul (f32: H is output).
        m2 = jnp.maximum(jnp.maximum(a2[:, 0:M2], a2[:, 1:M2 + 1]),
                         jnp.maximum(a2[:, W2p:W2p + M2], a2[:, W2p + 1:W2p + 1 + M2]))
        feat = jnp.dot(m2, g2, preferred_element_type=jnp.float32)   # (50, F2)
        h_ref[b] = feat


# ------------------------------- forward pass --------------------------------

def mil_forward(x_in, params, *, max_block=8):
    # x_in: (1, N, 1, d1, d2)  -- PyTorch NCHW bag with a leading singleton dim
    x = jnp.squeeze(x_in, axis=0)                    # (N, 1, H, W)
    N = x.shape[0]
    H, W = x.shape[2], x.shape[3]
    plan = _make_plan(H, W)
    Xw, F2 = plan['X'], plan['F2']

    # Batch B instances per grid step; keep >= 2 grid steps when possible so
    # dimension_semantics=("parallel",) can use both v7x TensorCores.
    B = int(min(max_block, max(1, -(-N // 2))))
    Npad = -(-N // B) * B

    # Flatten the 2-padded image onto the lane axis, zero-padded to X lanes.
    xpad = jnp.pad(x[:, 0], ((0, Npad - N), (2, 2), (2, 2)))     # (Npad, H+4, W+4)
    xflat = xpad.reshape(Npad, (H + 4) * (W + 4))
    xflat = jnp.pad(xflat, ((0, 0), (0, Xw - (H + 4) * (W + 4))))
    xflat = xflat.reshape(Npad, 1, Xw)

    # Fold eval-mode BatchNorm scale into the conv weights; keep only a shift.
    s1 = params['g1'] / jnp.sqrt(params['v1'] + EPS)
    w1f = (params['w1'].reshape(20, 25) * s1[:, None]).astype(jnp.bfloat16)   # (20, 25)
    b1f = (s1 * (params['b1'] - params['m1']) + params['be1']).reshape(20, 1)
    s2 = params['g2'] / jnp.sqrt(params['v2'] + EPS)
    w2s = params['w2'] * s2[:, None, None, None]                              # (50,20,5,5)
    # (o, dy, dx, c) -> (50, 500): column index = (dy*5+dx)*20 + c  (matches win2 stacking)
    w2big = jnp.transpose(w2s, (0, 2, 3, 1)).reshape(50, 500).astype(jnp.bfloat16)
    b2f = (s2 * (params['b2'] - params['m2']) + params['be2']).reshape(50, 1)

    g1sel, g2sel = _selection_matrices(plan)

    kernel = functools.partial(_mil_fused_kernel, plan=plan, batch=B)
    h3d = pl.pallas_call(
        kernel,
        out_shape=jax.ShapeDtypeStruct((Npad, 50, F2), jnp.float32),
        grid=(Npad // B,),
        in_specs=[
            pl.BlockSpec((B, 1, Xw), lambda n: (n, 0, 0)),             # images (batched)
            pl.BlockSpec((20, 25), lambda n: (0, 0)),                  # w1 (BN folded)
            pl.BlockSpec((20, 1), lambda n: (0, 0)),                   # shift1
            pl.BlockSpec((plan['M1'], plan['Q1']), lambda n: (0, 0)),  # pool1 select (bf16)
            pl.BlockSpec((50, 500), lambda n: (0, 0)),                 # w2 slab (BN folded)
            pl.BlockSpec((50, 1), lambda n: (0, 0)),                   # shift2
            pl.BlockSpec((plan['M2'], F2), lambda n: (0, 0)),          # pool2 select
        ],
        out_specs=pl.BlockSpec((B, 50, F2), lambda n: (n, 0, 0)),
        scratch_shapes=[
            pltpu.VMEM((25, plan['A1']), jnp.float32),                 # conv1 window stack
            pltpu.VMEM((500, plan['A2']), jnp.float32),                # conv2 window stack
        ],
        compiler_params=pltpu.CompilerParams(dimension_semantics=("parallel",)),
    )(xflat, w1f, b1f, g1sel, w2big, b2f, g2sel)

    # (Npad,50,F2) -> (N, n_feat): contiguous channel-major flatten (matches
    # PyTorch's H.reshape(-1, n_feat) on NCHW); free in XLA.
    h_flat = h3d[:N].reshape(N, -1)
    # Linear(n_feat, 1, bias=False) done in the wrapper (review: drop the 4-byte
    # masked store / XLU reduce from the kernel; this matvec is free in XLA).
    y_hat = h_flat @ params['wfc']
    # TODO(synk): PyTorch returns H.detach().cpu().numpy(); we return a JAX array.
    return y_hat, h_flat


# ------------------------- pure-JAX reference --------------------------------

def reference_forward(x_in, params):
    x = jnp.squeeze(x_in, axis=0)
    x = jnp.transpose(x, (0, 2, 3, 1))

    def block(x, w_oihw, b, g, be, m, v):
        w = jnp.transpose(w_oihw, (2, 3, 1, 0))     # HWIO
        y = jax.lax.conv_general_dilated(
            x, w, (1, 1), [(2, 2), (2, 2)],
            dimension_numbers=('NHWC', 'HWIO', 'NHWC')) + b
        y = g * (y - m) / jnp.sqrt(v + EPS) + be
        y = jnp.maximum(y, 0.0)
        return jax.lax.reduce_window(y, -jnp.inf, jax.lax.max,
                                     (1, 2, 2, 1), (1, 2, 2, 1), 'VALID')

    h = block(x, params['w1'], params['b1'], params['g1'], params['be1'],
              params['m1'], params['v1'])
    h = block(h, params['w2'], params['b2'], params['g2'], params['be2'],
              params['m2'], params['v2'])
    h_flat = jnp.transpose(h, (0, 3, 1, 2)).reshape(x.shape[0], -1)
    return h_flat @ params['wfc'], h_flat


# ---------------------------------- main --------------------------------------

if __name__ == "__main__":
    d1 = d2 = 16          # img_sz=(16,16)  (small, divisible by 4)
    N = 8                 # instances in the bag (-> B=4, grid=2)
    n_feat = 50 * (d1 // 4) * (d2 // 4)   # 800

    key = jax.random.PRNGKey(0)
    ks = jax.random.split(key, 14)
    params = dict(
        w1=0.1 * jax.random.normal(ks[0], (20, 1, 5, 5), jnp.float32),
        b1=0.1 * jax.random.normal(ks[1], (20,), jnp.float32),
        g1=1.0 + 0.1 * jax.random.normal(ks[2], (20,), jnp.float32),
        be1=0.1 * jax.random.normal(ks[3], (20,), jnp.float32),
        m1=0.1 * jax.random.normal(ks[4], (20,), jnp.float32),
        v1=jax.random.uniform(ks[5], (20,), jnp.float32, 0.5, 1.5),
        w2=0.05 * jax.random.normal(ks[6], (50, 20, 5, 5), jnp.float32),
        b2=0.1 * jax.random.normal(ks[7], (50,), jnp.float32),
        g2=1.0 + 0.1 * jax.random.normal(ks[8], (50,), jnp.float32),
        be2=0.1 * jax.random.normal(ks[9], (50,), jnp.float32),
        m2=0.1 * jax.random.normal(ks[10], (50,), jnp.float32),
        v2=jax.random.uniform(ks[11], (50,), jnp.float32, 0.5, 1.5),
        wfc=0.05 * jax.random.normal(ks[12], (n_feat, 1), jnp.float32),
    )
    x = jax.random.normal(ks[13], (1, N, 1, d1, d2), jnp.float32)

    y_hat, h_flat = jax.jit(mil_forward)(x, params)
    jax.block_until_ready((y_hat, h_flat))

    y_ref_v, h_ref_v = reference_forward(x, params)
    assert y_hat.shape == (N, 1) and h_flat.shape == (N, n_feat)
    np.testing.assert_allclose(np.asarray(h_flat), np.asarray(h_ref_v),
                               rtol=5e-2, atol=5e-2)
    np.testing.assert_allclose(np.asarray(y_hat), np.asarray(y_ref_v),
                               rtol=5e-2, atol=5e-2)
    print("KERNEL_OK")
</pallas_src>

<mosaic_0001>
module attributes {stable_mosaic.version = 11 : i64} {
  func.func @_mil_fused_kernel(%arg0: i32, %arg1: memref<4x1x512xf32, #tpu.memory_space<vmem>>, %arg2: memref<20x25xbf16, #tpu.memory_space<vmem>>, %arg3: memref<20x1xf32, #tpu.memory_space<vmem>>, %arg4: memref<296x256xbf16, #tpu.memory_space<vmem>>, %arg5: memref<50x500xbf16, #tpu.memory_space<vmem>>, %arg6: memref<50x1xf32, #tpu.memory_space<vmem>>, %arg7: memref<80x16xf32, #tpu.memory_space<vmem>>, %arg8: memref<4x50x16xf32, #tpu.memory_space<vmem>>, %arg9: memref<25x384xf32, #tpu.memory_space<vmem>>, %arg10: memref<500x128xf32, #tpu.memory_space<vmem>>) attributes {dimension_semantics = [#tpu.dimension_semantics<parallel>], iteration_bounds = array<i64: 2>, scalar_prefetch = 0 : i64, scratch_operands = 2 : i64, tpu.core_type = #tpu.core_type<tc>, window_params = [{transform_indices = @transform_0, window_bounds = array<i64: 4, 1, 512>}, {pipeline_mode = #tpu.pipeline_mode<synchronous>, transform_indices = @transform_1, window_bounds = array<i64: 20, 25>}, {pipeline_mode = #tpu.pipeline_mode<synchronous>, transform_indices = @transform_2, window_bounds = array<i64: 20, 1>}, {pipeline_mode = #tpu.pipeline_mode<synchronous>, transform_indices = @transform_3, window_bounds = array<i64: 296, 256>}, {pipeline_mode = #tpu.pipeline_mode<synchronous>, transform_indices = @transform_4, window_bounds = array<i64: 50, 500>}, {pipeline_mode = #tpu.pipeline_mode<synchronous>, transform_indices = @transform_5, window_bounds = array<i64: 50, 1>}, {pipeline_mode = #tpu.pipeline_mode<synchronous>, transform_indices = @transform_6, window_bounds = array<i64: 80, 16>}, {transform_indices = @transform_7, window_bounds = array<i64: 4, 50, 16>}]} {
    %c0 = arith.constant 0 : index
    %c0_0 = arith.constant 0 : index
    %c0_1 = arith.constant 0 : index
    %0 = vector.load %arg1[%c0, %c0_0, %c0_1] : memref<4x1x512xf32, #tpu.memory_space<vmem>>, vector<4x1x512xf32>
    %c0_2 = arith.constant 0 : index
    %c0_3 = arith.constant 0 : index
    %1 = vector.load %arg2[%c0_2, %c0_3] : memref<20x25xbf16, #tpu.memory_space<vmem>>, vector<20x25xbf16>
    %c0_4 = arith.constant 0 : index
    %c0_5 = arith.constant 0 : index
    %2 = vector.load %arg3[%c0_4, %c0_5] : memref<20x1xf32, #tpu.memory_space<vmem>>, vector<20x1xf32>
    %c0_6 = arith.constant 0 : index
    %c0_7 = arith.constant 0 : index
    %3 = vector.load %arg4[%c0_6, %c0_7] : memref<296x256xbf16, #tpu.memory_space<vmem>>, vector<296x256xbf16>
    %c0_8 = arith.constant 0 : index
    %c0_9 = arith.constant 0 : index
    %4 = vector.load %arg5[%c0_8, %c0_9] : memref<50x500xbf16, #tpu.memory_space<vmem>>, vector<50x500xbf16>
    %c0_10 = arith.constant 0 : index
    %c0_11 = arith.constant 0 : index
    %5 = vector.load %arg6[%c0_10, %c0_11] : memref<50x1xf32, #tpu.memory_space<vmem>>, vector<50x1xf32>
    %c0_12 = arith.constant 0 : index
    %c0_13 = arith.constant 0 : index
    %6 = vector.load %arg7[%c0_12, %c0_13] : memref<80x16xf32, #tpu.memory_space<vmem>>, vector<80x16xf32>
    %7 = vector.extract_strided_slice %0 {offsets = [0, 0, 0], sizes = [1, 1, 512], strides = [1, 1, 1]} : vector<4x1x512xf32> to vector<1x1x512xf32>
    %8 = vector.shape_cast %7 : vector<1x1x512xf32> to vector<1x512xf32>
    %9 = vector.extract_strided_slice %8 {offsets = [0, 0], sizes = [1, 384], strides = [1, 1]} : vector<1x512xf32> to vector<1x384xf32>
    %c0_14 = arith.constant 0 : index
    %c0_15 = arith.constant 0 : index
    %10 = vector.load %arg9[%c0_14, %c0_15] : memref<25x384xf32, #tpu.memory_space<vmem>>, vector<1x384xf32>
    tpu.vector_store %arg9[%c0_14, %c0_15], %9 {strides = array<i32>} : memref<25x384xf32, #tpu.memory_space<vmem>>, vector<1x384xf32>,
    %11 = vector.extract_strided_slice %8 {offsets = [0, 1], sizes = [1, 384], strides = [1, 1]} : vector<1x512xf32> to vector<1x384xf32>
    %c1 = arith.constant 1 : index
    %c0_16 = arith.constant 0 : index
    %12 = vector.load %arg9[%c1, %c0_16] : memref<25x384xf32, #tpu.memory_space<vmem>>, vector<1x384xf32>
    tpu.vector_store %arg9[%c1, %c0_16], %11 {strides = array<i32>} : memref<25x384xf32, #tpu.memory_space<vmem>>, vector<1x384xf32>,
    %13 = vector.extract_strided_slice %8 {offsets = [0, 2], sizes = [1, 384], strides = [1, 1]} : vector<1x512xf32> to vector<1x384xf32>
    %c2 = arith.constant 2 : index
    %c0_17 = arith.constant 0 : index
    %14 = vector.load %arg9[%c2, %c0_17] : memref<25x384xf32, #tpu.memory_space<vmem>>, vector<1x384xf32>
    tpu.vector_store %arg9[%c2, %c0_17], %13 {strides = array<i32>} : memref<25x384xf32, #tpu.memory_space<vmem>>, vector<1x384xf32>,
    %15 = vector.extract_strided_slice %8 {offsets = [0, 3], sizes = [1, 384], strides = [1, 1]} : vector<1x512xf32> to vector<1x384xf32>
    %c3 = arith.constant 3 : index
    %c0_18 = arith.constant 0 : index
    %16 = vector.load %arg9[%c3, %c0_18] : memref<25x384xf32, #tpu.memory_space<vmem>>, vector<1x384xf32>
    tpu.vector_store %arg9[%c3, %c0_18], %15 {strides = array<i32>} : memref<25x384xf32, #tpu.memory_space<vmem>>, vector<1x384xf32>,
    %17 = vector.extract_strided_slice %8 {offsets = [0, 4], sizes = [1, 384], strides = [1, 1]} : vector<1x512xf32> to vector<1x384xf32>
    %c4 = arith.constant 4 : index
    %c0_19 = arith.constant 0 : index
    %18 = vector.load %arg9[%c4, %c0_19] : memref<25x384xf32, #tpu.memory_space<vmem>>, vector<1x384xf32>
    tpu.vector_store %arg9[%c4, %c0_19], %17 {strides = array<i32>} : memref<25x384xf32, #tpu.memory_space<vmem>>, vector<1x384xf32>,
    %19 = vector.extract_strided_slice %8 {offsets = [0, 20], sizes = [1, 384], strides = [1, 1]} : vector<1x512xf32> to vector<1x384xf32>
    %c5 = arith.constant 5 : index
    %c0_20 = arith.constant 0 : index
    %20 = vector.load %arg9[%c5, %c0_20] : memref<25x384xf32, #tpu.memory_space<vmem>>, vector<1x384xf32>
    tpu.vector_store %arg9[%c5, %c0_20], %19 {strides = array<i32>} : memref<25x384xf32, #tpu.memory_space<vmem>>, vector<1x384xf32>,
    %21 = vector.extract_strided_slice %8 {offsets = [0, 21], sizes = [1, 384], strides = [1, 1]} : vector<1x512xf32> to vector<1x384xf32>
    %c6 = arith.constant 6 : index
    %c0_21 = arith.constant 0 : index
    %22 = vector.load %arg9[%c6, %c0_21] : memref<25x384xf32, #tpu.memory_space<vmem>>, vector<1x384xf32>
    tpu.vector_store %arg9[%c6, %c0_21], %21 {strides = array<i32>} : memref<25x384xf32, #tpu.memory_space<vmem>>, vector<1x384xf32>,
    %23 = vector.extract_strided_slice %8 {offsets = [0, 22], sizes = [1, 384], strides = [1, 1]} : vector<1x512xf32> to vector<1x384xf32>
    %c7 = arith.constant 7 : index
    %c0_22 = arith.constant 0 : index
    %24 = vector.load %arg9[%c7, %c0_22] : memref<25x384xf32, #tpu.memory_space<vmem>>, vector<1x384xf32>
    tpu.vector_store %arg9[%c7, %c0_22], %23 {strides = array<i32>} : memref<25x384xf32, #tpu.memory_space<vmem>>, vector<1x384xf32>,
    %25 = vector.extract_strided_slice %8 {offsets = [0, 23], sizes = [1, 384], strides = [1, 1]} : vector<1x512xf32> to vector<1x384xf32>
    %c8 = arith.constant 8 : index
    %c0_23 = arith.constant 0 : index
    %26 = vector.load %arg9[%c8, %c0_23] : memref<25x384xf32, #tpu.memory_space<vmem>>, vector<1x384xf32>
    tpu.vector_store %arg9[%c8, %c0_23], %25 {strides = array<i32>} : memref<25x384xf32, #tpu.memory_space<vmem>>, vector<1x384xf32>,
    %27 = vector.extract_strided_slice %8 {offsets = [0, 24], sizes = [1, 384], strides = [1, 1]} : vector<1x512xf32> to vector<1x384xf32>
    %c9 = arith.constant 9 : index
    %c0_24 = arith.constant 0 : index
    %28 = vector.load %arg9[%c9, %c0_24] : memref<25x384xf32, #tpu.memory_space<vmem>>, vector<1x384xf32>
    tpu.vector_store %arg9[%c9, %c0_24], %27 {strides = array<i32>} : memref<25x384xf32, #tpu.memory_space<vmem>>, vector<1x384xf32>,
    %29 = vector.extract_strided_slice %8 {offsets = [0, 40], sizes = [1, 384], strides = [1, 1]} : vector<1x512xf32> to vector<1x384xf32>
    %c10 = arith.constant 10 : index
    %c0_25 = arith.constant 0 : index
    %30 = vector.load %arg9[%c10, %c0_25] : memref<25x384xf32, #tpu.memory_space<vmem>>, vector<1x384xf32>
    tpu.vector_store %arg9[%c10, %c0_25], %29 {strides = array<i32>} : memref<25x384xf32, #tpu.memory_space<vmem>>, vector<1x384xf32>,
    %31 = vector.extract_strided_slice %8 {offsets = [0, 41], sizes = [1, 384], strides = [1, 1]} : vector<1x512xf32> to vector<1x384xf32>
    %c11 = arith.constant 11 : index
    %c0_26 = arith.constant 0 : index
    %32 = vector.load %arg9[%c11, %c0_26] : memref<25x384xf32, #tpu.memory_space<vmem>>, vector<1x384xf32>
    tpu.vector_store %arg9[%c11, %c0_26], %31 {strides = array<i32>} : memref<25x384xf32, #tpu.memory_space<vmem>>, vector<1x384xf32>,
    %33 = vector.extract_strided_slice %8 {offsets = [0, 42], sizes = [1, 384], strides = [1, 1]} : vector<1x512xf32> to vector<1x384xf32>
    %c12 = arith.constant 12 : index
    %c0_27 = arith.constant 0 : index
    %34 = vector.load %arg9[%c12, %c0_27] : memref<25x384xf32, #tpu.memory_space<vmem>>, vector<1x384xf32>
    tpu.vector_store %arg9[%c12, %c0_27], %33 {strides = array<i32>} : memref<25x384xf32, #tpu.memory_space<vmem>>, vector<1x384xf32>,
    %35 = vector.extract_strided_slice %8 {offsets = [0, 43], sizes = [1, 384], strides = [1, 1]} : vector<1x512xf32> to vector<1x384xf32>
    %c13 = arith.constant 13 : index
    %c0_28 = arith.constant 0 : index
    %36 = vector.load %arg9[%c13, %c0_28] : memref<25x384xf32, #tpu.memory_space<vmem>>, vector<1x384xf32>
    tpu.vector_store %arg9[%c13, %c0_28], %35 {strides = array<i32>} : memref<25x384xf32, #tpu.memory_space<vmem>>, vector<1x384xf32>,
    %37 = vector.extract_strided_slice %8 {offsets = [0, 44], sizes = [1, 384], strides = [1, 1]} : vector<1x512xf32> to vector<1x384xf32>
    %c14 = arith.constant 14 : index
    %c0_29 = arith.constant 0 : index
    %38 = vector.load %arg9[%c14, %c0_29] : memref<25x384xf32, #tpu.memory_space<vmem>>, vector<1x384xf32>
    tpu.vector_store %arg9[%c14, %c0_29], %37 {strides = array<i32>} : memref<25x384xf32, #tpu.memory_space<vmem>>, vector<1x384xf32>,
    %39 = vector.extract_strided_slice %8 {offsets = [0, 60], sizes = [1, 384], strides = [1, 1]} : vector<1x512xf32> to vector<1x384xf32>
    %c15 = arith.constant 15 : index
    %c0_30 = arith.constant 0 : index
    %40 = vector.load %arg9[%c15, %c0_30] : memref<25x384xf32, #tpu.memory_space<vmem>>, vector<1x384xf32>
    tpu.vector_store %arg9[%c15, %c0_30], %39 {strides = array<i32>} : memref<25x384xf32, #tpu.memory_space<vmem>>, vector<1x384xf32>,
    %41 = vector.extract_strided_slice %8 {offsets = [0, 61], sizes = [1, 384], strides = [1, 1]} : vector<1x512xf32> to vector<1x384xf32>
    %c16 = arith.constant 16 : index
    %c0_31 = arith.constant 0 : index
    %42 = vector.load %arg9[%c16, %c0_31] : memref<25x384xf32, #tpu.memory_space<vmem>>, vector<1x384xf32>
    tpu.vector_store %arg9[%c16, %c0_31], %41 {strides = array<i32>} : memref<25x384xf32, #tpu.memory_space<vmem>>, vector<1x384xf32>,
    %43 = vector.extract_strided_slice %8 {offsets = [0, 62], sizes = [1, 384], strides = [1, 1]} : vector<1x512xf32> to vector<1x384xf32>
    %c17 = arith.constant 17 : index
    %c0_32 = arith.constant 0 : index
    %44 = vector.load %arg9[%c17, %c0_32] : memref<25x384xf32, #tpu.memory_space<vmem>>, vector<1x384xf32>
    tpu.vector_store %arg9[%c17, %c0_32], %43 {strides = array<i32>} : memref<25x384xf32, #tpu.memory_space<vmem>>, vector<1x384xf32>,
    %45 = vector.extract_strided_slice %8 {offsets = [0, 63], sizes = [1, 384], strides = [1, 1]} : vector<1x512xf32> to vector<1x384xf32>
    %c18 = arith.constant 18 : index
    %c0_33 = arith.constant 0 : index
    %46 = vector.load %arg9[%c18, %c0_33] : memref<25x384xf32, #tpu.memory_space<vmem>>, vector<1x384xf32>
    tpu.vector_store %arg9[%c18, %c0_33], %45 {strides = array<i32>} : memref<25x384xf32, #tpu.memory_space<vmem>>, vector<1x384xf32>,
    %47 = vector.extract_strided_slice %8 {offsets = [0, 64], sizes = [1, 384], strides = [1, 1]} : vector<1x512xf32> to vector<1x384xf32>
    %c19 = arith.constant 19 : index
    %c0_34 = arith.constant 0 : index
    %48 = vector.load %arg9[%c19, %c0_34] : memref<25x384xf32, #tpu.memory_space<vmem>>, vector<1x384xf32>
    tpu.vector_store %arg9[%c19, %c0_34], %47 {strides = array<i32>} : memref<25x384xf32, #tpu.memory_space<vmem>>, vector<1x384xf32>,
    %49 = vector.extract_strided_slice %8 {offsets = [0, 80], sizes = [1, 384], strides = [1, 1]} : vector<1x512xf32> to vector<1x384xf32>
    %c20 = arith.constant 20 : index
    %c0_35 = arith.constant 0 : index
    %50 = vector.load %arg9[%c20, %c0_35] : memref<25x384xf32, #tpu.memory_space<vmem>>, vector<1x384xf32>
    tpu.vector_store %arg9[%c20, %c0_35], %49 {strides = array<i32>} : memref<25x384xf32, #tpu.memory_space<vmem>>, vector<1x384xf32>,
    %51 = vector.extract_strided_slice %8 {offsets = [0, 81], sizes = [1, 384], strides = [1, 1]} : vector<1x512xf32> to vector<1x384xf32>
    %c21 = arith.constant 21 : index
    %c0_36 = arith.constant 0 : index
    %52 = vector.load %arg9[%c21, %c0_36] : memref<25x384xf32, #tpu.memory_space<vmem>>, vector<1x384xf32>
    tpu.vector_store %arg9[%c21, %c0_36], %51 {strides = array<i32>} : memref<25x384xf32, #tpu.memory_space<vmem>>, vector<1x384xf32>,
    %53 = vector.extract_strided_slice %8 {offsets = [0, 82], sizes = [1, 384], strides = [1, 1]} : vector<1x512xf32> to vector<1x384xf32>
    %c22 = arith.constant 22 : index
    %c0_37 = arith.constant 0 : index
    %54 = vector.load %arg9[%c22, %c0_37] : memref<25x384xf32, #tpu.memory_space<vmem>>, vector<1x384xf32>
    tpu.vector_store %arg9[%c22, %c0_37], %53 {strides = array<i32>} : memref<25x384xf32, #tpu.memory_space<vmem>>, vector<1x384xf32>,
    %55 = vector.extract_strided_slice %8 {offsets = [0, 83], sizes = [1, 384], strides = [1, 1]} : vector<1x512xf32> to vector<1x384xf32>
    %c23 = arith.constant 23 : index
    %c0_38 = arith.constant 0 : index
    %56 = vector.load %arg9[%c23, %c0_38] : memref<25x384xf32, #tpu.memory_space<vmem>>, vector<1x384xf32>
    tpu.vector_store %arg9[%c23, %c0_38], %55 {strides = array<i32>} : memref<25x384xf32, #tpu.memory_space<vmem>>, vector<1x384xf32>,
    %57 = vector.extract_strided_slice %8 {offsets = [0, 84], sizes = [1, 384], strides = [1, 1]} : vector<1x512xf32> to vector<1x384xf32>
    %c24 = arith.constant 24 : index
    %c0_39 = arith.constant 0 : index
    %58 = vector.load %arg9[%c24, %c0_39] : memref<25x384xf32, #tpu.memory_space<vmem>>, vector<1x384xf32>
    tpu.vector_store %arg9[%c24, %c0_39], %57 {strides = array<i32>} : memref<25x384xf32, #tpu.memory_space<vmem>>, vector<1x384xf32>,
    %c0_40 = arith.constant 0 : index
    %c0_41 = arith.constant 0 : index
    %59 = vector.load %arg9[%c0_40, %c0_41] : memref<25x384xf32, #tpu.memory_space<vmem>>, vector<25x384xf32>
    %60 = arith.truncf %59 : vector<25x384xf32> to vector<25x384xbf16>
    %cst = arith.constant dense<0.000000e+00> : vector<20x384xf32>
    %61 = tpu.matmul %1, %60, %cst {dimension_numbers = #tpu.dot_dimension_numbers<[1], [0], [0], [1], [0, 0, 1, 1], [], []>} : vector<20x25xbf16>, vector<25x384xbf16>, vector<20x384xf32> -> vector<20x384xf32>
    %62 = vector.broadcast %2 : vector<20x1xf32> to vector<20x384xf32>
    %63 = arith.addf %61, %62 : vector<20x384xf32>
    %cst_42 = arith.constant 0.000000e+00 : f32
    %64 = vector.broadcast %cst_42 : f32 to vector<20x384xf32>
    %65 = arith.maximumf %63, %64 : vector<20x384xf32>
    %66 = vector.extract_strided_slice %65 {offsets = [0, 0], sizes = [20, 296], strides = [1, 1]} : vector<20x384xf32> to vector<20x296xf32>
    %67 = vector.extract_strided_slice %65 {offsets = [0, 1], sizes = [20, 296], strides = [1, 1]} : vector<20x384xf32> to vector<20x296xf32>
    %68 = arith.maximumf %66, %67 : vector<20x296xf32>
    %69 = vector.extract_strided_slice %65 {offsets = [0, 20], sizes = [20, 296], strides = [1, 1]} : vector<20x384xf32> to vector<20x296xf32>
    %70 = vector.extract_strided_slice %65 {offsets = [0, 21], sizes = [20, 296], strides = [1, 1]} : vector<20x384xf32> to vector<20x296xf32>
    %71 = arith.maximumf %69, %70 : vector<20x296xf32>
    %72 = arith.maximumf %68, %71 : vector<20x296xf32>
    %73 = arith.truncf %72 : vector<20x296xf32> to vector<20x296xbf16>
    %cst_43 = arith.constant dense<0.000000e+00> : vector<20x256xf32>
    %74 = tpu.matmul %73, %3, %cst_43 {dimension_numbers = #tpu.dot_dimension_numbers<[1], [0], [0], [1], [0, 0, 1, 1], [], []>} : vector<20x296xbf16>, vector<296x256xbf16>, vector<20x256xf32> -> vector<20x256xf32>
    %75 = vector.extract_strided_slice %74 {offsets = [0, 0], sizes = [20, 128], strides = [1, 1]} : vector<20x256xf32> to vector<20x128xf32>
    %c0_44 = arith.constant 0 : index
    %c0_45 = arith.constant 0 : index
    %76 = vector.load %arg10[%c0_44, %c0_45] : memref<500x128xf32, #tpu.memory_space<vmem>>, vector<20x128xf32>
    tpu.vector_store %arg10[%c0_44, %c0_45], %75 {strides = array<i32>} : memref<500x128xf32, #tpu.memory_space<vmem>>, vector<20x128xf32>,
    %77 = vector.extract_strided_slice %74 {offsets = [0, 1], sizes = [20, 128], strides = [1, 1]} : vector<20x256xf32> to vector<20x128xf32>
    %c20_46 = arith.constant 20 : index
    %c0_47 = arith.constant 0 : index
    %78 = vector.load %arg10[%c20_46, %c0_47] : memref<500x128xf32, #tpu.memory_space<vmem>>, vector<20x128xf32>
    tpu.vector_store %arg10[%c20_46, %c0_47], %77 {strides = array<i32>} : memref<500x128xf32, #tpu.memory_space<vmem>>, vector<20x128xf32>,
    %79 = vector.extract_strided_slice %74 {offsets = [0, 2], sizes = [20, 128], strides = [1, 1]} : vector<20x256xf32> to vector<20x128xf32>
    %c40 = arith.constant 40 : index
    %c0_48 = arith.constant 0 : index
    %80 = vector.load %arg10[%c40, %c0_48] : memref<500x128xf32, #tpu.memory_space<vmem>>, vector<20x128xf32>
    tpu.vector_store %arg10[%c40, %c0_48], %79 {strides = array<i32>} : memref<500x128xf32, #tpu.memory_space<vmem>>, vector<20x128xf32>,
    %81 = vector.extract_strided_slice %74 {offsets = [0, 3], sizes = [20, 128], strides = [1, 1]} : vector<20x256xf32> to vector<20x128xf32>
    %c60 = arith.constant 60 : index
    %c0_49 = arith.constant 0 : index
    %82 = vector.load %arg10[%c60, %c0_49] : memref<500x128xf32, #tpu.memory_space<vmem>>, vector<20x128xf32>
    tpu.vector_store %arg10[%c60, %c0_49], %81 {strides = array<i32>} : memref<500x128xf32, #tpu.memory_space<vmem>>, vector<20x128xf32>,
    %83 = vector.extract_strided_slice %74 {offsets = [0, 4], sizes = [20, 128], strides = [1, 1]} : vector<20x256xf32> to vector<20x128xf32>
    %c80 = arith.constant 80 : index
    %c0_50 = arith.constant 0 : index
    %84 = vector.load %arg10[%c80, %c0_50] : memref<500x128xf32, #tpu.memory_space<vmem>>, vector<20x128xf32>
    tpu.vector_store %arg10[%c80, %c0_50], %83 {strides = array<i32>} : memref<500x128xf32, #tpu.memory_space<vmem>>, vector<20x128xf32>,
    %85 = vector.extract_strided_slice %74 {offsets = [0, 12], sizes = [20, 128], strides = [1, 1]} : vector<20x256xf32> to vector<20x128xf32>
    %c100 = arith.constant 100 : index
    %c0_51 = arith.constant 0 : index
    %86 = vector.load %arg10[%c100, %c0_51] : memref<500x128xf32, #tpu.memory_space<vmem>>, vector<20x128xf32>
    tpu.vector_store %arg10[%c100, %c0_51], %85 {strides = array<i32>} : memref<500x128xf32, #tpu.memory_space<vmem>>, vector<20x128xf32>,
    %87 = vector.extract_strided_slice %74 {offsets = [0, 13], sizes = [20, 128], strides = [1, 1]} : vector<20x256xf32> to vector<20x128xf32>
    %c120 = arith.constant 120 : index
    %c0_52 = arith.constant 0 : index
    %88 = vector.load %arg10[%c120, %c0_52] : memref<500x128xf32, #tpu.memory_space<vmem>>, vector<20x128xf32>
    tpu.vector_store %arg10[%c120, %c0_52], %87 {strides = array<i32>} : memref<500x128xf32, #tpu.memory_space<vmem>>, vector<20x128xf32>,
    %89 = vector.extract_strided_slice %74 {offsets = [0, 14], sizes = [20, 128], strides = [1, 1]} : vector<20x256xf32> to vector<20x128xf32>
    %c140 = arith.constant 140 : index
    %c0_53 = arith.constant 0 : index
    %90 = vector.load %arg10[%c140, %c0_53] : memref<500x128xf32, #tpu.memory_space<vmem>>, vector<20x128xf32>
    tpu.vector_store %arg10[%c140, %c0_53], %89 {strides = array<i32>} : memref<500x128xf32, #tpu.memory_space<vmem>>, vector<20x128xf32>,
    %91 = vector.extract_strided_slice %74 {offsets = [0, 15], sizes = [20, 128], strides = [1, 1]} : vector<20x256xf32> to vector<20x128xf32>
    %c160 = arith.constant 160 : index
    %c0_54 = arith.constant 0 : index
    %92 = vector.load %arg10[%c160, %c0_54] : memref<500x128xf32, #tpu.memory_space<vmem>>, vector<20x128xf32>
    tpu.vector_store %arg10[%c160, %c0_54], %91 {strides = array<i32>} : memref<500x128xf32, #tpu.memory_space<vmem>>, vector<20x128xf32>,
    %93 = vector.extract_strided_slice %74 {offsets = [0, 16], sizes = [20, 128], strides = [1, 1]} : vector<20x256xf32> to vector<20x128xf32>
    %c180 = arith.constant 180 : index
    %c0_55 = arith.constant 0 : index
    %94 = vector.load %arg10[%c180, %c0_55] : memref<500x128xf32, #tpu.memory_space<vmem>>, vector<20x128xf32>
    tpu.vector_store %arg10[%c180, %c0_55], %93 {strides = array<i32>} : memref<500x128xf32, #tpu.memory_space<vmem>>, vector<20x128xf32>,
    %95 = vector.extract_strided_slice %74 {offsets = [0, 24], sizes = [20, 128], strides = [1, 1]} : vector<20x256xf32> to vector<20x128xf32>
    %c200 = arith.constant 200 : index
    %c0_56 = arith.constant 0 : index
    %96 = vector.load %arg10[%c200, %c0_56] : memref<500x128xf32, #tpu.memory_space<vmem>>, vector<20x128xf32>
    tpu.vector_store %arg10[%c200, %c0_56], %95 {strides = array<i32>} : memref<500x128xf32, #tpu.memory_space<vmem>>, vector<20x128xf32>,
    %97 = vector.extract_strided_slice %74 {offsets = [0, 25], sizes = [20, 128], strides = [1, 1]} : vector<20x256xf32> to vector<20x128xf32>
    %c220 = arith.constant 220 : index
    %c0_57 = arith.constant 0 : index
    %98 = vector.load %arg10[%c220, %c0_57] : memref<500x128xf32, #tpu.memory_space<vmem>>, vector<20x128xf32>
    tpu.vector_store %arg10[%c220, %c0_57], %97 {strides = array<i32>} : memref<500x128xf32, #tpu.memory_space<vmem>>, vector<20x128xf32>,
    %99 = vector.extract_strided_slice %74 {offsets = [0, 26], sizes = [20, 128], strides = [1, 1]} : vector<20x256xf32> to vector<20x128xf32>
    %c240 = arith.constant 240 : index
    %c0_58 = arith.constant 0 : index
    %100 = vector.load %arg10[%c240, %c0_58] : memref<500x128xf32, #tpu.memory_space<vmem>>, vector<20x128xf32>
    tpu.vector_store %arg10[%c240, %c0_58], %99 {strides = array<i32>} : memref<500x128xf32, #tpu.memory_space<vmem>>, vector<20x128xf32>,
    %101 = vector.extract_strided_slice %74 {offsets = [0, 27], sizes = [20, 128], strides = [1, 1]} : vector<20x256xf32> to vector<20x128xf32>
    %c260 = arith.constant 260 : index
    %c0_59 = arith.constant 0 : index
    %102 = vector.load %arg10[%c260, %c0_59] : memref<500x128xf32, #tpu.memory_space<vmem>>, vector<20x128xf32>
    tpu.vector_store %arg10[%c260, %c0_59], %101 {strides = array<i32>} : memref<500x128xf32, #tpu.memory_space<vmem>>, vector<20x128xf32>,
    %103 = vector.extract_strided_slice %74 {offsets = [0, 28], sizes = [20, 128], strides = [1, 1]} : vector<20x256xf32> to vector<20x128xf32>
    %c280 = arith.constant 280 : index
    %c0_60 = arith.constant 0 : index
    %104 = vector.load %arg10[%c280, %c0_60] : memref<500x128xf32, #tpu.memory_space<vmem>>, vector<20x128xf32>
    tpu.vector_store %arg10[%c280, %c0_60], %103 {strides = array<i32>} : memref<500x128xf32, #tpu.memory_space<vmem>>, vector<20x128xf32>,
    %105 = vector.extract_strided_slice %74 {offsets = [0, 36], sizes = [20, 128], strides = [1, 1]} : vector<20x256xf32> to vector<20x128xf32>
    %c300 = arith.constant 300 : index
    %c0_61 = arith.constant 0 : index
    %106 = vector.load %arg10[%c300, %c0_61] : memref<500x128xf32, #tpu.memory_space<vmem>>, vector<20x128xf32>
    tpu.vector_store %arg10[%c300, %c0_61], %105 {strides = array<i32>} : memref<500x128xf32, #tpu.memory_space<vmem>>, vector<20x128xf32>,
    %107 = vector.extract_strided_slice %74 {offsets = [0, 37], sizes = [20, 128], strides = [1, 1]} : vector<20x256xf32> to vector<20x128xf32>
    %c320 = arith.constant 320 : index
    %c0_62 = arith.constant 0 : index
    %108 = vector.load %arg10[%c320, %c0_62] : memref<500x128xf32, #tpu.memory_space<vmem>>, vector<20x128xf32>
    tpu.vector_store %arg10[%c320, %c0_62], %107 {strides = array<i32>} : memref<500x128xf32, #tpu.memory_space<vmem>>, vector<20x128xf32>,
    %109 = vector.extract_strided_slice %74 {offsets = [0, 38], sizes = [20, 128], strides = [1, 1]} : vector<20x256xf32> to vector<20x128xf32>
    %c340 = arith.constant 340 : index
    %c0_63 = arith.constant 0 : index
    %110 = vector.load %arg10[%c340, %c0_63] : memref<500x128xf32, #tpu.memory_space<vmem>>, vector<20x128xf32>
    tpu.vector_store %arg10[%c340, %c0_63], %109 {strides = array<i32>} : memref<500x128xf32, #tpu.memory_space<vmem>>, vector<20x128xf32>,
    %111 = vector.extract_strided_slice %74 {offsets = [0, 39], sizes = [20, 128], strides = [1, 1]} : vector<20x256xf32> to vector<20x128xf32>
    %c360 = arith.constant 360 : index
    %c0_64 = arith.constant 0 : index
    %112 = vector.load %arg10[%c360, %c0_64] : memref<500x128xf32, #tpu.memory_space<vmem>>, vector<20x128xf32>
    tpu.vector_store %arg10[%c360, %c0_64], %111 {strides = array<i32>} : memref<500x128xf32, #tpu.memory_space<vmem>>, vector<20x128xf32>,
    %113 = vector.extract_strided_slice %74 {offsets = [0, 40], sizes = [20, 128], strides = [1, 1]} : vector<20x256xf32> to vector<20x128xf32>
    %c380 = arith.constant 380 : index
    %c0_65 = arith.constant 0 : index
    %114 = vector.load %arg10[%c380, %c0_65] : memref<500x128xf32, #tpu.memory_space<vmem>>, vector<20x128xf32>
    tpu.vector_store %arg10[%c380, %c0_65], %113 {strides = array<i32>} : memref<500x128xf32, #tpu.memory_space<vmem>>, vector<20x128xf32>,
    %115 = vector.extract_strided_slice %74 {offsets = [0, 48], sizes = [20, 128], strides = [1, 1]} : vector<20x256xf32> to vector<20x128xf32>
    %c400 = arith.constant 400 : index
    %c0_66 = arith.constant 0 : index
    %116 = vector.load %arg10[%c400, %c0_66] : memref<500x128xf32, #tpu.memory_space<vmem>>, vector<20x128xf32>
    tpu.vector_store %arg10[%c400, %c0_66], %115 {strides = array<i32>} : memref<500x128xf32, #tpu.memory_space<vmem>>, vector<20x128xf32>,
    %117 = vector.extract_strided_slice %74 {offsets = [0, 49], sizes = [20, 128], strides = [1, 1]} : vector<20x256xf32> to vector<20x128xf32>
    %c420 = arith.constant 420 : index
    %c0_67 = arith.constant 0 : index
    %118 = vector.load %arg10[%c420, %c0_67] : memref<500x128xf32, #tpu.memory_space<vmem>>, vector<20x128xf32>
    tpu.vector_store %arg10[%c420, %c0_67], %117 {strides = array<i32>} : memref<500x128xf32, #tpu.memory_space<vmem>>, vector<20x128xf32>,
    %119 = vector.extract_strided_slice %74 {offsets = [0, 50], sizes = [20, 128], strides = [1, 1]} : vector<20x256xf32> to vector<20x128xf32>
    %c440 = arith.constant 440 : index
    %c0_68 = arith.constant 0 : index
    %120 = vector.load %arg10[%c440, %c0_68] : memref<500x128xf32, #tpu.memory_space<vmem>>, vector<20x128xf32>
    tpu.vector_store %arg10[%c440, %c0_68], %119 {strides = array<i32>} : memref<500x128xf32, #tpu.memory_space<vmem>>, vector<20x128xf32>,
    %121 = vector.extract_strided_slice %74 {offsets = [0, 51], sizes = [20, 128], strides = [1, 1]} : vector<20x256xf32> to vector<20x128xf32>
    %c460 = arith.constant 460 : index
    %c0_69 = arith.constant 0 : index
    %122 = vector.load %arg10[%c460, %c0_69] : memref<500x128xf32, #tpu.memory_space<vmem>>, vector<20x128xf32>
    tpu.vector_store %arg10[%c460, %c0_69], %121 {strides = array<i32>} : memref<500x128xf32, #tpu.memory_space<vmem>>, vector<20x128xf32>,
    %123 = vector.extract_strided_slice %74 {offsets = [0, 52], sizes = [20, 128], strides = [1, 1]} : vector<20x256xf32> to vector<20x128xf32>
    %c480 = arith.constant 480 : index
    %c0_70 = arith.constant 0 : index
    %124 = vector.load %arg10[%c480, %c0_70] : memref<500x128xf32, #tpu.memory_space<vmem>>, vector<20x128xf32>
    tpu.vector_store %arg10[%c480, %c0_70], %123 {strides = array<i32>} : memref<500x128xf32, #tpu.memory_space<vmem>>, vector<20x128xf32>,
    %c0_71 = arith.constant 0 : index
    %c0_72 = arith.constant 0 : index
    %125 = vector.load %arg10[%c0_71, %c0_72] : memref<500x128xf32, #tpu.memory_space<vmem>>, vector<500x128xf32>
    %126 = arith.truncf %125 : vector<500x128xf32> to vector<500x128xbf16>
    %cst_73 = arith.constant dense<0.000000e+00> : vector<50x128xf32>
    %127 = tpu.matmul %4, %126, %cst_73 {dimension_numbers = #tpu.dot_dimension_numbers<[1], [0], [0], [1], [0, 0, 1, 1], [], []>} : vector<50x500xbf16>, vector<500x128xbf16>, vector<50x128xf32> -> vector<50x128xf32>
    %128 = vector.broadcast %5 : vector<50x1xf32> to vector<50x128xf32>
    %129 = arith.addf %127, %128 : vector<50x128xf32>
    %cst_74 = arith.constant 0.000000e+00 : f32
    %130 = vector.broadcast %cst_74 : f32 to vector<50x128xf32>
    %131 = arith.maximumf %129, %130 : vector<50x128xf32>
    %132 = vector.extract_strided_slice %131 {offsets = [0, 0], sizes = [50, 80], strides = [1, 1]} : vector<50x128xf32> to vector<50x80xf32>
    %133 = vector.extract_strided_slice %131 {offsets = [0, 1], sizes = [50, 80], strides = [1, 1]} : vector<50x128xf32> to vector<50x80xf32>
    %134 = arith.maximumf %132, %133 : vector<50x80xf32>
    %135 = vector.extract_strided_slice %131 {offsets = [0, 12], sizes = [50, 80], strides = [1, 1]} : vector<50x128xf32> to vector<50x80xf32>
    %136 = vector.extract_strided_slice %131 {offsets = [0, 13], sizes = [50, 80], strides = [1, 1]} : vector<50x128xf32> to vector<50x80xf32>
    %137 = arith.maximumf %135, %136 : vector<50x80xf32>
    %138 = arith.maximumf %134, %137 : vector<50x80xf32>
    %cst_75 = arith.constant dense<0.000000e+00> : vector<50x16xf32>
    %139 = tpu.matmul %138, %6, %cst_75 {dimension_numbers = #tpu.dot_dimension_numbers<[1], [0], [0], [1], [0, 0, 1, 1], [], []>} : vector<50x80xf32>, vector<80x16xf32>, vector<50x16xf32> -> vector<50x16xf32>
    %c0_76 = arith.constant 0 : index
    %c0_77 = arith.constant 0 : index
    %c0_78 = arith.constant 0 : index
    %140 = vector.load %arg8[%c0_76, %c0_77, %c0_78] : memref<4x50x16xf32, #tpu.memory_space<vmem>>, vector<1x50x16xf32>
    %141 = vector.shape_cast %140 : vector<1x50x16xf32> to vector<50x16xf32>
    %142 = vector.shape_cast %139 : vector<50x16xf32> to vector<1x50x16xf32>
    tpu.vector_store %arg8[%c0_76, %c0_77, %c0_78], %142 {strides = array<i32>} : memref<4x50x16xf32, #tpu.memory_space<vmem>>, vector<1x50x16xf32>,
    %143 = vector.extract_strided_slice %0 {offsets = [1, 0, 0], sizes = [1, 1, 512], strides = [1, 1, 1]} : vector<4x1x512xf32> to vector<1x1x512xf32>
    %144 = vector.shape_cast %143 : vector<1x1x512xf32> to vector<1x512xf32>
    %145 = vector.extract_strided_slice %144 {offsets = [0, 0], sizes = [1, 384], strides = [1, 1]} : vector<1x512xf32> to vector<1x384xf32>
    %c0_79 = arith.constant 0 : index
    %c0_80 = arith.constant 0 : index
    %146 = vector.load %arg9[%c0_79, %c0_80] : memref<25x384xf32, #tpu.memory_space<vmem>>, vector<1x384xf32>
    tpu.vector_store %arg9[%c0_79, %c0_80], %145 {strides = array<i32>} : memref<25x384xf32, #tpu.memory_space<vmem>>, vector<1x384xf32>,
    %147 = vector.extract_strided_slice %144 {offsets = [0, 1], sizes = [1, 384], strides = [1, 1]} : vector<1x512xf32> to vector<1x384xf32>
    %c1_81 = arith.constant 1 : index
    %c0_82 = arith.constant 0 : index
    %148 = vector.load %arg9[%c1_81, %c0_82] : memref<25x384xf32, #tpu.memory_space<vmem>>, vector<1x384xf32>
    tpu.vector_store %arg9[%c1_81, %c0_82], %147 {strides = array<i32>} : memref<25x384xf32, #tpu.memory_space<vmem>>, vector<1x384xf32>,
    %149 = vector.extract_strided_slice %144 {offsets = [0, 2], sizes = [1, 384], strides = [1, 1]} : vector<1x512xf32> to vector<1x384xf32>
    %c2_83 = arith.constant 2 : index
    %c0_84 = arith.constant 0 : index
    %150 = vector.load %arg9[%c2_83, %c0_84] : memref<25x384xf32, #tpu.memory_space<vmem>>, vector<1x384xf32>
    tpu.vector_store %arg9[%c2_83, %c0_84], %149 {strides = array<i32>} : memref<25x384xf32, #tpu.memory_space<vmem>>, vector<1x384xf32>,
    %151 = vector.extract_strided_slice %144 {offsets = [0, 3], sizes = [1, 384], strides = [1, 1]} : vector<1x512xf32> to vector<1x384xf32>
    %c3_85 = arith.constant 3 : index
    %c0_86 = arith.constant 0 : index
    %152 = vector.load %arg9[%c3_85, %c0_86] : memref<25x384xf32, #tpu.memory_space<vmem>>, vector<1x384xf32>
    tpu.vector_store %arg9[%c3_85, %c0_86], %151 {strides = array<i32>} : memref<25x384xf32, #tpu.memory_space<vmem>>, vector<1x384xf32>,
    %153 = vector.extract_strided_slice %144 {offsets = [0, 4], sizes = [1, 384], strides = [1, 1]} : vector<1x512xf32> to vector<1x384xf32>
    %c4_87 = arith.constant 4 : index
    %c0_88 = arith.constant 0 : index
    %154 = vector.load %arg9[%c4_87, %c0_88] : memref<25x384xf32, #tpu.memory_space<vmem>>, vector<1x384xf32>
    tpu.vector_store %arg9[%c4_87, %c0_88], %153 {strides = array<i32>} : memref<25x384xf32, #tpu.memory_space<vmem>>, vector<1x384xf32>,
    %155 = vector.extract_strided_slice %144 {offsets = [0, 20], sizes = [1, 384], strides = [1, 1]} : vector<1x512xf32> to vector<1x384xf32>
    %c5_89 = arith.constant 5 : index
    %c0_90 = arith.constant 0 : index
    %156 = vector.load %arg9[%c5_89, %c0_90] : memref<25x384xf32, #tpu.memory_space<vmem>>, vector<1x384xf32>
    tpu.vector_store %arg9[%c5_89, %c0_90], %155 {strides = array<i32>} : memref<25x384xf32, #tpu.memory_space<vmem>>, vector<1x384xf32>,
    %157 = vector.extract_strided_slice %144 {offsets = [0, 21], sizes = [1, 384], strides = [1, 1]} : vector<1x512xf32> to vector<1x384xf32>
    %c6_91 = arith.constant 6 : index
    %c0_92 = arith.constant 0 : index
    %158 = vector.load %arg9[%c6_91, %c0_92] : memref<25x384xf32, #tpu.memory_space<vmem>>, vector<1x384xf32>
    tpu.vector_store %arg9[%c6_91, %c0_92], %157 {strides = array<i32>} : memref<25x384xf32, #tpu.memory_space<vmem>>, vector<1x384xf32>,
    %159 = vector.extract_strided_slice %144 {offsets = [0, 22], sizes = [1, 384], strides = [1, 1]} : vector<1x512xf32> to vector<1x384xf32>
    %c7_93 = arith.constant 7 : index
    %c0_94 = arith.constant 0 : index
    %160 = vector.load %arg9[%c7_93, %c0_94] : memref<25x384xf32, #tpu.memory_space<vmem>>, vector<1x384xf32>
    tpu.vector_store %arg9[%c7_93, %c0_94], %159 {strides = array<i32>} : memref<25x384xf32, #tpu.memory_space<vmem>>, vector<1x384xf32>,
    %161 = vector.extract_strided_slice %144 {offsets = [0, 23], sizes = [1, 384], strides = [1, 1]} : vector<1x512xf32> to vector<1x384xf32>
    %c8_95 = arith.constant 8 : index
    %c0_96 = arith.constant 0 : index
    %162 = vector.load %arg9[%c8_95, %c0_96] : memref<25x384xf32, #tpu.memory_space<vmem>>, vector<1x384xf32>
    tpu.vector_store %arg9[%c8_95, %c0_96], %161 {strides = array<i32>} : memref<25x384xf32, #tpu.memory_space<vmem>>, vector<1x384xf32>,
    %163 = vector.extract_strided_slice %144 {offsets = [0, 24], sizes = [1, 384], strides = [1, 1]} : vector<1x512xf32> to vector<1x384xf32>
    %c9_97 = arith.constant 9 : index
    %c0_98 = arith.constant 0 : index
    %164 = vector.load %arg9[%c9_97, %c0_98] : memref<25x384xf32, #tpu.memory_space<vmem>>, vector<1x384xf32>
    tpu.vector_store %arg9[%c9_97, %c0_98], %163 {strides = array<i32>} : memref<25x384xf32, #tpu.memory_space<vmem>>, vector<1x384xf32>,
    %165 = vector.extract_strided_slice %144 {offsets = [0, 40], sizes = [1, 384], strides = [1, 1]} : vector<1x512xf32> to vector<1x384xf32>
    %c10_99 = arith.constant 10 : index
    %c0_100 = arith.constant 0 : index
    %166 = vector.load %arg9[%c10_99, %c0_100] : memref<25x384xf32, #tpu.memory_space<vmem>>, vector<1x384xf32>
    tpu.vector_store %arg9[%c10_99, %c0_100], %165 {strides = array<i32>} : memref<25x384xf32, #tpu.memory_space<vmem>>, vector<1x384xf32>,
    %167 = vector.extract_strided_slice %144 {offsets = [0, 41], sizes = [1, 384], strides = [1, 1]} : vector<1x512xf32> to vector<1x384xf32>
    %c11_101 = arith.constant 11 : index
    %c0_102 = arith.constant 0 : index
    %168 = vector.load %arg9[%c11_101, %c0_102] : memref<25x384xf32, #tpu.memory_space<vmem>>, vector<1x384xf32>
    tpu.vector_store %arg9[%c11_101, %c0_102], %167 {strides = array<i32>} : memref<25x384xf32, #tpu.memory_space<vmem>>, vector<1x384xf32>,
    %169 = vector.extract_strided_slice %144 {offsets = [0, 42], sizes = [1, 384], strides = [1, 1]} : vector<1x512xf32> to vector<1x384xf32>
    %c12_103 = arith.constant 12 : index
    %c0_104 = arith.constant 0 : index
    %170 = vector.load %arg9[%c12_103, %c0_104] : memref<25x384xf32, #tpu.memory_space<vmem>>, vector<1x384xf32>
    tpu.vector_store %arg9[%c12_103, %c0_104], %169 {strides = array<i32>} : memref<25x384xf32, #tpu.memory_space<vmem>>, vector<1x384xf32>,
    %171 = vector.extract_strided_slice %144 {offsets = [0, 43], sizes = [1, 384], strides = [1, 1]} : vector<1x512xf32> to vector<1x384xf32>
    %c13_105 = arith.constant 13 : index
    %c0_106 = arith.constant 0 : index
    %172 = vector.load %arg9[%c13_105, %c0_106] : memref<25x384xf32, #tpu.memory_space<vmem>>, vector<1x384xf32>
    tpu.vector_store %arg9[%c13_105, %c0_106], %171 {strides = array<i32>} : memref<25x384xf32, #tpu.memory_space<vmem>>, vector<1x384xf32>,
    %173 = vector.extract_strided_slice %144 {offsets = [0, 44], sizes = [1, 384], strides = [1, 1]} : vector<1x512xf32> to vector<1x384xf32>
    %c14_107 = arith.constant 14 : index
    %c0_108 = arith.constant 0 : index
    %174 = vector.load %arg9[%c14_107, %c0_108] : memref<25x384xf32, #tpu.memory_space<vmem>>, vector<1x384xf32>
    tpu.vector_store %arg9[%c14_107, %c0_108], %173 {strides = array<i32>} : memref<25x384xf32, #tpu.memory_space<vmem>>, vector<1x384xf32>,
    %175 = vector.extract_strided_slice %144 {offsets = [0, 60], sizes = [1, 384], strides = [1, 1]} : vector<1x512xf32> to vector<1x384xf32>
    %c15_109 = arith.constant 15 : index
    %c0_110 = arith.constant 0 : index
    %176 = vector.load %arg9[%c15_109, %c0_110] : memref<25x384xf32, #tpu.memory_space<vmem>>, vector<1x384xf32>
    tpu.vector_store %arg9[%c15_109, %c0_110], %175 {strides = array<i32>} : memref<25x384xf32, #tpu.memory_space<vmem>>, vector<1x384xf32>,
    %177 = vector.extract_strided_slice %144 {offsets = [0, 61], sizes = [1, 384], strides = [1, 1]} : vector<1x512xf32> to vector<1x384xf32>
    %c16_111 = arith.constant 16 : index
    %c0_112 = arith.constant 0 : index
    %178 = vector.load %arg9[%c16_111, %c0_112] : memref<25x384xf32, #tpu.memory_space<vmem>>, vector<1x384xf32>
    tpu.vector_store %arg9[%c16_111, %c0_112], %177 {strides = array<i32>} : memref<25x384xf32, #tpu.memory_space<vmem>>, vector<1x384xf32>,
    %179 = vector.extract_strided_slice %144 {offsets = [0, 62], sizes = [1, 384], strides = [1, 1]} : vector<1x512xf32> to vector<1x384xf32>
    %c17_113 = arith.constant 17 : index
    %c0_114 = arith.constant 0 : index
    %180 = vector.load %arg9[%c17_113, %c0_114] : memref<25x384xf32, #tpu.memory_space<vmem>>, vector<1x384xf32>
    tpu.vector_store %arg9[%c17_113, %c0_114], %179 {strides = array<i32>} : memref<25x384xf32, #tpu.memory_space<vmem>>, vector<1x384xf32>,
    %181 = vector.extract_strided_slice %144 {offsets = [0, 63], sizes = [1, 384], strides = [1, 1]} : vector<1x512xf32> to vector<1x384xf32>
    %c18_115 = arith.constant 18 : index
    %c0_116 = arith.constant 0 : index
    %182 = vector.load %arg9[%c18_115, %c0_116] : memref<25x384xf32, #tpu.memory_space<vmem>>, vector<1x384xf32>
    tpu.vector_store %arg9[%c18_115, %c0_116], %181 {strides = array<i32>} : memref<25x384xf32, #tpu.memory_space<vmem>>, vector<1x384xf32>,
    %183 = vector.extract_strided_slice %144 {offsets = [0, 64], sizes = [1, 384], strides = [1, 1]} : vector<1x512xf32> to vector<1x384xf32>
    %c19_117 = arith.constant 19 : index
    %c0_118 = arith.constant 0 : index
    %184 = vector.load %arg9[%c19_117, %c0_118] : memref<25x384xf32, #tpu.memory_space<vmem>>, vector<1x384xf32>
    tpu.vector_store %arg9[%c19_117, %c0_118], %183 {strides = array<i32>} : memref<25x384xf32, #tpu.memory_space<vmem>>, vector<1x384xf32>,
    %185 = vector.extract_strided_slice %144 {offsets = [0, 80], sizes = [1, 384], strides = [1, 1]} : vector<1x512xf32> to vector<1x384xf32>
    %c20_119 = arith.constant 20 : index
    %c0_120 = arith.constant 0 : index
    %186 = vector.load %arg9[%c20_119, %c0_120] : memref<25x384xf32, #tpu.memory_space<vmem>>, vector<1x384xf32>
    tpu.vector_store %arg9[%c20_119, %c0_120], %185 {strides = array<i32>} : memref<25x384xf32, #tpu.memory_space<vmem>>, vector<1x384xf32>,
    %187 = vector.extract_strided_slice %144 {offsets = [0, 81], sizes = [1, 384], strides = [1, 1]} : vector<1x512xf32> to vector<1x384xf32>
    %c21_121 = arith.constant 21 : index
    %c0_122 = arith.constant 0 : index
    %188 = vector.load %arg9[%c21_121, %c0_122] : memref<25x384xf32, #tpu.memory_space<vmem>>, vector<1x384xf32>
    tpu.vector_store %arg9[%c21_121, %c0_122], %187 {strides = array<i32>} : memref<25x384xf32, #tpu.memory_space<vmem>>, vector<1x384xf32>,
    %189 = vector.extract_strided_slice %144 {offsets = [0, 82], sizes = [1, 384], strides = [1, 1]} : vector<1x512xf32> to vector<1x384xf32>
    %c22_123 = arith.constant 22 : index
    %c0_124 = arith.constant 0 : index
    %190 = vector.load %arg9[%c22_123, %c0_124] : memref<25x384xf32, #tpu.memory_space<vmem>>, vector<1x384xf32>
    tpu.vector_store %arg9[%c22_123, %c0_124], %189 {strides = array<i32>} : memref<25x384xf32, #tpu.memory_space<vmem>>, vector<1x384xf32>,
    %191 = vector.extract_strided_slice %144 {offsets = [0, 83], sizes = [1, 384], strides = [1, 1]} : vector<1x512xf32> to vector<1x384xf32>
    %c23_125 = arith.constant 23 : index
    %c0_126 = arith.constant 0 : index
    %192 = vector.load %arg9[%c23_125, %c0_126] : memref<25x384xf32, #tpu.memory_space<vmem>>, vector<1x384xf32>
    tpu.vector_store %arg9[%c23_125, %c0_126], %191 {strides = array<i32>} : memref<25x384xf32, #tpu.memory_space<vmem>>, vector<1x384xf32>,
    %193 = vector.extract_strided_slice %144 {offsets = [0, 84], sizes = [1, 384], strides = [1, 1]} : vector<1x512xf32> to vector<1x384xf32>
    %c24_127 = arith.constant 24 : index
    %c0_128 = arith.constant 0 : index
    %194 = vector.load %arg9[%c24_127, %c0_128] : memref<25x384xf32, #tpu.memory_space<vmem>>, vector<1x384xf32>
    tpu.vector_store %arg9[%c24_127, %c0_128], %193 {strides = array<i32>} : memref<25x384xf32, #tpu.memory_space<vmem>>, vector<1x384xf32>,
    %c0_129 = arith.constant 0 : index
    %c0_130 = arith.constant 0 : index
    %195 = vector.load %arg9[%c0_129, %c0_130] : memref<25x384xf32, #tpu.memory_space<vmem>>, vector<25x384xf32>
    %196 = arith.truncf %195 : vector<25x384xf32> to vector<25x384xbf16>
    %cst_131 = arith.constant dense<0.000000e+00> : vector<20x384xf32>
    %197 = tpu.matmul %1, %196, %cst_131 {dimension_numbers = #tpu.dot_dimension_numbers<[1], [0], [0], [1], [0, 0, 1, 1], [], []>} : vector<20x25xbf16>, vector<25x384xbf16>, vector<20x384xf32> -> vector<20x384xf32>
    %198 = vector.broadcast %2 : vector<20x1xf32> to vector<20x384xf32>
    %199 = arith.addf %197, %198 : vector<20x384xf32>
    %cst_132 = arith.constant 0.000000e+00 : f32
    %200 = vector.broadcast %cst_132 : f32 to vector<20x384xf32>
    %201 = arith.maximumf %199, %200 : vector<20x384xf32>
    %202 = vector.extract_strided_slice %201 {offsets = [0, 0], sizes = [20, 296], strides = [1, 1]} : vector<20x384xf32> to vector<20x296xf32>
    %203 = vector.extract_strided_slice %201 {offsets = [0, 1], sizes = [20, 296], strides = [1, 1]} : vector<20x384xf32> to vector<20x296xf32>
    %204 = arith.maximumf %202, %203 : vector<20x296xf32>
    %205 = vector.extract_strided_slice %201 {offsets = [0, 20], sizes = [20, 296], strides = [1, 1]} : vector<20x384xf32> to vector<20x296xf32>
    %206 = vector.extract_strided_slice %201 {offsets = [0, 21], sizes = [20, 296], strides = [1, 1]} : vector<20x384xf32> to vector<20x296xf32>
    %207 = arith.maximumf %205, %206 : vector<20x296xf32>
    %208 = arith.maximumf %204, %207 : vector<20x296xf32>
    %209 = arith.truncf %208 : vector<20x296xf32> to vector<20x296xbf16>
    %cst_133 = arith.constant dense<0.000000e+00> : vector<20x256xf32>
    %210 = tpu.matmul %209, %3, %cst_133 {dimension_numbers = #tpu.dot_dimension_numbers<[1], [0], [0], [1], [0, 0, 1, 1], [], []>} : vector<20x296xbf16>, vector<296x256xbf16>, vector<20x256xf32> -> vector<20x256xf32>
    %211 = vector.extract_strided_slice %210 {offsets = [0, 0], sizes = [20, 128], strides = [1, 1]} : vector<20x256xf32> to vector<20x128xf32>
    %c0_134 = arith.constant 0 : index
    %c0_135 = arith.constant 0 : index
    %212 = vector.load %arg10[%c0_134, %c0_135] : memref<500x128xf32, #tpu.memory_space<vmem>>, vector<20x128xf32>
    tpu.vector_store %arg10[%c0_134, %c0_135], %211 {strides = array<i32>} : memref<500x128xf32, #tpu.memory_space<vmem>>, vector<20x128xf32>,
    %213 = vector.extract_strided_slice %210 {offsets = [0, 1], sizes = [20, 128], strides = [1, 1]} : vector<20x256xf32> to vector<20x128xf32>
    %c20_136 = arith.constant 20 : index
    %c0_137 = arith.constant 0 : index
    %214 = vector.load %arg10[%c20_136, %c0_137] : memref<500x128xf32, #tpu.memory_space<vmem>>, vector<20x128xf32>
    tpu.vector_store %arg10[%c20_136, %c0_137], %213 {strides = array<i32>} : memref<500x128xf32, #tpu.memory_space<vmem>>, vector<20x128xf32>,
    %215 = vector.extract_strided_slice %210 {offsets = [0, 2], sizes = [20, 128], strides = [1, 1]} : vector<20x256xf32> to vector<20x128xf32>
    %c40_138 = arith.constant 40 : index
    %c0_139 = arith.constant 0 : index
    %216 = vector.load %arg10[%c40_138, %c0_139] : memref<500x128xf32, #tpu.memory_space<vmem>>, vector<20x128xf32>
    tpu.vector_store %arg10[%c40_138, %c0_139], %215 {strides = array<i32>} : memref<500x128xf32, #tpu.memory_space<vmem>>, vector<20x128xf32>,
    %217 = vector.extract_strided_slice %210 {offsets = [0, 3], sizes = [20, 128], strides = [1, 1]} : vector<20x256xf32> to vector<20x128xf32>
    %c60_140 = arith.constant 60 : index
    %c0_141 = arith.constant 0 : index
    %218 = vector.load %arg10[%c60_140, %c0_141] : memref<500x128xf32, #tpu.memory_space<vmem>>, vector<20x128xf32>
    tpu.vector_store %arg10[%c60_140, %c0_141], %217 {strides = array<i32>} : memref<500x128xf32, #tpu.memory_space<vmem>>, vector<20x128xf32>,
    %219 = vector.extract_strided_slice %210 {offsets = [0, 4], sizes = [20, 128], strides = [1, 1]} : vector<20x256xf32> to vector<20x128xf32>
    %c80_142 = arith.constant 80 : index
    %c0_143 = arith.constant 0 : index
    %220 = vector.load %arg10[%c80_142, %c0_143] : memref<500x128xf32, #tpu.memory_space<vmem>>, vector<20x128xf32>
    tpu.vector_store %arg10[%c80_142, %c0_143], %219 {strides = array<i32>} : memref<500x128xf32, #tpu.memory_space<vmem>>, vector<20x128xf32>,
    %221 = vector.extract_strided_slice %210 {offsets = [0, 12], sizes = [20, 128], strides = [1, 1]} : vector<20x256xf32> to vector<20x128xf32>
    %c100_144 = arith.constant 100 : index
    %c0_145 = arith.constant 0 : index
    %222 = vector.load %arg10[%c100_144, %c0_145] : memref<500x128xf32, #tpu.memory_space<vmem>>, vector<20x128xf32>
    tpu.vector_store %arg10[%c100_144, %c0_145], %221 {strides = array<i32>} : memref<500x128xf32, #tpu.memory_space<vmem>>, vector<20x128xf32>,
    %223 = vector.extract_strided_slice %210 {offsets = [0, 13], sizes = [20, 128], strides = [1, 1]} : vector<20x256xf32> to vector<20x128xf32>
    %c120_146 = arith.constant 120 : index
    %c0_147 = arith.constant 0 : index
    %224 = vector.load %arg10[%c120_146, %c0_147] : memref<500x128xf32, #tpu.memory_space<vmem>>, vector<20x128xf32>
    tpu.vector_store %arg10[%c120_146, %c0_147], %223 {strides = array<i32>} : memref<500x128xf32, #tpu.memory_space<vmem>>, vector<20x128xf32>,
    %225 = vector.extract_strided_slice %210 {offsets = [0, 14], sizes = [20, 128], strides = [1, 1]} : vector<20x256xf32> to vector<20x128xf32>
    %c140_148 = arith.constant 140 : index
    %c0_149 = arith.constant 0 : index
    %226 = vector.load %arg10[%c140_148, %c0_149] : memref<500x128xf32, #tpu.memory_space<vmem>>, vector<20x128xf32>
    tpu.vector_store %arg10[%c140_148, %c0_149], %225 {strides = array<i32>} : memref<500x128xf32, #tpu.memory_space<vmem>>, vector<20x128xf32>,
    %227 = vector.extract_strided_slice %210 {offsets = [0, 15], sizes = [20, 128], strides = [1, 1]} : vector<20x256xf32> to vector<20x128xf32>
    %c160_150 = arith.constant 160 : index
    %c0_151 = arith.constant 0 : index
    %228 = vector.load %arg10[%c160_150, %c0_151] : memref<500x128xf32, #tpu.memory_space<vmem>>, vector<20x128xf32>
    tpu.vector_store %arg10[%c160_150, %c0_151], %227 {strides = array<i32>} : memref<500x128xf32, #tpu.memory_space<vmem>>, vector<20x128xf32>,
    %229 = vector.extract_strided_slice %210 {offsets = [0, 16], sizes = [20, 128], strides = [1, 1]} : vector<20x256xf32> to vector<20x128xf32>
    %c180_152 = arith.constant 180 : index
    %c0_153 = arith.constant 0 : index
    %230 = vector.load %arg10[%c180_152, %c0_153] : memref<500x128xf32, #tpu.memory_space<vmem>>, vector<20x128xf32>
    tpu.vector_store %arg10[%c180_152, %c0_153], %229 {strides = array<i32>} : memref<500x128xf32, #tpu.memory_space<vmem>>, vector<20x128xf32>,
    %231 = vector.extract_strided_slice %210 {offsets = [0, 24], sizes = [20, 128], strides = [1, 1]} : vector<20x256xf32> to vector<20x128xf32>
    %c200_154 = arith.constant 200 : index
    %c0_155 = arith.constant 0 : index
    %232 = vector.load %arg10[%c200_154, %c0_155] : memref<500x128xf32, #tpu.memory_space<vmem>>, vector<20x128xf32>
    tpu.vector_store %arg10[%c200_154, %c0_155], %231 {strides = array<i32>} : memref<500x128xf32, #tpu.memory_space<vmem>>, vector<20x128xf32>,
    %233 = vector.extract_strided_slice %210 {offsets = [0, 25], sizes = [20, 128], strides = [1, 1]} : vector<20x256xf32> to vector<20x128xf32>
    %c220_156 = arith.constant 220 : index
    %c0_157 = arith.constant 0 : index
    %234 = vector.load %arg10[%c220_156, %c0_157] : memref<500x128xf32, #tpu.memory_space<vmem>>, vector<20x128xf32>
    tpu.vector_store %arg10[%c220_156, %c0_157], %233 {strides = array<i32>} : memref<500x128xf32, #tpu.memory_space<vmem>>, vector<20x128xf32>,
    %235 = vector.extract_strided_slice %210 {offsets = [0, 26], sizes = [20, 128], strides = [1, 1]} : vector<20x256xf32> to vector<20x128xf32>
    %c240_158 = arith.constant 240 : index
    %c0_159 = arith.constant 0 : index
    %236 = vector.load %arg10[%c240_158, %c0_159] : memref<500x128xf32, #tpu.memory_space<vmem>>, vector<20x128xf32>
    tpu.vector_store %arg10[%c240_158, %c0_159], %235 {strides = array<i32>} : memref<500x128xf32, #tpu.memory_space<vmem>>, vector<20x128xf32>,
    %237 = vector.extract_strided_slice %210 {offsets = [0, 27], sizes = [20, 128], strides = [1, 1]} : vector<20x256xf32> to vector<20x128xf32>
    %c260_160 = arith.constant 260 : index
    %c0_161 = arith.constant 0 : index
    %238 = vector.load %arg10[%c260_160, %c0_161] : memref<500x128xf32, #tpu.memory_space<vmem>>, vector<20x128xf32>
    tpu.vector_store %arg10[%c260_160, %c0_161], %237 {strides = array<i32>} : memref<500x128xf32, #tpu.memory_space<vmem>>, vector<20x128xf32>,
    %239 = vector.extract_strided_slice %210 {offsets = [0, 28], sizes = [20, 128], strides = [1, 1]} : vector<20x256xf32> to vector<20x128xf32>
    %c280_162 = arith.constant 280 : index
    %c0_163 = arith.constant 0 : index
    %240 = vector.load %arg10[%c280_162, %c0_163] : memref<500x128xf32, #tpu.memory_space<vmem>>, vector<20x128xf32>
    tpu.vector_store %arg10[%c280_162, %c0_163], %239 {strides = array<i32>} : memref<500x128xf32, #tpu.memory_space<vmem>>, vector<20x128xf32>,
    %241 = vector.extract_strided_slice %210 {offsets = [0, 36], sizes = [20, 128], strides = [1, 1]} : vector<20x256xf32> to vector<20x128xf32>
    %c300_164 = arith.constant 300 : index
    %c0_165 = arith.constant 0 : index
    %242 = vector.load %arg10[%c300_164, %c0_165] : memref<500x128xf32, #tpu.memory_space<vmem>>, vector<20x128xf32>
    tpu.vector_store %arg10[%c300_164, %c0_165], %241 {strides = array<i32>} : memref<500x128xf32, #tpu.memory_space<vmem>>, vector<20x128xf32>,
    %243 = vector.extract_strided_slice %210 {offsets = [0, 37], sizes = [20, 128], strides = [1, 1]} : vector<20x256xf32> to vector<20x128xf32>
    %c320_166 = arith.constant 320 : index
    %c0_167 = arith.constant 0 : index
    %244 = vector.load %arg10[%c320_166, %c0_167] : memref<500x128xf32, #tpu.memory_space<vmem>>, vector<20x128xf32>
    tpu.vector_store %arg10[%c320_166, %c0_167], %243 {strides = array<i32>} : memref<500x128xf32, #tpu.memory_space<vmem>>, vector<20x128xf32>,
    %245 = vector.extract_strided_slice %210 {offsets = [0, 38], sizes = [20, 128], strides = [1, 1]} : vector<20x256xf32> to vector<20x128xf32>
    %c340_168 = arith.constant 340 : index
    %c0_169 = arith.constant 0 : index
    %246 = vector.load %arg10[%c340_168, %c0_169] : memref<500x128xf32, #tpu.memory_space<vmem>>, vector<20x128xf32>
    tpu.vector_store %arg10[%c340_168, %c0_169], %245 {strides = array<i32>} : memref<500x128xf32, #tpu.memory_space<vmem>>, vector<20x128xf32>,
    %247 = vector.extract_strided_slice %210 {offsets = [0, 39], sizes = [20, 128], strides = [1, 1]} : vector<20x256xf32> to vector<20x128xf32>
    %c360_170 = arith.constant 360 : index
    %c0_171 = arith.constant 0 : index
    %248 = vector.load %arg10[%c360_170, %c0_171] : memref<500x128xf32, #tpu.memory_space<vmem>>, vector<20x128xf32>
    tpu.vector_store %arg10[%c360_170, %c0_171], %247 {strides = array<i32>} : memref<500x128xf32, #tpu.memory_space<vmem>>, vector<20x128xf32>,
    %249 = vector.extract_strided_slice %210 {offsets = [0, 40], sizes = [20, 128], strides = [1, 1]} : vector<20x256xf32> to vector<20x128xf32>
    %c380_172 = arith.constant 380 : index
    %c0_173 = arith.constant 0 : index
    %250 = vector.load %arg10[%c380_172, %c0_173] : memref<500x128xf32, #tpu.memory_space<vmem>>, vector<20x128xf32>
    tpu.vector_store %arg10[%c380_172, %c0_173], %249 {strides = array<i32>} : memref<500x128xf32, #tpu.memory_space<vmem>>, vector<20x128xf32>,
    %251 = vector.extract_strided_slice %210 {offsets = [0, 48], sizes = [20, 128], strides = [1, 1]} : vector<20x256xf32> to vector<20x128xf32>
    %c400_174 = arith.constant 400 : index
    %c0_175 = arith.constant 0 : index
    %252 = vector.load %arg10[%c400_174, %c0_175] : memref<500x128xf32, #tpu.memory_space<vmem>>, vector<20x128xf32>
    tpu.vector_store %arg10[%c400_174, %c0_175], %251 {strides = array<i32>} : memref<500x128xf32, #tpu.memory_space<vmem>>, vector<20x128xf32>,
    %253 = vector.extract_strided_slice %210 {offsets = [0, 49], sizes = [20, 128], strides = [1, 1]} : vector<20x256xf32> to vector<20x128xf32>
    %c420_176 = arith.constant 420 : index
    %c0_177 = arith.constant 0 : index
    %254 = vector.load %arg10[%c420_176, %c0_177] : memref<500x128xf32, #tpu.memory_space<vmem>>, vector<20x128xf32>
    tpu.vector_store %arg10[%c420_176, %c0_177], %253 {strides = array<i32>} : memref<500x128xf32, #tpu.memory_space<vmem>>, vector<20x128xf32>,
    %255 = vector.extract_strided_slice %210 {offsets = [0, 50], sizes = [20, 128], strides = [1, 1]} : vector<20x256xf32> to vector<20x128xf32>
    %c440_178 = arith.constant 440 : index
    %c0_179 = arith.constant 0 : index
    %256 = vector.load %arg10[%c440_178, %c0_179] : memref<500x128xf32, #tpu.memory_space<vmem>>, vector<20x128xf32>
    tpu.vector_store %arg10[%c440_178, %c0_179], %255 {strides = array<i32>} : memref<500x128xf32, #tpu.memory_space<vmem>>, vector<20x128xf32>,
    %257 = vector.extract_strided_slice %210 {offsets = [0, 51], sizes = [20, 128], strides = [1, 1]} : vector<20x256xf32> to vector<20x128xf32>
    %c460_180 = arith.constant 460 : index
    %c0_181 = arith.constant 0 : index
    %258 = vector.load %arg10[%c460_180, %c0_181] : memref<500x128xf32, #tpu.memory_space<vmem>>, vector<20x128xf32>
    tpu.vector_store %arg10[%c460_180, %c0_181], %257 {strides = array<i32>} : memref<500x128xf32, #tpu.memory_space<vmem>>, vector<20x128xf32>,
    %259 = vector.extract_strided_slice %210 {offsets = [0, 52], sizes = [20, 128], strides = [1, 1]} : vector<20x256xf32> to vector<20x128xf32>
    %c480_182 = arith.constant 480 : index
    %c0_183 = arith.constant 0 : index
    %260 = vector.load %arg10[%c480_182, %c0_183] : memref<500x128xf32, #tpu.memory_space<vmem>>, vector<20x128xf32>
    tpu.vector_store %arg10[%c480_182, %c0_183], %259 {strides = array<i32>} : memref<500x128xf32, #tpu.memory_space<vmem>>, vector<20x128xf32>,
    %c0_184 = arith.constant 0 : index
    %c0_185 = arith.constant 0 : index
    %261 = vector.load %arg10[%c0_184, %c0_185] : memref<500x128xf32, #tpu.memory_space<vmem>>, vector<500x128xf32>
    %262 = arith.truncf %261 : vector<500x128xf32> to vector<500x128xbf16>
    %cst_186 = arith.constant dense<0.000000e+00> : vector<50x128xf32>
    %263 = tpu.matmul %4, %262, %cst_186 {dimension_numbers = #tpu.dot_dimension_numbers<[1], [0], [0], [1], [0, 0, 1, 1], [], []>} : vector<50x500xbf16>, vector<500x128xbf16>, vector<50x128xf32> -> vector<50x128xf32>
    %264 = vector.broadcast %5 : vector<50x1xf32> to vector<50x128xf32>
    %265 = arith.addf %263, %264 : vector<50x128xf32>
    %cst_187 = arith.constant 0.000000e+00 : f32
    %266 = vector.broadcast %cst_187 : f32 to vector<50x128xf32>
    %267 = arith.maximumf %265, %266 : vector<50x128xf32>
    %268 = vector.extract_strided_slice %267 {offsets = [0, 0], sizes = [50, 80], strides = [1, 1]} : vector<50x128xf32> to vector<50x80xf32>
    %269 = vector.extract_strided_slice %267 {offsets = [0, 1], sizes = [50, 80], strides = [1, 1]} : vector<50x128xf32> to vector<50x80xf32>
    %270 = arith.maximumf %268, %269 : vector<50x80xf32>
    %271 = vector.extract_strided_slice %267 {offsets = [0, 12], sizes = [50, 80], strides = [1, 1]} : vector<50x128xf32> to vector<50x80xf32>
    %272 = vector.extract_strided_slice %267 {offsets = [0, 13], sizes = [50, 80], strides = [1, 1]} : vector<50x128xf32> to vector<50x80xf32>
    %273 = arith.maximumf %271, %272 : vector<50x80xf32>
    %274 = arith.maximumf %270, %273 : vector<50x80xf32>
    %cst_188 = arith.constant dense<0.000000e+00> : vector<50x16xf32>
    %275 = tpu.matmul %274, %6, %cst_188 {dimension_numbers = #tpu.dot_dimension_numbers<[1], [0], [0], [1], [0, 0, 1, 1], [], []>} : vector<50x80xf32>, vector<80x16xf32>, vector<50x16xf32> -> vector<50x16xf32>
    %c1_189 = arith.constant 1 : index
    %c0_190 = arith.constant 0 : index
    %c0_191 = arith.constant 0 : index
    %276 = vector.load %arg8[%c1_189, %c0_190, %c0_191] : memref<4x50x16xf32, #tpu.memory_space<vmem>>, vector<1x50x16xf32>
    %277 = vector.shape_cast %276 : vector<1x50x16xf32> to vector<50x16xf32>
    %278 = vector.shape_cast %275 : vector<50x16xf32> to vector<1x50x16xf32>
    tpu.vector_store %arg8[%c1_189, %c0_190, %c0_191], %278 {strides = array<i32>} : memref<4x50x16xf32, #tpu.memory_space<vmem>>, vector<1x50x16xf32>,
    %279 = vector.extract_strided_slice %0 {offsets = [2, 0, 0], sizes = [1, 1, 512], strides = [1, 1, 1]} : vector<4x1x512xf32> to vector<1x1x512xf32>
    %280 = vector.shape_cast %279 : vector<1x1x512xf32> to vector<1x512xf32>
    %281 = vector.extract_strided_slice %280 {offsets = [0, 0], sizes = [1, 384], strides = [1, 1]} : vector<1x512xf32> to vector<1x384xf32>
    %c0_192 = arith.constant 0 : index
    %c0_193 = arith.constant 0 : index
    %282 = vector.load %arg9[%c0_192, %c0_193] : memref<25x384xf32, #tpu.memory_space<vmem>>, vector<1x384xf32>
    tpu.vector_store %arg9[%c0_192, %c0_193], %281 {strides = array<i32>} : memref<25x384xf32, #tpu.memory_space<vmem>>, vector<1x384xf32>,
    %283 = vector.extract_strided_slice %280 {offsets = [0, 1], sizes = [1, 384], strides = [1, 1]} : vector<1x512xf32> to vector<1x384xf32>
    %c1_194 = arith.constant 1 : index
    %c0_195 = arith.constant 0 : index
    %284 = vector.load %arg9[%c1_194, %c0_195] : memref<25x384xf32, #tpu.memory_space<vmem>>, vector<1x384xf32>
    tpu.vector_store %arg9[%c1_194, %c0_195], %283 {strides = array<i32>} : memref<25x384xf32, #tpu.memory_space<vmem>>, vector<1x384xf32>,
    %285 = vector.extract_strided_slice %280 {offsets = [0, 2], sizes = [1, 384], strides = [1, 1]} : vector<1x512xf32> to vector<1x384xf32>
    %c2_196 = arith.constant 2 : index
    %c0_197 = arith.constant 0 : index
    %286 = vector.load %arg9[%c2_196, %c0_197] : memref<25x384xf32, #tpu.memory_space<vmem>>, vector<1x384xf32>
    tpu.vector_store %arg9[%c2_196, %c0_197], %285 {strides = array<i32>} : memref<25x384xf32, #tpu.memory_space<vmem>>, vector<1x384xf32>,
    %287 = vector.extract_strided_slice %280 {offsets = [0, 3], sizes = [1, 384], strides = [1, 1]} : vector<1x512xf32> to vector<1x384xf32>
    %c3_198 = arith.constant 3 : index
    %c0_199 = arith.constant 0 : index
    %288 = vector.load %arg9[%c3_198, %c0_199] : memref<25x384xf32, #tpu.memory_space<vmem>>, vector<1x384xf32>
    tpu.vector_store %arg9[%c3_198, %c0_199], %287 {strides = array<i32>} : memref<25x384xf32, #tpu.memory_space<vmem>>, vector<1x384xf32>,
    %289 = vector.extract_strided_slice %280 {offsets = [0, 4], sizes = [1, 384], strides = [1, 1]} : vector<1x512xf32> to vector<1x384xf32>
    %c4_200 = arith.constant 4 : index
    %c0_201 = arith.constant 0 : index
    %290 = vector.load %arg9[%c4_200, %c0_201] : memref<25x384xf32, #tpu.memory_space<vmem>>, vector<1x384xf32>
    tpu.vector_store %arg9[%c4_200, %c0_201], %289 {strides = array<i32>} : memref<25x384xf32, #tpu.memory_space<vmem>>, vector<1x384xf32>,
    %291 = vector.extract_strided_slice %280 {offsets = [0, 20], sizes = [1, 384], strides = [1, 1]} : vector<1x512xf32> to vector<1x384xf32>
    %c5_202 = arith.constant 5 : index
    %c0_203 = arith.constant 0 : index
    %292 = vector.load %arg9[%c5_202, %c0_203] : memref<25x384xf32, #tpu.memory_space<vmem>>, vector<1x384xf32>
    tpu.vector_store %arg9[%c5_202, %c0_203], %291 {strides = array<i32>} : memref<25x384xf32, #tpu.memory_space<vmem>>, vector<1x384xf32>,
    %293 = vector.extract_strided_slice %280 {offsets = [0, 21], sizes = [1, 384], strides = [1, 1]} : vector<1x512xf32> to vector<1x384xf32>
    %c6_204 = arith.constant 6 : index
    %c0_205 = arith.constant 0 : index
    %294 = vector.load %arg9[%c6_204, %c0_205] : memref<25x384xf32, #tpu.memory_space<vmem>>, vector<1x384xf32>
    tpu.vector_store %arg9[%c6_204, %c0_205], %293 {strides = array<i32>} : memref<25x384xf32, #tpu.memory_space<vmem>>, vector<1x384xf32>,
    %295 = vector.extract_strided_slice %280 {offsets = [0, 22], sizes = [1, 384], strides = [1, 1]} : vector<1x512xf32> to vector<1x384xf32>
    %c7_206 = arith.constant 7 : index
    %c0_207 = arith.constant 0 : index
    %296 = vector.load %arg9[%c7_206, %c0_207] : memref<25x384xf32, #tpu.memory_space<vmem>>, vector<1x384xf32>
    tpu.vector_store %arg9[%c7_206, %c0_207], %295 {strides = array<i32>} : memref<25x384xf32, #tpu.memory_space<vmem>>, vector<1x384xf32>,
    %297 = vector.extract_strided_slice %280 {offsets = [0, 23], sizes = [1, 384], strides = [1, 1]} : vector<1x512xf32> to vector<1x384xf32>
    %c8_208 = arith.constant 8 : index
    %c0_209 = arith.constant 0 : index
    %298 = vector.load %arg9[%c8_208, %c0_209] : memref<25x384xf32, #tpu.memory_space<vmem>>, vector<1x384xf32>
    tpu.vector_store %arg9[%c8_208, %c0_209], %297 {strides = array<i32>} : memref<25x384xf32, #tpu.memory_space<vmem>>, vector<1x384xf32>,
    %299 = vector.extract_strided_slice %280 {offsets = [0, 24], sizes = [1, 384], strides = [1, 1]} : vector<1x512xf32> to vector<1x384xf32>
    %c9_210 = arith.constant 9 : index
    %c0_211 = arith.constant 0 : index
    %300 = vector.load %arg9[%c9_210, %c0_211] : memref<25x384xf32, #tpu.memory_space<vmem>>, vector<1x384xf32>
    tpu.vector_store %arg9[%c9_210, %c0_211], %299 {strides = array<i32>} : memref<25x384xf32, #tpu.memory_space<vmem>>, vector<1x384xf32>,
    %301 = vector.extract_strided_slice %280 {offsets = [0, 40], sizes = [1, 384], strides = [1, 1]} : vector<1x512xf32> to vector<1x384xf32>
    %c10_212 = arith.constant 10 : index
    %c0_213 = arith.constant 0 : index
    %302 = vector.load %arg9[%c10_212, %c0_213] : memref<25x384xf32, #tpu.memory_space<vmem>>, vector<1x384xf32>
    tpu.vector_store %arg9[%c10_212, %c0_213], %301 {strides = array<i32>} : memref<25x384xf32, #tpu.memory_space<vmem>>, vector<1x384xf32>,
    %303 = vector.extract_strided_slice %280 {offsets = [0, 41], sizes = [1, 384], strides = [1, 1]} : vector<1x512xf32> to vector<1x384xf32>
    %c11_214 = arith.constant 11 : index
    %c0_215 = arith.constant 0 : index
    %304 = vector.load %arg9[%c11_214, %c0_215] : memref<25x384xf32, #tpu.memory_space<vmem>>, vector<1x384xf32>
    tpu.vector_store %arg9[%c11_214, %c0_215], %303 {strides = array<i32>} : memref<25x384xf32, #tpu.memory_space<vmem>>, vector<1x384xf32>,
    %305 = vector.extract_strided_slice %280 {offsets = [0, 42], sizes = [1, 384], strides = [1, 1]} : vector<1x512xf32> to vector<1x384xf32>
    %c12_216 = arith.constant 12 : index
    %c0_217 = arith.constant 0 : index
    %306 = vector.load %arg9[%c12_216, %c0_217] : memref<25x384xf32, #tpu.memory_space<vmem>>, vector<1x384xf32>
    tpu.vector_store %arg9[%c12_216, %c0_217], %305 {strides = array<i32>} : memref<25x384xf32, #tpu.memory_space<vmem>>, vector<1x384xf32>,
    %307 = vector.extract_strided_slice %280 {offsets = [0, 43], sizes = [1, 384], strides = [1, 1]} : vector<1x512xf32> to vector<1x384xf32>
    %c13_218 = arith.constant 13 : index
    %c0_219 = arith.constant 0 : index
    %308 = vector.load %arg9[%c13_218, %c0_219] : memref<25x384xf32, #tpu.memory_space<vmem>>, vector<1x384xf32>
    tpu.vector_store %arg9[%c13_218, %c0_219], %307 {strides = array<i32>} : memref<25x384xf32, #tpu.memory_space<vmem>>, vector<1x384xf32>,
    %309 = vector.extract_strided_slice %280 {offsets = [0, 44], sizes = [1, 384], strides = [1, 1]} : vector<1x512xf32> to vector<1x384xf32>
    %c14_220 = arith.constant 14 : index
    %c0_221 = arith.constant 0 : index
    %310 = vector.load %arg9[%c14_220, %c0_221] : memref<25x384xf32, #tpu.memory_space<vmem>>, vector<1x384xf32>
    tpu.vector_store %arg9[%c14_220, %c0_221], %309 {strides = array<i32>} : memref<25x384xf32, #tpu.memory_space<vmem>>, vector<1x384xf32>,
    %311 = vector.extract_strided_slice %280 {offsets = [0, 60], sizes = [1, 384], strides = [1, 1]} : vector<1x512xf32> to vector<1x384xf32>
    %c15_222 = arith.constant 15 : index
    %c0_223 = arith.constant 0 : index
    %312 = vector.load %arg9[%c15_222, %c0_223] : memref<25x384xf32, #tpu.memory_space<vmem>>, vector<1x384xf32>
    tpu.vector_store %arg9[%c15_222, %c0_223], %311 {strides = array<i32>} : memref<25x384xf32, #tpu.memory_space<vmem>>, vector<1x384xf32>,
    %313 = vector.extract_strided_slice %280 {offsets = [0, 61], sizes = [1, 384], strides = [1, 1]} : vector<1x512xf32> to vector<1x384xf32>
    %c16_224 = arith.constant 16 : index
    %c0_225 = arith.constant 0 : index
    %314 = vector.load %arg9[%c16_224, %c0_225] : memref<25x384xf32, #tpu.memory_space<vmem>>, vector<1x384xf32>
    tpu.vector_store %arg9[%c16_224, %c0_225], %313 {strides = array<i32>} : memref<25x384xf32, #tpu.memory_space<vmem>>, vector<1x384xf32>,
    %315 = vector.extract_strided_slice %280 {offsets = [0, 62], sizes = [1, 384], strides = [1, 1]} : vector<1x512xf32> to vector<1x384xf32>
    %c17_226 = arith.constant 17 : index
    %c0_227 = arith.constant 0 : index
    %316 = vector.load %arg9[%c17_226, %c0_227] : memref<25x384xf32, #tpu.memory_space<vmem>>, vector<1x384xf32>
    tpu.vector_store %arg9[%c17_226, %c0_227], %315 {strides = array<i32>} : memref<25x384xf32, #tpu.memory_space<vmem>>, vector<1x384xf32>,
    %317 = vector.extract_strided_slice %280 {offsets = [0, 63], sizes = [1, 384], strides = [1, 1]} : vector<1x512xf32> to vector<1x384xf32>
    %c18_228 = arith.constant 18 : index
    %c0_229 = arith.constant 0 : index
    %318 = vector.load %arg9[%c18_228, %c0_229] : memref<25x384xf32, #tpu.memory_space<vmem>>, vector<1x384xf32>
    tpu.vector_store %arg9[%c18_228, %c0_229], %317 {strides = array<i32>} : memref<25x384xf32, #tpu.memory_space<vmem>>, vector<1x384xf32>,
    %319 = vector.extract_strided_slice %280 {offsets = [0, 64], sizes = [1, 384], strides = [1, 1]} : vector<1x512xf32> to vector<1x384xf32>
    %c19_230 = arith.constant 19 : index
    %c0_231 = arith.constant 0 : index
    %320 = vector.load %arg9[%c19_230, %c0_231] : memref<25x384xf32, #tpu.memory_space<vmem>>, vector<1x384xf32>
    tpu.vector_store %arg9[%c19_230, %c0_231], %319 {strides = array<i32>} : memref<25x384xf32, #tpu.memory_space<vmem>>, vector<1x384xf32>,
    %321 = vector.extract_strided_slice %280 {offsets = [0, 80], sizes = [1, 384], strides = [1, 1]} : vector<1x512xf32> to vector<1x384xf32>
    %c20_232 = arith.constant 20 : index
    %c0_233 = arith.constant 0 : index
    %322 = vector.load %arg9[%c20_232, %c0_233] : memref<25x384xf32, #tpu.memory_space<vmem>>, vector<1x384xf32>
    tpu.vector_store %arg9[%c20_232, %c0_233], %321 {strides = array<i32>} : memref<25x384xf32, #tpu.memory_space<vmem>>, vector<1x384xf32>,
    %323 = vector.extract_strided_slice %280 {offsets = [0, 81], sizes = [1, 384], strides = [1, 1]} : vector<1x512xf32> to vector<1x384xf32>
    %c21_234 = arith.constant 21 : index
    %c0_235 = arith.constant 0 : index
    %324 = vector.load %arg9[%c21_234, %c0_235] : memref<25x384xf32, #tpu.memory_space<vmem>>, vector<1x384xf32>
    tpu.vector_store %arg9[%c21_234, %c0_235], %323 {strides = array<i32>} : memref<25x384xf32, #tpu.memory_space<vmem>>, vector<1x384xf32>,
    %325 = vector.extract_strided_slice %280 {offsets = [0, 82], sizes = [1, 384], strides = [1, 1]} : vector<1x512xf32> to vector<1x384xf32>
    %c22_236 = arith.constant 22 : index
    %c0_237 = arith.constant 0 : index
    %326 = vector.load %arg9[%c22_236, %c0_237] : memref<25x384xf32, #tpu.memory_space<vmem>>, vector<1x384xf32>
    tpu.vector_store %arg9[%c22_236, %c0_237], %325 {strides = array<i32>} : memref<25x384xf32, #tpu.memory_space<vmem>>, vector<1x384xf32>,
    %327 = vector.extract_strided_slice %280 {offsets = [0, 83], sizes = [1, 384], strides = [1, 1]} : vector<1x512xf32> to vector<1x384xf32>
    %c23_238 = arith.constant 23 : index
    %c0_239 = arith.constant 0 : index
    %328 = vector.load %arg9[%c23_238, %c0_239] : memref<25x384xf32, #tpu.memory_space<vmem>>, vector<1x384xf32>
    tpu.vector_store %arg9[%c23_238, %c0_239], %327 {strides = array<i32>} : memref<25x384xf32, #tpu.memory_space<vmem>>, vector<1x384xf32>,
    %329 = vector.extract_strided_slice %280 {offsets = [0, 84], sizes = [1, 384], strides = [1, 1]} : vector<1x512xf32> to vector<1x384xf32>
    %c24_240 = arith.constant 24 : index
    %c0_241 = arith.constant 0 : index
    %330 = vector.load %arg9[%c24_240, %c0_241] : memref<25x384xf32, #tpu.memory_space<vmem>>, vector<1x384xf32>
    tpu.vector_store %arg9[%c24_240, %c0_241], %329 {strides = array<i32>} : memref<25x384xf32, #tpu.memory_space<vmem>>, vector<1x384xf32>,
    %c0_242 = arith.constant 0 : index
    %c0_243 = arith.constant 0 : index
    %331 = vector.load %arg9[%c0_242, %c0_243] : memref<25x384xf32, #tpu.memory_space<vmem>>, vector<25x384xf32>
    %332 = arith.truncf %331 : vector<25x384xf32> to vector<25x384xbf16>
    %cst_244 = arith.constant dense<0.000000e+00> : vector<20x384xf32>
    %333 = tpu.matmul %1, %332, %cst_244 {dimension_numbers = #tpu.dot_dimension_numbers<[1], [0], [0], [1], [0, 0, 1, 1], [], []>} : vector<20x25xbf16>, vector<25x384xbf16>, vector<20x384xf32> -> vector<20x384xf32>
    %334 = vector.broadcast %2 : vector<20x1xf32> to vector<20x384xf32>
    %335 = arith.addf %333, %334 : vector<20x384xf32>
    %cst_245 = arith.constant 0.000000e+00 : f32
    %336 = vector.broadcast %cst_245 : f32 to vector<20x384xf32>
    %337 = arith.maximumf %335, %336 : vector<20x384xf32>
    %338 = vector.extract_strided_slice %337 {offsets = [0, 0], sizes = [20, 296], strides = [1, 1]} : vector<20x384xf32> to vector<20x296xf32>
    %339 = vector.extract_strided_slice %337 {offsets = [0, 1], sizes = [20, 296], strides = [1, 1]} : vector<20x384xf32> to vector<20x296xf32>
    %340 = arith.maximumf %338, %339 : vector<20x296xf32>
    %341 = vector.extract_strided_slice %337 {offsets = [0, 20], sizes = [20, 296], strides = [1, 1]} : vector<20x384xf32> to vector<20x296xf32>
    %342 = vector.extract_strided_slice %337 {offsets = [0, 21], sizes = [20, 296], strides = [1, 1]} : vector<20x384xf32> to vector<20x296xf32>
    %343 = arith.maximumf %341, %342 : vector<20x296xf32>
    %344 = arith.maximumf %340, %343 : vector<20x296xf32>
    %345 = arith.truncf %344 : vector<20x296xf32> to vector<20x296xbf16>
    %cst_246 = arith.constant dense<0.000000e+00> : vector<20x256xf32>
    %346 = tpu.matmul %345, %3, %cst_246 {dimension_numbers = #tpu.dot_dimension_numbers<[1], [0], [0], [1], [0, 0, 1, 1], [], []>} : vector<20x296xbf16>, vector<296x256xbf16>, vector<20x256xf32> -> vector<20x256xf32>
    %347 = vector.extract_strided_slice %346 {offsets = [0, 0], sizes = [20, 128], strides = [1, 1]} : vector<20x256xf32> to vector<20x128xf32>
    %c0_247 = arith.constant 0 : index
    %c0_248 = arith.constant 0 : index
    %348 = vector.load %arg10[%c0_247, %c0_248] : memref<500x128xf32, #tpu.memory_space<vmem>>, vector<20x128xf32>
    tpu.vector_store %arg10[%c0_247, %c0_248], %347 {strides = array<i32>} : memref<500x128xf32, #tpu.memory_space<vmem>>, vector<20x128xf32>,
    %349 = vector.extract_strided_slice %346 {offsets = [0, 1], sizes = [20, 128], strides = [1, 1]} : vector<20x256xf32> to vector<20x128xf32>
    %c20_249 = arith.constant 20 : index
    %c0_250 = arith.constant 0 : index
    %350 = vector.load %arg10[%c20_249, %c0_250] : memref<500x128xf32, #tpu.memory_space<vmem>>, vector<20x128xf32>
    tpu.vector_store %arg10[%c20_249, %c0_250], %349 {strides = array<i32>} : memref<500x128xf32, #tpu.memory_space<vmem>>, vector<20x128xf32>,
    %351 = vector.extract_strided_slice %346 {offsets = [0, 2], sizes = [20, 128], strides = [1, 1]} : vector<20x256xf32> to vector<20x128xf32>
    %c40_251 = arith.constant 40 : index
    %c0_252 = arith.constant 0 : index
    %352 = vector.load %arg10[%c40_251, %c0_252] : memref<500x128xf32, #tpu.memory_space<vmem>>, vector<20x128xf32>
    tpu.vector_store %arg10[%c40_251, %c0_252], %351 {strides = array<i32>} : memref<500x128xf32, #tpu.memory_space<vmem>>, vector<20x128xf32>,
    %353 = vector.extract_strided_slice %346 {offsets = [0, 3], sizes = [20, 128], strides = [1, 1]} : vector<20x256xf32> to vector<20x128xf32>
    %c60_253 = arith.constant 60 : index
    %c0_254 = arith.constant 0 : index
    %354 = vector.load %arg10[%c60_253, %c0_254] : memref<500x128xf32, #tpu.memory_space<vmem>>, vector<20x128xf32>
    tpu.vector_store %arg10[%c60_253, %c0_254], %353 {strides = array<i32>} : memref<500x128xf32, #tpu.memory_space<vmem>>, vector<20x128xf32>,
    %355 = vector.extract_strided_slice %346 {offsets = [0, 4], sizes = [20, 128], strides = [1, 1]} : vector<20x256xf32> to vector<20x128xf32>
    %c80_255 = arith.constant 80 : index
    %c0_256 = arith.constant 0 : index
    %356 = vector.load %arg10[%c80_255, %c0_256] : memref<500x128xf32, #tpu.memory_space<vmem>>, vector<20x128xf32>
    tpu.vector_store %arg10[%c80_255, %c0_256], %355 {strides = array<i32>} : memref<500x128xf32, #tpu.memory_space<vmem>>, vector<20x128xf32>,
    %357 = vector.extract_strided_slice %346 {offsets = [0, 12], sizes = [20, 128], strides = [1, 1]} : vector<20x256xf32> to vector<20x128xf32>
    %c100_257 = arith.constant 100 : index
    %c0_258 = arith.constant 0 : index
    %358 = vector.load %arg10[%c100_257, %c0_258] : memref<500x128xf32, #tpu.memory_space<vmem>>, vector<20x128xf32>
    tpu.vector_store %arg10[%c100_257, %c0_258], %357 {strides = array<i32>} : memref<500x128xf32, #tpu.memory_space<vmem>>, vector<20x128xf32>,
    %359 = vector.extract_strided_slice %346 {offsets = [0, 13], sizes = [20, 128], strides = [1, 1]} : vector<20x256xf32> to vector<20x128xf32>
    %c120_259 = arith.constant 120 : index
    %c0_260 = arith.constant 0 : index
    %360 = vector.load %arg10[%c120_259, %c0_260] : memref<500x128xf32, #tpu.memory_space<vmem>>, vector<20x128xf32>
    tpu.vector_store %arg10[%c120_259, %c0_260], %359 {strides = array<i32>} : memref<500x128xf32, #tpu.memory_space<vmem>>, vector<20x128xf32>,
    %361 = vector.extract_strided_slice %346 {offsets = [0, 14], sizes = [20, 128], strides = [1, 1]} : vector<20x256xf32> to vector<20x128xf32>
    %c140_261 = arith.constant 140 : index
    %c0_262 = arith.constant 0 : index
    %362 = vector.load %arg10[%c140_261, %c0_262] : memref<500x128xf32, #tpu.memory_space<vmem>>, vector<20x128xf32>
    tpu.vector_store %arg10[%c140_261, %c0_262], %361 {strides = array<i32>} : memref<500x128xf32, #tpu.memory_space<vmem>>, vector<20x128xf32>,
    %363 = vector.extract_strided_slice %346 {offsets = [0, 15], sizes = [20, 128], strides = [1, 1]} : vector<20x256xf32> to vector<20x128xf32>
    %c160_263 = arith.constant 160 : index
    %c0_264 = arith.constant 0 : index
    %364 = vector.load %arg10[%c160_263, %c0_264] : memref<500x128xf32, #tpu.memory_space<vmem>>, vector<20x128xf32>
    tpu.vector_store %arg10[%c160_263, %c0_264], %363 {strides = array<i32>} : memref<500x128xf32, #tpu.memory_space<vmem>>, vector<20x128xf32>,
    %365 = vector.extract_strided_slice %346 {offsets = [0, 16], sizes = [20, 128], strides = [1, 1]} : vector<20x256xf32> to vector<20x128xf32>
    %c180_265 = arith.constant 180 : index
    %c0_266 = arith.constant 0 : index
    %366 = vector.load %arg10[%c180_265, %c0_266] : memref<500x128xf32, #tpu.memory_space<vmem>>, vector<20x128xf32>
    tpu.vector_store %arg10[%c180_265, %c0_266], %365 {strides = array<i32>} : memref<500x128xf32, #tpu.memory_space<vmem>>, vector<20x128xf32>,
    %367 = vector.extract_strided_slice %346 {offsets = [0, 24], sizes = [20, 128], strides = [1, 1]} : vector<20x256xf32> to vector<20x128xf32>
    %c200_267 = arith.constant 200 : index
    %c0_268 = arith.constant 0 : index
    %368 = vector.load %arg10[%c200_267, %c0_268] : memref<500x128xf32, #tpu.memory_space<vmem>>, vector<20x128xf32>
    tpu.vector_store %arg10[%c200_267, %c0_268], %367 {strides = array<i32>} : memref<500x128xf32, #tpu.memory_space<vmem>>, vector<20x128xf32>,
    %369 = vector.extract_strided_slice %346 {offsets = [0, 25], sizes = [20, 128], strides = [1, 1]} : vector<20x256xf32> to vector<20x128xf32>
    %c220_269 = arith.constant 220 : index
    %c0_270 = arith.constant 0 : index
    %370 = vector.load %arg10[%c220_269, %c0_270] : memref<500x128xf32, #tpu.memory_space<vmem>>, vector<20x128xf32>
    tpu.vector_store %arg10[%c220_269, %c0_270], %369 {strides = array<i32>} : memref<500x128xf32, #tpu.memory_space<vmem>>, vector<20x128xf32>,
    %371 = vector.extract_strided_slice %346 {offsets = [0, 26], sizes = [20, 128], strides = [1, 1]} : vector<20x256xf32> to vector<20x128xf32>
    %c240_271 = arith.constant 240 : index
    %c0_272 = arith.constant 0 : index
    %372 = vector.load %arg10[%c240_271, %c0_272] : memref<500x128xf32, #tpu.memory_space<vmem>>, vector<20x128xf32>
    tpu.vector_store %arg10[%c240_271, %c0_272], %371 {strides = array<i32>} : memref<500x128xf32, #tpu.memory_space<vmem>>, vector<20x128xf32>,
    %373 = vector.extract_strided_slice %346 {offsets = [0, 27], sizes = [20, 128], strides = [1, 1]} : vector<20x256xf32> to vector<20x128xf32>
    %c260_273 = arith.constant 260 : index
    %c0_274 = arith.constant 0 : index
    %374 = vector.load %arg10[%c260_273, %c0_274] : memref<500x128xf32, #tpu.memory_space<vmem>>, vector<20x128xf32>
    tpu.vector_store %arg10[%c260_273, %c0_274], %373 {strides = array<i32>} : memref<500x128xf32, #tpu.memory_space<vmem>>, vector<20x128xf32>,
    %375 = vector.extract_strided_slice %346 {offsets = [0, 28], sizes = [20, 128], strides = [1, 1]} : vector<20x256xf32> to vector<20x128xf32>
    %c280_275 = arith.constant 280 : index
    %c0_276 = arith.constant 0 : index
    %376 = vector.load %arg10[%c280_275, %c0_276] : memref<500x128xf32, #tpu.memory_space<vmem>>, vector<20x128xf32>
    tpu.vector_store %arg10[%c280_275, %c0_276], %375 {strides = array<i32>} : memref<500x128xf32, #tpu.memory_space<vmem>>, vector<20x128xf32>,
    %377 = vector.extract_strided_slice %346 {offsets = [0, 36], sizes = [20, 128], strides = [1, 1]} : vector<20x256xf32> to vector<20x128xf32>
    %c300_277 = arith.constant 300 : index
    %c0_278 = arith.constant 0 : index
    %378 = vector.load %arg10[%c300_277, %c0_278] : memref<500x128xf32, #tpu.memory_space<vmem>>, vector<20x128xf32>
    tpu.vector_store %arg10[%c300_277, %c0_278], %377 {strides = array<i32>} : memref<500x128xf32, #tpu.memory_space<vmem>>, vector<20x128xf32>,
    %379 = vector.extract_strided_slice %346 {offsets = [0, 37], sizes = [20, 128], strides = [1, 1]} : vector<20x256xf32> to vector<20x128xf32>
    %c320_279 = arith.constant 320 : index
    %c0_280 = arith.constant 0 : index
    %380 = vector.load %arg10[%c320_279, %c0_280] : memref<500x128xf32, #tpu.memory_space<vmem>>, vector<20x128xf32>
    tpu.vector_store %arg10[%c320_279, %c0_280], %379 {strides = array<i32>} : memref<500x128xf32, #tpu.memory_space<vmem>>, vector<20x128xf32>,
    %381 = vector.extract_strided_slice %346 {offsets = [0, 38], sizes = [20, 128], strides = [1, 1]} : vector<20x256xf32> to vector<20x128xf32>
    %c340_281 = arith.constant 340 : index
    %c0_282 = arith.constant 0 : index
    %382 = vector.load %arg10[%c340_281, %c0_282] : memref<500x128xf32, #tpu.memory_space<vmem>>, vector<20x128xf32>
    tpu.vector_store %arg10[%c340_281, %c0_282], %381 {strides = array<i32>} : memref<500x128xf32, #tpu.memory_space<vmem>>, vector<20x128xf32>,
    %383 = vector.extract_strided_slice %346 {offsets = [0, 39], sizes = [20, 128], strides = [1, 1]} : vector<20x256xf32> to vector<20x128xf32>
    %c360_283 = arith.constant 360 : index
    %c0_284 = arith.constant 0 : index
    %384 = vector.load %arg10[%c360_283, %c0_284] : memref<500x128xf32, #tpu.memory_space<vmem>>, vector<20x128xf32>
    tpu.vector_store %arg10[%c360_283, %c0_284], %383 {strides = array<i32>} : memref<500x128xf32, #tpu.memory_space<vmem>>, vector<20x128xf32>,
    %385 = vector.extract_strided_slice %346 {offsets = [0, 40], sizes = [20, 128], strides = [1, 1]} : vector<20x256xf32> to vector<20x128xf32>
    %c380_285 = arith.constant 380 : index
    %c0_286 = arith.constant 0 : index
    %386 = vector.load %arg10[%c380_285, %c0_286] : memref<500x128xf32, #tpu.memory_space<vmem>>, vector<20x128xf32>
    tpu.vector_store %arg10[%c380_285, %c0_286], %385 {strides = array<i32>} : memref<500x128xf32, #tpu.memory_space<vmem>>, vector<20x128xf32>,
    %387 = vector.extract_strided_slice %346 {offsets = [0, 48], sizes = [20, 128], strides = [1, 1]} : vector<20x256xf32> to vector<20x128xf32>
    %c400_287 = arith.constant 400 : index
    %c0_288 = arith.constant 0 : index
    %388 = vector.load %arg10[%c400_287, %c0_288] : memref<500x128xf32, #tpu.memory_space<vmem>>, vector<20x128xf32>
    tpu.vector_store %arg10[%c400_287, %c0_288], %387 {strides = array<i32>} : memref<500x128xf32, #tpu.memory_space<vmem>>, vector<20x128xf32>,
    %389 = vector.extract_strided_slice %346 {offsets = [0, 49], sizes = [20, 128], strides = [1, 1]} : vector<20x256xf32> to vector<20x128xf32>
    %c420_289 = arith.constant 420 : index
    %c0_290 = arith.constant 0 : index
    %390 = vector.load %arg10[%c420_289, %c0_290] : memref<500x128xf32, #tpu.memory_space<vmem>>, vector<20x128xf32>
    tpu.vector_store %arg10[%c420_289, %c0_290], %389 {strides = array<i32>} : memref<500x128xf32, #tpu.memory_space<vmem>>, vector<20x128xf32>,
    %391 = vector.extract_strided_slice %346 {offsets = [0, 50], sizes = [20, 128], strides = [1, 1]} : vector<20x256xf32> to vector<20x128xf32>
    %c440_291 = arith.constant 440 : index
    %c0_292 = arith.constant 0 : index
    %392 = vector.load %arg10[%c440_291, %c0_292] : memref<500x128xf32, #tpu.memory_space<vmem>>, vector<20x128xf32>
    tpu.vector_store %arg10[%c440_291, %c0_292], %391 {strides = array<i32>} : memref<500x128xf32, #tpu.memory_space<vmem>>, vector<20x128xf32>,
    %393 = vector.extract_strided_slice %346 {offsets = [0, 51], sizes = [20, 128], strides = [1, 1]} : vector<20x256xf32> to vector<20x128xf32>
    %c460_293 = arith.constant 460 : index
    %c0_294 = arith.constant 0 : index
    %394 = vector.load %arg10[%c460_293, %c0_294] : memref<500x128xf32, #tpu.memory_space<vmem>>, vector<20x128xf32>
    tpu.vector_store %arg10[%c460_293, %c0_294], %393 {strides = array<i32>} : memref<500x128xf32, #tpu.memory_space<vmem>>, vector<20x128xf32>,
    %395 = vector.extract_strided_slice %346 {offsets = [0, 52], sizes = [20, 128], strides = [1, 1]} : vector<20x256xf32> to vector<20x128xf32>
    %c480_295 = arith.constant 480 : index
    %c0_296 = arith.constant 0 : index
    %396 = vector.load %arg10[%c480_295, %c0_296] : memref<500x128xf32, #tpu.memory_space<vmem>>, vector<20x128xf32>
    tpu.vector_store %arg10[%c480_295, %c0_296], %395 {strides = array<i32>} : memref<500x128xf32, #tpu.memory_space<vmem>>, vector<20x128xf32>,
    %c0_297 = arith.constant 0 : index
    %c0_298 = arith.constant 0 : index
    %397 = vector.load %arg10[%c0_297, %c0_298] : memref<500x128xf32, #tpu.memory_space<vmem>>, vector<500x128xf32>
    %398 = arith.truncf %397 : vector<500x128xf32> to vector<500x128xbf16>
    %cst_299 = arith.constant dense<0.000000e+00> : vector<50x128xf32>
    %399 = tpu.matmul %4, %398, %cst_299 {dimension_numbers = #tpu.dot_dimension_numbers<[1], [0], [0], [1], [0, 0, 1, 1], [], []>} : vector<50x500xbf16>, vector<500x128xbf16>, vector<50x128xf32> -> vector<50x128xf32>
    %400 = vector.broadcast %5 : vector<50x1xf32> to vector<50x128xf32>
    %401 = arith.addf %399, %400 : vector<50x128xf32>
    %cst_300 = arith.constant 0.000000e+00 : f32
    %402 = vector.broadcast %cst_300 : f32 to vector<50x128xf32>
    %403 = arith.maximumf %401, %402 : vector<50x128xf32>
    %404 = vector.extract_strided_slice %403 {offsets = [0, 0], sizes = [50, 80], strides = [1, 1]} : vector<50x128xf32> to vector<50x80xf32>
    %405 = vector.extract_strided_slice %403 {offsets = [0, 1], sizes = [50, 80], strides = [1, 1]} : vector<50x128xf32> to vector<50x80xf32>
    %406 = arith.maximumf %404, %405 : vector<50x80xf32>
    %407 = vector.extract_strided_slice %403 {offsets = [0, 12], sizes = [50, 80], strides = [1, 1]} : vector<50x128xf32> to vector<50x80xf32>
    %408 = vector.extract_strided_slice %403 {offsets = [0, 13], sizes = [50, 80], strides = [1, 1]} : vector<50x128xf32> to vector<50x80xf32>
    %409 = arith.maximumf %407, %408 : vector<50x80xf32>
    %410 = arith.maximumf %406, %409 : vector<50x80xf32>
    %cst_301 = arith.constant dense<0.000000e+00> : vector<50x16xf32>
    %411 = tpu.matmul %410, %6, %cst_301 {dimension_numbers = #tpu.dot_dimension_numbers<[1], [0], [0], [1], [0, 0, 1, 1], [], []>} : vector<50x80xf32>, vector<80x16xf32>, vector<50x16xf32> -> vector<50x16xf32>
    %c2_302 = arith.constant 2 : index
    %c0_303 = arith.constant 0 : index
    %c0_304 = arith.constant 0 : index
    %412 = vector.load %arg8[%c2_302, %c0_303, %c0_304] : memref<4x50x16xf32, #tpu.memory_space<vmem>>, vector<1x50x16xf32>
    %413 = vector.shape_cast %412 : vector<1x50x16xf32> to vector<50x16xf32>
    %414 = vector.shape_cast %411 : vector<50x16xf32> to vector<1x50x16xf32>
    tpu.vector_store %arg8[%c2_302, %c0_303, %c0_304], %414 {strides = array<i32>} : memref<4x50x16xf32, #tpu.memory_space<vmem>>, vector<1x50x16xf32>,
    %415 = vector.extract_strided_slice %0 {offsets = [3, 0, 0], sizes = [1, 1, 512], strides = [1, 1, 1]} : vector<4x1x512xf32> to vector<1x1x512xf32>
    %416 = vector.shape_cast %415 : vector<1x1x512xf32> to vector<1x512xf32>
    %417 = vector.extract_strided_slice %416 {offsets = [0, 0], sizes = [1, 384], strides = [1, 1]} : vector<1x512xf32> to vector<1x384xf32>
    %c0_305 = arith.constant 0 : index
    %c0_306 = arith.constant 0 : index
    %418 = vector.load %arg9[%c0_305, %c0_306] : memref<25x384xf32, #tpu.memory_space<vmem>>, vector<1x384xf32>
    tpu.vector_store %arg9[%c0_305, %c0_306], %417 {strides = array<i32>} : memref<25x384xf32, #tpu.memory_space<vmem>>, vector<1x384xf32>,
    %419 = vector.extract_strided_slice %416 {offsets = [0, 1], sizes = [1, 384], strides = [1, 1]} : vector<1x512xf32> to vector<1x384xf32>
    %c1_307 = arith.constant 1 : index
    %c0_308 = arith.constant 0 : index
    %420 = vector.load %arg9[%c1_307, %c0_308] : memref<25x384xf32, #tpu.memory_space<vmem>>, vector<1x384xf32>
    tpu.vector_store %arg9[%c1_307, %c0_308], %419 {strides = array<i32>} : memref<25x384xf32, #tpu.memory_space<vmem>>, vector<1x384xf32>,
    %421 = vector.extract_strided_slice %416 {offsets = [0, 2], sizes = [1, 384], strides = [1, 1]} : vector<1x512xf32> to vector<1x384xf32>
    %c2_309 = arith.constant 2 : index
    %c0_310 = arith.constant 0 : index
    %422 = vector.load %arg9[%c2_309, %c0_310] : memref<25x384xf32, #tpu.memory_space<vmem>>, vector<1x384xf32>
    tpu.vector_store %arg9[%c2_309, %c0_310], %421 {strides = array<i32>} : memref<25x384xf32, #tpu.memory_space<vmem>>, vector<1x384xf32>,
    %423 = vector.extract_strided_slice %416 {offsets = [0, 3], sizes = [1, 384], strides = [1, 1]} : vector<1x512xf32> to vector<1x384xf32>
    %c3_311 = arith.constant 3 : index
    %c0_312 = arith.constant 0 : index
    %424 = vector.load %arg9[%c3_311, %c0_312] : memref<25x384xf32, #tpu.memory_space<vmem>>, vector<1x384xf32>
    tpu.vector_store %arg9[%c3_311, %c0_312], %423 {strides = array<i32>} : memref<25x384xf32, #tpu.memory_space<vmem>>, vector<1x384xf32>,
    %425 = vector.extract_strided_slice %416 {offsets = [0, 4], sizes = [1, 384], strides = [1, 1]} : vector<1x512xf32> to vector<1x384xf32>
    %c4_313 = arith.constant 4 : index
    %c0_314 = arith.constant 0 : index
    %426 = vector.load %arg9[%c4_313, %c0_314] : memref<25x384xf32, #tpu.memory_space<vmem>>, vector<1x384xf32>
    tpu.vector_store %arg9[%c4_313, %c0_314], %425 {strides = array<i32>} : memref<25x384xf32, #tpu.memory_space<vmem>>, vector<1x384xf32>,
    %427 = vector.extract_strided_slice %416 {offsets = [0, 20], sizes = [1, 384], strides = [1, 1]} : vector<1x512xf32> to vector<1x384xf32>
    %c5_315 = arith.constant 5 : index
    %c0_316 = arith.constant 0 : index
    %428 = vector.load %arg9[%c5_315, %c0_316] : memref<25x384xf32, #tpu.memory_space<vmem>>, vector<1x384xf32>
    tpu.vector_store %arg9[%c5_315, %c0_316], %427 {strides = array<i32>} : memref<25x384xf32, #tpu.memory_space<vmem>>, vector<1x384xf32>,
    %429 = vector.extract_strided_slice %416 {offsets = [0, 21], sizes = [1, 384], strides = [1, 1]} : vector<1x512xf32> to vector<1x384xf32>
    %c6_317 = arith.constant 6 : index
    %c0_318 = arith.constant 0 : index
    %430 = vector.load %arg9[%c6_317, %c0_318] : memref<25x384xf32, #tpu.memory_space<vmem>>, vector<1x384xf32>
    tpu.vector_store %arg9[%c6_317, %c0_318], %429 {strides = array<i32>} : memref<25x384xf32, #tpu.memory_space<vmem>>, vector<1x384xf32>,
    %431 = vector.extract_strided_slice %416 {offsets = [0, 22], sizes = [1, 384], strides = [1, 1]} : vector<1x512xf32> to vector<1x384xf32>
    %c7_319 = arith.constant 7 : index
    %c0_320 = arith.constant 0 : index
    %432 = vector.load %arg9[%c7_319, %c0_320] : memref<25x384xf32, #tpu.memory_space<vmem>>, vector<1x384xf32>
    tpu.vector_store %arg9[%c7_319, %c0_320], %431 {strides = array<i32>} : memref<25x384xf32, #tpu.memory_space<vmem>>, vector<1x384xf32>,
    %433 = vector.extract_strided_slice %416 {offsets = [0, 23], sizes = [1, 384], strides = [1, 1]} : vector<1x512xf32> to vector<1x384xf32>
    %c8_321 = arith.constant 8 : index
    %c0_322 = arith.constant 0 : index
    %434 = vector.load %arg9[%c8_321, %c0_322] : memref<25x384xf32, #tpu.memory_space<vmem>>, vector<1x384xf32>
    tpu.vector_store %arg9[%c8_321, %c0_322], %433 {strides = array<i32>} : memref<25x384xf32, #tpu.memory_space<vmem>>, vector<1x384xf32>,
    %435 = vector.extract_strided_slice %416 {offsets = [0, 24], sizes = [1, 384], strides = [1, 1]} : vector<1x512xf32> to vector<1x384xf32>
    %c9_323 = arith.constant 9 : index
    %c0_324 = arith.constant 0 : index
    %436 = vector.load %arg9[%c9_323, %c0_324] : memref<25x384xf32, #tpu.memory_space<vmem>>, vector<1x384xf32>
    tpu.vector_store %arg9[%c9_323, %c0_324], %435 {strides = array<i32>} : memref<25x384xf32, #tpu.memory_space<vmem>>, vector<1x384xf32>,
    %437 = vector.extract_strided_slice %416 {offsets = [0, 40], sizes = [1, 384], strides = [1, 1]} : vector<1x512xf32> to vector<1x384xf32>
    %c10_325 = arith.constant 10 : index
    %c0_326 = arith.constant 0 : index
    %438 = vector.load %arg9[%c10_325, %c0_326] : memref<25x384xf32, #tpu.memory_space<vmem>>, vector<1x384xf32>
    tpu.vector_store %arg9[%c10_325, %c0_326], %437 {strides = array<i32>} : memref<25x384xf32, #tpu.memory_space<vmem>>, vector<1x384xf32>,
    %439 = vector.extract_strided_slice %416 {offsets = [0, 41], sizes = [1, 384], strides = [1, 1]} : vector<1x512xf32> to vector<1x384xf32>
    %c11_327 = arith.constant 11 : index
    %c0_328 = arith.constant 0 : index
    %440 = vector.load %arg9[%c11_327, %c0_328] : memref<25x384xf32, #tpu.memory_space<vmem>>, vector<1x384xf32>
    tpu.vector_store %arg9[%c11_327, %c0_328], %439 {strides = array<i32>} : memref<25x384xf32, #tpu.memory_space<vmem>>, vector<1x384xf32>,
    %441 = vector.extract_strided_slice %416 {offsets = [0, 42], sizes = [1, 384], strides = [1, 1]} : vector<1x512xf32> to vector<1x384xf32>
    %c12_329 = arith.constant 12 : index
    %c0_330 = arith.constant 0 : index
    %442 = vector.load %arg9[%c12_329, %c0_330] : memref<25x384xf32, #tpu.memory_space<vmem>>, vector<1x384xf32>
    tpu.vector_store %arg9[%c12_329, %c0_330], %441 {strides = array<i32>} : memref<25x384xf32, #tpu.memory_space<vmem>>, vector<1x384xf32>,
    %443 = vector.extract_strided_slice %416 {offsets = [0, 43], sizes = [1, 384], strides = [1, 1]} : vector<1x512xf32> to vector<1x384xf32>
    %c13_331 = arith.constant 13 : index
    %c0_332 = arith.constant 0 : index
    %444 = vector.load %arg9[%c13_331, %c0_332] : memref<25x384xf32, #tpu.memory_space<vmem>>, vector<1x384xf32>
    tpu.vector_store %arg9[%c13_331, %c0_332], %443 {strides = array<i32>} : memref<25x384xf32, #tpu.memory_space<vmem>>, vector<1x384xf32>,
    %445 = vector.extract_strided_slice %416 {offsets = [0, 44], sizes = [1, 384], strides = [1, 1]} : vector<1x512xf32> to vector<1x384xf32>
    %c14_333 = arith.constant 14 : index
    %c0_334 = arith.constant 0 : index
    %446 = vector.load %arg9[%c14_333, %c0_334] : memref<25x384xf32, #tpu.memory_space<vmem>>, vector<1x384xf32>
    tpu.vector_store %arg9[%c14_333, %c0_334], %445 {strides = array<i32>} : memref<25x384xf32, #tpu.memory_space<vmem>>, vector<1x384xf32>,
    %447 = vector.extract_strided_slice %416 {offsets = [0, 60], sizes = [1, 384], strides = [1, 1]} : vector<1x512xf32> to vector<1x384xf32>
    %c15_335 = arith.constant 15 : index
    %c0_336 = arith.constant 0 : index
    %448 = vector.load %arg9[%c15_335, %c0_336] : memref<25x384xf32, #tpu.memory_space<vmem>>, vector<1x384xf32>
    tpu.vector_store %arg9[%c15_335, %c0_336], %447 {strides = array<i32>} : memref<25x384xf32, #tpu.memory_space<vmem>>, vector<1x384xf32>,
    %449 = vector.extract_strided_slice %416 {offsets = [0, 61], sizes = [1, 384], strides = [1, 1]} : vector<1x512xf32> to vector<1x384xf32>
    %c16_337 = arith.constant 16 : index
    %c0_338 = arith.constant 0 : index
    %450 = vector.load %arg9[%c16_337, %c0_338] : memref<25x384xf32, #tpu.memory_space<vmem>>, vector<1x384xf32>
    tpu.vector_store %arg9[%c16_337, %c0_338], %449 {strides = array<i32>} : memref<25x384xf32, #tpu.memory_space<vmem>>, vector<1x384xf32>,
    %451 = vector.extract_strided_slice %416 {offsets = [0, 62], sizes = [1, 384], strides = [1, 1]} : vector<1x512xf32> to vector<1x384xf32>
    %c17_339 = arith.constant 17 : index
    %c0_340 = arith.constant 0 : index
    %452 = vector.load %arg9[%c17_339, %c0_340] : memref<25x384xf32, #tpu.memory_space<vmem>>, vector<1x384xf32>
    tpu.vector_store %arg9[%c17_339, %c0_340], %451 {strides = array<i32>} : memref<25x384xf32, #tpu.memory_space<vmem>>, vector<1x384xf32>,
    %453 = vector.extract_strided_slice %416 {offsets = [0, 63], sizes = [1, 384], strides = [1, 1]} : vector<1x512xf32> to vector<1x384xf32>
    %c18_341 = arith.constant 18 : index
    %c0_342 = arith.constant 0 : index
    %454 = vector.load %arg9[%c18_341, %c0_342] : memref<25x384xf32, #tpu.memory_space<vmem>>, vector<1x384xf32>
    tpu.vector_store %arg9[%c18_341, %c0_342], %453 {strides = array<i32>} : memref<25x384xf32, #tpu.memory_space<vmem>>, vector<1x384xf32>,
    %455 = vector.extract_strided_slice %416 {offsets = [0, 64], sizes = [1, 384], strides = [1, 1]} : vector<1x512xf32> to vector<1x384xf32>
    %c19_343 = arith.constant 19 : index
    %c0_344 = arith.constant 0 : index
    %456 = vector.load %arg9[%c19_343, %c0_344] : memref<25x384xf32, #tpu.memory_space<vmem>>, vector<1x384xf32>
    tpu.vector_store %arg9[%c19_343, %c0_344], %455 {strides = array<i32>} : memref<25x384xf32, #tpu.memory_space<vmem>>, vector<1x384xf32>,
    %457 = vector.extract_strided_slice %416 {offsets = [0, 80], sizes = [1, 384], strides = [1, 1]} : vector<1x512xf32> to vector<1x384xf32>
    %c20_345 = arith.constant 20 : index
    %c0_346 = arith.constant 0 : index
    %458 = vector.load %arg9[%c20_345, %c0_346] : memref<25x384xf32, #tpu.memory_space<vmem>>, vector<1x384xf32>
    tpu.vector_store %arg9[%c20_345, %c0_346], %457 {strides = array<i32>} : memref<25x384xf32, #tpu.memory_space<vmem>>, vector<1x384xf32>,
    %459 = vector.extract_strided_slice %416 {offsets = [0, 81], sizes = [1, 384], strides = [1, 1]} : vector<1x512xf32> to vector<1x384xf32>
    %c21_347 = arith.constant 21 : index
    %c0_348 = arith.constant 0 : index
    %460 = vector.load %arg9[%c21_347, %c0_348] : memref<25x384xf32, #tpu.memory_space<vmem>>, vector<1x384xf32>
    tpu.vector_store %arg9[%c21_347, %c0_348], %459 {strides = array<i32>} : memref<25x384xf32, #tpu.memory_space<vmem>>, vector<1x384xf32>,
    %461 = vector.extract_strided_slice %416 {offsets = [0, 82], sizes = [1, 384], strides = [1, 1]} : vector<1x512xf32> to vector<1x384xf32>
    %c22_349 = arith.constant 22 : index
    %c0_350 = arith.constant 0 : index
    %462 = vector.load %arg9[%c22_349, %c0_350] : memref<25x384xf32, #tpu.memory_space<vmem>>, vector<1x384xf32>
    tpu.vector_store %arg9[%c22_349, %c0_350], %461 {strides = array<i32>} : memref<25x384xf32, #tpu.memory_space<vmem>>, vector<1x384xf32>,
    %463 = vector.extract_strided_slice %416 {offsets = [0, 83], sizes = [1, 384], strides = [1, 1]} : vector<1x512xf32> to vector<1x384xf32>
    %c23_351 = arith.constant 23 : index
    %c0_352 = arith.constant 0 : index
    %464 = vector.load %arg9[%c23_351, %c0_352] : memref<25x384xf32, #tpu.memory_space<vmem>>, vector<1x384xf32>
    tpu.vector_store %arg9[%c23_351, %c0_352], %463 {strides = array<i32>} : memref<25x384xf32, #tpu.memory_space<vmem>>, vector<1x384xf32>,
    %465 = vector.extract_strided_slice %416 {offsets = [0, 84], sizes = [1, 384], strides = [1, 1]} : vector<1x512xf32> to vector<1x384xf32>
    %c24_353 = arith.constant 24 : index
    %c0_354 = arith.constant 0 : index
    %466 = vector.load %arg9[%c24_353, %c0_354] : memref<25x384xf32, #tpu.memory_space<vmem>>, vector<1x384xf32>
    tpu.vector_store %arg9[%c24_353, %c0_354], %465 {strides = array<i32>} : memref<25x384xf32, #tpu.memory_space<vmem>>, vector<1x384xf32>,
    %c0_355 = arith.constant 0 : index
    %c0_356 = arith.constant 0 : index
    %467 = vector.load %arg9[%c0_355, %c0_356] : memref<25x384xf32, #tpu.memory_space<vmem>>, vector<25x384xf32>
    %468 = arith.truncf %467 : vector<25x384xf32> to vector<25x384xbf16>
    %cst_357 = arith.constant dense<0.000000e+00> : vector<20x384xf32>
    %469 = tpu.matmul %1, %468, %cst_357 {dimension_numbers = #tpu.dot_dimension_numbers<[1], [0], [0], [1], [0, 0, 1, 1], [], []>} : vector<20x25xbf16>, vector<25x384xbf16>, vector<20x384xf32> -> vector<20x384xf32>
    %470 = vector.broadcast %2 : vector<20x1xf32> to vector<20x384xf32>
    %471 = arith.addf %469, %470 : vector<20x384xf32>
    %cst_358 = arith.constant 0.000000e+00 : f32
    %472 = vector.broadcast %cst_358 : f32 to vector<20x384xf32>
    %473 = arith.maximumf %471, %472 : vector<20x384xf32>
    %474 = vector.extract_strided_slice %473 {offsets = [0, 0], sizes = [20, 296], strides = [1, 1]} : vector<20x384xf32> to vector<20x296xf32>
    %475 = vector.extract_strided_slice %473 {offsets = [0, 1], sizes = [20, 296], strides = [1, 1]} : vector<20x384xf32> to vector<20x296xf32>
    %476 = arith.maximumf %474, %475 : vector<20x296xf32>
    %477 = vector.extract_strided_slice %473 {offsets = [0, 20], sizes = [20, 296], strides = [1, 1]} : vector<20x384xf32> to vector<20x296xf32>
    %478 = vector.extract_strided_slice %473 {offsets = [0, 21], sizes = [20, 296], strides = [1, 1]} : vector<20x384xf32> to vector<20x296xf32>
    %479 = arith.maximumf %477, %478 : vector<20x296xf32>
    %480 = arith.maximumf %476, %479 : vector<20x296xf32>
    %481 = arith.truncf %480 : vector<20x296xf32> to vector<20x296xbf16>
    %cst_359 = arith.constant dense<0.000000e+00> : vector<20x256xf32>
    %482 = tpu.matmul %481, %3, %cst_359 {dimension_numbers = #tpu.dot_dimension_numbers<[1], [0], [0], [1], [0, 0, 1, 1], [], []>} : vector<20x296xbf16>, vector<296x256xbf16>, vector<20x256xf32> -> vector<20x256xf32>
    %483 = vector.extract_strided_slice %482 {offsets = [0, 0], sizes = [20, 128], strides = [1, 1]} : vector<20x256xf32> to vector<20x128xf32>
    %c0_360 = arith.constant 0 : index
    %c0_361 = arith.constant 0 : index
    %484 = vector.load %arg10[%c0_360, %c0_361] : memref<500x128xf32, #tpu.memory_space<vmem>>, vector<20x128xf32>
    tpu.vector_store %arg10[%c0_360, %c0_361], %483 {strides = array<i32>} : memref<500x128xf32, #tpu.memory_space<vmem>>, vector<20x128xf32>,
    %485 = vector.extract_strided_slice %482 {offsets = [0, 1], sizes = [20, 128], strides = [1, 1]} : vector<20x256xf32> to vector<20x128xf32>
    %c20_362 = arith.constant 20 : index
    %c0_363 = arith.constant 0 : index
    %486 = vector.load %arg10[%c20_362, %c0_363] : memref<500x128xf32, #tpu.memory_space<vmem>>, vector<20x128xf32>
    tpu.vector_store %arg10[%c20_362, %c0_363], %485 {strides = array<i32>} : memref<500x128xf32, #tpu.memory_space<vmem>>, vector<20x128xf32>,
    %487 = vector.extract_strided_slice %482 {offsets = [0, 2], sizes = [20, 128], strides = [1, 1]} : vector<20x256xf32> to vector<20x128xf32>
    %c40_364 = arith.constant 40 : index
    %c0_365 = arith.constant 0 : index
    %488 = vector.load %arg10[%c40_364, %c0_365] : memref<500x128xf32, #tpu.memory_space<vmem>>, vector<20x128xf32>
    tpu.vector_store %arg10[%c40_364, %c0_365], %487 {strides = array<i32>} : memref<500x128xf32, #tpu.memory_space<vmem>>, vector<20x128xf32>,
    %489 = vector.extract_strided_slice %482 {offsets = [0, 3], sizes = [20, 128], strides = [1, 1]} : vector<20x256xf32> to vector<20x128xf32>
    %c60_366 = arith.constant 60 : index
    %c0_367 = arith.constant 0 : index
    %490 = vector.load %arg10[%c60_366, %c0_367] : memref<500x128xf32, #tpu.memory_space<vmem>>, vector<20x128xf32>
    tpu.vector_store %arg10[%c60_366, %c0_367], %489 {strides = array<i32>} : memref<500x128xf32, #tpu.memory_space<vmem>>, vector<20x128xf32>,
    %491 = vector.extract_strided_slice %482 {offsets = [0, 4], sizes = [20, 128], strides = [1, 1]} : vector<20x256xf32> to vector<20x128xf32>
    %c80_368 = arith.constant 80 : index
    %c0_369 = arith.constant 0 : index
    %492 = vector.load %arg10[%c80_368, %c0_369] : memref<500x128xf32, #tpu.memory_space<vmem>>, vector<20x128xf32>
    tpu.vector_store %arg10[%c80_368, %c0_369], %491 {strides = array<i32>} : memref<500x128xf32, #tpu.memory_space<vmem>>, vector<20x128xf32>,
    %493 = vector.extract_strided_slice %482 {offsets = [0, 12], sizes = [20, 128], strides = [1, 1]} : vector<20x256xf32> to vector<20x128xf32>
    %c100_370 = arith.constant 100 : index
    %c0_371 = arith.constant 0 : index
    %494 = vector.load %arg10[%c100_370, %c0_371] : memref<500x128xf32, #tpu.memory_space<vmem>>, vector<20x128xf32>
    tpu.vector_store %arg10[%c100_370, %c0_371], %493 {strides = array<i32>} : memref<500x128xf32, #tpu.memory_space<vmem>>, vector<20x128xf32>,
    %495 = vector.extract_strided_slice %482 {offsets = [0, 13], sizes = [20, 128], strides = [1, 1]} : vector<20x256xf32> to vector<20x128xf32>
    %c120_372 = arith.constant 120 : index
    %c0_373 = arith.constant 0 : index
    %496 = vector.load %arg10[%c120_372, %c0_373] : memref<500x128xf32, #tpu.memory_space<vmem>>, vector<20x128xf32>
    tpu.vector_store %arg10[%c120_372, %c0_373], %495 {strides = array<i32>} : memref<500x128xf32, #tpu.memory_space<vmem>>, vector<20x128xf32>,
    %497 = vector.extract_strided_slice %482 {offsets = [0, 14], sizes = [20, 128], strides = [1, 1]} : vector<20x256xf32> to vector<20x128xf32>
    %c140_374 = arith.constant 140 : index
    %c0_375 = arith.constant 0 : index
    %498 = vector.load %arg10[%c140_374, %c0_375] : memref<500x128xf32, #tpu.memory_space<vmem>>, vector<20x128xf32>
    tpu.vector_store %arg10[%c140_374, %c0_375], %497 {strides = array<i32>} : memref<500x128xf32, #tpu.memory_space<vmem>>, vector<20x128xf32>,
    %499 = vector.extract_strided_slice %482 {offsets = [0, 15], sizes = [20, 128], strides = [1, 1]} : vector<20x256xf32> to vector<20x128xf32>
    %c160_376 = arith.constant 160 : index
    %c0_377 = arith.constant 0 : index
    %500 = vector.load %arg10[%c160_376, %c0_377] : memref<500x128xf32, #tpu.memory_space<vmem>>, vector<20x128xf32>
    tpu.vector_store %arg10[%c160_376, %c0_377], %499 {strides = array<i32>} : memref<500x128xf32, #tpu.memory_space<vmem>>, vector<20x128xf32>,
    %501 = vector.extract_strided_slice %482 {offsets = [0, 16], sizes = [20, 128], strides = [1, 1]} : vector<20x256xf32> to vector<20x128xf32>
    %c180_378 = arith.constant 180 : index
    %c0_379 = arith.constant 0 : index
    %502 = vector.load %arg10[%c180_378, %c0_379] : memref<500x128xf32, #tpu.memory_space<vmem>>, vector<20x128xf32>
    tpu.vector_store %arg10[%c180_378, %c0_379], %501 {strides = array<i32>} : memref<500x128xf32, #tpu.memory_space<vmem>>, vector<20x128xf32>,
    %503 = vector.extract_strided_slice %482 {offsets = [0, 24], sizes = [20, 128], strides = [1, 1]} : vector<20x256xf32> to vector<20x128xf32>
    %c200_380 = arith.constant 200 : index
    %c0_381 = arith.constant 0 : index
    %504 = vector.load %arg10[%c200_380, %c0_381] : memref<500x128xf32, #tpu.memory_space<vmem>>, vector<20x128xf32>
    tpu.vector_store %arg10[%c200_380, %c0_381], %503 {strides = array<i32>} : memref<500x128xf32, #tpu.memory_space<vmem>>, vector<20x128xf32>,
    %505 = vector.extract_strided_slice %482 {offsets = [0, 25], sizes = [20, 128], strides = [1, 1]} : vector<20x256xf32> to vector<20x128xf32>
    %c220_382 = arith.constant 220 : index
    %c0_383 = arith.constant 0 : index
    %506 = vector.load %arg10[%c220_382, %c0_383] : memref<500x128xf32, #tpu.memory_space<vmem>>, vector<20x128xf32>
    tpu.vector_store %arg10[%c220_382, %c0_383], %505 {strides = array<i32>} : memref<500x128xf32, #tpu.memory_space<vmem>>, vector<20x128xf32>,
    %507 = vector.extract_strided_slice %482 {offsets = [0, 26], sizes = [20, 128], strides = [1, 1]} : vector<20x256xf32> to vector<20x128xf32>
    %c240_384 = arith.constant 240 : index
    %c0_385 = arith.constant 0 : index
    %508 = vector.load %arg10[%c240_384, %c0_385] : memref<500x128xf32, #tpu.memory_space<vmem>>, vector<20x128xf32>
    tpu.vector_store %arg10[%c240_384, %c0_385], %507 {strides = array<i32>} : memref<500x128xf32, #tpu.memory_space<vmem>>, vector<20x128xf32>,
    %509 = vector.extract_strided_slice %482 {offsets = [0, 27], sizes = [20, 128], strides = [1, 1]} : vector<20x256xf32> to vector<20x128xf32>
    %c260_386 = arith.constant 260 : index
    %c0_387 = arith.constant 0 : index
    %510 = vector.load %arg10[%c260_386, %c0_387] : memref<500x128xf32, #tpu.memory_space<vmem>>, vector<20x128xf32>
    tpu.vector_store %arg10[%c260_386, %c0_387], %509 {strides = array<i32>} : memref<500x128xf32, #tpu.memory_space<vmem>>, vector<20x128xf32>,
    %511 = vector.extract_strided_slice %482 {offsets = [0, 28], sizes = [20, 128], strides = [1, 1]} : vector<20x256xf32> to vector<20x128xf32>
    %c280_388 = arith.constant 280 : index
    %c0_389 = arith.constant 0 : index
    %512 = vector.load %arg10[%c280_388, %c0_389] : memref<500x128xf32, #tpu.memory_space<vmem>>, vector<20x128xf32>
    tpu.vector_store %arg10[%c280_388, %c0_389], %511 {strides = array<i32>} : memref<500x128xf32, #tpu.memory_space<vmem>>, vector<20x128xf32>,
    %513 = vector.extract_strided_slice %482 {offsets = [0, 36], sizes = [20, 128], strides = [1, 1]} : vector<20x256xf32> to vector<20x128xf32>
    %c300_390 = arith.constant 300 : index
    %c0_391 = arith.constant 0 : index
    %514 = vector.load %arg10[%c300_390, %c0_391] : memref<500x128xf32, #tpu.memory_space<vmem>>, vector<20x128xf32>
    tpu.vector_store %arg10[%c300_390, %c0_391], %513 {strides = array<i32>} : memref<500x128xf32, #tpu.memory_space<vmem>>, vector<20x128xf32>,
    %515 = vector.extract_strided_slice %482 {offsets = [0, 37], sizes = [20, 128], strides = [1, 1]} : vector<20x256xf32> to vector<20x128xf32>
    %c320_392 = arith.constant 320 : index
    %c0_393 = arith.constant 0 : index
    %516 = vector.load %arg10[%c320_392, %c0_393] : memref<500x128xf32, #tpu.memory_space<vmem>>, vector<20x128xf32>
    tpu.vector_store %arg10[%c320_392, %c0_393], %515 {strides = array<i32>} : memref<500x128xf32, #tpu.memory_space<vmem>>, vector<20x128xf32>,
    %517 = vector.extract_strided_slice %482 {offsets = [0, 38], sizes = [20, 128], strides = [1, 1]} : vector<20x256xf32> to vector<20x128xf32>
    %c340_394 = arith.constant 340 : index
    %c0_395 = arith.constant 0 : index
    %518 = vector.load %arg10[%c340_394, %c0_395] : memref<500x128xf32, #tpu.memory_space<vmem>>, vector<20x128xf32>
    tpu.vector_store %arg10[%c340_394, %c0_395], %517 {strides = array<i32>} : memref<500x128xf32, #tpu.memory_space<vmem>>, vector<20x128xf32>,
    %519 = vector.extract_strided_slice %482 {offsets = [0, 39], sizes = [20, 128], strides = [1, 1]} : vector<20x256xf32> to vector<20x128xf32>
    %c360_396 = arith.constant 360 : index
    %c0_397 = arith.constant 0 : index
    %520 = vector.load %arg10[%c360_396, %c0_397] : memref<500x128xf32, #tpu.memory_space<vmem>>, vector<20x128xf32>
    tpu.vector_store %arg10[%c360_396, %c0_397], %519 {strides = array<i32>} : memref<500x128xf32, #tpu.memory_space<vmem>>, vector<20x128xf32>,
    %521 = vector.extract_strided_slice %482 {offsets = [0, 40], sizes = [20, 128], strides = [1, 1]} : vector<20x256xf32> to vector<20x128xf32>
    %c380_398 = arith.constant 380 : index
    %c0_399 = arith.constant 0 : index
    %522 = vector.load %arg10[%c380_398, %c0_399] : memref<500x128xf32, #tpu.memory_space<vmem>>, vector<20x128xf32>
    tpu.vector_store %arg10[%c380_398, %c0_399], %521 {strides = array<i32>} : memref<500x128xf32, #tpu.memory_space<vmem>>, vector<20x128xf32>,
    %523 = vector.extract_strided_slice %482 {offsets = [0, 48], sizes = [20, 128], strides = [1, 1]} : vector<20x256xf32> to vector<20x128xf32>
    %c400_400 = arith.constant 400 : index
    %c0_401 = arith.constant 0 : index
    %524 = vector.load %arg10[%c400_400, %c0_401] : memref<500x128xf32, #tpu.memory_space<vmem>>, vector<20x128xf32>
    tpu.vector_store %arg10[%c400_400, %c0_401], %523 {strides = array<i32>} : memref<500x128xf32, #tpu.memory_space<vmem>>, vector<20x128xf32>,
    %525 = vector.extract_strided_slice %482 {offsets = [0, 49], sizes = [20, 128], strides = [1, 1]} : vector<20x256xf32> to vector<20x128xf32>
    %c420_402 = arith.constant 420 : index
    %c0_403 = arith.constant 0 : index
    %526 = vector.load %arg10[%c420_402, %c0_403] : memref<500x128xf32, #tpu.memory_space<vmem>>, vector<20x128xf32>
    tpu.vector_store %arg10[%c420_402, %c0_403], %525 {strides = array<i32>} : memref<500x128xf32, #tpu.memory_space<vmem>>, vector<20x128xf32>,
    %527 = vector.extract_strided_slice %482 {offsets = [0, 50], sizes = [20, 128], strides = [1, 1]} : vector<20x256xf32> to vector<20x128xf32>
    %c440_404 = arith.constant 440 : index
    %c0_405 = arith.constant 0 : index
    %528 = vector.load %arg10[%c440_404, %c0_405] : memref<500x128xf32, #tpu.memory_space<vmem>>, vector<20x128xf32>
    tpu.vector_store %arg10[%c440_404, %c0_405], %527 {strides = array<i32>} : memref<500x128xf32, #tpu.memory_space<vmem>>, vector<20x128xf32>,
    %529 = vector.extract_strided_slice %482 {offsets = [0, 51], sizes = [20, 128], strides = [1, 1]} : vector<20x256xf32> to vector<20x128xf32>
    %c460_406 = arith.constant 460 : index
    %c0_407 = arith.constant 0 : index
    %530 = vector.load %arg10[%c460_406, %c0_407] : memref<500x128xf32, #tpu.memory_space<vmem>>, vector<20x128xf32>
    tpu.vector_store %arg10[%c460_406, %c0_407], %529 {strides = array<i32>} : memref<500x128xf32, #tpu.memory_space<vmem>>, vector<20x128xf32>,
    %531 = vector.extract_strided_slice %482 {offsets = [0, 52], sizes = [20, 128], strides = [1, 1]} : vector<20x256xf32> to vector<20x128xf32>
    %c480_408 = arith.constant 480 : index
    %c0_409 = arith.constant 0 : index
    %532 = vector.load %arg10[%c480_408, %c0_409] : memref<500x128xf32, #tpu.memory_space<vmem>>, vector<20x128xf32>
    tpu.vector_store %arg10[%c480_408, %c0_409], %531 {strides = array<i32>} : memref<500x128xf32, #tpu.memory_space<vmem>>, vector<20x128xf32>,
    %c0_410 = arith.constant 0 : index
    %c0_411 = arith.constant 0 : index
    %533 = vector.load %arg10[%c0_410, %c0_411] : memref<500x128xf32, #tpu.memory_space<vmem>>, vector<500x128xf32>
    %534 = arith.truncf %533 : vector<500x128xf32> to vector<500x128xbf16>
    %cst_412 = arith.constant dense<0.000000e+00> : vector<50x128xf32>
    %535 = tpu.matmul %4, %534, %cst_412 {dimension_numbers = #tpu.dot_dimension_numbers<[1], [0], [0], [1], [0, 0, 1, 1], [], []>} : vector<50x500xbf16>, vector<500x128xbf16>, vector<50x128xf32> -> vector<50x128xf32>
    %536 = vector.broadcast %5 : vector<50x1xf32> to vector<50x128xf32>
    %537 = arith.addf %535, %536 : vector<50x128xf32>
    %cst_413 = arith.constant 0.000000e+00 : f32
    %538 = vector.broadcast %cst_413 : f32 to vector<50x128xf32>
    %539 = arith.maximumf %537, %538 : vector<50x128xf32>
    %540 = vector.extract_strided_slice %539 {offsets = [0, 0], sizes = [50, 80], strides = [1, 1]} : vector<50x128xf32> to vector<50x80xf32>
    %541 = vector.extract_strided_slice %539 {offsets = [0, 1], sizes = [50, 80], strides = [1, 1]} : vector<50x128xf32> to vector<50x80xf32>
    %542 = arith.maximumf %540, %541 : vector<50x80xf32>
    %543 = vector.extract_strided_slice %539 {offsets = [0, 12], sizes = [50, 80], strides = [1, 1]} : vector<50x128xf32> to vector<50x80xf32>
    %544 = vector.extract_strided_slice %539 {offsets = [0, 13], sizes = [50, 80], strides = [1, 1]} : vector<50x128xf32> to vector<50x80xf32>
    %545 = arith.maximumf %543, %544 : vector<50x80xf32>
    %546 = arith.maximumf %542, %545 : vector<50x80xf32>
    %cst_414 = arith.constant dense<0.000000e+00> : vector<50x16xf32>
    %547 = tpu.matmul %546, %6, %cst_414 {dimension_numbers = #tpu.dot_dimension_numbers<[1], [0], [0], [1], [0, 0, 1, 1], [], []>} : vector<50x80xf32>, vector<80x16xf32>, vector<50x16xf32> -> vector<50x16xf32>
    %c3_415 = arith.constant 3 : index
    %c0_416 = arith.constant 0 : index
    %c0_417 = arith.constant 0 : index
    %548 = vector.load %arg8[%c3_415, %c0_416, %c0_417] : memref<4x50x16xf32, #tpu.memory_space<vmem>>, vector<1x50x16xf32>
    %549 = vector.shape_cast %548 : vector<1x50x16xf32> to vector<50x16xf32>
    %550 = vector.shape_cast %547 : vector<50x16xf32> to vector<1x50x16xf32>
    tpu.vector_store %arg8[%c3_415, %c0_416, %c0_417], %550 {strides = array<i32>} : memref<4x50x16xf32, #tpu.memory_space<vmem>>, vector<1x50x16xf32>,
    return
  }
  func.func @transform_0(%arg0: i32) -> (i32, i32, i32) {
    %c0_i32 = arith.constant 0 : i32
    %c0_i32_0 = arith.constant 0 : i32
    %c0_i32_1 = arith.constant 0 : i32
    return %arg0, %c0_i32, %c0_i32_0 : i32, i32, i32
  }
  func.func @transform_1(%arg0: i32) -> (i32, i32) {
    %c0_i32 = arith.constant 0 : i32
    %c0_i32_0 = arith.constant 0 : i32
    %c0_i32_1 = arith.constant 0 : i32
    return %c0_i32, %c0_i32_0 : i32, i32
  }
  func.func @transform_2(%arg0: i32) -> (i32, i32) {
    %c0_i32 = arith.constant 0 : i32
    %c0_i32_0 = arith.constant 0 : i32
    %c0_i32_1 = arith.constant 0 : i32
    return %c0_i32, %c0_i32_0 : i32, i32
  }
  func.func @transform_3(%arg0: i32) -> (i32, i32) {
    %c0_i32 = arith.constant 0 : i32
    %c0_i32_0 = arith.constant 0 : i32
    %c0_i32_1 = arith.constant 0 : i32
    return %c0_i32, %c0_i32_0 : i32, i32
  }
  func.func @transform_4(%arg0: i32) -> (i32, i32) {
    %c0_i32 = arith.constant 0 : i32
    %c0_i32_0 = arith.constant 0 : i32
    %c0_i32_1 = arith.constant 0 : i32
    return %c0_i32, %c0_i32_0 : i32, i32
  }
  func.func @transform_5(%arg0: i32) -> (i32, i32) {
    %c0_i32 = arith.constant 0 : i32
    %c0_i32_0 = arith.constant 0 : i32
    %c0_i32_1 = arith.constant 0 : i32
    return %c0_i32, %c0_i32_0 : i32, i32
  }
  func.func @transform_6(%arg0: i32) -> (i32, i32) {
    %c0_i32 = arith.constant 0 : i32
    %c0_i32_0 = arith.constant 0 : i32
    %c0_i32_1 = arith.constant 0 : i32
    return %c0_i32, %c0_i32_0 : i32, i32
  }
  func.func @transform_7(%arg0: i32) -> (i32, i32, i32) {
    %c0_i32 = arith.constant 0 : i32
    %c0_i32_0 = arith.constant 0 : i32
    %c0_i32_1 = arith.constant 0 : i32
    return %arg0, %c0_i32, %c0_i32_0 : i32, i32, i32
  }
}

</mosaic_0001>

<llo_original>
// kernel: mil_forward.1
$region0: #{mil_forward.1}
  #allocation0 [shape = 'u32[]', space=smem, size = 0x4, offset = 0x4, fixed_abs, tag = 'smem constant byte address 0x4 - core index']
  #allocation1 [shape = 'u32[72,128]{1,0:T(1,128)}', space=vmem, size = 0x9000, scoped, tag = 'internal scratch']
  #allocation2 [shape = 'f32[25,384]{1,0:T(8,128)}', space=vmem, size = 0xc000, scoped, tag = 'scratch operand']
  #allocation3 [shape = 'f32[500,128]{1,0:T(8,128)}', space=vmem, size = 0x3f000, scoped, tag = 'scratch operand']
  %s0 = inlined_call_operand.vmem [shape: f32[8,1,512], index: 0, kind: input, shape index: {}]
  %s1 = inlined_call_operand.vmem [shape: bf16[20,25], index: 1, kind: input, shape index: {}]
  %s2 = inlined_call_operand.vmem [shape: f32[20,1], index: 2, kind: input, shape index: {}]
  %s3 = inlined_call_operand.vmem [shape: bf16[296,256], index: 3, kind: input, shape index: {}]
  %s4 = inlined_call_operand.vmem [shape: bf16[50,500], index: 4, kind: input, shape index: {}]
  %s5 = inlined_call_operand.vmem [shape: f32[50,1], index: 5, kind: input, shape index: {}]
  %s6 = inlined_call_operand.vmem [shape: f32[80,16], index: 6, kind: input, shape index: {}]
  %s7 = inlined_call_operand.vmem [shape: f32[8,50,16], index: 7, kind: output, shape index: {}]
  %s8 = sld [smem:[#allocation0]]
  $region61: #{mil_forward.1} parent=0
    _
  %s10 = ssub.s32 1, %s8
  %s11 = scalar_select 0, %s10, %s8
  loop: start=0, step=1, limit=4
  $region2: #{mil_forward.1} parent=0 // loop_pre_header
    _
  $region3: #{mil_forward.1} parent=0 // loop_header
    %s13 = sphi 0, %s17
    %p14 = scmp.ge.s32.totalorder %s13, 4
    %s23 = sphi 0, %s25
    %s26 = sphi 0, %s23
    %s27 = sphi 0, %s26
    %s43 = sphi 0, %s27
    %s47 = sphi 0, %s47
    %s49 = sphi 0, %s47
    %s50 = sphi 0, %s49
    %s64 = sphi 0, %s50
    %s68 = sphi 0, %s68
    %s70 = sphi 0, %s68
    %s71 = sphi 0, %s70
    %s85 = sphi 0, %s71
    %s89 = sphi 0, %s89
    %s91 = sphi 0, %s89
    %s92 = sphi 0, %s91
    %s106 = sphi 0, %s92
    %s110 = sphi 0, %s110
    %s112 = sphi 0, %s110
    %s113 = sphi 0, %s112
    %s127 = sphi 0, %s113
    %s131 = sphi 0, %s131
    %s133 = sphi 0, %s131
    %s134 = sphi 0, %s133
    %s148 = sphi 0, %s134
    %s152 = sphi 0, %s152
    %s154 = sphi 0, %s152
    %s155 = sphi 0, %s154
    %s169 = sphi 0, %s155
    %s175 = sphi 0, %s177
    %s178 = sphi 0, %s175
    %s179 = sphi 0, %s178
    %s195 = sphi 0, %s179
  $region4: #{mil_forward.1} parent=0 // loop_header_branch
    %16 = sbr.rel (%p14) target = $region8
  $region5: #{mil_forward.1} parent=0 // loop_body
    %s18 = ssub.s32 %s13, 1
    %s19 = ssub.s32 %s13, 2
    %s20 = sadd.s32 %s13, 1
    %s21 = ssub.s32 %s13, %s20
    %p22 = scmp.eq.s32.totalorder %s21, 0
    %s24 = sadd.s32 %s23, 1
    %s25 = scalar_select %p22, %s23, %s24
    %p28 = pneg %p22
    %p29 = scmp.eq.s32.totalorder %s13, 1
    %p30 = por %p28, %p29
    %p31 = scmp.ne.s32.totalorder %s23, %s26
    %p32 = scmp.eq.s32.totalorder %s13, 0
    %p33 = por %p31, %p32
    %p34 = scmp.ne.s32.totalorder %s23, %s26
    %p35 = scmp.eq.s32.totalorder %s18, 1
    %p36 = por %p34, %p35
    %p37 = scmp.ne.s32.totalorder %s26, %s27
    %p38 = scmp.eq.s32.totalorder %s18, 0
    %p39 = por %p37, %p38
    %p40 = scmp.ne.s32.totalorder %s26, %s27
    %p41 = scmp.eq.s32.totalorder %s19, 1
    %p42 = por %p40, %p41
    %p44 = scmp.ne.s32.totalorder %s27, %s43
    %p45 = scmp.eq.s32.totalorder %s19, 0
    %p46 = por %p44, %p45
    %s48 = sadd.s32 %s47, 1
    %p51 = scmp.eq.s32.totalorder %s13, 1
    %p52 = scmp.ne.s32.totalorder %s47, %s49
    %p53 = scmp.eq.s32.totalorder %s13, 0
    %p54 = por %p52, %p53
    %p55 = scmp.ne.s32.totalorder %s47, %s49
    %p56 = scmp.eq.s32.totalorder %s18, 1
    %p57 = por %p55, %p56
    %p58 = scmp.ne.s32.totalorder %s49, %s50
    %p59 = scmp.eq.s32.totalorder %s18, 0
    %p60 = por %p58, %p59
    %p61 = scmp.ne.s32.totalorder %s49, %s50
    %p62 = scmp.eq.s32.totalorder %s19, 1
    %p63 = por %p61, %p62
    %p65 = scmp.ne.s32.totalorder %s50, %s64
    %p66 = scmp.eq.s32.totalorder %s19, 0
    %p67 = por %p65, %p66
    %s69 = sadd.s32 %s68, 1
    %p72 = scmp.eq.s32.totalorder %s13, 1
    %p73 = scmp.ne.s32.totalorder %s68, %s70
    %p74 = scmp.eq.s32.totalorder %s13, 0
    %p75 = por %p73, %p74
    %p76 = scmp.ne.s32.totalorder %s68, %s70
    %p77 = scmp.eq.s32.totalorder %s18, 1
    %p78 = por %p76, %p77
    %p79 = scmp.ne.s32.totalorder %s70, %s71
    %p80 = scmp.eq.s32.totalorder %s18, 0
    %p81 = por %p79, %p80
    %p82 = scmp.ne.s32.totalorder %s70, %s71
    %p83 = scmp.eq.s32.totalorder %s19, 1
    %p84 = por %p82, %p83
    %p86 = scmp.ne.s32.totalorder %s71, %s85
    %p87 = scmp.eq.s32.totalorder %s19, 0
    %p88 = por %p86, %p87
    %s90 = sadd.s32 %s89, 1
    %p93 = scmp.eq.s32.totalorder %s13, 1
    %p94 = scmp.ne.s32.totalorder %s89, %s91
    %p95 = scmp.eq.s32.totalorder %s13, 0
    %p96 = por %p94, %p95
    %p97 = scmp.ne.s32.totalorder %s89, %s91
    %p98 = scmp.eq.s32.totalorder %s18, 1
    %p99 = por %p97, %p98
    %p100 = scmp.ne.s32.totalorder %s91, %s92
    %p101 = scmp.eq.s32.totalorder %s18, 0
    %p102 = por %p100, %p101
    %p103 = scmp.ne.s32.totalorder %s91, %s92
    %p104 = scmp.eq.s32.totalorder %s19, 1
    %p105 = por %p103, %p104
    %p107 = scmp.ne.s32.totalorder %s92, %s106
    %p108 = scmp.eq.s32.totalorder %s19, 0
    %p109 = por %p107, %p108
    %s111 = sadd.s32 %s110, 1
    %p114 = scmp.eq.s32.totalorder %s13, 1
    %p115 = scmp.ne.s32.totalorder %s110, %s112
    %p116 = scmp.eq.s32.totalorder %s13, 0
    %p117 = por %p115, %p116
    %p118 = scmp.ne.s32.totalorder %s110, %s112
    %p119 = scmp.eq.s32.totalorder %s18, 1
    %p120 = por %p118, %p119
    %p121 = scmp.ne.s32.totalorder %s112, %s113
    %p122 = scmp.eq.s32.totalorder %s18, 0
    %p123 = por %p121, %p122
    %p124 = scmp.ne.s32.totalorder %s112, %s113
    %p125 = scmp.eq.s32.totalorder %s19, 1
    %p126 = por %p124, %p125
    %p128 = scmp.ne.s32.totalorder %s113, %s127
    %p129 = scmp.eq.s32.totalorder %s19, 0
    %p130 = por %p128, %p129
    %s132 = sadd.s32 %s131, 1
    %p135 = scmp.eq.s32.totalorder %s13, 1
    %p136 = scmp.ne.s32.totalorder %s131, %s133
    %p137 = scmp.eq.s32.totalorder %s13, 0
    %p138 = por %p136, %p137
    %p139 = scmp.ne.s32.totalorder %s131, %s133
    %p140 = scmp.eq.s32.totalorder %s18, 1
    %p141 = por %p139, %p140
    %p142 = scmp.ne.s32.totalorder %s133, %s134
    %p143 = scmp.eq.s32.totalorder %s18, 0
    %p144 = por %p142, %p143
    %p145 = scmp.ne.s32.totalorder %s133, %s134
    %p146 = scmp.eq.s32.totalorder %s19, 1
    %p147 = por %p145, %p146
    %p149 = scmp.ne.s32.totalorder %s134, %s148
    %p150 = scmp.eq.s32.totalorder %s19, 0
    %p151 = por %p149, %p150
    %s153 = sadd.s32 %s152, 1
    %p156 = scmp.eq.s32.totalorder %s13, 1
    %p157 = scmp.ne.s32.totalorder %s152, %s154
    %p158 = scmp.eq.s32.totalorder %s13, 0
    %p159 = por %p157, %p158
    %p160 = scmp.ne.s32.totalorder %s152, %s154
    %p161 = scmp.eq.s32.totalorder %s18, 1
    %p162 = por %p160, %p161
    %p163 = scmp.ne.s32.totalorder %s154, %s155
    %p164 = scmp.eq.s32.totalorder %s18, 0
    %p165 = por %p163, %p164
    %p166 = scmp.ne.s32.totalorder %s154, %s155
    %p167 = scmp.eq.s32.totalorder %s19, 1
    %p168 = por %p166, %p167
    %p170 = scmp.ne.s32.totalorder %s155, %s169
    %p171 = scmp.eq.s32.totalorder %s19, 0
    %p172 = por %p170, %p171
    %s173 = ssub.s32 %s13, %s20
    %p174 = scmp.eq.s32.totalorder %s173, 0
    %s176 = sadd.s32 %s175, 1
    %s177 = scalar_select %p174, %s175, %s176
    %p180 = pneg %p174
    %p181 = scmp.eq.s32.totalorder %s13, 1
    %p182 = por %p180, %p181
    %p183 = scmp.ne.s32.totalorder %s175, %s178
    %p184 = scmp.eq.s32.totalorder %s13, 0
    %p185 = por %p183, %p184
    %p186 = scmp.ne.s32.totalorder %s175, %s178
    %p187 = scmp.eq.s32.totalorder %s18, 1
    %p188 = por %p186, %p187
    %p189 = scmp.ne.s32.totalorder %s178, %s179
    %p190 = scmp.eq.s32.totalorder %s18, 0
    %p191 = por %p189, %p190
    %p192 = scmp.ne.s32.totalorder %s178, %s179
    %p193 = scmp.eq.s32.totalorder %s19, 1
    %p194 = por %p192, %p193
    %p196 = scmp.ne.s32.totalorder %s179, %s195
    %p197 = scmp.eq.s32.totalorder %s19, 0
    %p198 = por %p196, %p197
    %p199 = scmp.le.s32.totalorder 1, %s13
    %p200 = scmp.lt.s32.totalorder %s13, 3
    %p201 = pnand %p199, %p200
    %p202 = pneg %p201
    // Predicated region
    $region9: #{mil_forward.1} parent=5 // pred_check
      _
    $region10: #{mil_forward.1} parent=5 // pred_check_branch
      %204 = sbr.rel (%p201) target = $region12
    $region11: #{mil_forward.1} parent=5 // pred_region
      %s205 = ssub.s32 %s13, 1
      // Predicated region
      $region13: #{mil_forward.1} parent=11 // pred_check
        %p206 = pneg %p60
      $region14: #{mil_forward.1} parent=11 // pred_check_branch
        %208 = sbr.rel (%p206) target = $region16
      $region15: #{mil_forward.1} parent=11 // pred_region
        _
      $region16: #{mil_forward.1} parent=11 // pred_fallthru
        _
      // Predicated region
      $region17: #{mil_forward.1} parent=11 // pred_check
        %p209 = pneg %p81
      $region18: #{mil_forward.1} parent=11 // pred_check_branch
        %211 = sbr.rel (%p209) target = $region20
      $region19: #{mil_forward.1} parent=11 // pred_region
        _
      $region20: #{mil_forward.1} parent=11 // pred_fallthru
        _
      // Predicated region
      $region21: #{mil_forward.1} parent=11 // pred_check
        %p212 = pneg %p102
      $region22: #{mil_forward.1} parent=11 // pred_check_branch
        %214 = sbr.rel (%p212) target = $region24
      $region23: #{mil_forward.1} parent=11 // pred_region
        _
      $region24: #{mil_forward.1} parent=11 // pred_fallthru
        _
      // Predicated region
      $region25: #{mil_forward.1} parent=11 // pred_check
        %p215 = pneg %p123
      $region26: #{mil_forward.1} parent=11 // pred_check_branch
        %217 = sbr.rel (%p215) target = $region28
      $region27: #{mil_forward.1} parent=11 // pred_region
        _
      $region28: #{mil_forward.1} parent=11 // pred_fallthru
        _
      // Predicated region
      $region29: #{mil_forward.1} parent=11 // pred_check
        %p218 = pneg %p144
      $region30: #{mil_forward.1} parent=11 // pred_check_branch
        %220 = sbr.rel (%p218) target = $region32
      $region31: #{mil_forward.1} parent=11 // pred_region
        _
      $region32: #{mil_forward.1} parent=11 // pred_fallthru
        _
      // Predicated region
      $region33: #{mil_forward.1} parent=11 // pred_check
        %p221 = pneg %p165
      $region34: #{mil_forward.1} parent=11 // pred_check_branch
        %223 = sbr.rel (%p221) target = $region36
      $region35: #{mil_forward.1} parent=11 // pred_region
        _
      $region36: #{mil_forward.1} parent=11 // pred_fallthru
        _
    $region12: #{mil_forward.1} parent=5 // pred_fallthru
      _
    %p224 = scmp.lt.s32.totalorder %s13, 2
    // Predicated region
    $region37: #{mil_forward.1} parent=5 // pred_check
      %p225 = pneg %p224
    $region38: #{mil_forward.1} parent=5 // pred_check_branch
      %227 = sbr.rel (%p225) target = $region40
    $region39: #{mil_forward.1} parent=5 // pred_region
      // Predicated region
      $region41: #{mil_forward.1} parent=39 // pred_check
        %p228 = pneg %p33
      $region42: #{mil_forward.1} parent=39 // pred_check_branch
        %230 = sbr.rel (%p228) target = $region44
      $region43: #{mil_forward.1} parent=39 // pred_region
        %s231 = smul.u32 4, %s13
        %p232 = scmp.lt.s32.totalorder %s231, 7
        %s233 = scalar_select %p232, %s231, 7
        %s234 = smul.addr %s233, 4
        %s235 = scalar_lea.vmem %s0, %s234
        %s236 = smul.u32 4, %s13
      $region44: #{mil_forward.1} parent=39 // pred_fallthru
        _
    $region40: #{mil_forward.1} parent=5 // pred_fallthru
      _
    %p237 = scmp.le.s32.totalorder 1, %s13
    %p238 = scmp.lt.s32.totalorder %s13, 3
    %p239 = pnand %p237, %p238
    %p240 = pneg %p239
    // Predicated region
    $region45: #{mil_forward.1} parent=5 // pred_check
      _
    $region46: #{mil_forward.1} parent=5 // pred_check_branch
      %242 = sbr.rel (%p239) target = $region48
    $region47: #{mil_forward.1} parent=5 // pred_region
      %s243 = ssub.s32 %s13, 1
      %s244 = smul.u32 4, %s18
      %p245 = scmp.lt.s32.totalorder %s244, 7
      %s246 = scalar_select %p245, %s244, 7
      %s247 = smul.addr %s246, 4
      %s248 = scalar_lea.vmem %s0, %s247
      %p249 = pneg %p39
      %p250 = pneg %p36
      %p251 = pneg %p60
      %p252 = pneg %p57
      %p253 = pneg %p81
      %p254 = pneg %p78
      %p255 = pneg %p102
      %p256 = pneg %p99
      %p257 = pneg %p123
      %p258 = pneg %p120
      %p259 = pneg %p144
      %p260 = pneg %p141
      %p261 = pneg %p165
      %p262 = pneg %p162
      %p263 = pneg %p191
      %p264 = pneg %p188
      %s265 = smul.u32 4, %s18
      %p266 = scmp.lt.s32.totalorder %s265, 7
      %s267 = scalar_select %p266, %s265, 7
      %s268 = smul.addr %s267, 7
      %s269 = smul.addr %s268, 8
      %s270 = scalar_lea.vmem %s7, %s269
      %s271 = smul.u32 4, %s18
      %p272 = scmp.lt.s32.totalorder %s271, 7
      %s273 = scalar_select %p272, %s271, 7
      %s274 = smul.addr %s273, 4
      %s275 = scalar_lea.vmem %s0, %s274
      %s276 = smul.u32 4, %s18
      %s277 = smul.u32 4, %s18
      %p278 = scmp.lt.s32.totalorder %s277, 7
      %s279 = scalar_select %p278, %s277, 7
      %s280 = smul.addr %s279, 7
      %s281 = smul.addr %s280, 8
      %s282 = scalar_lea.vmem %s7, %s281
      %s283 = smul.u32 4, %s18
      %v285 = vld [vmem:[%s275] sm:$0xf]
      %v286 = vld [vmem:[%s275 + $0x4] sm:$0xf]
      %v287 = vld [vmem:[%s275 + $0x8] sm:$0xf]
      %v288 = vld [vmem:[%s275 + $0xc] sm:$0xf]
      %v289 = vld [vmem:[%s1] sm:$0xf]
      %v290 = vld [vmem:[%s1 + $0x4] sm:$0xf]
      %v291 = vld [vmem:[%s1 + $0x8] sm:$0x3]
      %v292 = vld [vmem:[%s2] sm:$0xff]
      %v293 = vld [vmem:[%s2 + $0x8] sm:$0xff]
      %v294 = vld [vmem:[%s2 + $0x10] sm:$0xf]
      %v295 = vld [vmem:[%s3] sm:$0xff]
      %v296 = vld [vmem:[%s3 + $0x8] sm:$0xff]
      %v297 = vld [vmem:[%s3 + $0x10] sm:$0xff]
      %v298 = vld [vmem:[%s3 + $0x18] sm:$0xff]
      %v299 = vld [vmem:[%s3 + $0x20] sm:$0xff]
      %v300 = vld [vmem:[%s3 + $0x28] sm:$0xff]
      %v301 = vld [vmem:[%s3 + $0x30] sm:$0xff]
      %v302 = vld [vmem:[%s3 + $0x38] sm:$0xff]
      %v303 = vld [vmem:[%s3 + $0x40] sm:$0xff]
      %v304 = vld [vmem:[%s3 + $0x48] sm:$0xff]
      %v305 = vld [vmem:[%s3 + $0x50] sm:$0xff]
      %v306 = vld [vmem:[%s3 + $0x58] sm:$0xff]
      %v307 = vld [vmem:[%s3 + $0x60] sm:$0xff]
      %v308 = vld [vmem:[%s3 + $0x68] sm:$0xff]
      %v309 = vld [vmem:[%s3 + $0x70] sm:$0xff]
      %v310 = vld [vmem:[%s3 + $0x78] sm:$0xff]
      %v311 = vld [vmem:[%s3 + $0x80] sm:$0xff]
      %v312 = vld [vmem:[%s3 + $0x88] sm:$0xff]
      %v313 = vld [vmem:[%s3 + $0x90] sm:$0xff]
      %v314 = vld [vmem:[%s3 + $0x98] sm:$0xff]
      %v315 = vld [vmem:[%s3 + $0xa0] sm:$0xff]
      %v316 = vld [vmem:[%s3 + $0xa8] sm:$0xff]
      %v317 = vld [vmem:[%s3 + $0xb0] sm:$0xff]
      %v318 = vld [vmem:[%s3 + $0xb8] sm:$0xff]
      %v319 = vld [vmem:[%s3 + $0xc0] sm:$0xff]
      %v320 = vld [vmem:[%s3 + $0xc8] sm:$0xff]
      %v321 = vld [vmem:[%s3 + $0xd0] sm:$0xff]
      %v322 = vld [vmem:[%s3 + $0xd8] sm:$0xff]
      %v323 = vld [vmem:[%s3 + $0xe0] sm:$0xff]
      %v324 = vld [vmem:[%s3 + $0xe8] sm:$0xff]
      %v325 = vld [vmem:[%s3 + $0xf0] sm:$0xff]
      %v326 = vld [vmem:[%s3 + $0xf8] sm:$0xff]
      %v327 = vld [vmem:[%s3 + $0x100] sm:$0xff]
      %v328 = vld [vmem:[%s3 + $0x108] sm:$0xff]
      %v329 = vld [vmem:[%s3 + $0x110] sm:$0xff]
      %v330 = vld [vmem:[%s3 + $0x118] sm:$0xff]
      %v331 = vld [vmem:[%s3 + $0x120] sm:$0xff]
      %v332 = vld [vmem:[%s4] sm:$0xff]
      %v333 = vld [vmem:[%s4 + $0x8] sm:$0xff]
      %v334 = vld [vmem:[%s4 + $0x10] sm:$0xff]
      %v335 = vld [vmem:[%s4 + $0x18] sm:$0xff]
      %v336 = vld [vmem:[%s4 + $0x20] sm:$0xff]
      %v337 = vld [vmem:[%s4 + $0x28] sm:$0xff]
      %v338 = vld [vmem:[%s4 + $0x30] sm:$0xff]
      %v339 = vld [vmem:[%s4 + $0x38] sm:$0xff]
      %v340 = vld [vmem:[%s4 + $0x40] sm:$0xff]
      %v341 = vld [vmem:[%s4 + $0x48] sm:$0xff]
      %v342 = vld [vmem:[%s4 + $0x50] sm:$0xff]
      %v343 = vld [vmem:[%s4 + $0x58] sm:$0xff]
      %v344 = vld [vmem:[%s4 + $0x60] sm:$0x11]
      %v345 = vld [vmem:[%s4 + $0x68] sm:$0x11]
      %v346 = vld [vmem:[%s5] sm:$0xff]
      %v347 = vld [vmem:[%s5 + $0x8] sm:$0xff]
      %v348 = vld [vmem:[%s5 + $0x10] sm:$0xff]
      %v349 = vld [vmem:[%s5 + $0x18] sm:$0xff]
      %v350 = vld [vmem:[%s5 + $0x20] sm:$0xff]
      %v351 = vld [vmem:[%s5 + $0x28] sm:$0xff]
      %v352 = vld [vmem:[%s5 + $0x30] sm:$0x3]
      %v353 = vld [vmem:[%s6] sm:$0xff]
      %v354 = vld [vmem:[%s6 + $0x8] sm:$0xff]
      %v355 = vld [vmem:[%s6 + $0x10] sm:$0xff]
      %v356 = vld [vmem:[%s6 + $0x18] sm:$0xff]
      %v357 = vld [vmem:[%s6 + $0x20] sm:$0xff]
      %v358 = vld [vmem:[%s6 + $0x28] sm:$0xff]
      %v359 = vld [vmem:[%s6 + $0x30] sm:$0xff]
      %v360 = vld [vmem:[%s6 + $0x38] sm:$0xff]
      %v361 = vld [vmem:[%s6 + $0x40] sm:$0xff]
      %v362 = vld [vmem:[%s6 + $0x48] sm:$0xff]
      %v363 = vlaneseq
      %vm364 = vcmp.ge.s32.totalorder %v363, 0
      %vm365 = vcmp.lt.s32.totalorder %v363, 384
      %vm366 = vmand %vm364, %vm365
      %367 = vst.msk [vmem:[#allocation2] ss:$8 sm:$0x7] %vm366, %v285
      %368 = vst.msk [vmem:[#allocation2] ss:$8 sm:$0x0] %vm366, %v285
      %370 = vrot.lane.b32.xlu0 %v285, 127
      %v371 = vpop.permute.xlu0 %370
      %v372 = vrot.slane %v371, 1
      %vm373 = vcmask 1039360
      %v374 = vsel %vm373, %v371, %v372
      %s376 = scalar_lea.vmem [#allocation2], 1
      %377 = vst.msk [vmem:[%s376] ss:$8 sm:$0x7] %vm366, %v374
      %378 = vst.msk [vmem:[%s376] ss:$8 sm:$0x0] %vm366, %v374
      %379 = vrot.lane.b32.xlu0 %v285, 126
      %v380 = vpop.permute.xlu0 %379
      %v381 = vrot.slane %v380, 1
      %vm382 = vcmask 1031168
      %v383 = vsel %vm382, %v380, %v381
      %s385 = scalar_lea.vmem [#allocation2], 2
      %386 = vst.msk [vmem:[%s385] ss:$8 sm:$0x7] %vm366, %v383
      %387 = vst.msk [vmem:[%s385] ss:$8 sm:$0x0] %vm366, %v383
      %388 = vrot.lane.b32.xlu0 %v285, 125
      %v389 = vpop.permute.xlu0 %388
      %v390 = vrot.slane %v389, 1
      %vm391 = vcmask 1022976
      %v392 = vsel %vm391, %v389, %v390
      %s394 = scalar_lea.vmem [#allocation2], 3
      %395 = vst.msk [vmem:[%s394] ss:$8 sm:$0x7] %vm366, %v392
      %396 = vst.msk [vmem:[%s394] ss:$8 sm:$0x0] %vm366, %v392
      %397 = vrot.lane.b32.xlu0 %v285, 124
      %v398 = vpop.permute.xlu0 %397
      %v399 = vrot.slane %v398, 1
      %vm400 = vcmask 1014784
      %v401 = vsel %vm400, %v398, %v399
      %s403 = scalar_lea.vmem [#allocation2], 4
      %404 = vst.msk [vmem:[%s403] ss:$8 sm:$0x7] %vm366, %v401
      %405 = vst.msk [vmem:[%s403] ss:$8 sm:$0x0] %vm366, %v401
      %406 = vrot.lane.b32.xlu0 %v285, 108
      %v407 = vpop.permute.xlu0 %406
      %v408 = vrot.slane %v407, 1
      %vm409 = vcmask 883712
      %v410 = vsel %vm409, %v407, %v408
      %s412 = scalar_lea.vmem [#allocation2], 5
      %413 = vst.msk [vmem:[%s412] ss:$8 sm:$0x7] %vm366, %v410
      %414 = vst.msk [vmem:[%s412] ss:$8 sm:$0x0] %vm366, %v410
      %415 = vrot.lane.b32.xlu0 %v285, 107
      %v416 = vpop.permute.xlu0 %415
      %v417 = vrot.slane %v416, 1
      %vm418 = vcmask 875520
      %v419 = vsel %vm418, %v416, %v417
      %s421 = scalar_lea.vmem [#allocation2], 6
      %422 = vst.msk [vmem:[%s421] ss:$8 sm:$0x7] %vm366, %v419
      %423 = vst.msk [vmem:[%s421] ss:$8 sm:$0x0] %vm366, %v419
      %424 = vrot.lane.b32.xlu0 %v285, 106
      %v425 = vpop.permute.xlu0 %424
      %v426 = vrot.slane %v425, 1
      %vm427 = vcmask 867328
      %v428 = vsel %vm427, %v425, %v426
      %s430 = scalar_lea.vmem [#allocation2], 7
      %431 = vst.msk [vmem:[%s430] ss:$8 sm:$0x7] %vm366, %v428
      %432 = vst.msk [vmem:[%s430] ss:$8 sm:$0x0] %vm366, %v428
      %433 = vrot.lane.b32.xlu0 %v285, 105
      %v434 = vpop.permute.xlu0 %433
      %v435 = vrot.slane %v434, 1
      %vm436 = vcmask 859136
      %v437 = vsel %vm436, %v434, %v435
      %s439 = scalar_lea.vmem [#allocation2], 24
      %440 = vst.msk [vmem:[%s439] ss:$8 sm:$0x7] %vm366, %v437
      %441 = vst.msk [vmem:[%s439] ss:$8 sm:$0x0] %vm366, %v437
      %442 = vrot.lane.b32.xlu0 %v285, 104
      %v443 = vpop.permute.xlu0 %442
      %v444 = vrot.slane %v443, 1
      %vm445 = vcmask 850944
      %v446 = vsel %vm445, %v443, %v444
      %s448 = scalar_lea.vmem [#allocation2], 25
      %449 = vst.msk [vmem:[%s448] ss:$8 sm:$0x7] %vm366, %v446
      %450 = vst.msk [vmem:[%s448] ss:$8 sm:$0x0] %vm366, %v446
      %451 = vrot.lane.b32.xlu0 %v285, 88
      %v452 = vpop.permute.xlu0 %451
      %v453 = vrot.slane %v452, 1
      %vm454 = vcmask 719872
      %v455 = vsel %vm454, %v452, %v453
      %s457 = scalar_lea.vmem [#allocation2], 26
      %458 = vst.msk [vmem:[%s457] ss:$8 sm:$0x7] %vm366, %v455
      %459 = vst.msk [vmem:[%s457] ss:$8 sm:$0x0] %vm366, %v455
      %460 = vrot.lane.b32.xlu0 %v285, 87
      %v461 = vpop.permute.xlu0 %460
      %v462 = vrot.slane %v461, 1
      %vm463 = vcmask 711680
      %v464 = vsel %vm463, %v461, %v462
      %s466 = scalar_lea.vmem [#allocation2], 27
      %467 = vst.msk [vmem:[%s466] ss:$8 sm:$0x7] %vm366, %v464
      %468 = vst.msk [vmem:[%s466] ss:$8 sm:$0x0] %vm366, %v464
      %469 = vrot.lane.b32.xlu0 %v285, 86
      %v470 = vpop.permute.xlu0 %469
      %v471 = vrot.slane %v470, 1
      %vm472 = vcmask 703488
      %v473 = vsel %vm472, %v470, %v471
      %s475 = scalar_lea.vmem [#allocation2], 28
      %476 = vst.msk [vmem:[%s475] ss:$8 sm:$0x7] %vm366, %v473
      %477 = vst.msk [vmem:[%s475] ss:$8 sm:$0x0] %vm366, %v473
      %478 = vrot.lane.b32.xlu0 %v285, 85
      %v479 = vpop.permute.xlu0 %478
      %v480 = vrot.slane %v479, 1
      %vm481 = vcmask 695296
      %v482 = vsel %vm481, %v479, %v480
      %s484 = scalar_lea.vmem [#allocation2], 29
      %485 = vst.msk [vmem:[%s484] ss:$8 sm:$0x7] %vm366, %v482
      %486 = vst.msk [vmem:[%s484] ss:$8 sm:$0x0] %vm366, %v482
      %487 = vrot.lane.b32.xlu0 %v285, 84
      %v488 = vpop.permute.xlu0 %487
      %v489 = vrot.slane %v488, 1
      %vm490 = vcmask 687104
      %v491 = vsel %vm490, %v488, %v489
      %s493 = scalar_lea.vmem [#allocation2], 30
      %494 = vst.msk [vmem:[%s493] ss:$8 sm:$0x7] %vm366, %v491
      %495 = vst.msk [vmem:[%s493] ss:$8 sm:$0x0] %vm366, %v491
      %496 = vrot.lane.b32.xlu0 %v285, 68
      %v497 = vpop.permute.xlu0 %496
      %v498 = vrot.slane %v497, 1
      %vm499 = vcmask 556032
      %v500 = vsel %vm499, %v497, %v498
      %s502 = scalar_lea.vmem [#allocation2], 31
      %503 = vst.msk [vmem:[%s502] ss:$8 sm:$0x7] %vm366, %v500
      %504 = vst.msk [vmem:[%s502] ss:$8 sm:$0x0] %vm366, %v500
      %505 = vrot.lane.b32.xlu0 %v285, 67
      %v506 = vpop.permute.xlu0 %505
      %v507 = vrot.slane %v506, 1
      %vm508 = vcmask 547840
      %v509 = vsel %vm508, %v506, %v507
      %s511 = scalar_lea.vmem [#allocation2], 48
      %512 = vst.msk [vmem:[%s511] ss:$8 sm:$0x7] %vm366, %v509
      %513 = vst.msk [vmem:[%s511] ss:$8 sm:$0x0] %vm366, %v509
      %514 = vrot.lane.b32.xlu0 %v285, 66
      %v515 = vpop.permute.xlu0 %514
      %v516 = vrot.slane %v515, 1
      %vm517 = vcmask 539648
      %v518 = vsel %vm517, %v515, %v516
      %s520 = scalar_lea.vmem [#allocation2], 49
      %521 = vst.msk [vmem:[%s520] ss:$8 sm:$0x7] %vm366, %v518
      %522 = vst.msk [vmem:[%s520] ss:$8 sm:$0x0] %vm366, %v518
      %523 = vrot.lane.b32.xlu0 %v285, 65
      %v524 = vpop.permute.xlu0 %523
      %v525 = vrot.slane %v524, 1
      %vm526 = vcmask 531456
      %v527 = vsel %vm526, %v524, %v525
      %s529 = scalar_lea.vmem [#allocation2], 50
      %530 = vst.msk [vmem:[%s529] ss:$8 sm:$0x7] %vm366, %v527
      %531 = vst.msk [vmem:[%s529] ss:$8 sm:$0x0] %vm366, %v527
      %532 = vrot.lane.b32.xlu0 %v285, 64
      %v533 = vpop.permute.xlu0 %532
      %v534 = vrot.slane %v533, 1
      %vm535 = vcmask 523264
      %v536 = vsel %vm535, %v533, %v534
      %s538 = scalar_lea.vmem [#allocation2], 51
      %539 = vst.msk [vmem:[%s538] ss:$8 sm:$0x7] %vm366, %v536
      %540 = vst.msk [vmem:[%s538] ss:$8 sm:$0x0] %vm366, %v536
      %541 = vrot.lane.b32.xlu0 %v285, 48
      %v542 = vpop.permute.xlu0 %541
      %v543 = vrot.slane %v542, 1
      %vm544 = vcmask 392192
      %v545 = vsel %vm544, %v542, %v543
      %s547 = scalar_lea.vmem [#allocation2], 52
      %548 = vst.msk [vmem:[%s547] ss:$8 sm:$0x7] %vm366, %v545
      %549 = vst.msk [vmem:[%s547] ss:$8 sm:$0x0] %vm366, %v545
      %550 = vrot.lane.b32.xlu0 %v285, 47
      %v551 = vpop.permute.xlu0 %550
      %v552 = vrot.slane %v551, 1
      %vm553 = vcmask 384000
      %v554 = vsel %vm553, %v551, %v552
      %s556 = scalar_lea.vmem [#allocation2], 53
      %557 = vst.msk [vmem:[%s556] ss:$8 sm:$0x7] %vm366, %v554
      %558 = vst.msk [vmem:[%s556] ss:$8 sm:$0x0] %vm366, %v554
      %559 = vrot.lane.b32.xlu0 %v285, 46
      %v560 = vpop.permute.xlu0 %559
      %v561 = vrot.slane %v560, 1
      %vm562 = vcmask 375808
      %v563 = vsel %vm562, %v560, %v561
      %s565 = scalar_lea.vmem [#allocation2], 54
      %566 = vst.msk [vmem:[%s565] ss:$8 sm:$0x7] %vm366, %v563
      %567 = vst.msk [vmem:[%s565] ss:$8 sm:$0x0] %vm366, %v563
      %568 = vrot.lane.b32.xlu0 %v285, 45
      %v569 = vpop.permute.xlu0 %568
      %v570 = vrot.slane %v569, 1
      %vm571 = vcmask 367616
      %v572 = vsel %vm571, %v569, %v570
      %s574 = scalar_lea.vmem [#allocation2], 55
      %575 = vst.msk [vmem:[%s574] ss:$8 sm:$0x7] %vm366, %v572
      %576 = vst.msk [vmem:[%s574] ss:$8 sm:$0x0] %vm366, %v572
      %577 = vrot.lane.b32.xlu0 %v285, 44
      %v578 = vpop.permute.xlu0 %577
      %v579 = vrot.slane %v578, 1
      %vm580 = vcmask 359424
      %v581 = vsel %vm580, %v578, %v579
      %s583 = scalar_lea.vmem [#allocation2], 72
      %584 = vst.msk [vmem:[%s583] ss:$8 sm:$0x7] %vm366, %v581
      %585 = vst.msk [vmem:[%s583] ss:$8 sm:$0x0] %vm366, %v581
      %v586 = vld [vmem:[#allocation2] sm:$0xff]
      %v587 = vld [vmem:[#allocation2 + $0x8] sm:$0xff]
      %v588 = vld [vmem:[#allocation2 + $0x10] sm:$0xff]
      %v589 = vld [vmem:[#allocation2 + $0x18] sm:$0xff]
      %v590 = vld [vmem:[#allocation2 + $0x20] sm:$0xff]
      %v591 = vld [vmem:[#allocation2 + $0x28] sm:$0xff]
      %v592 = vld [vmem:[#allocation2 + $0x30] sm:$0xff]
      %v593 = vld [vmem:[#allocation2 + $0x38] sm:$0xff]
      %v594 = vld [vmem:[#allocation2 + $0x40] sm:$0xff]
      %v595 = vld [vmem:[#allocation2 + $0x48] sm:$0x1]
      %v596 = vld [vmem:[#allocation2 + $0x50] sm:$0x1]
      %v597 = vld [vmem:[#allocation2 + $0x58] sm:$0x1]
      %v598 = vpack.c.bf16 %v589, %v586
      %v599 = vpack.c.bf16 %v590, %v587
      %v600 = vpack.c.bf16 %v591, %v588
      %v601 = vpack.c.bf16 %v595, %v592
      %v602 = vpack.c.bf16 %v596, %v593
      %v603 = vpack.c.bf16 %v597, %v594
      %605 = vset.pattern.permute.xlu0 0
      %606 = vperm.xlu0 %605, %v292
      %v607 = vpop.permute.xlu0 %606
      %610 = vset.pattern.permute.xlu0 0
      %611 = vperm.xlu0 %610, %v293
      %v612 = vpop.permute.xlu0 %611
      %615 = vset.pattern.permute.xlu0 0
      %616 = vperm.xlu0 %615, %v294
      %v617 = vpop.permute.xlu0 %616
      %v622 = vunpack.c.l.b16 %v289
      %v623 = vunpack.c.l.b16 %v290
      %v624 = vunpack.c.l.b16 %v291
      %v625 = vpack.c.b16 %v623, %v622
      %v626 = vpack.c.b16 %v624, %v624
      %vm627 = vcmask 203776
      %v629 = vsel %vm627, %v625, 0
      %v632 = vsel %vm627, %v626, 0
      %vm634 = vcmask 1043456
      %vm635 = vcmask 1044480
      %v636 = vsel %vm634, 4294967295, 65535
      %v637 = vsel %vm635, %v636, 0
      %v639 = vand.u32 %v601, %v637
      %v642 = vand.u32 %v602, %v637
      %v645 = vand.u32 %v603, %v637
      %647 = vmatpush.bf16.msra.mxu0 0
      %648 = vmatpush.bf16.msra.mxu0 0
      %649 = vmatpush.bf16.msra.mxu0 0
      %650 = vmatpush.bf16.msra.mxu0 0
      %651 = vmatpush.bf16.msra.mxu0 0
      %652 = vmatpush.bf16.msra.mxu0 0
      %653 = vmatpush.bf16.msra.mxu0 %v639
      %654 = vmatpush.bf16.msra.mxu0 %v598
      %655 = vmatmul.bf16.gmra.mxu0 %v629
      %v656 = vpop.f32.mrf.mxu0
      %v657 = vadd.f32 %v607, %v656
      %v658 = vpop.f32.mrf.mxu0
      %v659 = vadd.f32 %v612, %v658
      %660 = vmatmul.bf16.gmra.mxu0 %v632
      %v661 = vpop.f32.mrf.mxu0
      %v662 = vadd.f32 %v617, %v661
      %v663 = vpop.f32.mrf.mxu0
      %664 = vdwg.mxu0
      %665 = vmatpush.bf16.msra.mxu0 0
      %666 = vmatpush.bf16.msra.mxu0 0
      %667 = vmatpush.bf16.msra.mxu0 0
      %668 = vmatpush.bf16.msra.mxu0 0
      %669 = vmatpush.bf16.msra.mxu0 0
      %670 = vmatpush.bf16.msra.mxu0 0
      %671 = vmatpush.bf16.msra.mxu0 %v642
      %672 = vmatpush.bf16.msra.mxu0 %v599
      %673 = vmatmul.bf16.gmra.mxu0 %v629
      %v674 = vpop.f32.mrf.mxu0
      %v675 = vadd.f32 %v607, %v674
      %v676 = vpop.f32.mrf.mxu0
      %v677 = vadd.f32 %v612, %v676
      %678 = vmatmul.bf16.gmra.mxu0 %v632
      %v679 = vpop.f32.mrf.mxu0
      %v680 = vadd.f32 %v617, %v679
      %v681 = vpop.f32.mrf.mxu0
      %682 = vdwg.mxu0
      %683 = vmatpush.bf16.msra.mxu0 0
      %684 = vmatpush.bf16.msra.mxu0 0
      %685 = vmatpush.bf16.msra.mxu0 0
      %686 = vmatpush.bf16.msra.mxu0 0
      %687 = vmatpush.bf16.msra.mxu0 0
      %688 = vmatpush.bf16.msra.mxu0 0
      %689 = vmatpush.bf16.msra.mxu0 %v645
      %690 = vmatpush.bf16.msra.mxu0 %v600
      %691 = vmatmul.bf16.gmra.mxu0 %v629
      %v692 = vpop.f32.mrf.mxu0
      %v693 = vadd.f32 %v607, %v692
      %v694 = vpop.f32.mrf.mxu0
      %v695 = vadd.f32 %v612, %v694
      %696 = vmatmul.bf16.gmra.mxu0 %v632
      %v697 = vpop.f32.mrf.mxu0
      %v698 = vadd.f32 %v617, %v697
      %v699 = vpop.f32.mrf.mxu0
      %700 = vdwg.mxu0
      %v701 = vmax.f32 %v657, 0.0
      %v702 = vmax.f32 %v675, 0.0
      %v703 = vmax.f32 %v693, 0.0
      %v704 = vmax.f32 %v659, 0.0
      %v705 = vmax.f32 %v677, 0.0
      %v706 = vmax.f32 %v695, 0.0
      %v707 = vmax.f32 %v662, 0.0
      %v708 = vmax.f32 %v680, 0.0
      %v709 = vmax.f32 %v698, 0.0
      %719 = vrot.lane.b32.xlu0 %v701, 127
      %v720 = vpop.permute.xlu0 %719
      %721 = vrot.lane.b32.xlu0 %v702, 127
      %v722 = vpop.permute.xlu0 %721
      %723 = vrot.lane.b32.xlu0 %v703, 127
      %v724 = vpop.permute.xlu0 %723
      %725 = vrot.lane.b32.xlu0 %v704, 127
      %v726 = vpop.permute.xlu0 %725
      %727 = vrot.lane.b32.xlu0 %v705, 127
      %v728 = vpop.permute.xlu0 %727
      %729 = vrot.lane.b32.xlu0 %v706, 127
      %v730 = vpop.permute.xlu0 %729
      %731 = vrot.lane.b32.xlu0 %v707, 127
      %v732 = vpop.permute.xlu0 %731
      %733 = vrot.lane.b32.xlu0 %v708, 127
      %v734 = vpop.permute.xlu0 %733
      %735 = vrot.lane.b32.xlu0 %v709, 127
      %v736 = vpop.permute.xlu0 %735
      %v737 = vsel %vm373, %v720, %v722
      %v738 = vsel %vm373, %v722, %v724
      %v739 = vsel %vm373, %v726, %v728
      %v740 = vsel %vm373, %v728, %v730
      %v741 = vsel %vm373, %v732, %v734
      %v742 = vsel %vm373, %v734, %v736
      %v752 = vmax.f32 %v701, %v737
      %v753 = vmax.f32 %v702, %v738
      %v754 = vmax.f32 %v703, %v724
      %v755 = vmax.f32 %v704, %v739
      %v756 = vmax.f32 %v705, %v740
      %v757 = vmax.f32 %v706, %v730
      %v758 = vmax.f32 %v707, %v741
      %v759 = vmax.f32 %v708, %v742
      %v760 = vmax.f32 %v709, %v736
      %770 = vrot.lane.b32.xlu0 %v752, 108
      %v771 = vpop.permute.xlu0 %770
      %772 = vrot.lane.b32.xlu0 %v753, 108
      %v773 = vpop.permute.xlu0 %772
      %774 = vrot.lane.b32.xlu0 %v754, 108
      %v775 = vpop.permute.xlu0 %774
      %776 = vrot.lane.b32.xlu0 %v755, 108
      %v777 = vpop.permute.xlu0 %776
      %778 = vrot.lane.b32.xlu0 %v756, 108
      %v779 = vpop.permute.xlu0 %778
      %780 = vrot.lane.b32.xlu0 %v757, 108
      %v781 = vpop.permute.xlu0 %780
      %782 = vrot.lane.b32.xlu0 %v758, 108
      %v783 = vpop.permute.xlu0 %782
      %784 = vrot.lane.b32.xlu0 %v759, 108
      %v785 = vpop.permute.xlu0 %784
      %786 = vrot.lane.b32.xlu0 %v760, 108
      %v787 = vpop.permute.xlu0 %786
      %v788 = vsel %vm409, %v771, %v773
      %v789 = vsel %vm409, %v773, %v775
      %v790 = vsel %vm409, %v777, %v779
      %v791 = vsel %vm409, %v779, %v781
      %v792 = vsel %vm409, %v783, %v785
      %v793 = vsel %vm409, %v785, %v787
      %v803 = vmax.f32 %v752, %v788
      %v804 = vmax.f32 %v753, %v789
      %v805 = vmax.f32 %v754, %v775
      %v806 = vmax.f32 %v755, %v790
      %v807 = vmax.f32 %v756, %v791
      %v808 = vmax.f32 %v757, %v781
      %v809 = vmax.f32 %v758, %v792
      %v810 = vmax.f32 %v759, %v793
      %v811 = vmax.f32 %v760, %v787
      %v812 = vpack.c.bf16 %v806, %v803
      %v813 = vpack.c.bf16 %v807, %v804
      %v814 = vpack.c.bf16 %v808, %v805
      %v815 = vpack.c.bf16 %v809, %v809
      %v816 = vpack.c.bf16 %v810, %v810
      %v817 = vpack.c.bf16 %v811, %v811
      %v855 = vunpack.c.l.b16 %v295
      %v856 = vunpack.c.h.b16 %v295
      %v857 = vunpack.c.l.b16 %v296
      %v858 = vunpack.c.h.b16 %v296
      %v859 = vunpack.c.l.b16 %v297
      %v860 = vunpack.c.h.b16 %v297
      %v861 = vunpack.c.l.b16 %v298
      %v862 = vunpack.c.h.b16 %v298
      %v863 = vunpack.c.l.b16 %v299
      %v864 = vunpack.c.h.b16 %v299
      %v865 = vunpack.c.l.b16 %v300
      %v866 = vunpack.c.h.b16 %v300
      %v867 = vunpack.c.l.b16 %v301
      %v868 = vunpack.c.h.b16 %v301
      %v869 = vunpack.c.l.b16 %v302
      %v870 = vunpack.c.h.b16 %v302
      %v871 = vunpack.c.l.b16 %v303
      %v872 = vunpack.c.h.b16 %v303
      %v873 = vunpack.c.l.b16 %v304
      %v874 = vunpack.c.h.b16 %v304
      %v875 = vunpack.c.l.b16 %v305
      %v876 = vunpack.c.h.b16 %v305
      %v877 = vunpack.c.l.b16 %v306
      %v878 = vunpack.c.h.b16 %v306
      %v879 = vunpack.c.l.b16 %v307
      %v880 = vunpack.c.h.b16 %v307
      %v881 = vunpack.c.l.b16 %v308
      %v882 = vunpack.c.h.b16 %v308
      %v883 = vunpack.c.l.b16 %v309
      %v884 = vunpack.c.h.b16 %v309
      %v885 = vunpack.c.l.b16 %v310
      %v886 = vunpack.c.h.b16 %v310
      %v887 = vunpack.c.l.b16 %v311
      %v888 = vunpack.c.h.b16 %v311
      %v889 = vunpack.c.l.b16 %v312
      %v890 = vunpack.c.h.b16 %v312
      %v891 = vunpack.c.l.b16 %v313
      %v892 = vunpack.c.h.b16 %v313
      %v893 = vunpack.c.l.b16 %v314
      %v894 = vunpack.c.h.b16 %v314
      %v895 = vunpack.c.l.b16 %v315
      %v896 = vunpack.c.h.b16 %v315
      %v897 = vunpack.c.l.b16 %v316
      %v898 = vunpack.c.h.b16 %v316
      %v899 = vunpack.c.l.b16 %v317
      %v900 = vunpack.c.h.b16 %v317
      %v901 = vunpack.c.l.b16 %v318
      %v902 = vunpack.c.h.b16 %v318
      %v903 = vunpack.c.l.b16 %v319
      %v904 = vunpack.c.h.b16 %v319
      %v905 = vunpack.c.l.b16 %v320
      %v906 = vunpack.c.h.b16 %v320
      %v907 = vunpack.c.l.b16 %v321
      %v908 = vunpack.c.h.b16 %v321
      %v909 = vunpack.c.l.b16 %v322
      %v910 = vunpack.c.h.b16 %v322
      %v911 = vunpack.c.l.b16 %v323
      %v912 = vunpack.c.h.b16 %v323
      %v913 = vunpack.c.l.b16 %v324
      %v914 = vunpack.c.h.b16 %v324
      %v915 = vunpack.c.l.b16 %v325
      %v916 = vunpack.c.h.b16 %v325
      %v917 = vunpack.c.l.b16 %v326
      %v918 = vunpack.c.h.b16 %v326
      %v919 = vunpack.c.l.b16 %v327
      %v920 = vunpack.c.h.b16 %v327
      %v921 = vunpack.c.l.b16 %v328
      %v922 = vunpack.c.h.b16 %v328
      %v923 = vunpack.c.l.b16 %v329
      %v924 = vunpack.c.h.b16 %v329
      %v925 = vunpack.c.l.b16 %v330
      %v926 = vunpack.c.h.b16 %v330
      %v927 = vunpack.c.l.b16 %v331
      %v928 = vunpack.c.h.b16 %v331
      %v929 = vpack.c.b16 %v857, %v855
      %v930 = vpack.c.b16 %v858, %v856
      %v931 = vpack.c.b16 %v861, %v859
      %v932 = vpack.c.b16 %v862, %v860
      %v933 = vpack.c.b16 %v865, %v863
      %v934 = vpack.c.b16 %v866, %v864
      %v935 = vpack.c.b16 %v869, %v867
      %v936 = vpack.c.b16 %v870, %v868
      %v937 = vpack.c.b16 %v873, %v871
      %v938 = vpack.c.b16 %v874, %v872
      %v939 = vpack.c.b16 %v877, %v875
      %v940 = vpack.c.b16 %v878, %v876
      %v941 = vpack.c.b16 %v881, %v879
      %v942 = vpack.c.b16 %v882, %v880
      %v943 = vpack.c.b16 %v885, %v883
      %v944 = vpack.c.b16 %v886, %v884
      %v945 = vpack.c.b16 %v889, %v887
      %v946 = vpack.c.b16 %v890, %v888
      %v947 = vpack.c.b16 %v893, %v891
      %v948 = vpack.c.b16 %v894, %v892
      %v949 = vpack.c.b16 %v897, %v895
      %v950 = vpack.c.b16 %v898, %v896
      %v951 = vpack.c.b16 %v901, %v899
      %v952 = vpack.c.b16 %v902, %v900
      %v953 = vpack.c.b16 %v905, %v903
      %v954 = vpack.c.b16 %v906, %v904
      %v955 = vpack.c.b16 %v909, %v907
      %v956 = vpack.c.b16 %v910, %v908
      %v957 = vpack.c.b16 %v913, %v911
      %v958 = vpack.c.b16 %v914, %v912
      %v959 = vpack.c.b16 %v917, %v915
      %v960 = vpack.c.b16 %v918, %v916
      %v961 = vpack.c.b16 %v921, %v919
      %v962 = vpack.c.b16 %v922, %v920
      %v963 = vpack.c.b16 %v925, %v923
      %v964 = vpack.c.b16 %v926, %v924
      %v965 = vpack.c.b16 %v927, %v927
      %v966 = vpack.c.b16 %v928, %v928
      %vm1003 = vcmask 326656
      %v1005 = vsel %vm1003, %v814, 0
      %v1008 = vsel %vm1003, %v817, 0
      %v1011 = vsel %vm634, %v965, 0
      %v1014 = vsel %vm634, %v966, 0
      %1016 = vmatpush.bf16.msra.mxu0 %v943
      %1017 = vmatpush.bf16.msra.mxu0 %v941
      %1018 = vmatpush.bf16.msra.mxu0 %v939
      %1019 = vmatpush.bf16.msra.mxu0 %v937
      %1020 = vmatpush.bf16.msra.mxu0 %v935
      %1021 = vmatpush.bf16.msra.mxu0 %v933
      %1022 = vmatpush.bf16.msra.mxu0 %v931
      %1023 = vmatpush.bf16.msra.mxu0 %v929
      %1024 = vmatmul.bf16.gmra.mxu0 %v812
      %v1025 = vpop.f32.mrf.mxu0
      %v1026 = vadd.f32 0.0, %v1025
      %v1027 = vpop.f32.mrf.mxu0
      %v1028 = vadd.f32 0.0, %v1027
      %1029 = vmatmul.bf16.gmra.mxu0 %v815
      %v1030 = vpop.f32.mrf.mxu0
      %v1031 = vadd.f32 0.0, %v1030
      %v1032 = vpop.f32.mrf.mxu0
      %1033 = vdwg.mxu0
      %1034 = vmatpush.bf16.msra.mxu0 %v959
      %1035 = vmatpush.bf16.msra.mxu0 %v957
      %1036 = vmatpush.bf16.msra.mxu0 %v955
      %1037 = vmatpush.bf16.msra.mxu0 %v953
      %1038 = vmatpush.bf16.msra.mxu0 %v951
      %1039 = vmatpush.bf16.msra.mxu0 %v949
      %1040 = vmatpush.bf16.msra.mxu0 %v947
      %1041 = vmatpush.bf16.msra.mxu0 %v945
      %1042 = vmatmul.bf16.gmra.mxu0 %v813
      %v1043 = vpop.f32.mrf.mxu0
      %v1044 = vadd.f32 %v1026, %v1043
      %v1045 = vpop.f32.mrf.mxu0
      %v1046 = vadd.f32 %v1028, %v1045
      %1047 = vmatmul.bf16.gmra.mxu0 %v816
      %v1048 = vpop.f32.mrf.mxu0
      %v1049 = vadd.f32 %v1031, %v1048
      %v1050 = vpop.f32.mrf.mxu0
      %1051 = vdwg.mxu0
      %1052 = vmatpush.bf16.msra.mxu0 0
      %1053 = vmatpush.bf16.msra.mxu0 0
      %1054 = vmatpush.bf16.msra.mxu0 0
      %1055 = vmatpush.bf16.msra.mxu0 0
      %1056 = vmatpush.bf16.msra.mxu0 0
      %1057 = vmatpush.bf16.msra.mxu0 %v1011
      %1058 = vmatpush.bf16.msra.mxu0 %v963
      %1059 = vmatpush.bf16.msra.mxu0 %v961
      %1060 = vmatmul.bf16.gmra.mxu0 %v1005
      %v1061 = vpop.f32.mrf.mxu0
      %v1062 = vadd.f32 %v1044, %v1061
      %v1063 = vpop.f32.mrf.mxu0
      %v1064 = vadd.f32 %v1046, %v1063
      %1065 = vmatmul.bf16.gmra.mxu0 %v1008
      %v1066 = vpop.f32.mrf.mxu0
      %v1067 = vadd.f32 %v1049, %v1066
      %v1068 = vpop.f32.mrf.mxu0
      %1069 = vdwg.mxu0
      %1070 = vmatpush.bf16.msra.mxu0 %v944
      %1071 = vmatpush.bf16.msra.mxu0 %v942
      %1072 = vmatpush.bf16.msra.mxu0 %v940
      %1073 = vmatpush.bf16.msra.mxu0 %v938
      %1074 = vmatpush.bf16.msra.mxu0 %v936
      %1075 = vmatpush.bf16.msra.mxu0 %v934
      %1076 = vmatpush.bf16.msra.mxu0 %v932
      %1077 = vmatpush.bf16.msra.mxu0 %v930
      %1078 = vmatmul.bf16.gmra.mxu0 %v812
      %v1079 = vpop.f32.mrf.mxu0
      %v1080 = vadd.f32 0.0, %v1079
      %v1081 = vpop.f32.mrf.mxu0
      %v1082 = vadd.f32 0.0, %v1081
      %1083 = vmatmul.bf16.gmra.mxu0 %v815
      %v1084 = vpop.f32.mrf.mxu0
      %v1085 = vadd.f32 0.0, %v1084
      %v1086 = vpop.f32.mrf.mxu0
      %1087 = vdwg.mxu0
      %1088 = vmatpush.bf16.msra.mxu0 %v960
      %1089 = vmatpush.bf16.msra.mxu0 %v958
      %1090 = vmatpush.bf16.msra.mxu0 %v956
      %1091 = vmatpush.bf16.msra.mxu0 %v954
      %1092 = vmatpush.bf16.msra.mxu0 %v952
      %1093 = vmatpush.bf16.msra.mxu0 %v950
      %1094 = vmatpush.bf16.msra.mxu0 %v948
      %1095 = vmatpush.bf16.msra.mxu0 %v946
      %1096 = vmatmul.bf16.gmra.mxu0 %v813
      %v1097 = vpop.f32.mrf.mxu0
      %v1098 = vadd.f32 %v1080, %v1097
      %v1099 = vpop.f32.mrf.mxu0
      %v1100 = vadd.f32 %v1082, %v1099
      %1101 = vmatmul.bf16.gmra.mxu0 %v816
      %v1102 = vpop.f32.mrf.mxu0
      %v1103 = vadd.f32 %v1085, %v1102
      %v1104 = vpop.f32.mrf.mxu0
      %1105 = vdwg.mxu0
      %1106 = vmatpush.bf16.msra.mxu0 0
      %1107 = vmatpush.bf16.msra.mxu0 0
      %1108 = vmatpush.bf16.msra.mxu0 0
      %1109 = vmatpush.bf16.msra.mxu0 0
      %1110 = vmatpush.bf16.msra.mxu0 0
      %1111 = vmatpush.bf16.msra.mxu0 %v1014
      %1112 = vmatpush.bf16.msra.mxu0 %v964
      %1113 = vmatpush.bf16.msra.mxu0 %v962
      %1114 = vmatmul.bf16.gmra.mxu0 %v1005
      %v1115 = vpop.f32.mrf.mxu0
      %v1116 = vadd.f32 %v1098, %v1115
      %v1117 = vpop.f32.mrf.mxu0
      %v1118 = vadd.f32 %v1100, %v1117
      %1119 = vmatmul.bf16.gmra.mxu0 %v1008
      %v1120 = vpop.f32.mrf.mxu0
      %v1121 = vadd.f32 %v1103, %v1120
      %v1122 = vpop.f32.mrf.mxu0
      %1123 = vdwg.mxu0
      %1124 = vst [vmem:[#allocation3] sm:$0xff] %v1062
      %1125 = vst [vmem:[#allocation3 + $0x8] sm:$0xff] %v1064
      %1126 = vst [vmem:[#allocation3 + $0x10] sm:$0xf] %v1067
      %1133 = vrot.lane.b32.xlu0 %v1062, 127
      %v1134 = vpop.permute.xlu0 %1133
      %1135 = vrot.lane.b32.xlu0 %v1116, 127
      %v1136 = vpop.permute.xlu0 %1135
      %1137 = vrot.lane.b32.xlu0 %v1064, 127
      %v1138 = vpop.permute.xlu0 %1137
      %1139 = vrot.lane.b32.xlu0 %v1118, 127
      %v1140 = vpop.permute.xlu0 %1139
      %1141 = vrot.lane.b32.xlu0 %v1067, 127
      %v1142 = vpop.permute.xlu0 %1141
      %1143 = vrot.lane.b32.xlu0 %v1121, 127
      %v1144 = vpop.permute.xlu0 %1143
      %v1145 = vsel %vm373, %v1134, %v1136
      %v1146 = vsel %vm373, %v1138, %v1140
      %v1147 = vsel %vm373, %v1142, %v1144
      %1151 = vst [vmem:[#allocation3 + $0x14] sm:$0xff] %v1145
      %1152 = vst [vmem:[#allocation3 + $0x1c] sm:$0xff] %v1146
      %1153 = vst [vmem:[#allocation3 + $0x24] sm:$0xf] %v1147
      %1154 = vrot.lane.b32.xlu0 %v1062, 126
      %v1155 = vpop.permute.xlu0 %1154
      %1156 = vrot.lane.b32.xlu0 %v1116, 126
      %v1157 = vpop.permute.xlu0 %1156
      %1158 = vrot.lane.b32.xlu0 %v1064, 126
      %v1159 = vpop.permute.xlu0 %1158
      %1160 = vrot.lane.b32.xlu0 %v1118, 126
      %v1161 = vpop.permute.xlu0 %1160
      %1162 = vrot.lane.b32.xlu0 %v1067, 126
      %v1163 = vpop.permute.xlu0 %1162
      %1164 = vrot.lane.b32.xlu0 %v1121, 126
      %v1165 = vpop.permute.xlu0 %1164
      %v1166 = vsel %vm382, %v1155, %v1157
      %v1167 = vsel %vm382, %v1159, %v1161
      %v1168 = vsel %vm382, %v1163, %v1165
      %1172 = vst [vmem:[#allocation3 + $0x28] sm:$0xff] %v1166
      %1173 = vst [vmem:[#allocation3 + $0x30] sm:$0xff] %v1167
      %1174 = vst [vmem:[#allocation3 + $0x38] sm:$0xf] %v1168
      %1175 = vrot.lane.b32.xlu0 %v1062, 125
      %v1176 = vpop.permute.xlu0 %1175
      %1177 = vrot.lane.b32.xlu0 %v1116, 125
      %v1178 = vpop.permute.xlu0 %1177
      %1179 = vrot.lane.b32.xlu0 %v1064, 125
      %v1180 = vpop.permute.xlu0 %1179
      %1181 = vrot.lane.b32.xlu0 %v1118, 125
      %v1182 = vpop.permute.xlu0 %1181
      %1183 = vrot.lane.b32.xlu0 %v1067, 125
      %v1184 = vpop.permute.xlu0 %1183
      %1185 = vrot.lane.b32.xlu0 %v1121, 125
      %v1186 = vpop.permute.xlu0 %1185
      %v1187 = vsel %vm391, %v1176, %v1178
      %v1188 = vsel %vm391, %v1180, %v1182
      %v1189 = vsel %vm391, %v1184, %v1186
      %1193 = vst [vmem:[#allocation3 + $0x3c] sm:$0xff] %v1187
      %1194 = vst [vmem:[#allocation3 + $0x44] sm:$0xff] %v1188
      %1195 = vst [vmem:[#allocation3 + $0x4c] sm:$0xf] %v1189
      %1196 = vrot.lane.b32.xlu0 %v1062, 124
      %v1197 = vpop.permute.xlu0 %1196
      %1198 = vrot.lane.b32.xlu0 %v1116, 124
      %v1199 = vpop.permute.xlu0 %1198
      %1200 = vrot.lane.b32.xlu0 %v1064, 124
      %v1201 = vpop.permute.xlu0 %1200
      %1202 = vrot.lane.b32.xlu0 %v1118, 124
      %v1203 = vpop.permute.xlu0 %1202
      %1204 = vrot.lane.b32.xlu0 %v1067, 124
      %v1205 = vpop.permute.xlu0 %1204
      %1206 = vrot.lane.b32.xlu0 %v1121, 124
      %v1207 = vpop.permute.xlu0 %1206
      %v1208 = vsel %vm400, %v1197, %v1199
      %v1209 = vsel %vm400, %v1201, %v1203
      %v1210 = vsel %vm400, %v1205, %v1207
      %1214 = vst [vmem:[#allocation3 + $0x50] sm:$0xff] %v1208
      %1215 = vst [vmem:[#allocation3 + $0x58] sm:$0xff] %v1209
      %1216 = vst [vmem:[#allocation3 + $0x60] sm:$0xf] %v1210
      %1217 = vrot.lane.b32.xlu0 %v1062, 116
      %v1218 = vpop.permute.xlu0 %1217
      %1219 = vrot.lane.b32.xlu0 %v1116, 116
      %v1220 = vpop.permute.xlu0 %1219
      %1221 = vrot.lane.b32.xlu0 %v1064, 116
      %v1222 = vpop.permute.xlu0 %1221
      %1223 = vrot.lane.b32.xlu0 %v1118, 116
      %v1224 = vpop.permute.xlu0 %1223
      %1225 = vrot.lane.b32.xlu0 %v1067, 116
      %v1226 = vpop.permute.xlu0 %1225
      %1227 = vrot.lane.b32.xlu0 %v1121, 116
      %v1228 = vpop.permute.xlu0 %1227
      %vm1229 = vcmask 949248
      %v1230 = vsel %vm1229, %v1218, %v1220
      %v1231 = vsel %vm1229, %v1222, %v1224
      %v1232 = vsel %vm1229, %v1226, %v1228
      %1236 = vst [vmem:[#allocation3 + $0x64] sm:$0xff] %v1230
      %1237 = vst [vmem:[#allocation3 + $0x6c] sm:$0xff] %v1231
      %1238 = vst [vmem:[#allocation3 + $0x74] sm:$0xf] %v1232
      %1239 = vrot.lane.b32.xlu0 %v1062, 115
      %v1240 = vpop.permute.xlu0 %1239
      %1241 = vrot.lane.b32.xlu0 %v1116, 115
      %v1242 = vpop.permute.xlu0 %1241
      %1243 = vrot.lane.b32.xlu0 %v1064, 115
      %v1244 = vpop.permute.xlu0 %1243
      %1245 = vrot.lane.b32.xlu0 %v1118, 115
      %v1246 = vpop.permute.xlu0 %1245
      %1247 = vrot.lane.b32.xlu0 %v1067, 115
      %v1248 = vpop.permute.xlu0 %1247
      %1249 = vrot.lane.b32.xlu0 %v1121, 115
      %v1250 = vpop.permute.xlu0 %1249
      %vm1251 = vcmask 941056
      %v1252 = vsel %vm1251, %v1240, %v1242
      %v1253 = vsel %vm1251, %v1244, %v1246
      %v1254 = vsel %vm1251, %v1248, %v1250
      %1258 = vst [vmem:[#allocation3 + $0x78] sm:$0xff] %v1252
      %1259 = vst [vmem:[#allocation3 + $0x80] sm:$0xff] %v1253
      %1260 = vst [vmem:[#allocation3 + $0x88] sm:$0xf] %v1254
      %1261 = vrot.lane.b32.xlu0 %v1062, 114
      %v1262 = vpop.permute.xlu0 %1261
      %1263 = vrot.lane.b32.xlu0 %v1116, 114
      %v1264 = vpop.permute.xlu0 %1263
      %1265 = vrot.lane.b32.xlu0 %v1064, 114
      %v1266 = vpop.permute.xlu0 %1265
      %1267 = vrot.lane.b32.xlu0 %v1118, 114
      %v1268 = vpop.permute.xlu0 %1267
      %1269 = vrot.lane.b32.xlu0 %v1067, 114
      %v1270 = vpop.permute.xlu0 %1269
      %1271 = vrot.lane.b32.xlu0 %v1121, 114
      %v1272 = vpop.permute.xlu0 %1271
      %vm1273 = vcmask 932864
      %v1274 = vsel %vm1273, %v1262, %v1264
      %v1275 = vsel %vm1273, %v1266, %v1268
      %v1276 = vsel %vm1273, %v1270, %v1272
      %1280 = vst [vmem:[#allocation3 + $0x8c] sm:$0xff] %v1274
      %1281 = vst [vmem:[#allocation3 + $0x94] sm:$0xff] %v1275
      %1282 = vst [vmem:[#allocation3 + $0x9c] sm:$0xf] %v1276
      %1283 = vrot.lane.b32.xlu0 %v1062, 113
      %v1284 = vpop.permute.xlu0 %1283
      %1285 = vrot.lane.b32.xlu0 %v1116, 113
      %v1286 = vpop.permute.xlu0 %1285
      %1287 = vrot.lane.b32.xlu0 %v1064, 113
      %v1288 = vpop.permute.xlu0 %1287
      %1289 = vrot.lane.b32.xlu0 %v1118, 113
      %v1290 = vpop.permute.xlu0 %1289
      %1291 = vrot.lane.b32.xlu0 %v1067, 113
      %v1292 = vpop.permute.xlu0 %1291
      %1293 = vrot.lane.b32.xlu0 %v1121, 113
      %v1294 = vpop.permute.xlu0 %1293
      %vm1295 = vcmask 924672
      %v1296 = vsel %vm1295, %v1284, %v1286
      %v1297 = vsel %vm1295, %v1288, %v1290
      %v1298 = vsel %vm1295, %v1292, %v1294
      %1302 = vst [vmem:[#allocation3 + $0xa0] sm:$0xff] %v1296
      %1303 = vst [vmem:[#allocation3 + $0xa8] sm:$0xff] %v1297
      %1304 = vst [vmem:[#allocation3 + $0xb0] sm:$0xf] %v1298
      %1305 = vrot.lane.b32.xlu0 %v1062, 112
      %v1306 = vpop.permute.xlu0 %1305
      %1307 = vrot.lane.b32.xlu0 %v1116, 112
      %v1308 = vpop.permute.xlu0 %1307
      %1309 = vrot.lane.b32.xlu0 %v1064, 112
      %v1310 = vpop.permute.xlu0 %1309
      %1311 = vrot.lane.b32.xlu0 %v1118, 112
      %v1312 = vpop.permute.xlu0 %1311
      %1313 = vrot.lane.b32.xlu0 %v1067, 112
      %v1314 = vpop.permute.xlu0 %1313
      %1315 = vrot.lane.b32.xlu0 %v1121, 112
      %v1316 = vpop.permute.xlu0 %1315
      %vm1317 = vcmask 916480
      %v1318 = vsel %vm1317, %v1306, %v1308
      %v1319 = vsel %vm1317, %v1310, %v1312
      %v1320 = vsel %vm1317, %v1314, %v1316
      %1324 = vst [vmem:[#allocation3 + $0xb4] sm:$0xff] %v1318
      %1325 = vst [vmem:[#allocation3 + $0xbc] sm:$0xff] %v1319
      %1326 = vst [vmem:[#allocation3 + $0xc4] sm:$0xf] %v1320
      %1327 = vrot.lane.b32.xlu0 %v1062, 104
      %v1328 = vpop.permute.xlu0 %1327
      %1329 = vrot.lane.b32.xlu0 %v1116, 104
      %v1330 = vpop.permute.xlu0 %1329
      %1331 = vrot.lane.b32.xlu0 %v1064, 104
      %v1332 = vpop.permute.xlu0 %1331
      %1333 = vrot.lane.b32.xlu0 %v1118, 104
      %v1334 = vpop.permute.xlu0 %1333
      %1335 = vrot.lane.b32.xlu0 %v1067, 104
      %v1336 = vpop.permute.xlu0 %1335
      %1337 = vrot.lane.b32.xlu0 %v1121, 104
      %v1338 = vpop.permute.xlu0 %1337
      %v1339 = vsel %vm445, %v1328, %v1330
      %v1340 = vsel %vm445, %v1332, %v1334
      %v1341 = vsel %vm445, %v1336, %v1338
      %1345 = vst [vmem:[#allocation3 + $0xc8] sm:$0xff] %v1339
      %1346 = vst [vmem:[#allocation3 + $0xd0] sm:$0xff] %v1340
      %1347 = vst [vmem:[#allocation3 + $0xd8] sm:$0xf] %v1341
      %1348 = vrot.lane.b32.xlu0 %v1062, 103
      %v1349 = vpop.permute.xlu0 %1348
      %1350 = vrot.lane.b32.xlu0 %v1116, 103
      %v1351 = vpop.permute.xlu0 %1350
      %1352 = vrot.lane.b32.xlu0 %v1064, 103
      %v1353 = vpop.permute.xlu0 %1352
      %1354 = vrot.lane.b32.xlu0 %v1118, 103
      %v1355 = vpop.permute.xlu0 %1354
      %1356 = vrot.lane.b32.xlu0 %v1067, 103
      %v1357 = vpop.permute.xlu0 %1356
      %1358 = vrot.lane.b32.xlu0 %v1121, 103
      %v1359 = vpop.permute.xlu0 %1358
      %vm1360 = vcmask 842752
      %v1361 = vsel %vm1360, %v1349, %v1351
      %v1362 = vsel %vm1360, %v1353, %v1355
      %v1363 = vsel %vm1360, %v1357, %v1359
      %1367 = vst [vmem:[#allocation3 + $0xdc] sm:$0xff] %v1361
      %1368 = vst [vmem:[#allocation3 + $0xe4] sm:$0xff] %v1362
      %1369 = vst [vmem:[#allocation3 + $0xec] sm:$0xf] %v1363
      %1370 = vrot.lane.b32.xlu0 %v1062, 102
      %v1371 = vpop.permute.xlu0 %1370
      %1372 = vrot.lane.b32.xlu0 %v1116, 102
      %v1373 = vpop.permute.xlu0 %1372
      %1374 = vrot.lane.b32.xlu0 %v1064, 102
      %v1375 = vpop.permute.xlu0 %1374
      %1376 = vrot.lane.b32.xlu0 %v1118, 102
      %v1377 = vpop.permute.xlu0 %1376
      %1378 = vrot.lane.b32.xlu0 %v1067, 102
      %v1379 = vpop.permute.xlu0 %1378
      %1380 = vrot.lane.b32.xlu0 %v1121, 102
      %v1381 = vpop.permute.xlu0 %1380
      %vm1382 = vcmask 834560
      %v1383 = vsel %vm1382, %v1371, %v1373
      %v1384 = vsel %vm1382, %v1375, %v1377
      %v1385 = vsel %vm1382, %v1379, %v1381
      %1389 = vst [vmem:[#allocation3 + $0xf0] sm:$0xff] %v1383
      %1390 = vst [vmem:[#allocation3 + $0xf8] sm:$0xff] %v1384
      %1391 = vst [vmem:[#allocation3 + $0x100] sm:$0xf] %v1385
      %1392 = vrot.lane.b32.xlu0 %v1062, 101
      %v1393 = vpop.permute.xlu0 %1392
      %1394 = vrot.lane.b32.xlu0 %v1116, 101
      %v1395 = vpop.permute.xlu0 %1394
      %1396 = vrot.lane.b32.xlu0 %v1064, 101
      %v1397 = vpop.permute.xlu0 %1396
      %1398 = vrot.lane.b32.xlu0 %v1118, 101
      %v1399 = vpop.permute.xlu0 %1398
      %1400 = vrot.lane.b32.xlu0 %v1067, 101
      %v1401 = vpop.permute.xlu0 %1400
      %1402 = vrot.lane.b32.xlu0 %v1121, 101
      %v1403 = vpop.permute.xlu0 %1402
      %vm1404 = vcmask 826368
      %v1405 = vsel %vm1404, %v1393, %v1395
      %v1406 = vsel %vm1404, %v1397, %v1399
      %v1407 = vsel %vm1404, %v1401, %v1403
      %1411 = vst [vmem:[#allocation3 + $0x104] sm:$0xff] %v1405
      %1412 = vst [vmem:[#allocation3 + $0x10c] sm:$0xff] %v1406
      %1413 = vst [vmem:[#allocation3 + $0x114] sm:$0xf] %v1407
      %1414 = vrot.lane.b32.xlu0 %v1062, 100
      %v1415 = vpop.permute.xlu0 %1414
      %1416 = vrot.lane.b32.xlu0 %v1116, 100
      %v1417 = vpop.permute.xlu0 %1416
      %1418 = vrot.lane.b32.xlu0 %v1064, 100
      %v1419 = vpop.permute.xlu0 %1418
      %1420 = vrot.lane.b32.xlu0 %v1118, 100
      %v1421 = vpop.permute.xlu0 %1420
      %1422 = vrot.lane.b32.xlu0 %v1067, 100
      %v1423 = vpop.permute.xlu0 %1422
      %1424 = vrot.lane.b32.xlu0 %v1121, 100
      %v1425 = vpop.permute.xlu0 %1424
      %vm1426 = vcmask 818176
      %v1427 = vsel %vm1426, %v1415, %v1417
      %v1428 = vsel %vm1426, %v1419, %v1421
      %v1429 = vsel %vm1426, %v1423, %v1425
      %1433 = vst [vmem:[#allocation3 + $0x118] sm:$0xff] %v1427
      %1434 = vst [vmem:[#allocation3 + $0x120] sm:$0xff] %v1428
      %1435 = vst [vmem:[#allocation3 + $0x128] sm:$0xf] %v1429
      %1436 = vrot.lane.b32.xlu0 %v1062, 92
      %v1437 = vpop.permute.xlu0 %1436
      %1438 = vrot.lane.b32.xlu0 %v1116, 92
      %v1439 = vpop.permute.xlu0 %1438
      %1440 = vrot.lane.b32.xlu0 %v1064, 92
      %v1441 = vpop.permute.xlu0 %1440
      %1442 = vrot.lane.b32.xlu0 %v1118, 92
      %v1443 = vpop.permute.xlu0 %1442
      %1444 = vrot.lane.b32.xlu0 %v1067, 92
      %v1445 = vpop.permute.xlu0 %1444
      %1446 = vrot.lane.b32.xlu0 %v1121, 92
      %v1447 = vpop.permute.xlu0 %1446
      %vm1448 = vcmask 752640
      %v1449 = vsel %vm1448, %v1437, %v1439
      %v1450 = vsel %vm1448, %v1441, %v1443
      %v1451 = vsel %vm1448, %v1445, %v1447
      %1455 = vst [vmem:[#allocation3 + $0x12c] sm:$0xff] %v1449
      %1456 = vst [vmem:[#allocation3 + $0x134] sm:$0xff] %v1450
      %1457 = vst [vmem:[#allocation3 + $0x13c] sm:$0xf] %v1451
      %1458 = vrot.lane.b32.xlu0 %v1062, 91
      %v1459 = vpop.permute.xlu0 %1458
      %1460 = vrot.lane.b32.xlu0 %v1116, 91
      %v1461 = vpop.permute.xlu0 %1460
      %1462 = vrot.lane.b32.xlu0 %v1064, 91
      %v1463 = vpop.permute.xlu0 %1462
      %1464 = vrot.lane.b32.xlu0 %v1118, 91
      %v1465 = vpop.permute.xlu0 %1464
      %1466 = vrot.lane.b32.xlu0 %v1067, 91
      %v1467 = vpop.permute.xlu0 %1466
      %1468 = vrot.lane.b32.xlu0 %v1121, 91
      %v1469 = vpop.permute.xlu0 %1468
      %vm1470 = vcmask 744448
      %v1471 = vsel %vm1470, %v1459, %v1461
      %v1472 = vsel %vm1470, %v1463, %v1465
      %v1473 = vsel %vm1470, %v1467, %v1469
      %1477 = vst [vmem:[#allocation3 + $0x140] sm:$0xff] %v1471
      %1478 = vst [vmem:[#allocation3 + $0x148] sm:$0xff] %v1472
      %1479 = vst [vmem:[#allocation3 + $0x150] sm:$0xf] %v1473
      %1480 = vrot.lane.b32.xlu0 %v1062, 90
      %v1481 = vpop.permute.xlu0 %1480
      %1482 = vrot.lane.b32.xlu0 %v1116, 90
      %v1483 = vpop.permute.xlu0 %1482
      %1484 = vrot.lane.b32.xlu0 %v1064, 90
      %v1485 = vpop.permute.xlu0 %1484
      %1486 = vrot.lane.b32.xlu0 %v1118, 90
      %v1487 = vpop.permute.xlu0 %1486
      %1488 = vrot.lane.b32.xlu0 %v1067, 90
      %v1489 = vpop.permute.xlu0 %1488
      %1490 = vrot.lane.b32.xlu0 %v1121, 90
      %v1491 = vpop.permute.xlu0 %1490
      %vm1492 = vcmask 736256
      %v1493 = vsel %vm1492, %v1481, %v1483
      %v1494 = vsel %vm1492, %v1485, %v1487
      %v1495 = vsel %vm1492, %v1489, %v1491
      %1499 = vst [vmem:[#allocation3 + $0x154] sm:$0xff] %v1493
      %1500 = vst [vmem:[#allocation3 + $0x15c] sm:$0xff] %v1494
      %1501 = vst [vmem:[#allocation3 + $0x164] sm:$0xf] %v1495
      %1502 = vrot.lane.b32.xlu0 %v1062, 89
      %v1503 = vpop.permute.xlu0 %1502
      %1504 = vrot.lane.b32.xlu0 %v1116, 89
      %v1505 = vpop.permute.xlu0 %1504
      %1506 = vrot.lane.b32.xlu0 %v1064, 89
      %v1507 = vpop.permute.xlu0 %1506
      %1508 = vrot.lane.b32.xlu0 %v1118, 89
      %v1509 = vpop.permute.xlu0 %1508
      %1510 = vrot.lane.b32.xlu0 %v1067, 89
      %v1511 = vpop.permute.xlu0 %1510
      %1512 = vrot.lane.b32.xlu0 %v1121, 89
      %v1513 = vpop.permute.xlu0 %1512
      %vm1514 = vcmask 728064
      %v1515 = vsel %vm1514, %v1503, %v1505
      %v1516 = vsel %vm1514, %v1507, %v1509
      %v1517 = vsel %vm1514, %v1511, %v1513
      %1521 = vst [vmem:[#allocation3 + $0x168] sm:$0xff] %v1515
      %1522 = vst [vmem:[#allocation3 + $0x170] sm:$0xff] %v1516
      %1523 = vst [vmem:[#allocation3 + $0x178] sm:$0xf] %v1517
      %1524 = vrot.lane.b32.xlu0 %v1062, 88
      %v1525 = vpop.permute.xlu0 %1524
      %1526 = vrot.lane.b32.xlu0 %v1116, 88
      %v1527 = vpop.permute.xlu0 %1526
      %1528 = vrot.lane.b32.xlu0 %v1064, 88
      %v1529 = vpop.permute.xlu0 %1528
      %1530 = vrot.lane.b32.xlu0 %v1118, 88
      %v1531 = vpop.permute.xlu0 %1530
      %1532 = vrot.lane.b32.xlu0 %v1067, 88
      %v1533 = vpop.permute.xlu0 %1532
      %1534 = vrot.lane.b32.xlu0 %v1121, 88
      %v1535 = vpop.permute.xlu0 %1534
      %v1536 = vsel %vm454, %v1525, %v1527
      %v1537 = vsel %vm454, %v1529, %v1531
      %v1538 = vsel %vm454, %v1533, %v1535
      %1542 = vst [vmem:[#allocation3 + $0x17c] sm:$0xff] %v1536
      %1543 = vst [vmem:[#allocation3 + $0x184] sm:$0xff] %v1537
      %1544 = vst [vmem:[#allocation3 + $0x18c] sm:$0xf] %v1538
      %1545 = vrot.lane.b32.xlu0 %v1062, 80
      %v1546 = vpop.permute.xlu0 %1545
      %1547 = vrot.lane.b32.xlu0 %v1116, 80
      %v1548 = vpop.permute.xlu0 %1547
      %1549 = vrot.lane.b32.xlu0 %v1064, 80
      %v1550 = vpop.permute.xlu0 %1549
      %1551 = vrot.lane.b32.xlu0 %v1118, 80
      %v1552 = vpop.permute.xlu0 %1551
      %1553 = vrot.lane.b32.xlu0 %v1067, 80
      %v1554 = vpop.permute.xlu0 %1553
      %1555 = vrot.lane.b32.xlu0 %v1121, 80
      %v1556 = vpop.permute.xlu0 %1555
      %vm1557 = vcmask 654336
      %v1558 = vsel %vm1557, %v1546, %v1548
      %v1559 = vsel %vm1557, %v1550, %v1552
      %v1560 = vsel %vm1557, %v1554, %v1556
      %1564 = vst [vmem:[#allocation3 + $0x190] sm:$0xff] %v1558
      %1565 = vst [vmem:[#allocation3 + $0x198] sm:$0xff] %v1559
      %1566 = vst [vmem:[#allocation3 + $0x1a0] sm:$0xf] %v1560
      %1567 = vrot.lane.b32.xlu0 %v1062, 79
      %v1568 = vpop.permute.xlu0 %1567
      %1569 = vrot.lane.b32.xlu0 %v1116, 79
      %v1570 = vpop.permute.xlu0 %1569
      %1571 = vrot.lane.b32.xlu0 %v1064, 79
      %v1572 = vpop.permute.xlu0 %1571
      %1573 = vrot.lane.b32.xlu0 %v1118, 79
      %v1574 = vpop.permute.xlu0 %1573
      %1575 = vrot.lane.b32.xlu0 %v1067, 79
      %v1576 = vpop.permute.xlu0 %1575
      %1577 = vrot.lane.b32.xlu0 %v1121, 79
      %v1578 = vpop.permute.xlu0 %1577
      %vm1579 = vcmask 646144
      %v1580 = vsel %vm1579, %v1568, %v1570
      %v1581 = vsel %vm1579, %v1572, %v1574
      %v1582 = vsel %vm1579, %v1576, %v1578
      %1586 = vst [vmem:[#allocation3 + $0x1a4] sm:$0xff] %v1580
      %1587 = vst [vmem:[#allocation3 + $0x1ac] sm:$0xff] %v1581
      %1588 = vst [vmem:[#allocation3 + $0x1b4] sm:$0xf] %v1582
      %1589 = vrot.lane.b32.xlu0 %v1062, 78
      %v1590 = vpop.permute.xlu0 %1589
      %1591 = vrot.lane.b32.xlu0 %v1116, 78
      %v1592 = vpop.permute.xlu0 %1591
      %1593 = vrot.lane.b32.xlu0 %v1064, 78
      %v1594 = vpop.permute.xlu0 %1593
      %1595 = vrot.lane.b32.xlu0 %v1118, 78
      %v1596 = vpop.permute.xlu0 %1595
      %1597 = vrot.lane.b32.xlu0 %v1067, 78
      %v1598 = vpop.permute.xlu0 %1597
      %1599 = vrot.lane.b32.xlu0 %v1121, 78
      %v1600 = vpop.permute.xlu0 %1599
      %vm1601 = vcmask 637952
      %v1602 = vsel %vm1601, %v1590, %v1592
      %v1603 = vsel %vm1601, %v1594, %v1596
      %v1604 = vsel %vm1601, %v1598, %v1600
      %1608 = vst [vmem:[#allocation3 + $0x1b8] sm:$0xff] %v1602
      %1609 = vst [vmem:[#allocation3 + $0x1c0] sm:$0xff] %v1603
      %1610 = vst [vmem:[#allocation3 + $0x1c8] sm:$0xf] %v1604
      %1611 = vrot.lane.b32.xlu0 %v1062, 77
      %v1612 = vpop.permute.xlu0 %1611
      %1613 = vrot.lane.b32.xlu0 %v1116, 77
      %v1614 = vpop.permute.xlu0 %1613
      %1615 = vrot.lane.b32.xlu0 %v1064, 77
      %v1616 = vpop.permute.xlu0 %1615
      %1617 = vrot.lane.b32.xlu0 %v1118, 77
      %v1618 = vpop.permute.xlu0 %1617
      %1619 = vrot.lane.b32.xlu0 %v1067, 77
      %v1620 = vpop.permute.xlu0 %1619
      %1621 = vrot.lane.b32.xlu0 %v1121, 77
      %v1622 = vpop.permute.xlu0 %1621
      %vm1623 = vcmask 629760
      %v1624 = vsel %vm1623, %v1612, %v1614
      %v1625 = vsel %vm1623, %v1616, %v1618
      %v1626 = vsel %vm1623, %v1620, %v1622
      %1630 = vst [vmem:[#allocation3 + $0x1cc] sm:$0xff] %v1624
      %1631 = vst [vmem:[#allocation3 + $0x1d4] sm:$0xff] %v1625
      %1632 = vst [vmem:[#allocation3 + $0x1dc] sm:$0xf] %v1626
      %1633 = vrot.lane.b32.xlu0 %v1062, 76
      %v1634 = vpop.permute.xlu0 %1633
      %1635 = vrot.lane.b32.xlu0 %v1116, 76
      %v1636 = vpop.permute.xlu0 %1635
      %1637 = vrot.lane.b32.xlu0 %v1064, 76
      %v1638 = vpop.permute.xlu0 %1637
      %1639 = vrot.lane.b32.xlu0 %v1118, 76
      %v1640 = vpop.permute.xlu0 %1639
      %1641 = vrot.lane.b32.xlu0 %v1067, 76
      %v1642 = vpop.permute.xlu0 %1641
      %1643 = vrot.lane.b32.xlu0 %v1121, 76
      %v1644 = vpop.permute.xlu0 %1643
      %vm1645 = vcmask 621568
      %v1646 = vsel %vm1645, %v1634, %v1636
      %v1647 = vsel %vm1645, %v1638, %v1640
      %v1648 = vsel %vm1645, %v1642, %v1644
      %1652 = vst [vmem:[#allocation3 + $0x1e0] sm:$0xff] %v1646
      %1653 = vst [vmem:[#allocation3 + $0x1e8] sm:$0xff] %v1647
      %1654 = vst [vmem:[#allocation3 + $0x1f0] sm:$0xf] %v1648
      %v1655 = vld [vmem:[#allocation3] sm:$0xff]
      %v1656 = vld [vmem:[#allocation3 + $0x8] sm:$0xff]
      %v1657 = vld [vmem:[#allocation3 + $0x10] sm:$0xff]
      %v1658 = vld [vmem:[#allocation3 + $0x18] sm:$0xff]
      %v1659 = vld [vmem:[#allocation3 + $0x20] sm:$0xff]
      %v1660 = vld [vmem:[#allocation3 + $0x28] sm:$0xff]
      %v1661 = vld [vmem:[#allocation3 + $0x30] sm:$0xff]
      %v1662 = vld [vmem:[#allocation3 + $0x38] sm:$0xff]
      %v1663 = vld [vmem:[#allocation3 + $0x40] sm:$0xff]
      %v1664 = vld [vmem:[#allocation3 + $0x48] sm:$0xff]
      %v1665 = vld [vmem:[#allocation3 + $0x50] sm:$0xff]
      %v1666 = vld [vmem:[#allocation3 + $0x58] sm:$0xff]
      %v1667 = vld [vmem:[#allocation3 + $0x60] sm:$0xff]
      %v1668 = vld [vmem:[#allocation3 + $0x68] sm:$0xff]
      %v1669 = vld [vmem:[#allocation3 + $0x70] sm:$0xff]
      %v1670 = vld [vmem:[#allocation3 + $0x78] sm:$0xff]
      %v1671 = vld [vmem:[#allocation3 + $0x80] sm:$0xff]
      %v1672 = vld [vmem:[#allocation3 + $0x88] sm:$0xff]
      %v1673 = vld [vmem:[#allocation3 + $0x90] sm:$0xff]
      %v1674 = vld [vmem:[#allocation3 + $0x98] sm:$0xff]
      %v1675 = vld [vmem:[#allocation3 + $0xa0] sm:$0xff]
      %v1676 = vld [vmem:[#allocation3 + $0xa8] sm:$0xff]
      %v1677 = vld [vmem:[#allocation3 + $0xb0] sm:$0xff]
      %v1678 = vld [vmem:[#allocation3 + $0xb8] sm:$0xff]
      %v1679 = vld [vmem:[#allocation3 + $0xc0] sm:$0xff]
      %v1680 = vld [vmem:[#allocation3 + $0xc8] sm:$0xff]
      %v1681 = vld [vmem:[#allocation3 + $0xd0] sm:$0xff]
      %v1682 = vld [vmem:[#allocation3 + $0xd8] sm:$0xff]
      %v1683 = vld [vmem:[#allocation3 + $0xe0] sm:$0xff]
      %v1684 = vld [vmem:[#allocation3 + $0xe8] sm:$0xff]
      %v1685 = vld [vmem:[#allocation3 + $0xf0] sm:$0xff]
      %v1686 = vld [vmem:[#allocation3 + $0xf8] sm:$0xff]
      %v1687 = vld [vmem:[#allocation3 + $0x100] sm:$0xff]
      %v1688 = vld [vmem:[#allocation3 + $0x108] sm:$0xff]
      %v1689 = vld [vmem:[#allocation3 + $0x110] sm:$0xff]
      %v1690 = vld [vmem:[#allocation3 + $0x118] sm:$0xff]
      %v1691 = vld [vmem:[#allocation3 + $0x120] sm:$0xff]
      %v1692 = vld [vmem:[#allocation3 + $0x128] sm:$0xff]
      %v1693 = vld [vmem:[#allocation3 + $0x130] sm:$0xff]
      %v1694 = vld [vmem:[#allocation3 + $0x138] sm:$0xff]
      %v1695 = vld [vmem:[#allocation3 + $0x140] sm:$0xff]
      %v1696 = vld [vmem:[#allocation3 + $0x148] sm:$0xff]
      %v1697 = vld [vmem:[#allocation3 + $0x150] sm:$0xff]
      %v1698 = vld [vmem:[#allocation3 + $0x158] sm:$0xff]
      %v1699 = vld [vmem:[#allocation3 + $0x160] sm:$0xff]
      %v1700 = vld [vmem:[#allocation3 + $0x168] sm:$0xff]
      %v1701 = vld [vmem:[#allocation3 + $0x170] sm:$0xff]
      %v1702 = vld [vmem:[#allocation3 + $0x178] sm:$0xff]
      %v1703 = vld [vmem:[#allocation3 + $0x180] sm:$0xff]
      %v1704 = vld [vmem:[#allocation3 + $0x188] sm:$0xff]
      %v1705 = vld [vmem:[#allocation3 + $0x190] sm:$0xff]
      %v1706 = vld [vmem:[#allocation3 + $0x198] sm:$0xff]
      %v1707 = vld [vmem:[#allocation3 + $0x1a0] sm:$0xff]
      %v1708 = vld [vmem:[#allocation3 + $0x1a8] sm:$0xff]
      %v1709 = vld [vmem:[#allocation3 + $0x1b0] sm:$0xff]
      %v1710 = vld [vmem:[#allocation3 + $0x1b8] sm:$0xff]
      %v1711 = vld [vmem:[#allocation3 + $0x1c0] sm:$0xff]
      %v1712 = vld [vmem:[#allocation3 + $0x1c8] sm:$0xff]
      %v1713 = vld [vmem:[#allocation3 + $0x1d0] sm:$0xff]
      %v1714 = vld [vmem:[#allocation3 + $0x1d8] sm:$0xff]
      %v1715 = vld [vmem:[#allocation3 + $0x1e0] sm:$0xff]
      %v1716 = vld [vmem:[#allocation3 + $0x1e8] sm:$0xff]
      %v1717 = vld [vmem:[#allocation3 + $0x1f0] sm:$0xf]
      %v1718 = vpack.c.bf16 %v1656, %v1655
      %v1719 = vpack.c.bf16 %v1658, %v1657
      %v1720 = vpack.c.bf16 %v1660, %v1659
      %v1721 = vpack.c.bf16 %v1662, %v1661
      %v1722 = vpack.c.bf16 %v1664, %v1663
      %v1723 = vpack.c.bf16 %v1666, %v1665
      %v1724 = vpack.c.bf16 %v1668, %v1667
      %v1725 = vpack.c.bf16 %v1670, %v1669
      %v1726 = vpack.c.bf16 %v1672, %v1671
      %v1727 = vpack.c.bf16 %v1674, %v1673
      %v1728 = vpack.c.bf16 %v1676, %v1675
      %v1729 = vpack.c.bf16 %v1678, %v1677
      %v1730 = vpack.c.bf16 %v1680, %v1679
      %v1731 = vpack.c.bf16 %v1682, %v1681
      %v1732 = vpack.c.bf16 %v1684, %v1683
      %v1733 = vpack.c.bf16 %v1686, %v1685
      %v1734 = vpack.c.bf16 %v1688, %v1687
      %v1735 = vpack.c.bf16 %v1690, %v1689
      %v1736 = vpack.c.bf16 %v1692, %v1691
      %v1737 = vpack.c.bf16 %v1694, %v1693
      %v1738 = vpack.c.bf16 %v1696, %v1695
      %v1739 = vpack.c.bf16 %v1698, %v1697
      %v1740 = vpack.c.bf16 %v1700, %v1699
      %v1741 = vpack.c.bf16 %v1702, %v1701
      %v1742 = vpack.c.bf16 %v1704, %v1703
      %v1743 = vpack.c.bf16 %v1706, %v1705
      %v1744 = vpack.c.bf16 %v1708, %v1707
      %v1745 = vpack.c.bf16 %v1710, %v1709
      %v1746 = vpack.c.bf16 %v1712, %v1711
      %v1747 = vpack.c.bf16 %v1714, %v1713
      %v1748 = vpack.c.bf16 %v1716, %v1715
      %v1749 = vpack.c.bf16 %v1717, %v1717
      %1751 = vset.pattern.permute.xlu0 0
      %1752 = vperm.xlu0 %1751, %v346
      %v1753 = vpop.permute.xlu0 %1752
      %1756 = vset.pattern.permute.xlu0 0
      %1757 = vperm.xlu0 %1756, %v347
      %v1758 = vpop.permute.xlu0 %1757
      %1761 = vset.pattern.permute.xlu0 0
      %1762 = vperm.xlu0 %1761, %v348
      %v1763 = vpop.permute.xlu0 %1762
      %1766 = vset.pattern.permute.xlu0 0
      %1767 = vperm.xlu0 %1766, %v349
      %v1768 = vpop.permute.xlu0 %1767
      %1771 = vset.pattern.permute.xlu0 0
      %1772 = vperm.xlu0 %1771, %v350
      %v1773 = vpop.permute.xlu0 %1772
      %1776 = vset.pattern.permute.xlu0 0
      %1777 = vperm.xlu0 %1776, %v351
      %v1778 = vpop.permute.xlu0 %1777
      %1781 = vset.pattern.permute.xlu0 0
      %1782 = vperm.xlu0 %1781, %v352
      %v1783 = vpop.permute.xlu0 %1782
      %v1799 = vunpack.c.l.b16 %v332
      %v1800 = vunpack.c.h.b16 %v332
      %v1801 = vunpack.c.l.b16 %v333
      %v1802 = vunpack.c.h.b16 %v333
      %v1803 = vunpack.c.l.b16 %v334
      %v1804 = vunpack.c.h.b16 %v334
      %v1805 = vunpack.c.l.b16 %v335
      %v1806 = vunpack.c.h.b16 %v335
      %v1807 = vunpack.c.l.b16 %v336
      %v1808 = vunpack.c.h.b16 %v336
      %v1809 = vunpack.c.l.b16 %v337
      %v1810 = vunpack.c.h.b16 %v337
      %v1811 = vunpack.c.l.b16 %v338
      %v1812 = vunpack.c.h.b16 %v338
      %v1813 = vunpack.c.l.b16 %v339
      %v1814 = vunpack.c.h.b16 %v339
      %v1815 = vunpack.c.l.b16 %v340
      %v1816 = vunpack.c.h.b16 %v340
      %v1817 = vunpack.c.l.b16 %v341
      %v1818 = vunpack.c.h.b16 %v341
      %v1819 = vunpack.c.l.b16 %v342
      %v1820 = vunpack.c.h.b16 %v342
      %v1821 = vunpack.c.l.b16 %v343
      %v1822 = vunpack.c.h.b16 %v343
      %v1823 = vunpack.c.l.b16 %v344
      %v1824 = vunpack.c.h.b16 %v344
      %v1825 = vunpack.c.l.b16 %v345
      %v1826 = vunpack.c.h.b16 %v345
      %v1827 = vpack.c.b16 %v1803, %v1799
      %v1828 = vpack.c.b16 %v1804, %v1800
      %v1829 = vpack.c.b16 %v1805, %v1801
      %v1830 = vpack.c.b16 %v1806, %v1802
      %v1831 = vpack.c.b16 %v1811, %v1807
      %v1832 = vpack.c.b16 %v1812, %v1808
      %v1833 = vpack.c.b16 %v1813, %v1809
      %v1834 = vpack.c.b16 %v1814, %v1810
      %v1835 = vpack.c.b16 %v1819, %v1815
      %v1836 = vpack.c.b16 %v1820, %v1816
      %v1837 = vpack.c.b16 %v1821, %v1817
      %v1838 = vpack.c.b16 %v1822, %v1818
      %v1839 = vpack.c.b16 %v1823, %v1823
      %v1840 = vpack.c.b16 %v1824, %v1824
      %v1841 = vpack.c.b16 %v1825, %v1825
      %v1842 = vpack.c.b16 %v1826, %v1826
      %v1856 = vsel %vm1229, %v1830, 0
      %v1859 = vsel %vm1229, %v1834, 0
      %v1862 = vsel %vm1229, %v1838, 0
      %v1865 = vsel %vm1229, %v1842, 0
      %vm1867 = vcmask 1041408
      %v1869 = vsel %vm1867, %v1749, 0
      %1871 = vmatpush.bf16.msra.mxu0 %v1725
      %1872 = vmatpush.bf16.msra.mxu0 %v1724
      %1873 = vmatpush.bf16.msra.mxu0 %v1723
      %1874 = vmatpush.bf16.msra.mxu0 %v1722
      %1875 = vmatpush.bf16.msra.mxu0 %v1721
      %1876 = vmatpush.bf16.msra.mxu0 %v1720
      %1877 = vmatpush.bf16.msra.mxu0 %v1719
      %1878 = vmatpush.bf16.msra.mxu0 %v1718
      %1879 = vmatmul.bf16.gmra.mxu0 %v1827
      %v1880 = vpop.f32.mrf.mxu0
      %v1881 = vadd.f32 %v1753, %v1880
      %v1882 = vpop.f32.mrf.mxu0
      %v1883 = vadd.f32 %v1758, %v1882
      %1884 = vmatmul.bf16.gmra.mxu0 %v1831
      %v1885 = vpop.f32.mrf.mxu0
      %v1886 = vadd.f32 %v1763, %v1885
      %v1887 = vpop.f32.mrf.mxu0
      %v1888 = vadd.f32 %v1768, %v1887
      %1889 = vmatmul.bf16.gmra.mxu0 %v1835
      %v1890 = vpop.f32.mrf.mxu0
      %v1891 = vadd.f32 %v1773, %v1890
      %v1892 = vpop.f32.mrf.mxu0
      %v1893 = vadd.f32 %v1778, %v1892
      %1894 = vmatmul.bf16.gmra.mxu0 %v1839
      %v1895 = vpop.f32.mrf.mxu0
      %v1896 = vadd.f32 %v1783, %v1895
      %v1897 = vpop.f32.mrf.mxu0
      %1898 = vdwg.mxu0
      %1899 = vmatpush.bf16.msra.mxu0 %v1733
      %1900 = vmatpush.bf16.msra.mxu0 %v1732
      %1901 = vmatpush.bf16.msra.mxu0 %v1731
      %1902 = vmatpush.bf16.msra.mxu0 %v1730
      %1903 = vmatpush.bf16.msra.mxu0 %v1729
      %1904 = vmatpush.bf16.msra.mxu0 %v1728
      %1905 = vmatpush.bf16.msra.mxu0 %v1727
      %1906 = vmatpush.bf16.msra.mxu0 %v1726
      %1907 = vmatmul.bf16.gmra.mxu0 %v1828
      %v1908 = vpop.f32.mrf.mxu0
      %v1909 = vadd.f32 %v1881, %v1908
      %v1910 = vpop.f32.mrf.mxu0
      %v1911 = vadd.f32 %v1883, %v1910
      %1912 = vmatmul.bf16.gmra.mxu0 %v1832
      %v1913 = vpop.f32.mrf.mxu0
      %v1914 = vadd.f32 %v1886, %v1913
      %v1915 = vpop.f32.mrf.mxu0
      %v1916 = vadd.f32 %v1888, %v1915
      %1917 = vmatmul.bf16.gmra.mxu0 %v1836
      %v1918 = vpop.f32.mrf.mxu0
      %v1919 = vadd.f32 %v1891, %v1918
      %v1920 = vpop.f32.mrf.mxu0
      %v1921 = vadd.f32 %v1893, %v1920
      %1922 = vmatmul.bf16.gmra.mxu0 %v1840
      %v1923 = vpop.f32.mrf.mxu0
      %v1924 = vadd.f32 %v1896, %v1923
      %v1925 = vpop.f32.mrf.mxu0
      %1926 = vdwg.mxu0
      %1927 = vmatpush.bf16.msra.mxu0 %v1741
      %1928 = vmatpush.bf16.msra.mxu0 %v1740
      %1929 = vmatpush.bf16.msra.mxu0 %v1739
      %1930 = vmatpush.bf16.msra.mxu0 %v1738
      %1931 = vmatpush.bf16.msra.mxu0 %v1737
      %1932 = vmatpush.bf16.msra.mxu0 %v1736
      %1933 = vmatpush.bf16.msra.mxu0 %v1735
      %1934 = vmatpush.bf16.msra.mxu0 %v1734
      %1935 = vmatmul.bf16.gmra.mxu0 %v1829
      %v1936 = vpop.f32.mrf.mxu0
      %v1937 = vadd.f32 %v1909, %v1936
      %v1938 = vpop.f32.mrf.mxu0
      %v1939 = vadd.f32 %v1911, %v1938
      %1940 = vmatmul.bf16.gmra.mxu0 %v1833
      %v1941 = vpop.f32.mrf.mxu0
      %v1942 = vadd.f32 %v1914, %v1941
      %v1943 = vpop.f32.mrf.mxu0
      %v1944 = vadd.f32 %v1916, %v1943
      %1945 = vmatmul.bf16.gmra.mxu0 %v1837
      %v1946 = vpop.f32.mrf.mxu0
      %v1947 = vadd.f32 %v1919, %v1946
      %v1948 = vpop.f32.mrf.mxu0
      %v1949 = vadd.f32 %v1921, %v1948
      %1950 = vmatmul.bf16.gmra.mxu0 %v1841
      %v1951 = vpop.f32.mrf.mxu0
      %v1952 = vadd.f32 %v1924, %v1951
      %v1953 = vpop.f32.mrf.mxu0
      %1954 = vdwg.mxu0
      %1955 = vmatpush.bf16.msra.mxu0 %v1869
      %1956 = vmatpush.bf16.msra.mxu0 %v1748
      %1957 = vmatpush.bf16.msra.mxu0 %v1747
      %1958 = vmatpush.bf16.msra.mxu0 %v1746
      %1959 = vmatpush.bf16.msra.mxu0 %v1745
      %1960 = vmatpush.bf16.msra.mxu0 %v1744
      %1961 = vmatpush.bf16.msra.mxu0 %v1743
      %1962 = vmatpush.bf16.msra.mxu0 %v1742
      %1963 = vmatmul.bf16.gmra.mxu0 %v1856
      %v1964 = vpop.f32.mrf.mxu0
      %v1965 = vadd.f32 %v1937, %v1964
      %v1966 = vpop.f32.mrf.mxu0
      %v1967 = vadd.f32 %v1939, %v1966
      %1968 = vmatmul.bf16.gmra.mxu0 %v1859
      %v1969 = vpop.f32.mrf.mxu0
      %v1970 = vadd.f32 %v1942, %v1969
      %v1971 = vpop.f32.mrf.mxu0
      %v1972 = vadd.f32 %v1944, %v1971
      %1973 = vmatmul.bf16.gmra.mxu0 %v1862
      %v1974 = vpop.f32.mrf.mxu0
      %v1975 = vadd.f32 %v1947, %v1974
      %v1976 = vpop.f32.mrf.mxu0
      %v1977 = vadd.f32 %v1949, %v1976
      %1978 = vmatmul.bf16.gmra.mxu0 %v1865
      %v1979 = vpop.f32.mrf.mxu0
      %v1980 = vadd.f32 %v1952, %v1979
      %v1981 = vpop.f32.mrf.mxu0
      %1982 = vdwg.mxu0
      %v1983 = vmax.f32 %v1965, 0.0
      %v1984 = vmax.f32 %v1967, 0.0
      %v1985 = vmax.f32 %v1970, 0.0
      %v1986 = vmax.f32 %v1972, 0.0
      %v1987 = vmax.f32 %v1975, 0.0
      %v1988 = vmax.f32 %v1977, 0.0
      %v1989 = vmax.f32 %v1980, 0.0
      %1997 = vrot.lane.b32.xlu0 %v1983, 127
      %v1998 = vpop.permute.xlu0 %1997
      %1999 = vrot.lane.b32.xlu0 %v1984, 127
      %v2000 = vpop.permute.xlu0 %1999
      %2001 = vrot.lane.b32.xlu0 %v1985, 127
      %v2002 = vpop.permute.xlu0 %2001
      %2003 = vrot.lane.b32.xlu0 %v1986, 127
      %v2004 = vpop.permute.xlu0 %2003
      %2005 = vrot.lane.b32.xlu0 %v1987, 127
      %v2006 = vpop.permute.xlu0 %2005
      %2007 = vrot.lane.b32.xlu0 %v1988, 127
      %v2008 = vpop.permute.xlu0 %2007
      %2009 = vrot.lane.b32.xlu0 %v1989, 127
      %v2010 = vpop.permute.xlu0 %2009
      %v2018 = vmax.f32 %v1983, %v1998
      %v2019 = vmax.f32 %v1984, %v2000
      %v2020 = vmax.f32 %v1985, %v2002
      %v2021 = vmax.f32 %v1986, %v2004
      %v2022 = vmax.f32 %v1987, %v2006
      %v2023 = vmax.f32 %v1988, %v2008
      %v2024 = vmax.f32 %v1989, %v2010
      %2032 = vrot.lane.b32.xlu0 %v2018, 116
      %v2033 = vpop.permute.xlu0 %2032
      %2034 = vrot.lane.b32.xlu0 %v2019, 116
      %v2035 = vpop.permute.xlu0 %2034
      %2036 = vrot.lane.b32.xlu0 %v2020, 116
      %v2037 = vpop.permute.xlu0 %2036
      %2038 = vrot.lane.b32.xlu0 %v2021, 116
      %v2039 = vpop.permute.xlu0 %2038
      %2040 = vrot.lane.b32.xlu0 %v2022, 116
      %v2041 = vpop.permute.xlu0 %2040
      %2042 = vrot.lane.b32.xlu0 %v2023, 116
      %v2043 = vpop.permute.xlu0 %2042
      %2044 = vrot.lane.b32.xlu0 %v2024, 116
      %v2045 = vpop.permute.xlu0 %2044
      %v2053 = vmax.f32 %v2018, %v2033
      %v2054 = vmax.f32 %v2019, %v2035
      %v2055 = vmax.f32 %v2020, %v2037
      %v2056 = vmax.f32 %v2021, %v2039
      %v2057 = vmax.f32 %v2022, %v2041
      %v2058 = vmax.f32 %v2023, %v2043
      %v2059 = vmax.f32 %v2024, %v2045
      %v2061 = vsel %vm1557, %v2053, 0
      %v2064 = vsel %vm1557, %v2054, 0
      %v2067 = vsel %vm1557, %v2055, 0
      %v2070 = vsel %vm1557, %v2056, 0
      %v2073 = vsel %vm1557, %v2057, 0
      %v2076 = vsel %vm1557, %v2058, 0
      %v2079 = vsel %vm1557, %v2059, 0
      %2081 = vmatpush.msra.mxu0 0.0
      %2082 = vmatpush.msra.mxu0 0.0
      %2083 = vmatpush.msra.mxu0 0.0
      %2084 = vmatpush.msra.mxu0 0.0
      %2085 = vmatpush.msra.mxu0 0.0
      %2086 = vmatpush.msra.mxu0 0.0
      %2087 = vmatpush.msra.mxu0 %v362
      %2088 = vmatpush.msra.mxu0 %v361
      %2089 = vmatpush.msra.mxu0 %v360
      %2090 = vmatpush.msra.mxu0 %v359
      %2091 = vmatpush.msra.mxu0 %v358
      %2092 = vmatpush.msra.mxu0 %v357
      %2093 = vmatpush.msra.mxu0 %v356
      %2094 = vmatpush.msra.mxu0 %v355
      %2095 = vmatpush.msra.mxu0 %v354
      %2096 = vmatpush.msra.mxu0 %v353
      %2097 = vmatmul.f32.gmra.mxu0 %v2061
      %v2098 = vpop.f32.mrf.mxu0
      %v2099 = vadd.f32 0.0, %v2098
      %2100 = vmatmul.f32.gmra.mxu0 %v2064
      %v2101 = vpop.f32.mrf.mxu0
      %v2102 = vadd.f32 0.0, %v2101
      %2103 = vmatmul.f32.gmra.mxu0 %v2067
      %v2104 = vpop.f32.mrf.mxu0
      %v2105 = vadd.f32 0.0, %v2104
      %2106 = vmatmul.f32.gmra.mxu0 %v2070
      %v2107 = vpop.f32.mrf.mxu0
      %v2108 = vadd.f32 0.0, %v2107
      %2109 = vmatmul.f32.gmra.mxu0 %v2073
      %v2110 = vpop.f32.mrf.mxu0
      %v2111 = vadd.f32 0.0, %v2110
      %2112 = vmatmul.f32.gmra.mxu0 %v2076
      %v2113 = vpop.f32.mrf.mxu0
      %v2114 = vadd.f32 0.0, %v2113
      %2115 = vmatmul.f32.gmra.mxu0 %v2079
      %v2116 = vpop.f32.mrf.mxu0
      %v2117 = vadd.f32 0.0, %v2116
      %2118 = vdwg.mxu0
      %vm2119 = vcmask 130048
      %2120 = vst.msk [vmem:[%s282] sm:$0xff] %vm2119, %v2099
      %2121 = vst.msk [vmem:[%s282 + $0x8] sm:$0xff] %vm2119, %v2102
      %2122 = vst.msk [vmem:[%s282 + $0x10] sm:$0xff] %vm2119, %v2105
      %2123 = vst.msk [vmem:[%s282 + $0x18] sm:$0xff] %vm2119, %v2108
      %2124 = vst.msk [vmem:[%s282 + $0x20] sm:$0xff] %vm2119, %v2111
      %2125 = vst.msk [vmem:[%s282 + $0x28] sm:$0xff] %vm2119, %v2114
      %vm2126 = vcmask 123904
      %2127 = vst.msk [vmem:[%s282 + $0x30] sm:$0x3] %vm2126, %v2117
      %2128 = vst.msk [vmem:[#allocation2] ss:$8 sm:$0x7] %vm366, %v286
      %2129 = vst.msk [vmem:[#allocation2] ss:$8 sm:$0x0] %vm366, %v286
      %2131 = vrot.lane.b32.xlu0 %v286, 127
      %v2132 = vpop.permute.xlu0 %2131
      %v2133 = vrot.slane %v2132, 1
      %v2134 = vsel %vm373, %v2132, %v2133
      %2136 = vst.msk [vmem:[%s376] ss:$8 sm:$0x7] %vm366, %v2134
      %2137 = vst.msk [vmem:[%s376] ss:$8 sm:$0x0] %vm366, %v2134
      %2138 = vrot.lane.b32.xlu0 %v286, 126
      %v2139 = vpop.permute.xlu0 %2138
      %v2140 = vrot.slane %v2139, 1
      %v2141 = vsel %vm382, %v2139, %v2140
      %2143 = vst.msk [vmem:[%s385] ss:$8 sm:$0x7] %vm366, %v2141
      %2144 = vst.msk [vmem:[%s385] ss:$8 sm:$0x0] %vm366, %v2141
      %2145 = vrot.lane.b32.xlu0 %v286, 125
      %v2146 = vpop.permute.xlu0 %2145
      %v2147 = vrot.slane %v2146, 1
      %v2148 = vsel %vm391, %v2146, %v2147
      %2150 = vst.msk [vmem:[%s394] ss:$8 sm:$0x7] %vm366, %v2148
      %2151 = vst.msk [vmem:[%s394] ss:$8 sm:$0x0] %vm366, %v2148
      %2152 = vrot.lane.b32.xlu0 %v286, 124
      %v2153 = vpop.permute.xlu0 %2152
      %v2154 = vrot.slane %v2153, 1
      %v2155 = vsel %vm400, %v2153, %v2154
      %2157 = vst.msk [vmem:[%s403] ss:$8 sm:$0x7] %vm366, %v2155
      %2158 = vst.msk [vmem:[%s403] ss:$8 sm:$0x0] %vm366, %v2155
      %2159 = vrot.lane.b32.xlu0 %v286, 108
      %v2160 = vpop.permute.xlu0 %2159
      %v2161 = vrot.slane %v2160, 1
      %v2162 = vsel %vm409, %v2160, %v2161
      %2164 = vst.msk [vmem:[%s412] ss:$8 sm:$0x7] %vm366, %v2162
      %2165 = vst.msk [vmem:[%s412] ss:$8 sm:$0x0] %vm366, %v2162
      %2166 = vrot.lane.b32.xlu0 %v286, 107
      %v2167 = vpop.permute.xlu0 %2166
      %v2168 = vrot.slane %v2167, 1
      %v2169 = vsel %vm418, %v2167, %v2168
      %2171 = vst.msk [vmem:[%s421] ss:$8 sm:$0x7] %vm366, %v2169
      %2172 = vst.msk [vmem:[%s421] ss:$8 sm:$0x0] %vm366, %v2169
      %2173 = vrot.lane.b32.xlu0 %v286, 106
      %v2174 = vpop.permute.xlu0 %2173
      %v2175 = vrot.slane %v2174, 1
      %v2176 = vsel %vm427, %v2174, %v2175
      %2178 = vst.msk [vmem:[%s430] ss:$8 sm:$0x7] %vm366, %v2176
      %2179 = vst.msk [vmem:[%s430] ss:$8 sm:$0x0] %vm366, %v2176
      %2180 = vrot.lane.b32.xlu0 %v286, 105
      %v2181 = vpop.permute.xlu0 %2180
      %v2182 = vrot.slane %v2181, 1
      %v2183 = vsel %vm436, %v2181, %v2182
      %2185 = vst.msk [vmem:[%s439] ss:$8 sm:$0x7] %vm366, %v2183
      %2186 = vst.msk [vmem:[%s439] ss:$8 sm:$0x0] %vm366, %v2183
      %2187 = vrot.lane.b32.xlu0 %v286, 104
      %v2188 = vpop.permute.xlu0 %2187
      %v2189 = vrot.slane %v2188, 1
      %v2190 = vsel %vm445, %v2188, %v2189
      %2192 = vst.msk [vmem:[%s448] ss:$8 sm:$0x7] %vm366, %v2190
      %2193 = vst.msk [vmem:[%s448] ss:$8 sm:$0x0] %vm366, %v2190
      %2194 = vrot.lane.b32.xlu0 %v286, 88
      %v2195 = vpop.permute.xlu0 %2194
      %v2196 = vrot.slane %v2195, 1
      %v2197 = vsel %vm454, %v2195, %v2196
      %2199 = vst.msk [vmem:[%s457] ss:$8 sm:$0x7] %vm366, %v2197
      %2200 = vst.msk [vmem:[%s457] ss:$8 sm:$0x0] %vm366, %v2197
      %2201 = vrot.lane.b32.xlu0 %v286, 87
      %v2202 = vpop.permute.xlu0 %2201
      %v2203 = vrot.slane %v2202, 1
      %v2204 = vsel %vm463, %v2202, %v2203
      %2206 = vst.msk [vmem:[%s466] ss:$8 sm:$0x7] %vm366, %v2204
      %2207 = vst.msk [vmem:[%s466] ss:$8 sm:$0x0] %vm366, %v2204
      %2208 = vrot.lane.b32.xlu0 %v286, 86
      %v2209 = vpop.permute.xlu0 %2208
      %v2210 = vrot.slane %v2209, 1
      %v2211 = vsel %vm472, %v2209, %v2210
      %2213 = vst.msk [vmem:[%s475] ss:$8 sm:$0x7] %vm366, %v2211
      %2214 = vst.msk [vmem:[%s475] ss:$8 sm:$0x0] %vm366, %v2211
      %2215 = vrot.lane.b32.xlu0 %v286, 85
      %v2216 = vpop.permute.xlu0 %2215
      %v2217 = vrot.slane %v2216, 1
      %v2218 = vsel %vm481, %v2216, %v2217
      %2220 = vst.msk [vmem:[%s484] ss:$8 sm:$0x7] %vm366, %v2218
      %2221 = vst.msk [vmem:[%s484] ss:$8 sm:$0x0] %vm366, %v2218
      %2222 = vrot.lane.b32.xlu0 %v286, 84
      %v2223 = vpop.permute.xlu0 %2222
      %v2224 = vrot.slane %v2223, 1
      %v2225 = vsel %vm490, %v2223, %v2224
      %2227 = vst.msk [vmem:[%s493] ss:$8 sm:$0x7] %vm366, %v2225
      %2228 = vst.msk [vmem:[%s493] ss:$8 sm:$0x0] %vm366, %v2225
      %2229 = vrot.lane.b32.xlu0 %v286, 68
      %v2230 = vpop.permute.xlu0 %2229
      %v2231 = vrot.slane %v2230, 1
      %v2232 = vsel %vm499, %v2230, %v2231
      %2234 = vst.msk [vmem:[%s502] ss:$8 sm:$0x7] %vm366, %v2232
      %2235 = vst.msk [vmem:[%s502] ss:$8 sm:$0x0] %vm366, %v2232
      %2236 = vrot.lane.b32.xlu0 %v286, 67
      %v2237 = vpop.permute.xlu0 %2236
      %v2238 = vrot.slane %v2237, 1
      %v2239 = vsel %vm508, %v2237, %v2238
      %2241 = vst.msk [vmem:[%s511] ss:$8 sm:$0x7] %vm366, %v2239
      %2242 = vst.msk [vmem:[%s511] ss:$8 sm:$0x0] %vm366, %v2239
      %2243 = vrot.lane.b32.xlu0 %v286, 66
      %v2244 = vpop.permute.xlu0 %2243
      %v2245 = vrot.slane %v2244, 1
      %v2246 = vsel %vm517, %v2244, %v2245
      %2248 = vst.msk [vmem:[%s520] ss:$8 sm:$0x7] %vm366, %v2246
      %2249 = vst.msk [vmem:[%s520] ss:$8 sm:$0x0] %vm366, %v2246
      %2250 = vrot.lane.b32.xlu0 %v286, 65
      %v2251 = vpop.permute.xlu0 %2250
      %v2252 = vrot.slane %v2251, 1
      %v2253 = vsel %vm526, %v2251, %v2252
      %2255 = vst.msk [vmem:[%s529] ss:$8 sm:$0x7] %vm366, %v2253
      %2256 = vst.msk [vmem:[%s529] ss:$8 sm:$0x0] %vm366, %v2253
      %2257 = vrot.lane.b32.xlu0 %v286, 64
      %v2258 = vpop.permute.xlu0 %2257
      %v2259 = vrot.slane %v2258, 1
      %v2260 = vsel %vm535, %v2258, %v2259
      %2262 = vst.msk [vmem:[%s538] ss:$8 sm:$0x7] %vm366, %v2260
      %2263 = vst.msk [vmem:[%s538] ss:$8 sm:$0x0] %vm366, %v2260
      %2264 = vrot.lane.b32.xlu0 %v286, 48
      %v2265 = vpop.permute.xlu0 %2264
      %v2266 = vrot.slane %v2265, 1
      %v2267 = vsel %vm544, %v2265, %v2266
      %2269 = vst.msk [vmem:[%s547] ss:$8 sm:$0x7] %vm366, %v2267
      %2270 = vst.msk [vmem:[%s547] ss:$8 sm:$0x0] %vm366, %v2267
      %2271 = vrot.lane.b32.xlu0 %v286, 47
      %v2272 = vpop.permute.xlu0 %2271
      %v2273 = vrot.slane %v2272, 1
      %v2274 = vsel %vm553, %v2272, %v2273
      %2276 = vst.msk [vmem:[%s556] ss:$8 sm:$0x7] %vm366, %v2274
      %2277 = vst.msk [vmem:[%s556] ss:$8 sm:$0x0] %vm366, %v2274
      %2278 = vrot.lane.b32.xlu0 %v286, 46
      %v2279 = vpop.permute.xlu0 %2278
      %v2280 = vrot.slane %v2279, 1
      %v2281 = vsel %vm562, %v2279, %v2280
      %2283 = vst.msk [vmem:[%s565] ss:$8 sm:$0x7] %vm366, %v2281
      %2284 = vst.msk [vmem:[%s565] ss:$8 sm:$0x0] %vm366, %v2281
      %2285 = vrot.lane.b32.xlu0 %v286, 45
      %v2286 = vpop.permute.xlu0 %2285
      %v2287 = vrot.slane %v2286, 1
      %v2288 = vsel %vm571, %v2286, %v2287
      %2290 = vst.msk [vmem:[%s574] ss:$8 sm:$0x7] %vm366, %v2288
      %2291 = vst.msk [vmem:[%s574] ss:$8 sm:$0x0] %vm366, %v2288
      %2292 = vrot.lane.b32.xlu0 %v286, 44
      %v2293 = vpop.permute.xlu0 %2292
      %v2294 = vrot.slane %v2293, 1
      %v2295 = vsel %vm580, %v2293, %v2294
      %2297 = vst.msk [vmem:[%s583] ss:$8 sm:$0x7] %vm366, %v2295
      %2298 = vst.msk [vmem:[%s583] ss:$8 sm:$0x0] %vm366, %v2295
      %v2299 = vld [vmem:[#allocation2] sm:$0xff]
      %v2300 = vld [vmem:[#allocation2 + $0x8] sm:$0xff]
      %v2301 = vld [vmem:[#allocation2 + $0x10] sm:$0xff]
      %v2302 = vld [vmem:[#allocation2 + $0x18] sm:$0xff]
      %v2303 = vld [vmem:[#allocation2 + $0x20] sm:$0xff]
      %v2304 = vld [vmem:[#allocation2 + $0x28] sm:$0xff]
      %v2305 = vld [vmem:[#allocation2 + $0x30] sm:$0xff]
      %v2306 = vld [vmem:[#allocation2 + $0x38] sm:$0xff]
      %v2307 = vld [vmem:[#allocation2 + $0x40] sm:$0xff]
      %v2308 = vld [vmem:[#allocation2 + $0x48] sm:$0x1]
      %v2309 = vld [vmem:[#allocation2 + $0x50] sm:$0x1]
      %v2310 = vld [vmem:[#allocation2 + $0x58] sm:$0x1]
      %v2311 = vpack.c.bf16 %v2302, %v2299
      %v2312 = vpack.c.bf16 %v2303, %v2300
      %v2313 = vpack.c.bf16 %v2304, %v2301
      %v2314 = vpack.c.bf16 %v2308, %v2305
      %v2315 = vpack.c.bf16 %v2309, %v2306
      %v2316 = vpack.c.bf16 %v2310, %v2307
      %v2318 = vand.u32 %v2314, %v637
      %v2321 = vand.u32 %v2315, %v637
      %v2324 = vand.u32 %v2316, %v637
      %2326 = vmatpush.bf16.msra.mxu0 0
      %2327 = vmatpush.bf16.msra.mxu0 0
      %2328 = vmatpush.bf16.msra.mxu0 0
      %2329 = vmatpush.bf16.msra.mxu0 0
      %2330 = vmatpush.bf16.msra.mxu0 0
      %2331 = vmatpush.bf16.msra.mxu0 0
      %2332 = vmatpush.bf16.msra.mxu0 %v2318
      %2333 = vmatpush.bf16.msra.mxu0 %v2311
      %2334 = vmatmul.bf16.gmra.mxu0 %v629
      %v2335 = vpop.f32.mrf.mxu0
      %v2336 = vadd.f32 %v607, %v2335
      %v2337 = vpop.f32.mrf.mxu0
      %v2338 = vadd.f32 %v612, %v2337
      %2339 = vmatmul.bf16.gmra.mxu0 %v632
      %v2340 = vpop.f32.mrf.mxu0
      %v2341 = vadd.f32 %v617, %v2340
      %v2342 = vpop.f32.mrf.mxu0
      %2343 = vdwg.mxu0
      %2344 = vmatpush.bf16.msra.mxu0 0
      %2345 = vmatpush.bf16.msra.mxu0 0
      %2346 = vmatpush.bf16.msra.mxu0 0
      %2347 = vmatpush.bf16.msra.mxu0 0
      %2348 = vmatpush.bf16.msra.mxu0 0
      %2349 = vmatpush.bf16.msra.mxu0 0
      %2350 = vmatpush.bf16.msra.mxu0 %v2321
      %2351 = vmatpush.bf16.msra.mxu0 %v2312
      %2352 = vmatmul.bf16.gmra.mxu0 %v629
      %v2353 = vpop.f32.mrf.mxu0
      %v2354 = vadd.f32 %v607, %v2353
      %v2355 = vpop.f32.mrf.mxu0
      %v2356 = vadd.f32 %v612, %v2355
      %2357 = vmatmul.bf16.gmra.mxu0 %v632
      %v2358 = vpop.f32.mrf.mxu0
      %v2359 = vadd.f32 %v617, %v2358
      %v2360 = vpop.f32.mrf.mxu0
      %2361 = vdwg.mxu0
      %2362 = vmatpush.bf16.msra.mxu0 0
      %2363 = vmatpush.bf16.msra.mxu0 0
      %2364 = vmatpush.bf16.msra.mxu0 0
      %2365 = vmatpush.bf16.msra.mxu0 0
      %2366 = vmatpush.bf16.msra.mxu0 0
      %2367 = vmatpush.bf16.msra.mxu0 0
      %2368 = vmatpush.bf16.msra.mxu0 %v2324
      %2369 = vmatpush.bf16.msra.mxu0 %v2313
      %2370 = vmatmul.bf16.gmra.mxu0 %v629
      %v2371 = vpop.f32.mrf.mxu0
      %v2372 = vadd.f32 %v607, %v2371
      %v2373 = vpop.f32.mrf.mxu0
      %v2374 = vadd.f32 %v612, %v2373
      %2375 = vmatmul.bf16.gmra.mxu0 %v632
      %v2376 = vpop.f32.mrf.mxu0
      %v2377 = vadd.f32 %v617, %v2376
      %v2378 = vpop.f32.mrf.mxu0
      %2379 = vdwg.mxu0
      %v2380 = vmax.f32 %v2336, 0.0
      %v2381 = vmax.f32 %v2354, 0.0
      %v2382 = vmax.f32 %v2372, 0.0
      %v2383 = vmax.f32 %v2338, 0.0
      %v2384 = vmax.f32 %v2356, 0.0
      %v2385 = vmax.f32 %v2374, 0.0
      %v2386 = vmax.f32 %v2341, 0.0
      %v2387 = vmax.f32 %v2359, 0.0
      %v2388 = vmax.f32 %v2377, 0.0
      %2398 = vrot.lane.b32.xlu0 %v2380, 127
      %v2399 = vpop.permute.xlu0 %2398
      %2400 = vrot.lane.b32.xlu0 %v2381, 127
      %v2401 = vpop.permute.xlu0 %2400
      %2402 = vrot.lane.b32.xlu0 %v2382, 127
      %v2403 = vpop.permute.xlu0 %2402
      %2404 = vrot.lane.b32.xlu0 %v2383, 127
      %v2405 = vpop.permute.xlu0 %2404
      %2406 = vrot.lane.b32.xlu0 %v2384, 127
      %v2407 = vpop.permute.xlu0 %2406
      %2408 = vrot.lane.b32.xlu0 %v2385, 127
      %v2409 = vpop.permute.xlu0 %2408
      %2410 = vrot.lane.b32.xlu0 %v2386, 127
      %v2411 = vpop.permute.xlu0 %2410
      %2412 = vrot.lane.b32.xlu0 %v2387, 127
      %v2413 = vpop.permute.xlu0 %2412
      %2414 = vrot.lane.b32.xlu0 %v2388, 127
      %v2415 = vpop.permute.xlu0 %2414
      %v2416 = vsel %vm373, %v2399, %v2401
      %v2417 = vsel %vm373, %v2401, %v2403
      %v2418 = vsel %vm373, %v2405, %v2407
      %v2419 = vsel %vm373, %v2407, %v2409
      %v2420 = vsel %vm373, %v2411, %v2413
      %v2421 = vsel %vm373, %v2413, %v2415
      %v2431 = vmax.f32 %v2380, %v2416
      %v2432 = vmax.f32 %v2381, %v2417
      %v2433 = vmax.f32 %v2382, %v2403
      %v2434 = vmax.f32 %v2383, %v2418
      %v2435 = vmax.f32 %v2384, %v2419
      %v2436 = vmax.f32 %v2385, %v2409
      %v2437 = vmax.f32 %v2386, %v2420
      %v2438 = vmax.f32 %v2387, %v2421
      %v2439 = vmax.f32 %v2388, %v2415
      %2449 = vrot.lane.b32.xlu0 %v2431, 108
      %v2450 = vpop.permute.xlu0 %2449
      %2451 = vrot.lane.b32.xlu0 %v2432, 108
      %v2452 = vpop.permute.xlu0 %2451
      %2453 = vrot.lane.b32.xlu0 %v2433, 108
      %v2454 = vpop.permute.xlu0 %2453
      %2455 = vrot.lane.b32.xlu0 %v2434, 108
      %v2456 = vpop.permute.xlu0 %2455
      %2457 = vrot.lane.b32.xlu0 %v2435, 108
      %v2458 = vpop.permute.xlu0 %2457
      %2459 = vrot.lane.b32.xlu0 %v2436, 108
      %v2460 = vpop.permute.xlu0 %2459
      %2461 = vrot.lane.b32.xlu0 %v2437, 108
      %v2462 = vpop.permute.xlu0 %2461
      %2463 = vrot.lane.b32.xlu0 %v2438, 108
      %v2464 = vpop.permute.xlu0 %2463
      %2465 = vrot.lane.b32.xlu0 %v2439, 108
      %v2466 = vpop.permute.xlu0 %2465
      %v2467 = vsel %vm409, %v2450, %v2452
      %v2468 = vsel %vm409, %v2452, %v2454
      %v2469 = vsel %vm409, %v2456, %v2458
      %v2470 = vsel %vm409, %v2458, %v2460
      %v2471 = vsel %vm409, %v2462, %v2464
      %v2472 = vsel %vm409, %v2464, %v2466
      %v2482 = vmax.f32 %v2431, %v2467
      %v2483 = vmax.f32 %v2432, %v2468
      %v2484 = vmax.f32 %v2433, %v2454
      %v2485 = vmax.f32 %v2434, %v2469
      %v2486 = vmax.f32 %v2435, %v2470
      %v2487 = vmax.f32 %v2436, %v2460
      %v2488 = vmax.f32 %v2437, %v2471
      %v2489 = vmax.f32 %v2438, %v2472
      %v2490 = vmax.f32 %v2439, %v2466
      %v2491 = vpack.c.bf16 %v2485, %v2482
      %v2492 = vpack.c.bf16 %v2486, %v2483
      %v2493 = vpack.c.bf16 %v2487, %v2484
      %v2494 = vpack.c.bf16 %v2488, %v2488
      %v2495 = vpack.c.bf16 %v2489, %v2489
      %v2496 = vpack.c.bf16 %v2490, %v2490
      %v2498 = vsel %vm1003, %v2493, 0
      %v2501 = vsel %vm1003, %v2496, 0
      %2503 = vmatpush.bf16.msra.mxu0 %v943
      %2504 = vmatpush.bf16.msra.mxu0 %v941
      %2505 = vmatpush.bf16.msra.mxu0 %v939
      %2506 = vmatpush.bf16.msra.mxu0 %v937
      %2507 = vmatpush.bf16.msra.mxu0 %v935
      %2508 = vmatpush.bf16.msra.mxu0 %v933
      %2509 = vmatpush.bf16.msra.mxu0 %v931
      %2510 = vmatpush.bf16.msra.mxu0 %v929
      %2511 = vmatmul.bf16.gmra.mxu0 %v2491
      %v2512 = vpop.f32.mrf.mxu0
      %v2513 = vadd.f32 0.0, %v2512
      %v2514 = vpop.f32.mrf.mxu0
      %v2515 = vadd.f32 0.0, %v2514
      %2516 = vmatmul.bf16.gmra.mxu0 %v2494
      %v2517 = vpop.f32.mrf.mxu0
      %v2518 = vadd.f32 0.0, %v2517
      %v2519 = vpop.f32.mrf.mxu0
      %2520 = vdwg.mxu0
      %2521 = vmatpush.bf16.msra.mxu0 %v959
      %2522 = vmatpush.bf16.msra.mxu0 %v957
      %2523 = vmatpush.bf16.msra.mxu0 %v955
      %2524 = vmatpush.bf16.msra.mxu0 %v953
      %2525 = vmatpush.bf16.msra.mxu0 %v951
      %2526 = vmatpush.bf16.msra.mxu0 %v949
      %2527 = vmatpush.bf16.msra.mxu0 %v947
      %2528 = vmatpush.bf16.msra.mxu0 %v945
      %2529 = vmatmul.bf16.gmra.mxu0 %v2492
      %v2530 = vpop.f32.mrf.mxu0
      %v2531 = vadd.f32 %v2513, %v2530
      %v2532 = vpop.f32.mrf.mxu0
      %v2533 = vadd.f32 %v2515, %v2532
      %2534 = vmatmul.bf16.gmra.mxu0 %v2495
      %v2535 = vpop.f32.mrf.mxu0
      %v2536 = vadd.f32 %v2518, %v2535
      %v2537 = vpop.f32.mrf.mxu0
      %2538 = vdwg.mxu0
      %2539 = vmatpush.bf16.msra.mxu0 0
      %2540 = vmatpush.bf16.msra.mxu0 0
      %2541 = vmatpush.bf16.msra.mxu0 0
      %2542 = vmatpush.bf16.msra.mxu0 0
      %2543 = vmatpush.bf16.msra.mxu0 0
      %2544 = vmatpush.bf16.msra.mxu0 %v1011
      %2545 = vmatpush.bf16.msra.mxu0 %v963
      %2546 = vmatpush.bf16.msra.mxu0 %v961
      %2547 = vmatmul.bf16.gmra.mxu0 %v2498
      %v2548 = vpop.f32.mrf.mxu0
      %v2549 = vadd.f32 %v2531, %v2548
      %v2550 = vpop.f32.mrf.mxu0
      %v2551 = vadd.f32 %v2533, %v2550
      %2552 = vmatmul.bf16.gmra.mxu0 %v2501
      %v2553 = vpop.f32.mrf.mxu0
      %v2554 = vadd.f32 %v2536, %v2553
      %v2555 = vpop.f32.mrf.mxu0
      %2556 = vdwg.mxu0
      %2557 = vmatpush.bf16.msra.mxu0 %v944
      %2558 = vmatpush.bf16.msra.mxu0 %v942
      %2559 = vmatpush.bf16.msra.mxu0 %v940
      %2560 = vmatpush.bf16.msra.mxu0 %v938
      %2561 = vmatpush.bf16.msra.mxu0 %v936
      %2562 = vmatpush.bf16.msra.mxu0 %v934
      %2563 = vmatpush.bf16.msra.mxu0 %v932
      %2564 = vmatpush.bf16.msra.mxu0 %v930
      %2565 = vmatmul.bf16.gmra.mxu0 %v2491
      %v2566 = vpop.f32.mrf.mxu0
      %v2567 = vadd.f32 0.0, %v2566
      %v2568 = vpop.f32.mrf.mxu0
      %v2569 = vadd.f32 0.0, %v2568
      %2570 = vmatmul.bf16.gmra.mxu0 %v2494
      %v2571 = vpop.f32.mrf.mxu0
      %v2572 = vadd.f32 0.0, %v2571
      %v2573 = vpop.f32.mrf.mxu0
      %2574 = vdwg.mxu0
      %2575 = vmatpush.bf16.msra.mxu0 %v960
      %2576 = vmatpush.bf16.msra.mxu0 %v958
      %2577 = vmatpush.bf16.msra.mxu0 %v956
      %2578 = vmatpush.bf16.msra.mxu0 %v954
      %2579 = vmatpush.bf16.msra.mxu0 %v952
      %2580 = vmatpush.bf16.msra.mxu0 %v950
      %2581 = vmatpush.bf16.msra.mxu0 %v948
      %2582 = vmatpush.bf16.msra.mxu0 %v946
      %2583 = vmatmul.bf16.gmra.mxu0 %v2492
      %v2584 = vpop.f32.mrf.mxu0
      %v2585 = vadd.f32 %v2567, %v2584
      %v2586 = vpop.f32.mrf.mxu0
      %v2587 = vadd.f32 %v2569, %v2586
      %2588 = vmatmul.bf16.gmra.mxu0 %v2495
      %v2589 = vpop.f32.mrf.mxu0
      %v2590 = vadd.f32 %v2572, %v2589
      %v2591 = vpop.f32.mrf.mxu0
      %2592 = vdwg.mxu0
      %2593 = vmatpush.bf16.msra.mxu0 0
      %2594 = vmatpush.bf16.msra.mxu0 0
      %2595 = vmatpush.bf16.msra.mxu0 0
      %2596 = vmatpush.bf16.msra.mxu0 0
      %2597 = vmatpush.bf16.msra.mxu0 0
      %2598 = vmatpush.bf16.msra.mxu0 %v1014
      %2599 = vmatpush.bf16.msra.mxu0 %v964
      %2600 = vmatpush.bf16.msra.mxu0 %v962
      %2601 = vmatmul.bf16.gmra.mxu0 %v2498
      %v2602 = vpop.f32.mrf.mxu0
      %v2603 = vadd.f32 %v2585, %v2602
      %v2604 = vpop.f32.mrf.mxu0
      %v2605 = vadd.f32 %v2587, %v2604
      %2606 = vmatmul.bf16.gmra.mxu0 %v2501
      %v2607 = vpop.f32.mrf.mxu0
      %v2608 = vadd.f32 %v2590, %v2607
      %v2609 = vpop.f32.mrf.mxu0
      %2610 = vdwg.mxu0
      %2611 = vst [vmem:[#allocation3] sm:$0xff] %v2549
      %2612 = vst [vmem:[#allocation3 + $0x8] sm:$0xff] %v2551
      %2613 = vst [vmem:[#allocation3 + $0x10] sm:$0xf] %v2554
      %2620 = vrot.lane.b32.xlu0 %v2549, 127
      %v2621 = vpop.permute.xlu0 %2620
      %2622 = vrot.lane.b32.xlu0 %v2603, 127
      %v2623 = vpop.permute.xlu0 %2622
      %2624 = vrot.lane.b32.xlu0 %v2551, 127
      %v2625 = vpop.permute.xlu0 %2624
      %2626 = vrot.lane.b32.xlu0 %v2605, 127
      %v2627 = vpop.permute.xlu0 %2626
      %2628 = vrot.lane.b32.xlu0 %v2554, 127
      %v2629 = vpop.permute.xlu0 %2628
      %2630 = vrot.lane.b32.xlu0 %v2608, 127
      %v2631 = vpop.permute.xlu0 %2630
      %v2632 = vsel %vm373, %v2621, %v2623
      %v2633 = vsel %vm373, %v2625, %v2627
      %v2634 = vsel %vm373, %v2629, %v2631
      %2638 = vst [vmem:[#allocation3 + $0x14] sm:$0xff] %v2632
      %2639 = vst [vmem:[#allocation3 + $0x1c] sm:$0xff] %v2633
      %2640 = vst [vmem:[#allocation3 + $0x24] sm:$0xf] %v2634
      %2641 = vrot.lane.b32.xlu0 %v2549, 126
      %v2642 = vpop.permute.xlu0 %2641
      %2643 = vrot.lane.b32.xlu0 %v2603, 126
      %v2644 = vpop.permute.xlu0 %2643
      %2645 = vrot.lane.b32.xlu0 %v2551, 126
      %v2646 = vpop.permute.xlu0 %2645
      %2647 = vrot.lane.b32.xlu0 %v2605, 126
      %v2648 = vpop.permute.xlu0 %2647
      %2649 = vrot.lane.b32.xlu0 %v2554, 126
      %v2650 = vpop.permute.xlu0 %2649
      %2651 = vrot.lane.b32.xlu0 %v2608, 126
      %v2652 = vpop.permute.xlu0 %2651
      %v2653 = vsel %vm382, %v2642, %v2644
      %v2654 = vsel %vm382, %v2646, %v2648
      %v2655 = vsel %vm382, %v2650, %v2652
      %2659 = vst [vmem:[#allocation3 + $0x28] sm:$0xff] %v2653
      %2660 = vst [vmem:[#allocation3 + $0x30] sm:$0xff] %v2654
      %2661 = vst [vmem:[#allocation3 + $0x38] sm:$0xf] %v2655
      %2662 = vrot.lane.b32.xlu0 %v2549, 125
      %v2663 = vpop.permute.xlu0 %2662
      %2664 = vrot.lane.b32.xlu0 %v2603, 125
      %v2665 = vpop.permute.xlu0 %2664
      %2666 = vrot.lane.b32.xlu0 %v2551, 125
      %v2667 = vpop.permute.xlu0 %2666
      %2668 = vrot.lane.b32.xlu0 %v2605, 125
      %v2669 = vpop.permute.xlu0 %2668
      %2670 = vrot.lane.b32.xlu0 %v2554, 125
      %v2671 = vpop.permute.xlu0 %2670
      %2672 = vrot.lane.b32.xlu0 %v2608, 125
      %v2673 = vpop.permute.xlu0 %2672
      %v2674 = vsel %vm391, %v2663, %v2665
      %v2675 = vsel %vm391, %v2667, %v2669
      %v2676 = vsel %vm391, %v2671, %v2673
      %2680 = vst [vmem:[#allocation3 + $0x3c] sm:$0xff] %v2674
      %2681 = vst [vmem:[#allocation3 + $0x44] sm:$0xff] %v2675
      %2682 = vst [vmem:[#allocation3 + $0x4c] sm:$0xf] %v2676
      %2683 = vrot.lane.b32.xlu0 %v2549, 124
      %v2684 = vpop.permute.xlu0 %2683
      %2685 = vrot.lane.b32.xlu0 %v2603, 124
      %v2686 = vpop.permute.xlu0 %2685
      %2687 = vrot.lane.b32.xlu0 %v2551, 124
      %v2688 = vpop.permute.xlu0 %2687
      %2689 = vrot.lane.b32.xlu0 %v2605, 124
      %v2690 = vpop.permute.xlu0 %2689
      %2691 = vrot.lane.b32.xlu0 %v2554, 124
      %v2692 = vpop.permute.xlu0 %2691
      %2693 = vrot.lane.b32.xlu0 %v2608, 124
      %v2694 = vpop.permute.xlu0 %2693
      %v2695 = vsel %vm400, %v2684, %v2686
      %v2696 = vsel %vm400, %v2688, %v2690
      %v2697 = vsel %vm400, %v2692, %v2694
      %2701 = vst [vmem:[#allocation3 + $0x50] sm:$0xff] %v2695
      %2702 = vst [vmem:[#allocation3 + $0x58] sm:$0xff] %v2696
      %2703 = vst [vmem:[#allocation3 + $0x60] sm:$0xf] %v2697
      %2704 = vrot.lane.b32.xlu0 %v2549, 116
      %v2705 = vpop.permute.xlu0 %2704
      %2706 = vrot.lane.b32.xlu0 %v2603, 116
      %v2707 = vpop.permute.xlu0 %2706
      %2708 = vrot.lane.b32.xlu0 %v2551, 116
      %v2709 = vpop.permute.xlu0 %2708
      %2710 = vrot.lane.b32.xlu0 %v2605, 116
      %v2711 = vpop.permute.xlu0 %2710
      %2712 = vrot.lane.b32.xlu0 %v2554, 116
      %v2713 = vpop.permute.xlu0 %2712
      %2714 = vrot.lane.b32.xlu0 %v2608, 116
      %v2715 = vpop.permute.xlu0 %2714
      %v2716 = vsel %vm1229, %v2705, %v2707
      %v2717 = vsel %vm1229, %v2709, %v2711
      %v2718 = vsel %vm1229, %v2713, %v2715
      %2722 = vst [vmem:[#allocation3 + $0x64] sm:$0xff] %v2716
      %2723 = vst [vmem:[#allocation3 + $0x6c] sm:$0xff] %v2717
      %2724 = vst [vmem:[#allocation3 + $0x74] sm:$0xf] %v2718
      %2725 = vrot.lane.b32.xlu0 %v2549, 115
      %v2726 = vpop.permute.xlu0 %2725
      %2727 = vrot.lane.b32.xlu0 %v2603, 115
      %v2728 = vpop.permute.xlu0 %2727
      %2729 = vrot.lane.b32.xlu0 %v2551, 115
      %v2730 = vpop.permute.xlu0 %2729
      %2731 = vrot.lane.b32.xlu0 %v2605, 115
      %v2732 = vpop.permute.xlu0 %2731
      %2733 = vrot.lane.b32.xlu0 %v2554, 115
      %v2734 = vpop.permute.xlu0 %2733
      %2735 = vrot.lane.b32.xlu0 %v2608, 115
      %v2736 = vpop.permute.xlu0 %2735
      %v2737 = vsel %vm1251, %v2726, %v2728
      %v2738 = vsel %vm1251, %v2730, %v2732
      %v2739 = vsel %vm1251, %v2734, %v2736
      %2743 = vst [vmem:[#allocation3 + $0x78] sm:$0xff] %v2737
      %2744 = vst [vmem:[#allocation3 + $0x80] sm:$0xff] %v2738
      %2745 = vst [vmem:[#allocation3 + $0x88] sm:$0xf] %v2739
      %2746 = vrot.lane.b32.xlu0 %v2549, 114
      %v2747 = vpop.permute.xlu0 %2746
      %2748 = vrot.lane.b32.xlu0 %v2603, 114
      %v2749 = vpop.permute.xlu0 %2748
      %2750 = vrot.lane.b32.xlu0 %v2551, 114
      %v2751 = vpop.permute.xlu0 %2750
      %2752 = vrot.lane.b32.xlu0 %v2605, 114
      %v2753 = vpop.permute.xlu0 %2752
      %2754 = vrot.lane.b32.xlu0 %v2554, 114
      %v2755 = vpop.permute.xlu0 %2754
      %2756 = vrot.lane.b32.xlu0 %v2608, 114
      %v2757 = vpop.permute.xlu0 %2756
      %v2758 = vsel %vm1273, %v2747, %v2749
      %v2759 = vsel %vm1273, %v2751, %v2753
      %v2760 = vsel %vm1273, %v2755, %v2757
      %2764 = vst [vmem:[#allocation3 + $0x8c] sm:$0xff] %v2758
      %2765 = vst [vmem:[#allocation3 + $0x94] sm:$0xff] %v2759
      %2766 = vst [vmem:[#allocation3 + $0x9c] sm:$0xf] %v2760
      %2767 = vrot.lane.b32.xlu0 %v2549, 113
      %v2768 = vpop.permute.xlu0 %2767
      %2769 = vrot.lane.b32.xlu0 %v2603, 113
      %v2770 = vpop.permute.xlu0 %2769
      %2771 = vrot.lane.b32.xlu0 %v2551, 113
      %v2772 = vpop.permute.xlu0 %2771
      %2773 = vrot.lane.b32.xlu0 %v2605, 113
      %v2774 = vpop.permute.xlu0 %2773
      %2775 = vrot.lane.b32.xlu0 %v2554, 113
      %v2776 = vpop.permute.xlu0 %2775
      %2777 = vrot.lane.b32.xlu0 %v2608, 113
      %v2778 = vpop.permute.xlu0 %2777
      %v2779 = vsel %vm1295, %v2768, %v2770
      %v2780 = vsel %vm1295, %v2772, %v2774
      %v2781 = vsel %vm1295, %v2776, %v2778
      %2785 = vst [vmem:[#allocation3 + $0xa0] sm:$0xff] %v2779
      %2786 = vst [vmem:[#allocation3 + $0xa8] sm:$0xff] %v2780
      %2787 = vst [vmem:[#allocation3 + $0xb0] sm:$0xf] %v2781
      %2788 = vrot.lane.b32.xlu0 %v2549, 112
      %v2789 = vpop.permute.xlu0 %2788
      %2790 = vrot.lane.b32.xlu0 %v2603, 112
      %v2791 = vpop.permute.xlu0 %2790
      %2792 = vrot.lane.b32.xlu0 %v2551, 112
      %v2793 = vpop.permute.xlu0 %2792
      %2794 = vrot.lane.b32.xlu0 %v2605, 112
      %v2795 = vpop.permute.xlu0 %2794
      %2796 = vrot.lane.b32.xlu0 %v2554, 112
      %v2797 = vpop.permute.xlu0 %2796
      %2798 = vrot.lane.b32.xlu0 %v2608, 112
      %v2799 = vpop.permute.xlu0 %2798
      %v2800 = vsel %vm1317, %v2789, %v2791
      %v2801 = vsel %vm1317, %v2793, %v2795
      %v2802 = vsel %vm1317, %v2797, %v2799
      %2806 = vst [vmem:[#allocation3 + $0xb4] sm:$0xff] %v2800
      %2807 = vst [vmem:[#allocation3 + $0xbc] sm:$0xff] %v2801
      %2808 = vst [vmem:[#allocation3 + $0xc4] sm:$0xf] %v2802
      %2809 = vrot.lane.b32.xlu0 %v2549, 104
      %v2810 = vpop.permute.xlu0 %2809
      %2811 = vrot.lane.b32.xlu0 %v2603, 104
      %v2812 = vpop.permute.xlu0 %2811
      %2813 = vrot.lane.b32.xlu0 %v2551, 104
      %v2814 = vpop.permute.xlu0 %2813
      %2815 = vrot.lane.b32.xlu0 %v2605, 104
      %v2816 = vpop.permute.xlu0 %2815
      %2817 = vrot.lane.b32.xlu0 %v2554, 104
      %v2818 = vpop.permute.xlu0 %2817
      %2819 = vrot.lane.b32.xlu0 %v2608, 104
      %v2820 = vpop.permute.xlu0 %2819
      %v2821 = vsel %vm445, %v2810, %v2812
      %v2822 = vsel %vm445, %v2814, %v2816
      %v2823 = vsel %vm445, %v2818, %v2820
      %2827 = vst [vmem:[#allocation3 + $0xc8] sm:$0xff] %v2821
      %2828 = vst [vmem:[#allocation3 + $0xd0] sm:$0xff] %v2822
      %2829 = vst [vmem:[#allocation3 + $0xd8] sm:$0xf] %v2823
      %2830 = vrot.lane.b32.xlu0 %v2549, 103
      %v2831 = vpop.permute.xlu0 %2830
      %2832 = vrot.lane.b32.xlu0 %v2603, 103
      %v2833 = vpop.permute.xlu0 %2832
      %2834 = vrot.lane.b32.xlu0 %v2551, 103
      %v2835 = vpop.permute.xlu0 %2834
      %2836 = vrot.lane.b32.xlu0 %v2605, 103
      %v2837 = vpop.permute.xlu0 %2836
      %2838 = vrot.lane.b32.xlu0 %v2554, 103
      %v2839 = vpop.permute.xlu0 %2838
      %2840 = vrot.lane.b32.xlu0 %v2608, 103
      %v2841 = vpop.permute.xlu0 %2840
      %v2842 = vsel %vm1360, %v2831, %v2833
      %v2843 = vsel %vm1360, %v2835, %v2837
      %v2844 = vsel %vm1360, %v2839, %v2841
      %2848 = vst [vmem:[#allocation3 + $0xdc] sm:$0xff] %v2842
      %2849 = vst [vmem:[#allocation3 + $0xe4] sm:$0xff] %v2843
      %2850 = vst [vmem:[#allocation3 + $0xec] sm:$0xf] %v2844
      %2851 = vrot.lane.b32.xlu0 %v2549, 102
      %v2852 = vpop.permute.xlu0 %2851
      %2853 = vrot.lane.b32.xlu0 %v2603, 102
      %v2854 = vpop.permute.xlu0 %2853
      %2855 = vrot.lane.b32.xlu0 %v2551, 102
      %v2856 = vpop.permute.xlu0 %2855
      %2857 = vrot.lane.b32.xlu0 %v2605, 102
      %v2858 = vpop.permute.xlu0 %2857
      %2859 = vrot.lane.b32.xlu0 %v2554, 102
      %v2860 = vpop.permute.xlu0 %2859
      %2861 = vrot.lane.b32.xlu0 %v2608, 102
      %v2862 = vpop.permute.xlu0 %2861
      %v2863 = vsel %vm1382, %v2852, %v2854
      %v2864 = vsel %vm1382, %v2856, %v2858
      %v2865 = vsel %vm1382, %v2860, %v2862
      %2869 = vst [vmem:[#allocation3 + $0xf0] sm:$0xff] %v2863
      %2870 = vst [vmem:[#allocation3 + $0xf8] sm:$0xff] %v2864
      %2871 = vst [vmem:[#allocation3 + $0x100] sm:$0xf] %v2865
      %2872 = vrot.lane.b32.xlu0 %v2549, 101
      %v2873 = vpop.permute.xlu0 %2872
      %2874 = vrot.lane.b32.xlu0 %v2603, 101
      %v2875 = vpop.permute.xlu0 %2874
      %2876 = vrot.lane.b32.xlu0 %v2551, 101
      %v2877 = vpop.permute.xlu0 %2876
      %2878 = vrot.lane.b32.xlu0 %v2605, 101
      %v2879 = vpop.permute.xlu0 %2878
      %2880 = vrot.lane.b32.xlu0 %v2554, 101
      %v2881 = vpop.permute.xlu0 %2880
      %2882 = vrot.lane.b32.xlu0 %v2608, 101
      %v2883 = vpop.permute.xlu0 %2882
      %v2884 = vsel %vm1404, %v2873, %v2875
      %v2885 = vsel %vm1404, %v2877, %v2879
      %v2886 = vsel %vm1404, %v2881, %v2883
      %2890 = vst [vmem:[#allocation3 + $0x104] sm:$0xff] %v2884
      %2891 = vst [vmem:[#allocation3 + $0x10c] sm:$0xff] %v2885
      %2892 = vst [vmem:[#allocation3 + $0x114] sm:$0xf] %v2886
      %2893 = vrot.lane.b32.xlu0 %v2549, 100
      %v2894 = vpop.permute.xlu0 %2893
      %2895 = vrot.lane.b32.xlu0 %v2603, 100
      %v2896 = vpop.permute.xlu0 %2895
      %2897 = vrot.lane.b32.xlu0 %v2551, 100
      %v2898 = vpop.permute.xlu0 %2897
      %2899 = vrot.lane.b32.xlu0 %v2605, 100
      %v2900 = vpop.permute.xlu0 %2899
      %2901 = vrot.lane.b32.xlu0 %v2554, 100
      %v2902 = vpop.permute.xlu0 %2901
      %2903 = vrot.lane.b32.xlu0 %v2608, 100
      %v2904 = vpop.permute.xlu0 %2903
      %v2905 = vsel %vm1426, %v2894, %v2896
      %v2906 = vsel %vm1426, %v2898, %v2900
      %v2907 = vsel %vm1426, %v2902, %v2904
      %2911 = vst [vmem:[#allocation3 + $0x118] sm:$0xff] %v2905
      %2912 = vst [vmem:[#allocation3 + $0x120] sm:$0xff] %v2906
      %2913 = vst [vmem:[#allocation3 + $0x128] sm:$0xf] %v2907
      %2914 = vrot.lane.b32.xlu0 %v2549, 92
      %v2915 = vpop.permute.xlu0 %2914
      %2916 = vrot.lane.b32.xlu0 %v2603, 92
      %v2917 = vpop.permute.xlu0 %2916
      %2918 = vrot.lane.b32.xlu0 %v2551, 92
      %v2919 = vpop.permute.xlu0 %2918
      %2920 = vrot.lane.b32.xlu0 %v2605, 92
      %v2921 = vpop.permute.xlu0 %2920
      %2922 = vrot.lane.b32.xlu0 %v2554, 92
      %v2923 = vpop.permute.xlu0 %2922
      %2924 = vrot.lane.b32.xlu0 %v2608, 92
      %v2925 = vpop.permute.xlu0 %2924
      %v2926 = vsel %vm1448, %v2915, %v2917
      %v2927 = vsel %vm1448, %v2919, %v2921
      %v2928 = vsel %vm1448, %v2923, %v2925
      %2932 = vst [vmem:[#allocation3 + $0x12c] sm:$0xff] %v2926
      %2933 = vst [vmem:[#allocation3 + $0x134] sm:$0xff] %v2927
      %2934 = vst [vmem:[#allocation3 + $0x13c] sm:$0xf] %v2928
      %2935 = vrot.lane.b32.xlu0 %v2549, 91
      %v2936 = vpop.permute.xlu0 %2935
      %2937 = vrot.lane.b32.xlu0 %v2603, 91
      %v2938 = vpop.permute.xlu0 %2937
      %2939 = vrot.lane.b32.xlu0 %v2551, 91
      %v2940 = vpop.permute.xlu0 %2939
      %2941 = vrot.lane.b32.xlu0 %v2605, 91
      %v2942 = vpop.permute.xlu0 %2941
      %2943 = vrot.lane.b32.xlu0 %v2554, 91
      %v2944 = vpop.permute.xlu0 %2943
      %2945 = vrot.lane.b32.xlu0 %v2608, 91
      %v2946 = vpop.permute.xlu0 %2945
      %v2947 = vsel %vm1470, %v2936, %v2938
      %v2948 = vsel %vm1470, %v2940, %v2942
      %v2949 = vsel %vm1470, %v2944, %v2946
      %2953 = vst [vmem:[#allocation3 + $0x140] sm:$0xff] %v2947
      %2954 = vst [vmem:[#allocation3 + $0x148] sm:$0xff] %v2948
      %2955 = vst [vmem:[#allocation3 + $0x150] sm:$0xf] %v2949
      %2956 = vrot.lane.b32.xlu0 %v2549, 90
      %v2957 = vpop.permute.xlu0 %2956
      %2958 = vrot.lane.b32.xlu0 %v2603, 90
      %v2959 = vpop.permute.xlu0 %2958
      %2960 = vrot.lane.b32.xlu0 %v2551, 90
      %v2961 = vpop.permute.xlu0 %2960
      %2962 = vrot.lane.b32.xlu0 %v2605, 90
      %v2963 = vpop.permute.xlu0 %2962
      %2964 = vrot.lane.b32.xlu0 %v2554, 90
      %v2965 = vpop.permute.xlu0 %2964
      %2966 = vrot.lane.b32.xlu0 %v2608, 90
      %v2967 = vpop.permute.xlu0 %2966
      %v2968 = vsel %vm1492, %v2957, %v2959
      %v2969 = vsel %vm1492, %v2961, %v2963
      %v2970 = vsel %vm1492, %v2965, %v2967
      %2974 = vst [vmem:[#allocation3 + $0x154] sm:$0xff] %v2968
      %2975 = vst [vmem:[#allocation3 + $0x15c] sm:$0xff] %v2969
      %2976 = vst [vmem:[#allocation3 + $0x164] sm:$0xf] %v2970
      %2977 = vrot.lane.b32.xlu0 %v2549, 89
      %v2978 = vpop.permute.xlu0 %2977
      %2979 = vrot.lane.b32.xlu0 %v2603, 89
      %v2980 = vpop.permute.xlu0 %2979
      %2981 = vrot.lane.b32.xlu0 %v2551, 89
      %v2982 = vpop.permute.xlu0 %2981
      %2983 = vrot.lane.b32.xlu0 %v2605, 89
      %v2984 = vpop.permute.xlu0 %2983
      %2985 = vrot.lane.b32.xlu0 %v2554, 89
      %v2986 = vpop.permute.xlu0 %2985
      %2987 = vrot.lane.b32.xlu0 %v2608, 89
      %v2988 = vpop.permute.xlu0 %2987
      %v2989 = vsel %vm1514, %v2978, %v2980
      %v2990 = vsel %vm1514, %v2982, %v2984
      %v2991 = vsel %vm1514, %v2986, %v2988
      %2995 = vst [vmem:[#allocation3 + $0x168] sm:$0xff] %v2989
      %2996 = vst [vmem:[#allocation3 + $0x170] sm:$0xff] %v2990
      %2997 = vst [vmem:[#allocation3 + $0x178] sm:$0xf] %v2991
      %2998 = vrot.lane.b32.xlu0 %v2549, 88
      %v2999 = vpop.permute.xlu0 %2998
      %3000 = vrot.lane.b32.xlu0 %v2603, 88
      %v3001 = vpop.permute.xlu0 %3000
      %3002 = vrot.lane.b32.xlu0 %v2551, 88
      %v3003 = vpop.permute.xlu0 %3002
      %3004 = vrot.lane.b32.xlu0 %v2605, 88
      %v3005 = vpop.permute.xlu0 %3004
      %3006 = vrot.lane.b32.xlu0 %v2554, 88
      %v3007 = vpop.permute.xlu0 %3006
      %3008 = vrot.lane.b32.xlu0 %v2608, 88
      %v3009 = vpop.permute.xlu0 %3008
      %v3010 = vsel %vm454, %v2999, %v3001
      %v3011 = vsel %vm454, %v3003, %v3005
      %v3012 = vsel %vm454, %v3007, %v3009
      %3016 = vst [vmem:[#allocation3 + $0x17c] sm:$0xff] %v3010
      %3017 = vst [vmem:[#allocation3 + $0x184] sm:$0xff] %v3011
      %3018 = vst [vmem:[#allocation3 + $0x18c] sm:$0xf] %v3012
      %3019 = vrot.lane.b32.xlu0 %v2549, 80
      %v3020 = vpop.permute.xlu0 %3019
      %3021 = vrot.lane.b32.xlu0 %v2603, 80
      %v3022 = vpop.permute.xlu0 %3021
      %3023 = vrot.lane.b32.xlu0 %v2551, 80
      %v3024 = vpop.permute.xlu0 %3023
      %3025 = vrot.lane.b32.xlu0 %v2605, 80
      %v3026 = vpop.permute.xlu0 %3025
      %3027 = vrot.lane.b32.xlu0 %v2554, 80
      %v3028 = vpop.permute.xlu0 %3027
      %3029 = vrot.lane.b32.xlu0 %v2608, 80
      %v3030 = vpop.permute.xlu0 %3029
      %v3031 = vsel %vm1557, %v3020, %v3022
      %v3032 = vsel %vm1557, %v3024, %v3026
      %v3033 = vsel %vm1557, %v3028, %v3030
      %3037 = vst [vmem:[#allocation3 + $0x190] sm:$0xff] %v3031
      %3038 = vst [vmem:[#allocation3 + $0x198] sm:$0xff] %v3032
      %3039 = vst [vmem:[#allocation3 + $0x1a0] sm:$0xf] %v3033
      %3040 = vrot.lane.b32.xlu0 %v2549, 79
      %v3041 = vpop.permute.xlu0 %3040
      %3042 = vrot.lane.b32.xlu0 %v2603, 79
      %v3043 = vpop.permute.xlu0 %3042
      %3044 = vrot.lane.b32.xlu0 %v2551, 79
      %v3045 = vpop.permute.xlu0 %3044
      %3046 = vrot.lane.b32.xlu0 %v2605, 79
      %v3047 = vpop.permute.xlu0 %3046
      %3048 = vrot.lane.b32.xlu0 %v2554, 79
      %v3049 = vpop.permute.xlu0 %3048
      %3050 = vrot.lane.b32.xlu0 %v2608, 79
      %v3051 = vpop.permute.xlu0 %3050
      %v3052 = vsel %vm1579, %v3041, %v3043
      %v3053 = vsel %vm1579, %v3045, %v3047
      %v3054 = vsel %vm1579, %v3049, %v3051
      %3058 = vst [vmem:[#allocation3 + $0x1a4] sm:$0xff] %v3052
      %3059 = vst [vmem:[#allocation3 + $0x1ac] sm:$0xff] %v3053
      %3060 = vst [vmem:[#allocation3 + $0x1b4] sm:$0xf] %v3054
      %3061 = vrot.lane.b32.xlu0 %v2549, 78
      %v3062 = vpop.permute.xlu0 %3061
      %3063 = vrot.lane.b32.xlu0 %v2603, 78
      %v3064 = vpop.permute.xlu0 %3063
      %3065 = vrot.lane.b32.xlu0 %v2551, 78
      %v3066 = vpop.permute.xlu0 %3065
      %3067 = vrot.lane.b32.xlu0 %v2605, 78
      %v3068 = vpop.permute.xlu0 %3067
      %3069 = vrot.lane.b32.xlu0 %v2554, 78
      %v3070 = vpop.permute.xlu0 %3069
      %3071 = vrot.lane.b32.xlu0 %v2608, 78
      %v3072 = vpop.permute.xlu0 %3071
      %v3073 = vsel %vm1601, %v3062, %v3064
      %v3074 = vsel %vm1601, %v3066, %v3068
      %v3075 = vsel %vm1601, %v3070, %v3072
      %3079 = vst [vmem:[#allocation3 + $0x1b8] sm:$0xff] %v3073
      %3080 = vst [vmem:[#allocation3 + $0x1c0] sm:$0xff] %v3074
      %3081 = vst [vmem:[#allocation3 + $0x1c8] sm:$0xf] %v3075
      %3082 = vrot.lane.b32.xlu0 %v2549, 77
      %v3083 = vpop.permute.xlu0 %3082
      %3084 = vrot.lane.b32.xlu0 %v2603, 77
      %v3085 = vpop.permute.xlu0 %3084
      %3086 = vrot.lane.b32.xlu0 %v2551, 77
      %v3087 = vpop.permute.xlu0 %3086
      %3088 = vrot.lane.b32.xlu0 %v2605, 77
      %v3089 = vpop.permute.xlu0 %3088
      %3090 = vrot.lane.b32.xlu0 %v2554, 77
      %v3091 = vpop.permute.xlu0 %3090
      %3092 = vrot.lane.b32.xlu0 %v2608, 77
      %v3093 = vpop.permute.xlu0 %3092
      %v3094 = vsel %vm1623, %v3083, %v3085
      %v3095 = vsel %vm1623, %v3087, %v3089
      %v3096 = vsel %vm1623, %v3091, %v3093
      %3100 = vst [vmem:[#allocation3 + $0x1cc] sm:$0xff] %v3094
      %3101 = vst [vmem:[#allocation3 + $0x1d4] sm:$0xff] %v3095
      %3102 = vst [vmem:[#allocation3 + $0x1dc] sm:$0xf] %v3096
      %3103 = vrot.lane.b32.xlu0 %v2549, 76
      %v3104 = vpop.permute.xlu0 %3103
      %3105 = vrot.lane.b32.xlu0 %v2603, 76
      %v3106 = vpop.permute.xlu0 %3105
      %3107 = vrot.lane.b32.xlu0 %v2551, 76
      %v3108 = vpop.permute.xlu0 %3107
      %3109 = vrot.lane.b32.xlu0 %v2605, 76
      %v3110 = vpop.permute.xlu0 %3109
      %3111 = vrot.lane.b32.xlu0 %v2554, 76
      %v3112 = vpop.permute.xlu0 %3111
      %3113 = vrot.lane.b32.xlu0 %v2608, 76
      %v3114 = vpop.permute.xlu0 %3113
      %v3115 = vsel %vm1645, %v3104, %v3106
      %v3116 = vsel %vm1645, %v3108, %v3110
      %v3117 = vsel %vm1645, %v3112, %v3114
      %3121 = vst [vmem:[#allocation3 + $0x1e0] sm:$0xff] %v3115
      %3122 = vst [vmem:[#allocation3 + $0x1e8] sm:$0xff] %v3116
      %3123 = vst [vmem:[#allocation3 + $0x1f0] sm:$0xf] %v3117
      %v3124 = vld [vmem:[#allocation3] sm:$0xff]
      %v3125 = vld [vmem:[#allocation3 + $0x8] sm:$0xff]
      %v3126 = vld [vmem:[#allocation3 + $0x10] sm:$0xff]
      %v3127 = vld [vmem:[#allocation3 + $0x18] sm:$0xff]
      %v3128 = vld [vmem:[#allocation3 + $0x20] sm:$0xff]
      %v3129 = vld [vmem:[#allocation3 + $0x28] sm:$0xff]
      %v3130 = vld [vmem:[#allocation3 + $0x30] sm:$0xff]
      %v3131 = vld [vmem:[#allocation3 + $0x38] sm:$0xff]
      %v3132 = vld [vmem:[#allocation3 + $0x40] sm:$0xff]
      %v3133 = vld [vmem:[#allocation3 + $0x48] sm:$0xff]
      %v3134 = vld [vmem:[#allocation3 + $0x50] sm:$0xff]
      %v3135 = vld [vmem:[#allocation3 + $0x58] sm:$0xff]
      %v3136 = vld [vmem:[#allocation3 + $0x60] sm:$0xff]
      %v3137 = vld [vmem:[#allocation3 + $0x68] sm:$0xff]
      %v3138 = vld [vmem:[#allocation3 + $0x70] sm:$0xff]
      %v3139 = vld [vmem:[#allocation3 + $0x78] sm:$0xff]
      %v3140 = vld [vmem:[#allocation3 + $0x80] sm:$0xff]
      %v3141 = vld [vmem:[#allocation3 + $0x88] sm:$0xff]
      %v3142 = vld [vmem:[#allocation3 + $0x90] sm:$0xff]
      %v3143 = vld [vmem:[#allocation3 + $0x98] sm:$0xff]
      %v3144 = vld [vmem:[#allocation3 + $0xa0] sm:$0xff]
      %v3145 = vld [vmem:[#allocation3 + $0xa8] sm:$0xff]
      %v3146 = vld [vmem:[#allocation3 + $0xb0] sm:$0xff]
      %v3147 = vld [vmem:[#allocation3 + $0xb8] sm:$0xff]
      %v3148 = vld [vmem:[#allocation3 + $0xc0] sm:$0xff]
      %v3149 = vld [vmem:[#allocation3 + $0xc8] sm:$0xff]
      %v3150 = vld [vmem:[#allocation3 + $0xd0] sm:$0xff]
      %v3151 = vld [vmem:[#allocation3 + $0xd8] sm:$0xff]
      %v3152 = vld [vmem:[#allocation3 + $0xe0] sm:$0xff]
      %v3153 = vld [vmem:[#allocation3 + $0xe8] sm:$0xff]
      %v3154 = vld [vmem:[#allocation3 + $0xf0] sm:$0xff]
      %v3155 = vld [vmem:[#allocation3 + $0xf8] sm:$0xff]
      %v3156 = vld [vmem:[#allocation3 + $0x100] sm:$0xff]
      %v3157 = vld [vmem:[#allocation3 + $0x108] sm:$0xff]
      %v3158 = vld [vmem:[#allocation3 + $0x110] sm:$0xff]
      %v3159 = vld [vmem:[#allocation3 + $0x118] sm:$0xff]
      %v3160 = vld [vmem:[#allocation3 + $0x120] sm:$0xff]
      %v3161 = vld [vmem:[#allocation3 + $0x128] sm:$0xff]
      %v3162 = vld [vmem:[#allocation3 + $0x130] sm:$0xff]
      %v3163 = vld [vmem:[#allocation3 + $0x138] sm:$0xff]
      %v3164 = vld [vmem:[#allocation3 + $0x140] sm:$0xff]
      %v3165 = vld [vmem:[#allocation3 + $0x148] sm:$0xff]
      %v3166 = vld [vmem:[#allocation3 + $0x150] sm:$0xff]
      %v3167 = vld [vmem:[#allocation3 + $0x158] sm:$0xff]
      %v3168 = vld [vmem:[#allocation3 + $0x160] sm:$0xff]
      %v3169 = vld [vmem:[#allocation3 + $0x168] sm:$0xff]
      %v3170 = vld [vmem:[#allocation3 + $0x170] sm:$0xff]
      %v3171 = vld [vmem:[#allocation3 + $0x178] sm:$0xff]
      %v3172 = vld [vmem:[#allocation3 + $0x180] sm:$0xff]
      %v3173 = vld [vmem:[#allocation3 + $0x188] sm:$0xff]
      %v3174 = vld [vmem:[#allocation3 + $0x190] sm:$0xff]
      %v3175 = vld [vmem:[#allocation3 + $0x198] sm:$0xff]
      %v3176 = vld [vmem:[#allocation3 + $0x1a0] sm:$0xff]
      %v3177 = vld [vmem:[#allocation3 + $0x1a8] sm:$0xff]
      %v3178 = vld [vmem:[#allocation3 + $0x1b0] sm:$0xff]
      %v3179 = vld [vmem:[#allocation3 + $0x1b8] sm:$0xff]
      %v3180 = vld [vmem:[#allocation3 + $0x1c0] sm:$0xff]
      %v3181 = vld [vmem:[#allocation3 + $0x1c8] sm:$0xff]
      %v3182 = vld [vmem:[#allocation3 + $0x1d0] sm:$0xff]
      %v3183 = vld [vmem:[#allocation3 + $0x1d8] sm:$0xff]
      %v3184 = vld [vmem:[#allocation3 + $0x1e0] sm:$0xff]
      %v3185 = vld [vmem:[#allocation3 + $0x1e8] sm:$0xff]
      %v3186 = vld [vmem:[#allocation3 + $0x1f0] sm:$0xf]
      %v3187 = vpack.c.bf16 %v3125, %v3124
      %v3188 = vpack.c.bf16 %v3127, %v3126
      %v3189 = vpack.c.bf16 %v3129, %v3128
      %v3190 = vpack.c.bf16 %v3131, %v3130
      %v3191 = vpack.c.bf16 %v3133, %v3132
      %v3192 = vpack.c.bf16 %v3135, %v3134
      %v3193 = vpack.c.bf16 %v3137, %v3136
      %v3194 = vpack.c.bf16 %v3139, %v3138
      %v3195 = vpack.c.bf16 %v3141, %v3140
      %v3196 = vpack.c.bf16 %v3143, %v3142
      %v3197 = vpack.c.bf16 %v3145, %v3144
      %v3198 = vpack.c.bf16 %v3147, %v3146
      %v3199 = vpack.c.bf16 %v3149, %v3148
      %v3200 = vpack.c.bf16 %v3151, %v3150
      %v3201 = vpack.c.bf16 %v3153, %v3152
      %v3202 = vpack.c.bf16 %v3155, %v3154
      %v3203 = vpack.c.bf16 %v3157, %v3156
      %v3204 = vpack.c.bf16 %v3159, %v3158
      %v3205 = vpack.c.bf16 %v3161, %v3160
      %v3206 = vpack.c.bf16 %v3163, %v3162
      %v3207 = vpack.c.bf16 %v3165, %v3164
      %v3208 = vpack.c.bf16 %v3167, %v3166
      %v3209 = vpack.c.bf16 %v3169, %v3168
      %v3210 = vpack.c.bf16 %v3171, %v3170
      %v3211 = vpack.c.bf16 %v3173, %v3172
      %v3212 = vpack.c.bf16 %v3175, %v3174
      %v3213 = vpack.c.bf16 %v3177, %v3176
      %v3214 = vpack.c.bf16 %v3179, %v3178
      %v3215 = vpack.c.bf16 %v3181, %v3180
      %v3216 = vpack.c.bf16 %v3183, %v3182
      %v3217 = vpack.c.bf16 %v3185, %v3184
      %v3218 = vpack.c.bf16 %v3186, %v3186
      %v3220 = vsel %vm1867, %v3218, 0
      %3222 = vmatpush.bf16.msra.mxu0 %v3194
      %3223 = vmatpush.bf16.msra.mxu0 %v3193
      %3224 = vmatpush.bf16.msra.mxu0 %v3192
      %3225 = vmatpush.bf16.msra.mxu0 %v3191
      %3226 = vmatpush.bf16.msra.mxu0 %v3190
      %3227 = vmatpush.bf16.msra.mxu0 %v3189
      %3228 = vmatpush.bf16.msra.mxu0 %v3188
      %3229 = vmatpush.bf16.msra.mxu0 %v3187
      %3230 = vmatmul.bf16.gmra.mxu0 %v1827
      %v3231 = vpop.f32.mrf.mxu0
      %v3232 = vadd.f32 %v1753, %v3231
      %v3233 = vpop.f32.mrf.mxu0
      %v3234 = vadd.f32 %v1758, %v3233
      %3235 = vmatmul.bf16.gmra.mxu0 %v1831
      %v3236 = vpop.f32.mrf.mxu0
      %v3237 = vadd.f32 %v1763, %v3236
      %v3238 = vpop.f32.mrf.mxu0
      %v3239 = vadd.f32 %v1768, %v3238
      %3240 = vmatmul.bf16.gmra.mxu0 %v1835
      %v3241 = vpop.f32.mrf.mxu0
      %v3242 = vadd.f32 %v1773, %v3241
      %v3243 = vpop.f32.mrf.mxu0
      %v3244 = vadd.f32 %v1778, %v3243
      %3245 = vmatmul.bf16.gmra.mxu0 %v1839
      %v3246 = vpop.f32.mrf.mxu0
      %v3247 = vadd.f32 %v1783, %v3246
      %v3248 = vpop.f32.mrf.mxu0
      %3249 = vdwg.mxu0
      %3250 = vmatpush.bf16.msra.mxu0 %v3202
      %3251 = vmatpush.bf16.msra.mxu0 %v3201
      %3252 = vmatpush.bf16.msra.mxu0 %v3200
      %3253 = vmatpush.bf16.msra.mxu0 %v3199
      %3254 = vmatpush.bf16.msra.mxu0 %v3198
      %3255 = vmatpush.bf16.msra.mxu0 %v3197
      %3256 = vmatpush.bf16.msra.mxu0 %v3196
      %3257 = vmatpush.bf16.msra.mxu0 %v3195
      %3258 = vmatmul.bf16.gmra.mxu0 %v1828
      %v3259 = vpop.f32.mrf.mxu0
      %v3260 = vadd.f32 %v3232, %v3259
      %v3261 = vpop.f32.mrf.mxu0
      %v3262 = vadd.f32 %v3234, %v3261
      %3263 = vmatmul.bf16.gmra.mxu0 %v1832
      %v3264 = vpop.f32.mrf.mxu0
      %v3265 = vadd.f32 %v3237, %v3264
      %v3266 = vpop.f32.mrf.mxu0
      %v3267 = vadd.f32 %v3239, %v3266
      %3268 = vmatmul.bf16.gmra.mxu0 %v1836
      %v3269 = vpop.f32.mrf.mxu0
      %v3270 = vadd.f32 %v3242, %v3269
      %v3271 = vpop.f32.mrf.mxu0
      %v3272 = vadd.f32 %v3244, %v3271
      %3273 = vmatmul.bf16.gmra.mxu0 %v1840
      %v3274 = vpop.f32.mrf.mxu0
      %v3275 = vadd.f32 %v3247, %v3274
      %v3276 = vpop.f32.mrf.mxu0
      %3277 = vdwg.mxu0
      %3278 = vmatpush.bf16.msra.mxu0 %v3210
      %3279 = vmatpush.bf16.msra.mxu0 %v3209
      %3280 = vmatpush.bf16.msra.mxu0 %v3208
      %3281 = vmatpush.bf16.msra.mxu0 %v3207
      %3282 = vmatpush.bf16.msra.mxu0 %v3206
      %3283 = vmatpush.bf16.msra.mxu0 %v3205
      %3284 = vmatpush.bf16.msra.mxu0 %v3204
      %3285 = vmatpush.bf16.msra.mxu0 %v3203
      %3286 = vmatmul.bf16.gmra.mxu0 %v1829
      %v3287 = vpop.f32.mrf.mxu0
      %v3288 = vadd.f32 %v3260, %v3287
      %v3289 = vpop.f32.mrf.mxu0
      %v3290 = vadd.f32 %v3262, %v3289
      %3291 = vmatmul.bf16.gmra.mxu0 %v1833
      %v3292 = vpop.f32.mrf.mxu0
      %v3293 = vadd.f32 %v3265, %v3292
      %v3294 = vpop.f32.mrf.mxu0
      %v3295 = vadd.f32 %v3267, %v3294
      %3296 = vmatmul.bf16.gmra.mxu0 %v1837
      %v3297 = vpop.f32.mrf.mxu0
      %v3298 = vadd.f32 %v3270, %v3297
      %v3299 = vpop.f32.mrf.mxu0
      %v3300 = vadd.f32 %v3272, %v3299
      %3301 = vmatmul.bf16.gmra.mxu0 %v1841
      %v3302 = vpop.f32.mrf.mxu0
      %v3303 = vadd.f32 %v3275, %v3302
      %v3304 = vpop.f32.mrf.mxu0
      %3305 = vdwg.mxu0
      %3306 = vmatpush.bf16.msra.mxu0 %v3220
      %3307 = vmatpush.bf16.msra.mxu0 %v3217
      %3308 = vmatpush.bf16.msra.mxu0 %v3216
      %3309 = vmatpush.bf16.msra.mxu0 %v3215
      %3310 = vmatpush.bf16.msra.mxu0 %v3214
      %3311 = vmatpush.bf16.msra.mxu0 %v3213
      %3312 = vmatpush.bf16.msra.mxu0 %v3212
      %3313 = vmatpush.bf16.msra.mxu0 %v3211
      %3314 = vmatmul.bf16.gmra.mxu0 %v1856
      %v3315 = vpop.f32.mrf.mxu0
      %v3316 = vadd.f32 %v3288, %v3315
      %v3317 = vpop.f32.mrf.mxu0
      %v3318 = vadd.f32 %v3290, %v3317
      %3319 = vmatmul.bf16.gmra.mxu0 %v1859
      %v3320 = vpop.f32.mrf.mxu0
      %v3321 = vadd.f32 %v3293, %v3320
      %v3322 = vpop.f32.mrf.mxu0
      %v3323 = vadd.f32 %v3295, %v3322
      %3324 = vmatmul.bf16.gmra.mxu0 %v1862
      %v3325 = vpop.f32.mrf.mxu0
      %v3326 = vadd.f32 %v3298, %v3325
      %v3327 = vpop.f32.mrf.mxu0
      %v3328 = vadd.f32 %v3300, %v3327
      %3329 = vmatmul.bf16.gmra.mxu0 %v1865
      %v3330 = vpop.f32.mrf.mxu0
      %v3331 = vadd.f32 %v3303, %v3330
      %v3332 = vpop.f32.mrf.mxu0
      %3333 = vdwg.mxu0
      %v3334 = vmax.f32 %v3316, 0.0
      %v3335 = vmax.f32 %v3318, 0.0
      %v3336 = vmax.f32 %v3321, 0.0
      %v3337 = vmax.f32 %v3323, 0.0
      %v3338 = vmax.f32 %v3326, 0.0
      %v3339 = vmax.f32 %v3328, 0.0
      %v3340 = vmax.f32 %v3331, 0.0
      %3348 = vrot.lane.b32.xlu0 %v3334, 127
      %v3349 = vpop.permute.xlu0 %3348
      %3350 = vrot.lane.b32.xlu0 %v3335, 127
      %v3351 = vpop.permute.xlu0 %3350
      %3352 = vrot.lane.b32.xlu0 %v3336, 127
      %v3353 = vpop.permute.xlu0 %3352
      %3354 = vrot.lane.b32.xlu0 %v3337, 127
      %v3355 = vpop.permute.xlu0 %3354
      %3356 = vrot.lane.b32.xlu0 %v3338, 127
      %v3357 = vpop.permute.xlu0 %3356
      %3358 = vrot.lane.b32.xlu0 %v3339, 127
      %v3359 = vpop.permute.xlu0 %3358
      %3360 = vrot.lane.b32.xlu0 %v3340, 127
      %v3361 = vpop.permute.xlu0 %3360
      %v3369 = vmax.f32 %v3334, %v3349
      %v3370 = vmax.f32 %v3335, %v3351
      %v3371 = vmax.f32 %v3336, %v3353
      %v3372 = vmax.f32 %v3337, %v3355
      %v3373 = vmax.f32 %v3338, %v3357
      %v3374 = vmax.f32 %v3339, %v3359
      %v3375 = vmax.f32 %v3340, %v3361
      %3383 = vrot.lane.b32.xlu0 %v3369, 116
      %v3384 = vpop.permute.xlu0 %3383
      %3385 = vrot.lane.b32.xlu0 %v3370, 116
      %v3386 = vpop.permute.xlu0 %3385
      %3387 = vrot.lane.b32.xlu0 %v3371, 116
      %v3388 = vpop.permute.xlu0 %3387
      %3389 = vrot.lane.b32.xlu0 %v3372, 116
      %v3390 = vpop.permute.xlu0 %3389
      %3391 = vrot.lane.b32.xlu0 %v3373, 116
      %v3392 = vpop.permute.xlu0 %3391
      %3393 = vrot.lane.b32.xlu0 %v3374, 116
      %v3394 = vpop.permute.xlu0 %3393
      %3395 = vrot.lane.b32.xlu0 %v3375, 116
      %v3396 = vpop.permute.xlu0 %3395
      %v3404 = vmax.f32 %v3369, %v3384
      %v3405 = vmax.f32 %v3370, %v3386
      %v3406 = vmax.f32 %v3371, %v3388
      %v3407 = vmax.f32 %v3372, %v3390
      %v3408 = vmax.f32 %v3373, %v3392
      %v3409 = vmax.f32 %v3374, %v3394
      %v3410 = vmax.f32 %v3375, %v3396
      %v3412 = vsel %vm1557, %v3404, 0
      %v3415 = vsel %vm1557, %v3405, 0
      %v3418 = vsel %vm1557, %v3406, 0
      %v3421 = vsel %vm1557, %v3407, 0
      %v3424 = vsel %vm1557, %v3408, 0
      %v3427 = vsel %vm1557, %v3409, 0
      %v3430 = vsel %vm1557, %v3410, 0
      %3432 = vmatpush.msra.mxu0 0.0
      %3433 = vmatpush.msra.mxu0 0.0
      %3434 = vmatpush.msra.mxu0 0.0
      %3435 = vmatpush.msra.mxu0 0.0
      %3436 = vmatpush.msra.mxu0 0.0
      %3437 = vmatpush.msra.mxu0 0.0
      %3438 = vmatpush.msra.mxu0 %v362
      %3439 = vmatpush.msra.mxu0 %v361
      %3440 = vmatpush.msra.mxu0 %v360
      %3441 = vmatpush.msra.mxu0 %v359
      %3442 = vmatpush.msra.mxu0 %v358
      %3443 = vmatpush.msra.mxu0 %v357
      %3444 = vmatpush.msra.mxu0 %v356
      %3445 = vmatpush.msra.mxu0 %v355
      %3446 = vmatpush.msra.mxu0 %v354
      %3447 = vmatpush.msra.mxu0 %v353
      %3448 = vmatmul.f32.gmra.mxu0 %v3412
      %v3449 = vpop.f32.mrf.mxu0
      %v3450 = vadd.f32 0.0, %v3449
      %3451 = vmatmul.f32.gmra.mxu0 %v3415
      %v3452 = vpop.f32.mrf.mxu0
      %v3453 = vadd.f32 0.0, %v3452
      %3454 = vmatmul.f32.gmra.mxu0 %v3418
      %v3455 = vpop.f32.mrf.mxu0
      %v3456 = vadd.f32 0.0, %v3455
      %3457 = vmatmul.f32.gmra.mxu0 %v3421
      %v3458 = vpop.f32.mrf.mxu0
      %v3459 = vadd.f32 0.0, %v3458
      %3460 = vmatmul.f32.gmra.mxu0 %v3424
      %v3461 = vpop.f32.mrf.mxu0
      %v3462 = vadd.f32 0.0, %v3461
      %3463 = vmatmul.f32.gmra.mxu0 %v3427
      %v3464 = vpop.f32.mrf.mxu0
      %v3465 = vadd.f32 0.0, %v3464
      %3466 = vmatmul.f32.gmra.mxu0 %v3430
      %v3467 = vpop.f32.mrf.mxu0
      %v3468 = vadd.f32 0.0, %v3467
      %3469 = vdwg.mxu0
      %s3470 = scalar_lea.vmem %s282, 56
      %3471 = vst.msk [vmem:[%s3470] sm:$0xff] %vm2119, %v3450
      %3472 = vst.msk [vmem:[%s3470 + $0x8] sm:$0xff] %vm2119, %v3453
      %3473 = vst.msk [vmem:[%s3470 + $0x10] sm:$0xff] %vm2119, %v3456
      %3474 = vst.msk [vmem:[%s3470 + $0x18] sm:$0xff] %vm2119, %v3459
      %3475 = vst.msk [vmem:[%s3470 + $0x20] sm:$0xff] %vm2119, %v3462
      %3476 = vst.msk [vmem:[%s3470 + $0x28] sm:$0xff] %vm2119, %v3465
      %3477 = vst.msk [vmem:[%s3470 + $0x30] sm:$0x3] %vm2126, %v3468
      %3478 = vst.msk [vmem:[#allocation2] ss:$8 sm:$0x7] %vm366, %v287
      %3479 = vst.msk [vmem:[#allocation2] ss:$8 sm:$0x0] %vm366, %v287
      %3481 = vrot.lane.b32.xlu0 %v287, 127
      %v3482 = vpop.permute.xlu0 %3481
      %v3483 = vrot.slane %v3482, 1
      %v3484 = vsel %vm373, %v3482, %v3483
      %3486 = vst.msk [vmem:[%s376] ss:$8 sm:$0x7] %vm366, %v3484
      %3487 = vst.msk [vmem:[%s376] ss:$8 sm:$0x0] %vm366, %v3484
      %3488 = vrot.lane.b32.xlu0 %v287, 126
      %v3489 = vpop.permute.xlu0 %3488
      %v3490 = vrot.slane %v3489, 1
      %v3491 = vsel %vm382, %v3489, %v3490
      %3493 = vst.msk [vmem:[%s385] ss:$8 sm:$0x7] %vm366, %v3491
      %3494 = vst.msk [vmem:[%s385] ss:$8 sm:$0x0] %vm366, %v3491
      %3495 = vrot.lane.b32.xlu0 %v287, 125
      %v3496 = vpop.permute.xlu0 %3495
      %v3497 = vrot.slane %v3496, 1
      %v3498 = vsel %vm391, %v3496, %v3497
      %3500 = vst.msk [vmem:[%s394] ss:$8 sm:$0x7] %vm366, %v3498
      %3501 = vst.msk [vmem:[%s394] ss:$8 sm:$0x0] %vm366, %v3498
      %3502 = vrot.lane.b32.xlu0 %v287, 124
      %v3503 = vpop.permute.xlu0 %3502
      %v3504 = vrot.slane %v3503, 1
      %v3505 = vsel %vm400, %v3503, %v3504
      %3507 = vst.msk [vmem:[%s403] ss:$8 sm:$0x7] %vm366, %v3505
      %3508 = vst.msk [vmem:[%s403] ss:$8 sm:$0x0] %vm366, %v3505
      %3509 = vrot.lane.b32.xlu0 %v287, 108
      %v3510 = vpop.permute.xlu0 %3509
      %v3511 = vrot.slane %v3510, 1
      %v3512 = vsel %vm409, %v3510, %v3511
      %3514 = vst.msk [vmem:[%s412] ss:$8 sm:$0x7] %vm366, %v3512
      %3515 = vst.msk [vmem:[%s412] ss:$8 sm:$0x0] %vm366, %v3512
      %3516 = vrot.lane.b32.xlu0 %v287, 107
      %v3517 = vpop.permute.xlu0 %3516
      %v3518 = vrot.slane %v3517, 1
      %v3519 = vsel %vm418, %v3517, %v3518
      %3521 = vst.msk [vmem:[%s421] ss:$8 sm:$0x7] %vm366, %v3519
      %3522 = vst.msk [vmem:[%s421] ss:$8 sm:$0x0] %vm366, %v3519
      %3523 = vrot.lane.b32.xlu0 %v287, 106
      %v3524 = vpop.permute.xlu0 %3523
      %v3525 = vrot.slane %v3524, 1
      %v3526 = vsel %vm427, %v3524, %v3525
      %3528 = vst.msk [vmem:[%s430] ss:$8 sm:$0x7] %vm366, %v3526
      %3529 = vst.msk [vmem:[%s430] ss:$8 sm:$0x0] %vm366, %v3526
      %3530 = vrot.lane.b32.xlu0 %v287, 105
      %v3531 = vpop.permute.xlu0 %3530
      %v3532 = vrot.slane %v3531, 1
      %v3533 = vsel %vm436, %v3531, %v3532
      %3535 = vst.msk [vmem:[%s439] ss:$8 sm:$0x7] %vm366, %v3533
      %3536 = vst.msk [vmem:[%s439] ss:$8 sm:$0x0] %vm366, %v3533
      %3537 = vrot.lane.b32.xlu0 %v287, 104
      %v3538 = vpop.permute.xlu0 %3537
      %v3539 = vrot.slane %v3538, 1
      %v3540 = vsel %vm445, %v3538, %v3539
      %3542 = vst.msk [vmem:[%s448] ss:$8 sm:$0x7] %vm366, %v3540
      %3543 = vst.msk [vmem:[%s448] ss:$8 sm:$0x0] %vm366, %v3540
      %3544 = vrot.lane.b32.xlu0 %v287, 88
      %v3545 = vpop.permute.xlu0 %3544
      %v3546 = vrot.slane %v3545, 1
      %v3547 = vsel %vm454, %v3545, %v3546
      %3549 = vst.msk [vmem:[%s457] ss:$8 sm:$0x7] %vm366, %v3547
      %3550 = vst.msk [vmem:[%s457] ss:$8 sm:$0x0] %vm366, %v3547
      %3551 = vrot.lane.b32.xlu0 %v287, 87
      %v3552 = vpop.permute.xlu0 %3551
      %v3553 = vrot.slane %v3552, 1
      %v3554 = vsel %vm463, %v3552, %v3553
      %3556 = vst.msk [vmem:[%s466] ss:$8 sm:$0x7] %vm366, %v3554
      %3557 = vst.msk [vmem:[%s466] ss:$8 sm:$0x0] %vm366, %v3554
      %3558 = vrot.lane.b32.xlu0 %v287, 86
      %v3559 = vpop.permute.xlu0 %3558
      %v3560 = vrot.slane %v3559, 1
      %v3561 = vsel %vm472, %v3559, %v3560
      %3563 = vst.msk [vmem:[%s475] ss:$8 sm:$0x7] %vm366, %v3561
      %3564 = vst.msk [vmem:[%s475] ss:$8 sm:$0x0] %vm366, %v3561
      %3565 = vrot.lane.b32.xlu0 %v287, 85
      %v3566 = vpop.permute.xlu0 %3565
      %v3567 = vrot.slane %v3566, 1
      %v3568 = vsel %vm481, %v3566, %v3567
      %3570 = vst.msk [vmem:[%s484] ss:$8 sm:$0x7] %vm366, %v3568
      %3571 = vst.msk [vmem:[%s484] ss:$8 sm:$0x0] %vm366, %v3568
      %3572 = vrot.lane.b32.xlu0 %v287, 84
      %v3573 = vpop.permute.xlu0 %3572
      %v3574 = vrot.slane %v3573, 1
      %v3575 = vsel %vm490, %v3573, %v3574
      %3577 = vst.msk [vmem:[%s493] ss:$8 sm:$0x7] %vm366, %v3575
      %3578 = vst.msk [vmem:[%s493] ss:$8 sm:$0x0] %vm366, %v3575
      %3579 = vrot.lane.b32.xlu0 %v287, 68
      %v3580 = vpop.permute.xlu0 %3579
      %v3581 = vrot.slane %v3580, 1
      %v3582 = vsel %vm499, %v3580, %v3581
      %3584 = vst.msk [vmem:[%s502] ss:$8 sm:$0x7] %vm366, %v3582
      %3585 = vst.msk [vmem:[%s502] ss:$8 sm:$0x0] %vm366, %v3582
      %3586 = vrot.lane.b32.xlu0 %v287, 67
      %v3587 = vpop.permute.xlu0 %3586
      %v3588 = vrot.slane %v3587, 1
      %v3589 = vsel %vm508, %v3587, %v3588
      %3591 = vst.msk [vmem:[%s511] ss:$8 sm:$0x7] %vm366, %v3589
      %3592 = vst.msk [vmem:[%s511] ss:$8 sm:$0x0] %vm366, %v3589
      %3593 = vrot.lane.b32.xlu0 %v287, 66
      %v3594 = vpop.permute.xlu0 %3593
      %v3595 = vrot.slane %v3594, 1
      %v3596 = vsel %vm517, %v3594, %v3595
      %3598 = vst.msk [vmem:[%s520] ss:$8 sm:$0x7] %vm366, %v3596
      %3599 = vst.msk [vmem:[%s520] ss:$8 sm:$0x0] %vm366, %v3596
      %3600 = vrot.lane.b32.xlu0 %v287, 65
      %v3601 = vpop.permute.xlu0 %3600
      %v3602 = vrot.slane %v3601, 1
      %v3603 = vsel %vm526, %v3601, %v3602
      %3605 = vst.msk [vmem:[%s529] ss:$8 sm:$0x7] %vm366, %v3603
      %3606 = vst.msk [vmem:[%s529] ss:$8 sm:$0x0] %vm366, %v3603
      %3607 = vrot.lane.b32.xlu0 %v287, 64
      %v3608 = vpop.permute.xlu0 %3607
      %v3609 = vrot.slane %v3608, 1
      %v3610 = vsel %vm535, %v3608, %v3609
      %3612 = vst.msk [vmem:[%s538] ss:$8 sm:$0x7] %vm366, %v3610
      %3613 = vst.msk [vmem:[%s538] ss:$8 sm:$0x0] %vm366, %v3610
      %3614 = vrot.lane.b32.xlu0 %v287, 48
      %v3615 = vpop.permute.xlu0 %3614
      %v3616 = vrot.slane %v3615, 1
      %v3617 = vsel %vm544, %v3615, %v3616
      %3619 = vst.msk [vmem:[%s547] ss:$8 sm:$0x7] %vm366, %v3617
      %3620 = vst.msk [vmem:[%s547] ss:$8 sm:$0x0] %vm366, %v3617
      %3621 = vrot.lane.b32.xlu0 %v287, 47
      %v3622 = vpop.permute.xlu0 %3621
      %v3623 = vrot.slane %v3622, 1
      %v3624 = vsel %vm553, %v3622, %v3623
      %3626 = vst.msk [vmem:[%s556] ss:$8 sm:$0x7] %vm366, %v3624
      %3627 = vst.msk [vmem:[%s556] ss:$8 sm:$0x0] %vm366, %v3624
      %3628 = vrot.lane.b32.xlu0 %v287, 46
      %v3629 = vpop.permute.xlu0 %3628
      %v3630 = vrot.slane %v3629, 1
      %v3631 = vsel %vm562, %v3629, %v3630
      %3633 = vst.msk [vmem:[%s565] ss:$8 sm:$0x7] %vm366, %v3631
      %3634 = vst.msk [vmem:[%s565] ss:$8 sm:$0x0] %vm366, %v3631
      %3635 = vrot.lane.b32.xlu0 %v287, 45
      %v3636 = vpop.permute.xlu0 %3635
      %v3637 = vrot.slane %v3636, 1
      %v3638 = vsel %vm571, %v3636, %v3637
      %3640 = vst.msk [vmem:[%s574] ss:$8 sm:$0x7] %vm366, %v3638
      %3641 = vst.msk [vmem:[%s574] ss:$8 sm:$0x0] %vm366, %v3638
      %3642 = vrot.lane.b32.xlu0 %v287, 44
      %v3643 = vpop.permute.xlu0 %3642
      %v3644 = vrot.slane %v3643, 1
      %v3645 = vsel %vm580, %v3643, %v3644
      %3647 = vst.msk [vmem:[%s583] ss:$8 sm:$0x7] %vm366, %v3645
      %3648 = vst.msk [vmem:[%s583] ss:$8 sm:$0x0] %vm366, %v3645
      %v3649 = vld [vmem:[#allocation2] sm:$0xff]
      %v3650 = vld [vmem:[#allocation2 + $0x8] sm:$0xff]
      %v3651 = vld [vmem:[#allocation2 + $0x10] sm:$0xff]
      %v3652 = vld [vmem:[#allocation2 + $0x18] sm:$0xff]
      %v3653 = vld [vmem:[#allocation2 + $0x20] sm:$0xff]
      %v3654 = vld [vmem:[#allocation2 + $0x28] sm:$0xff]
      %v3655 = vld [vmem:[#allocation2 + $0x30] sm:$0xff]
      %v3656 = vld [vmem:[#allocation2 + $0x38] sm:$0xff]
      %v3657 = vld [vmem:[#allocation2 + $0x40] sm:$0xff]
      %v3658 = vld [vmem:[#allocation2 + $0x48] sm:$0x1]
      %v3659 = vld [vmem:[#allocation2 + $0x50] sm:$0x1]
      %v3660 = vld [vmem:[#allocation2 + $0x58] sm:$0x1]
      %v3661 = vpack.c.bf16 %v3652, %v3649
      %v3662 = vpack.c.bf16 %v3653, %v3650
      %v3663 = vpack.c.bf16 %v3654, %v3651
      %v3664 = vpack.c.bf16 %v3658, %v3655
      %v3665 = vpack.c.bf16 %v3659, %v3656
      %v3666 = vpack.c.bf16 %v3660, %v3657
      %v3668 = vand.u32 %v3664, %v637
      %v3671 = vand.u32 %v3665, %v637
      %v3674 = vand.u32 %v3666, %v637
      %3676 = vmatpush.bf16.msra.mxu0 0
      %3677 = vmatpush.bf16.msra.mxu0 0
      %3678 = vmatpush.bf16.msra.mxu0 0
      %3679 = vmatpush.bf16.msra.mxu0 0
      %3680 = vmatpush.bf16.msra.mxu0 0
      %3681 = vmatpush.bf16.msra.mxu0 0
      %3682 = vmatpush.bf16.msra.mxu0 %v3668
      %3683 = vmatpush.bf16.msra.mxu0 %v3661
      %3684 = vmatmul.bf16.gmra.mxu0 %v629
      %v3685 = vpop.f32.mrf.mxu0
      %v3686 = vadd.f32 %v607, %v3685
      %v3687 = vpop.f32.mrf.mxu0
      %v3688 = vadd.f32 %v612, %v3687
      %3689 = vmatmul.bf16.gmra.mxu0 %v632
      %v3690 = vpop.f32.mrf.mxu0
      %v3691 = vadd.f32 %v617, %v3690
      %v3692 = vpop.f32.mrf.mxu0
      %3693 = vdwg.mxu0
      %3694 = vmatpush.bf16.msra.mxu0 0
      %3695 = vmatpush.bf16.msra.mxu0 0
      %3696 = vmatpush.bf16.msra.mxu0 0
      %3697 = vmatpush.bf16.msra.mxu0 0
      %3698 = vmatpush.bf16.msra.mxu0 0
      %3699 = vmatpush.bf16.msra.mxu0 0
      %3700 = vmatpush.bf16.msra.mxu0 %v3671
      %3701 = vmatpush.bf16.msra.mxu0 %v3662
      %3702 = vmatmul.bf16.gmra.mxu0 %v629
      %v3703 = vpop.f32.mrf.mxu0
      %v3704 = vadd.f32 %v607, %v3703
      %v3705 = vpop.f32.mrf.mxu0
      %v3706 = vadd.f32 %v612, %v3705
      %3707 = vmatmul.bf16.gmra.mxu0 %v632
      %v3708 = vpop.f32.mrf.mxu0
      %v3709 = vadd.f32 %v617, %v3708
      %v3710 = vpop.f32.mrf.mxu0
      %3711 = vdwg.mxu0
      %3712 = vmatpush.bf16.msra.mxu0 0
      %3713 = vmatpush.bf16.msra.mxu0 0
      %3714 = vmatpush.bf16.msra.mxu0 0
      %3715 = vmatpush.bf16.msra.mxu0 0
      %3716 = vmatpush.bf16.msra.mxu0 0
      %3717 = vmatpush.bf16.msra.mxu0 0
      %3718 = vmatpush.bf16.msra.mxu0 %v3674
      %3719 = vmatpush.bf16.msra.mxu0 %v3663
      %3720 = vmatmul.bf16.gmra.mxu0 %v629
      %v3721 = vpop.f32.mrf.mxu0
      %v3722 = vadd.f32 %v607, %v3721
      %v3723 = vpop.f32.mrf.mxu0
      %v3724 = vadd.f32 %v612, %v3723
      %3725 = vmatmul.bf16.gmra.mxu0 %v632
      %v3726 = vpop.f32.mrf.mxu0
      %v3727 = vadd.f32 %v617, %v3726
      %v3728 = vpop.f32.mrf.mxu0
      %3729 = vdwg.mxu0
      %v3730 = vmax.f32 %v3686, 0.0
      %v3731 = vmax.f32 %v3704, 0.0
      %v3732 = vmax.f32 %v3722, 0.0
      %v3733 = vmax.f32 %v3688, 0.0
      %v3734 = vmax.f32 %v3706, 0.0
      %v3735 = vmax.f32 %v3724, 0.0
      %v3736 = vmax.f32 %v3691, 0.0
      %v3737 = vmax.f32 %v3709, 0.0
      %v3738 = vmax.f32 %v3727, 0.0
      %3748 = vrot.lane.b32.xlu0 %v3730, 127
      %v3749 = vpop.permute.xlu0 %3748
      %3750 = vrot.lane.b32.xlu0 %v3731, 127
      %v3751 = vpop.permute.xlu0 %3750
      %3752 = vrot.lane.b32.xlu0 %v3732, 127
      %v3753 = vpop.permute.xlu0 %3752
      %3754 = vrot.lane.b32.xlu0 %v3733, 127
      %v3755 = vpop.permute.xlu0 %3754
      %3756 = vrot.lane.b32.xlu0 %v3734, 127
      %v3757 = vpop.permute.xlu0 %3756
      %3758 = vrot.lane.b32.xlu0 %v3735, 127
      %v3759 = vpop.permute.xlu0 %3758
      %3760 = vrot.lane.b32.xlu0 %v3736, 127
      %v3761 = vpop.permute.xlu0 %3760
      %3762 = vrot.lane.b32.xlu0 %v3737, 127
      %v3763 = vpop.permute.xlu0 %3762
      %3764 = vrot.lane.b32.xlu0 %v3738, 127
      %v3765 = vpop.permute.xlu0 %3764
      %v3766 = vsel %vm373, %v3749, %v3751
      %v3767 = vsel %vm373, %v3751, %v3753
      %v3768 = vsel %vm373, %v3755, %v3757
      %v3769 = vsel %vm373, %v3757, %v3759
      %v3770 = vsel %vm373, %v3761, %v3763
      %v3771 = vsel %vm373, %v3763, %v3765
      %v3781 = vmax.f32 %v3730, %v3766
      %v3782 = vmax.f32 %v3731, %v3767
      %v3783 = vmax.f32 %v3732, %v3753
      %v3784 = vmax.f32 %v3733, %v3768
      %v3785 = vmax.f32 %v3734, %v3769
      %v3786 = vmax.f32 %v3735, %v3759
      %v3787 = vmax.f32 %v3736, %v3770
      %v3788 = vmax.f32 %v3737, %v3771
      %v3789 = vmax.f32 %v3738, %v3765
      %3799 = vrot.lane.b32.xlu0 %v3781, 108
      %v3800 = vpop.permute.xlu0 %3799
      %3801 = vrot.lane.b32.xlu0 %v3782, 108
      %v3802 = vpop.permute.xlu0 %3801
      %3803 = vrot.lane.b32.xlu0 %v3783, 108
      %v3804 = vpop.permute.xlu0 %3803
      %3805 = vrot.lane.b32.xlu0 %v3784, 108
      %v3806 = vpop.permute.xlu0 %3805
      %3807 = vrot.lane.b32.xlu0 %v3785, 108
      %v3808 = vpop.permute.xlu0 %3807
      %3809 = vrot.lane.b32.xlu0 %v3786, 108
      %v3810 = vpop.permute.xlu0 %3809
      %3811 = vrot.lane.b32.xlu0 %v3787, 108
      %v3812 = vpop.permute.xlu0 %3811
      %3813 = vrot.lane.b32.xlu0 %v3788, 108
      %v3814 = vpop.permute.xlu0 %3813
      %3815 = vrot.lane.b32.xlu0 %v3789, 108
      %v3816 = vpop.permute.xlu0 %3815
      %v3817 = vsel %vm409, %v3800, %v3802
      %v3818 = vsel %vm409, %v3802, %v3804
      %v3819 = vsel %vm409, %v3806, %v3808
      %v3820 = vsel %vm409, %v3808, %v3810
      %v3821 = vsel %vm409, %v3812, %v3814
      %v3822 = vsel %vm409, %v3814, %v3816
      %v3832 = vmax.f32 %v3781, %v3817
      %v3833 = vmax.f32 %v3782, %v3818
      %v3834 = vmax.f32 %v3783, %v3804
      %v3835 = vmax.f32 %v3784, %v3819
      %v3836 = vmax.f32 %v3785, %v3820
      %v3837 = vmax.f32 %v3786, %v3810
      %v3838 = vmax.f32 %v3787, %v3821
      %v3839 = vmax.f32 %v3788, %v3822
      %v3840 = vmax.f32 %v3789, %v3816
      %v3841 = vpack.c.bf16 %v3835, %v3832
      %v3842 = vpack.c.bf16 %v3836, %v3833
      %v3843 = vpack.c.bf16 %v3837, %v3834
      %v3844 = vpack.c.bf16 %v3838, %v3838
      %v3845 = vpack.c.bf16 %v3839, %v3839
      %v3846 = vpack.c.bf16 %v3840, %v3840
      %v3848 = vsel %vm1003, %v3843, 0
      %v3851 = vsel %vm1003, %v3846, 0
      %3853 = vmatpush.bf16.msra.mxu0 %v943
      %3854 = vmatpush.bf16.msra.mxu0 %v941
      %3855 = vmatpush.bf16.msra.mxu0 %v939
      %3856 = vmatpush.bf16.msra.mxu0 %v937
      %3857 = vmatpush.bf16.msra.mxu0 %v935
      %3858 = vmatpush.bf16.msra.mxu0 %v933
      %3859 = vmatpush.bf16.msra.mxu0 %v931
      %3860 = vmatpush.bf16.msra.mxu0 %v929
      %3861 = vmatmul.bf16.gmra.mxu0 %v3841
      %v3862 = vpop.f32.mrf.mxu0
      %v3863 = vadd.f32 0.0, %v3862
      %v3864 = vpop.f32.mrf.mxu0
      %v3865 = vadd.f32 0.0, %v3864
      %3866 = vmatmul.bf16.gmra.mxu0 %v3844
      %v3867 = vpop.f32.mrf.mxu0
      %v3868 = vadd.f32 0.0, %v3867
      %v3869 = vpop.f32.mrf.mxu0
      %3870 = vdwg.mxu0
      %3871 = vmatpush.bf16.msra.mxu0 %v959
      %3872 = vmatpush.bf16.msra.mxu0 %v957
      %3873 = vmatpush.bf16.msra.mxu0 %v955
      %3874 = vmatpush.bf16.msra.mxu0 %v953
      %3875 = vmatpush.bf16.msra.mxu0 %v951
      %3876 = vmatpush.bf16.msra.mxu0 %v949
      %3877 = vmatpush.bf16.msra.mxu0 %v947
      %3878 = vmatpush.bf16.msra.mxu0 %v945
      %3879 = vmatmul.bf16.gmra.mxu0 %v3842
      %v3880 = vpop.f32.mrf.mxu0
      %v3881 = vadd.f32 %v3863, %v3880
      %v3882 = vpop.f32.mrf.mxu0
      %v3883 = vadd.f32 %v3865, %v3882
      %3884 = vmatmul.bf16.gmra.mxu0 %v3845
      %v3885 = vpop.f32.mrf.mxu0
      %v3886 = vadd.f32 %v3868, %v3885
      %v3887 = vpop.f32.mrf.mxu0
      %3888 = vdwg.mxu0
      %3889 = vmatpush.bf16.msra.mxu0 0
      %3890 = vmatpush.bf16.msra.mxu0 0
      %3891 = vmatpush.bf16.msra.mxu0 0
      %3892 = vmatpush.bf16.msra.mxu0 0
      %3893 = vmatpush.bf16.msra.mxu0 0
      %3894 = vmatpush.bf16.msra.mxu0 %v1011
      %3895 = vmatpush.bf16.msra.mxu0 %v963
      %3896 = vmatpush.bf16.msra.mxu0 %v961
      %3897 = vmatmul.bf16.gmra.mxu0 %v3848
      %v3898 = vpop.f32.mrf.mxu0
      %v3899 = vadd.f32 %v3881, %v3898
      %v3900 = vpop.f32.mrf.mxu0
      %v3901 = vadd.f32 %v3883, %v3900
      %3902 = vmatmul.bf16.gmra.mxu0 %v3851
      %v3903 = vpop.f32.mrf.mxu0
      %v3904 = vadd.f32 %v3886, %v3903
      %v3905 = vpop.f32.mrf.mxu0
      %3906 = vdwg.mxu0
      %3907 = vmatpush.bf16.msra.mxu0 %v944
      %3908 = vmatpush.bf16.msra.mxu0 %v942
      %3909 = vmatpush.bf16.msra.mxu0 %v940
      %3910 = vmatpush.bf16.msra.mxu0 %v938
      %3911 = vmatpush.bf16.msra.mxu0 %v936
      %3912 = vmatpush.bf16.msra.mxu0 %v934
      %3913 = vmatpush.bf16.msra.mxu0 %v932
      %3914 = vmatpush.bf16.msra.mxu0 %v930
      %3915 = vmatmul.bf16.gmra.mxu0 %v3841
      %v3916 = vpop.f32.mrf.mxu0
      %v3917 = vadd.f32 0.0, %v3916
      %v3918 = vpop.f32.mrf.mxu0
      %v3919 = vadd.f32 0.0, %v3918
      %3920 = vmatmul.bf16.gmra.mxu0 %v3844
      %v3921 = vpop.f32.mrf.mxu0
      %v3922 = vadd.f32 0.0, %v3921
      %v3923 = vpop.f32.mrf.mxu0
      %3924 = vdwg.mxu0
      %3925 = vmatpush.bf16.msra.mxu0 %v960
      %3926 = vmatpush.bf16.msra.mxu0 %v958
      %3927 = vmatpush.bf16.msra.mxu0 %v956
      %3928 = vmatpush.bf16.msra.mxu0 %v954
      %3929 = vmatpush.bf16.msra.mxu0 %v952
      %3930 = vmatpush.bf16.msra.mxu0 %v950
      %3931 = vmatpush.bf16.msra.mxu0 %v948
      %3932 = vmatpush.bf16.msra.mxu0 %v946
      %3933 = vmatmul.bf16.gmra.mxu0 %v3842
      %v3934 = vpop.f32.mrf.mxu0
      %v3935 = vadd.f32 %v3917, %v3934
      %v3936 = vpop.f32.mrf.mxu0
      %v3937 = vadd.f32 %v3919, %v3936
      %3938 = vmatmul.bf16.gmra.mxu0 %v3845
      %v3939 = vpop.f32.mrf.mxu0
      %v3940 = vadd.f32 %v3922, %v3939
      %v3941 = vpop.f32.mrf.mxu0
      %3942 = vdwg.mxu0
      %3943 = vmatpush.bf16.msra.mxu0 0
      %3944 = vmatpush.bf16.msra.mxu0 0
      %3945 = vmatpush.bf16.msra.mxu0 0
      %3946 = vmatpush.bf16.msra.mxu0 0
      %3947 = vmatpush.bf16.msra.mxu0 0
      %3948 = vmatpush.bf16.msra.mxu0 %v1014
      %3949 = vmatpush.bf16.msra.mxu0 %v964
      %3950 = vmatpush.bf16.msra.mxu0 %v962
      %3951 = vmatmul.bf16.gmra.mxu0 %v3848
      %v3952 = vpop.f32.mrf.mxu0
      %v3953 = vadd.f32 %v3935, %v3952
      %v3954 = vpop.f32.mrf.mxu0
      %v3955 = vadd.f32 %v3937, %v3954
      %3956 = vmatmul.bf16.gmra.mxu0 %v3851
      %v3957 = vpop.f32.mrf.mxu0
      %v3958 = vadd.f32 %v3940, %v3957
      %v3959 = vpop.f32.mrf.mxu0
      %3960 = vdwg.mxu0
      %3961 = vst [vmem:[#allocation3] sm:$0xff] %v3899
      %3962 = vst [vmem:[#allocation3 + $0x8] sm:$0xff] %v3901
      %3963 = vst [vmem:[#allocation3 + $0x10] sm:$0xf] %v3904
      %3970 = vrot.lane.b32.xlu0 %v3899, 127
      %v3971 = vpop.permute.xlu0 %3970
      %3972 = vrot.lane.b32.xlu0 %v3953, 127
      %v3973 = vpop.permute.xlu0 %3972
      %3974 = vrot.lane.b32.xlu0 %v3901, 127
      %v3975 = vpop.permute.xlu0 %3974
      %3976 = vrot.lane.b32.xlu0 %v3955, 127
      %v3977 = vpop.permute.xlu0 %3976
      %3978 = vrot.lane.b32.xlu0 %v3904, 127
      %v3979 = vpop.permute.xlu0 %3978
      %3980 = vrot.lane.b32.xlu0 %v3958, 127
      %v3981 = vpop.permute.xlu0 %3980
      %v3982 = vsel %vm373, %v3971, %v3973
      %v3983 = vsel %vm373, %v3975, %v3977
      %v3984 = vsel %vm373, %v3979, %v3981
      %3988 = vst [vmem:[#allocation3 + $0x14] sm:$0xff] %v3982
      %3989 = vst [vmem:[#allocation3 + $0x1c] sm:$0xff] %v3983
      %3990 = vst [vmem:[#allocation3 + $0x24] sm:$0xf] %v3984
      %3991 = vrot.lane.b32.xlu0 %v3899, 126
      %v3992 = vpop.permute.xlu0 %3991
      %3993 = vrot.lane.b32.xlu0 %v3953, 126
      %v3994 = vpop.permute.xlu0 %3993
      %3995 = vrot.lane.b32.xlu0 %v3901, 126
      %v3996 = vpop.permute.xlu0 %3995
      %3997 = vrot.lane.b32.xlu0 %v3955, 126
      %v3998 = vpop.permute.xlu0 %3997
      %3999 = vrot.lane.b32.xlu0 %v3904, 126
      %v4000 = vpop.permute.xlu0 %3999
      %4001 = vrot.lane.b32.xlu0 %v3958, 126
      %v4002 = vpop.permute.xlu0 %4001
      %v4003 = vsel %vm382, %v3992, %v3994
      %v4004 = vsel %vm382, %v3996, %v3998
      %v4005 = vsel %vm382, %v4000, %v4002
      %4009 = vst [vmem:[#allocation3 + $0x28] sm:$0xff] %v4003
      %4010 = vst [vmem:[#allocation3 + $0x30] sm:$0xff] %v4004
      %4011 = vst [vmem:[#allocation3 + $0x38] sm:$0xf] %v4005
      %4012 = vrot.lane.b32.xlu0 %v3899, 125
      %v4013 = vpop.permute.xlu0 %4012
      %4014 = vrot.lane.b32.xlu0 %v3953, 125
      %v4015 = vpop.permute.xlu0 %4014
      %4016 = vrot.lane.b32.xlu0 %v3901, 125
      %v4017 = vpop.permute.xlu0 %4016
      %4018 = vrot.lane.b32.xlu0 %v3955, 125
      %v4019 = vpop.permute.xlu0 %4018
      %4020 = vrot.lane.b32.xlu0 %v3904, 125
      %v4021 = vpop.permute.xlu0 %4020
      %4022 = vrot.lane.b32.xlu0 %v3958, 125
      %v4023 = vpop.permute.xlu0 %4022
      %v4024 = vsel %vm391, %v4013, %v4015
      %v4025 = vsel %vm391, %v4017, %v4019
      %v4026 = vsel %vm391, %v4021, %v4023
      %4030 = vst [vmem:[#allocation3 + $0x3c] sm:$0xff] %v4024
      %4031 = vst [vmem:[#allocation3 + $0x44] sm:$0xff] %v4025
      %4032 = vst [vmem:[#allocation3 + $0x4c] sm:$0xf] %v4026
      %4033 = vrot.lane.b32.xlu0 %v3899, 124
      %v4034 = vpop.permute.xlu0 %4033
      %4035 = vrot.lane.b32.xlu0 %v3953, 124
      %v4036 = vpop.permute.xlu0 %4035
      %4037 = vrot.lane.b32.xlu0 %v3901, 124
      %v4038 = vpop.permute.xlu0 %4037
      %4039 = vrot.lane.b32.xlu0 %v3955, 124
      %v4040 = vpop.permute.xlu0 %4039
      %4041 = vrot.lane.b32.xlu0 %v3904, 124
      %v4042 = vpop.permute.xlu0 %4041
      %4043 = vrot.lane.b32.xlu0 %v3958, 124
      %v4044 = vpop.permute.xlu0 %4043
      %v4045 = vsel %vm400, %v4034, %v4036
      %v4046 = vsel %vm400, %v4038, %v4040
      %v4047 = vsel %vm400, %v4042, %v4044
      %4051 = vst [vmem:[#allocation3 + $0x50] sm:$0xff] %v4045
      %4052 = vst [vmem:[#allocation3 + $0x58] sm:$0xff] %v4046
      %4053 = vst [vmem:[#allocation3 + $0x60] sm:$0xf] %v4047
      %4054 = vrot.lane.b32.xlu0 %v3899, 116
      %v4055 = vpop.permute.xlu0 %4054
      %4056 = vrot.lane.b32.xlu0 %v3953, 116
      %v4057 = vpop.permute.xlu0 %4056
      %4058 = vrot.lane.b32.xlu0 %v3901, 116
      %v4059 = vpop.permute.xlu0 %4058
      %4060 = vrot.lane.b32.xlu0 %v3955, 116
      %v4061 = vpop.permute.xlu0 %4060
      %4062 = vrot.lane.b32.xlu0 %v3904, 116
      %v4063 = vpop.permute.xlu0 %4062
      %4064 = vrot.lane.b32.xlu0 %v3958, 116
      %v4065 = vpop.permute.xlu0 %4064
      %v4066 = vsel %vm1229, %v4055, %v4057
      %v4067 = vsel %vm1229, %v4059, %v4061
      %v4068 = vsel %vm1229, %v4063, %v4065
      %4072 = vst [vmem:[#allocation3 + $0x64] sm:$0xff] %v4066
      %4073 = vst [vmem:[#allocation3 + $0x6c] sm:$0xff] %v4067
      %4074 = vst [vmem:[#allocation3 + $0x74] sm:$0xf] %v4068
      %4075 = vrot.lane.b32.xlu0 %v3899, 115
      %v4076 = vpop.permute.xlu0 %4075
      %4077 = vrot.lane.b32.xlu0 %v3953, 115
      %v4078 = vpop.permute.xlu0 %4077
      %4079 = vrot.lane.b32.xlu0 %v3901, 115
      %v4080 = vpop.permute.xlu0 %4079
      %4081 = vrot.lane.b32.xlu0 %v3955, 115
      %v4082 = vpop.permute.xlu0 %4081
      %4083 = vrot.lane.b32.xlu0 %v3904, 115
      %v4084 = vpop.permute.xlu0 %4083
      %4085 = vrot.lane.b32.xlu0 %v3958, 115
      %v4086 = vpop.permute.xlu0 %4085
      %v4087 = vsel %vm1251, %v4076, %v4078
      %v4088 = vsel %vm1251, %v4080, %v4082
      %v4089 = vsel %vm1251, %v4084, %v4086
      %4093 = vst [vmem:[#allocation3 + $0x78] sm:$0xff] %v4087
      %4094 = vst [vmem:[#allocation3 + $0x80] sm:$0xff] %v4088
      %4095 = vst [vmem:[#allocation3 + $0x88] sm:$0xf] %v4089
      %4096 = vrot.lane.b32.xlu0 %v3899, 114
      %v4097 = vpop.permute.xlu0 %4096
      %4098 = vrot.lane.b32.xlu0 %v3953, 114
      %v4099 = vpop.permute.xlu0 %4098
      %4100 = vrot.lane.b32.xlu0 %v3901, 114
      %v4101 = vpop.permute.xlu0 %4100
      %4102 = vrot.lane.b32.xlu0 %v3955, 114
      %v4103 = vpop.permute.xlu0 %4102
      %4104 = vrot.lane.b32.xlu0 %v3904, 114
      %v4105 = vpop.permute.xlu0 %4104
      %4106 = vrot.lane.b32.xlu0 %v3958, 114
      %v4107 = vpop.permute.xlu0 %4106
      %v4108 = vsel %vm1273, %v4097, %v4099
      %v4109 = vsel %vm1273, %v4101, %v4103
      %v4110 = vsel %vm1273, %v4105, %v4107
      %4114 = vst [vmem:[#allocation3 + $0x8c] sm:$0xff] %v4108
      %4115 = vst [vmem:[#allocation3 + $0x94] sm:$0xff] %v4109
      %4116 = vst [vmem:[#allocation3 + $0x9c] sm:$0xf] %v4110
      %4117 = vrot.lane.b32.xlu0 %v3899, 113
      %v4118 = vpop.permute.xlu0 %4117
      %4119 = vrot.lane.b32.xlu0 %v3953, 113
      %v4120 = vpop.permute.xlu0 %4119
      %4121 = vrot.lane.b32.xlu0 %v3901, 113
      %v4122 = vpop.permute.xlu0 %4121
      %4123 = vrot.lane.b32.xlu0 %v3955, 113
      %v4124 = vpop.permute.xlu0 %4123
      %4125 = vrot.lane.b32.xlu0 %v3904, 113
      %v4126 = vpop.permute.xlu0 %4125
      %4127 = vrot.lane.b32.xlu0 %v3958, 113
      %v4128 = vpop.permute.xlu0 %4127
      %v4129 = vsel %vm1295, %v4118, %v4120
      %v4130 = vsel %vm1295, %v4122, %v4124
      %v4131 = vsel %vm1295, %v4126, %v4128
      %4135 = vst [vmem:[#allocation3 + $0xa0] sm:$0xff] %v4129
      %4136 = vst [vmem:[#allocation3 + $0xa8] sm:$0xff] %v4130
      %4137 = vst [vmem:[#allocation3 + $0xb0] sm:$0xf] %v4131
      %4138 = vrot.lane.b32.xlu0 %v3899, 112
      %v4139 = vpop.permute.xlu0 %4138
      %4140 = vrot.lane.b32.xlu0 %v3953, 112
      %v4141 = vpop.permute.xlu0 %4140
      %4142 = vrot.lane.b32.xlu0 %v3901, 112
      %v4143 = vpop.permute.xlu0 %4142
      %4144 = vrot.lane.b32.xlu0 %v3955, 112
      %v4145 = vpop.permute.xlu0 %4144
      %4146 = vrot.lane.b32.xlu0 %v3904, 112
      %v4147 = vpop.permute.xlu0 %4146
      %4148 = vrot.lane.b32.xlu0 %v3958, 112
      %v4149 = vpop.permute.xlu0 %4148
      %v4150 = vsel %vm1317, %v4139, %v4141
      %v4151 = vsel %vm1317, %v4143, %v4145
      %v4152 = vsel %vm1317, %v4147, %v4149
      %4156 = vst [vmem:[#allocation3 + $0xb4] sm:$0xff] %v4150
      %4157 = vst [vmem:[#allocation3 + $0xbc] sm:$0xff] %v4151
      %4158 = vst [vmem:[#allocation3 + $0xc4] sm:$0xf] %v4152
      %4159 = vrot.lane.b32.xlu0 %v3899, 104
      %v4160 = vpop.permute.xlu0 %4159
      %4161 = vrot.lane.b32.xlu0 %v3953, 104
      %v4162 = vpop.permute.xlu0 %4161
      %4163 = vrot.lane.b32.xlu0 %v3901, 104
      %v4164 = vpop.permute.xlu0 %4163
      %4165 = vrot.lane.b32.xlu0 %v3955, 104
      %v4166 = vpop.permute.xlu0 %4165
      %4167 = vrot.lane.b32.xlu0 %v3904, 104
      %v4168 = vpop.permute.xlu0 %4167
      %4169 = vrot.lane.b32.xlu0 %v3958, 104
      %v4170 = vpop.permute.xlu0 %4169
      %v4171 = vsel %vm445, %v4160, %v4162
      %v4172 = vsel %vm445, %v4164, %v4166
      %v4173 = vsel %vm445, %v4168, %v4170
      %4177 = vst [vmem:[#allocation3 + $0xc8] sm:$0xff] %v4171
      %4178 = vst [vmem:[#allocation3 + $0xd0] sm:$0xff] %v4172
      %4179 = vst [vmem:[#allocation3 + $0xd8] sm:$0xf] %v4173
      %4180 = vrot.lane.b32.xlu0 %v3899, 103
      %v4181 = vpop.permute.xlu0 %4180
      %4182 = vrot.lane.b32.xlu0 %v3953, 103
      %v4183 = vpop.permute.xlu0 %4182
      %4184 = vrot.lane.b32.xlu0 %v3901, 103
      %v4185 = vpop.permute.xlu0 %4184
      %4186 = vrot.lane.b32.xlu0 %v3955, 103
      %v4187 = vpop.permute.xlu0 %4186
      %4188 = vrot.lane.b32.xlu0 %v3904, 103
      %v4189 = vpop.permute.xlu0 %4188
      %4190 = vrot.lane.b32.xlu0 %v3958, 103
      %v4191 = vpop.permute.xlu0 %4190
      %v4192 = vsel %vm1360, %v4181, %v4183
      %v4193 = vsel %vm1360, %v4185, %v4187
      %v4194 = vsel %vm1360, %v4189, %v4191
      %4198 = vst [vmem:[#allocation3 + $0xdc] sm:$0xff] %v4192
      %4199 = vst [vmem:[#allocation3 + $0xe4] sm:$0xff] %v4193
      %4200 = vst [vmem:[#allocation3 + $0xec] sm:$0xf] %v4194
      %4201 = vrot.lane.b32.xlu0 %v3899, 102
      %v4202 = vpop.permute.xlu0 %4201
      %4203 = vrot.lane.b32.xlu0 %v3953, 102
      %v4204 = vpop.permute.xlu0 %4203
      %4205 = vrot.lane.b32.xlu0 %v3901, 102
      %v4206 = vpop.permute.xlu0 %4205
      %4207 = vrot.lane.b32.xlu0 %v3955, 102
      %v4208 = vpop.permute.xlu0 %4207
      %4209 = vrot.lane.b32.xlu0 %v3904, 102
      %v4210 = vpop.permute.xlu0 %4209
      %4211 = vrot.lane.b32.xlu0 %v3958, 102
      %v4212 = vpop.permute.xlu0 %4211
      %v4213 = vsel %vm1382, %v4202, %v4204
      %v4214 = vsel %vm1382, %v4206, %v4208
      %v4215 = vsel %vm1382, %v4210, %v4212
      %4219 = vst [vmem:[#allocation3 + $0xf0] sm:$0xff] %v4213
      %4220 = vst [vmem:[#allocation3 + $0xf8] sm:$0xff] %v4214
      %4221 = vst [vmem:[#allocation3 + $0x100] sm:$0xf] %v4215
      %4222 = vrot.lane.b32.xlu0 %v3899, 101
      %v4223 = vpop.permute.xlu0 %4222
      %4224 = vrot.lane.b32.xlu0 %v3953, 101
      %v4225 = vpop.permute.xlu0 %4224
      %4226 = vrot.lane.b32.xlu0 %v3901, 101
      %v4227 = vpop.permute.xlu0 %4226
      %4228 = vrot.lane.b32.xlu0 %v3955, 101
      %v4229 = vpop.permute.xlu0 %4228
      %4230 = vrot.lane.b32.xlu0 %v3904, 101
      %v4231 = vpop.permute.xlu0 %4230
      %4232 = vrot.lane.b32.xlu0 %v3958, 101
      %v4233 = vpop.permute.xlu0 %4232
      %v4234 = vsel %vm1404, %v4223, %v4225
      %v4235 = vsel %vm1404, %v4227, %v4229
      %v4236 = vsel %vm1404, %v4231, %v4233
      %4240 = vst [vmem:[#allocation3 + $0x104] sm:$0xff] %v4234
      %4241 = vst [vmem:[#allocation3 + $0x10c] sm:$0xff] %v4235
      %4242 = vst [vmem:[#allocation3 + $0x114] sm:$0xf] %v4236
      %4243 = vrot.lane.b32.xlu0 %v3899, 100
      %v4244 = vpop.permute.xlu0 %4243
      %4245 = vrot.lane.b32.xlu0 %v3953, 100
      %v4246 = vpop.permute.xlu0 %4245
      %4247 = vrot.lane.b32.xlu0 %v3901, 100
      %v4248 = vpop.permute.xlu0 %4247
      %4249 = vrot.lane.b32.xlu0 %v3955, 100
      %v4250 = vpop.permute.xlu0 %4249
      %4251 = vrot.lane.b32.xlu0 %v3904, 100
      %v4252 = vpop.permute.xlu0 %4251
      %4253 = vrot.lane.b32.xlu0 %v3958, 100
      %v4254 = vpop.permute.xlu0 %4253
      %v4255 = vsel %vm1426, %v4244, %v4246
      %v4256 = vsel %vm1426, %v4248, %v4250
      %v4257 = vsel %vm1426, %v4252, %v4254
      %4261 = vst [vmem:[#allocation3 + $0x118] sm:$0xff] %v4255
      %4262 = vst [vmem:[#allocation3 + $0x120] sm:$0xff] %v4256
      %4263 = vst [vmem:[#allocation3 + $0x128] sm:$0xf] %v4257
      %4264 = vrot.lane.b32.xlu0 %v3899, 92
      %v4265 = vpop.permute.xlu0 %4264
      %4266 = vrot.lane.b32.xlu0 %v3953, 92
      %v4267 = vpop.permute.xlu0 %4266
      %4268 = vrot.lane.b32.xlu0 %v3901, 92
      %v4269 = vpop.permute.xlu0 %4268
      %4270 = vrot.lane.b32.xlu0 %v3955, 92
      %v4271 = vpop.permute.xlu0 %4270
      %4272 = vrot.lane.b32.xlu0 %v3904, 92
      %v4273 = vpop.permute.xlu0 %4272
      %4274 = vrot.lane.b32.xlu0 %v3958, 92
      %v4275 = vpop.permute.xlu0 %4274
      %v4276 = vsel %vm1448, %v4265, %v4267
      %v4277 = vsel %vm1448, %v4269, %v4271
      %v4278 = vsel %vm1448, %v4273, %v4275
      %4282 = vst [vmem:[#allocation3 + $0x12c] sm:$0xff] %v4276
      %4283 = vst [vmem:[#allocation3 + $0x134] sm:$0xff] %v4277
      %4284 = vst [vmem:[#allocation3 + $0x13c] sm:$0xf] %v4278
      %4285 = vrot.lane.b32.xlu0 %v3899, 91
      %v4286 = vpop.permute.xlu0 %4285
      %4287 = vrot.lane.b32.xlu0 %v3953, 91
      %v4288 = vpop.permute.xlu0 %4287
      %4289 = vrot.lane.b32.xlu0 %v3901, 91
      %v4290 = vpop.permute.xlu0 %4289
      %4291 = vrot.lane.b32.xlu0 %v3955, 91
      %v4292 = vpop.permute.xlu0 %4291
      %4293 = vrot.lane.b32.xlu0 %v3904, 91
      %v4294 = vpop.permute.xlu0 %4293
      %4295 = vrot.lane.b32.xlu0 %v3958, 91
      %v4296 = vpop.permute.xlu0 %4295
      %v4297 = vsel %vm1470, %v4286, %v4288
      %v4298 = vsel %vm1470, %v4290, %v4292
      %v4299 = vsel %vm1470, %v4294, %v4296
      %4303 = vst [vmem:[#allocation3 + $0x140] sm:$0xff] %v4297
      %4304 = vst [vmem:[#allocation3 + $0x148] sm:$0xff] %v4298
      %4305 = vst [vmem:[#allocation3 + $0x150] sm:$0xf] %v4299
      %4306 = vrot.lane.b32.xlu0 %v3899, 90
      %v4307 = vpop.permute.xlu0 %4306
      %4308 = vrot.lane.b32.xlu0 %v3953, 90
      %v4309 = vpop.permute.xlu0 %4308
      %4310 = vrot.lane.b32.xlu0 %v3901, 90
      %v4311 = vpop.permute.xlu0 %4310
      %4312 = vrot.lane.b32.xlu0 %v3955, 90
      %v4313 = vpop.permute.xlu0 %4312
      %4314 = vrot.lane.b32.xlu0 %v3904, 90
      %v4315 = vpop.permute.xlu0 %4314
      %4316 = vrot.lane.b32.xlu0 %v3958, 90
      %v4317 = vpop.permute.xlu0 %4316
      %v4318 = vsel %vm1492, %v4307, %v4309
      %v4319 = vsel %vm1492, %v4311, %v4313
      %v4320 = vsel %vm1492, %v4315, %v4317
      %4324 = vst [vmem:[#allocation3 + $0x154] sm:$0xff] %v4318
      %4325 = vst [vmem:[#allocation3 + $0x15c] sm:$0xff] %v4319
      %4326 = vst [vmem:[#allocation3 + $0x164] sm:$0xf] %v4320
      %4327 = vrot.lane.b32.xlu0 %v3899, 89
      %v4328 = vpop.permute.xlu0 %4327
      %4329 = vrot.lane.b32.xlu0 %v3953, 89
      %v4330 = vpop.permute.xlu0 %4329
      %4331 = vrot.lane.b32.xlu0 %v3901, 89
      %v4332 = vpop.permute.xlu0 %4331
      %4333 = vrot.lane.b32.xlu0 %v3955, 89
      %v4334 = vpop.permute.xlu0 %4333
      %4335 = vrot.lane.b32.xlu0 %v3904, 89
      %v4336 = vpop.permute.xlu0 %4335
      %4337 = vrot.lane.b32.xlu0 %v3958, 89
      %v4338 = vpop.permute.xlu0 %4337
      %v4339 = vsel %vm1514, %v4328, %v4330
      %v4340 = vsel %vm1514, %v4332, %v4334
      %v4341 = vsel %vm1514, %v4336, %v4338
      %4345 = vst [vmem:[#allocation3 + $0x168] sm:$0xff] %v4339
      %4346 = vst [vmem:[#allocation3 + $0x170] sm:$0xff] %v4340
      %4347 = vst [vmem:[#allocation3 + $0x178] sm:$0xf] %v4341
      %4348 = vrot.lane.b32.xlu0 %v3899, 88
      %v4349 = vpop.permute.xlu0 %4348
      %4350 = vrot.lane.b32.xlu0 %v3953, 88
      %v4351 = vpop.permute.xlu0 %4350
      %4352 = vrot.lane.b32.xlu0 %v3901, 88
      %v4353 = vpop.permute.xlu0 %4352
      %4354 = vrot.lane.b32.xlu0 %v3955, 88
      %v4355 = vpop.permute.xlu0 %4354
      %4356 = vrot.lane.b32.xlu0 %v3904, 88
      %v4357 = vpop.permute.xlu0 %4356
      %4358 = vrot.lane.b32.xlu0 %v3958, 88
      %v4359 = vpop.permute.xlu0 %4358
      %v4360 = vsel %vm454, %v4349, %v4351
      %v4361 = vsel %vm454, %v4353, %v4355
      %v4362 = vsel %vm454, %v4357, %v4359
      %4366 = vst [vmem:[#allocation3 + $0x17c] sm:$0xff] %v4360
      %4367 = vst [vmem:[#allocation3 + $0x184] sm:$0xff] %v4361
      %4368 = vst [vmem:[#allocation3 + $0x18c] sm:$0xf] %v4362
      %4369 = vrot.lane.b32.xlu0 %v3899, 80
      %v4370 = vpop.permute.xlu0 %4369
      %4371 = vrot.lane.b32.xlu0 %v3953, 80
      %v4372 = vpop.permute.xlu0 %4371
      %4373 = vrot.lane.b32.xlu0 %v3901, 80
      %v4374 = vpop.permute.xlu0 %4373
      %4375 = vrot.lane.b32.xlu0 %v3955, 80
      %v4376 = vpop.permute.xlu0 %4375
      %4377 = vrot.lane.b32.xlu0 %v3904, 80
      %v4378 = vpop.permute.xlu0 %4377
      %4379 = vrot.lane.b32.xlu0 %v3958, 80
      %v4380 = vpop.permute.xlu0 %4379
      %v4381 = vsel %vm1557, %v4370, %v4372
      %v4382 = vsel %vm1557, %v4374, %v4376
      %v4383 = vsel %vm1557, %v4378, %v4380
      %4387 = vst [vmem:[#allocation3 + $0x190] sm:$0xff] %v4381
      %4388 = vst [vmem:[#allocation3 + $0x198] sm:$0xff] %v4382
      %4389 = vst [vmem:[#allocation3 + $0x1a0] sm:$0xf] %v4383
      %4390 = vrot.lane.b32.xlu0 %v3899, 79
      %v4391 = vpop.permute.xlu0 %4390
      %4392 = vrot.lane.b32.xlu0 %v3953, 79
      %v4393 = vpop.permute.xlu0 %4392
      %4394 = vrot.lane.b32.xlu0 %v3901, 79
      %v4395 = vpop.permute.xlu0 %4394
      %4396 = vrot.lane.b32.xlu0 %v3955, 79
      %v4397 = vpop.permute.xlu0 %4396
      %4398 = vrot.lane.b32.xlu0 %v3904, 79
      %v4399 = vpop.permute.xlu0 %4398
      %4400 = vrot.lane.b32.xlu0 %v3958, 79
      %v4401 = vpop.permute.xlu0 %4400
      %v4402 = vsel %vm1579, %v4391, %v4393
      %v4403 = vsel %vm1579, %v4395, %v4397
      %v4404 = vsel %vm1579, %v4399, %v4401
      %4408 = vst [vmem:[#allocation3 + $0x1a4] sm:$0xff] %v4402
      %4409 = vst [vmem:[#allocation3 + $0x1ac] sm:$0xff] %v4403
      %4410 = vst [vmem:[#allocation3 + $0x1b4] sm:$0xf] %v4404
      %4411 = vrot.lane.b32.xlu0 %v3899, 78
      %v4412 = vpop.permute.xlu0 %4411
      %4413 = vrot.lane.b32.xlu0 %v3953, 78
      %v4414 = vpop.permute.xlu0 %4413
      %4415 = vrot.lane.b32.xlu0 %v3901, 78
      %v4416 = vpop.permute.xlu0 %4415
      %4417 = vrot.lane.b32.xlu0 %v3955, 78
      %v4418 = vpop.permute.xlu0 %4417
      %4419 = vrot.lane.b32.xlu0 %v3904, 78
      %v4420 = vpop.permute.xlu0 %4419
      %4421 = vrot.lane.b32.xlu0 %v3958, 78
      %v4422 = vpop.permute.xlu0 %4421
      %v4423 = vsel %vm1601, %v4412, %v4414
      %v4424 = vsel %vm1601, %v4416, %v4418
      %v4425 = vsel %vm1601, %v4420, %v4422
      %4429 = vst [vmem:[#allocation3 + $0x1b8] sm:$0xff] %v4423
      %4430 = vst [vmem:[#allocation3 + $0x1c0] sm:$0xff] %v4424
      %4431 = vst [vmem:[#allocation3 + $0x1c8] sm:$0xf] %v4425
      %4432 = vrot.lane.b32.xlu0 %v3899, 77
      %v4433 = vpop.permute.xlu0 %4432
      %4434 = vrot.lane.b32.xlu0 %v3953, 77
      %v4435 = vpop.permute.xlu0 %4434
      %4436 = vrot.lane.b32.xlu0 %v3901, 77
      %v4437 = vpop.permute.xlu0 %4436
      %4438 = vrot.lane.b32.xlu0 %v3955, 77
      %v4439 = vpop.permute.xlu0 %4438
      %4440 = vrot.lane.b32.xlu0 %v3904, 77
      %v4441 = vpop.permute.xlu0 %4440
      %4442 = vrot.lane.b32.xlu0 %v3958, 77
      %v4443 = vpop.permute.xlu0 %4442
      %v4444 = vsel %vm1623, %v4433, %v4435
      %v4445 = vsel %vm1623, %v4437, %v4439
      %v4446 = vsel %vm1623, %v4441, %v4443
      %4450 = vst [vmem:[#allocation3 + $0x1cc] sm:$0xff] %v4444
      %4451 = vst [vmem:[#allocation3 + $0x1d4] sm:$0xff] %v4445
      %4452 = vst [vmem:[#allocation3 + $0x1dc] sm:$0xf] %v4446
      %4453 = vrot.lane.b32.xlu0 %v3899, 76
      %v4454 = vpop.permute.xlu0 %4453
      %4455 = vrot.lane.b32.xlu0 %v3953, 76
      %v4456 = vpop.permute.xlu0 %4455
      %4457 = vrot.lane.b32.xlu0 %v3901, 76
      %v4458 = vpop.permute.xlu0 %4457
      %4459 = vrot.lane.b32.xlu0 %v3955, 76
      %v4460 = vpop.permute.xlu0 %4459
      %4461 = vrot.lane.b32.xlu0 %v3904, 76
      %v4462 = vpop.permute.xlu0 %4461
      %4463 = vrot.lane.b32.xlu0 %v3958, 76
      %v4464 = vpop.permute.xlu0 %4463
      %v4465 = vsel %vm1645, %v4454, %v4456
      %v4466 = vsel %vm1645, %v4458, %v4460
      %v4467 = vsel %vm1645, %v4462, %v4464
      %4471 = vst [vmem:[#allocation3 + $0x1e0] sm:$0xff] %v4465
      %4472 = vst [vmem:[#allocation3 + $0x1e8] sm:$0xff] %v4466
      %4473 = vst [vmem:[#allocation3 + $0x1f0] sm:$0xf] %v4467
      %v4474 = vld [vmem:[#allocation3] sm:$0xff]
      %v4475 = vld [vmem:[#allocation3 + $0x8] sm:$0xff]
      %v4476 = vld [vmem:[#allocation3 + $0x10] sm:$0xff]
      %v4477 = vld [vmem:[#allocation3 + $0x18] sm:$0xff]
      %v4478 = vld [vmem:[#allocation3 + $0x20] sm:$0xff]
      %v4479 = vld [vmem:[#allocation3 + $0x28] sm:$0xff]
      %v4480 = vld [vmem:[#allocation3 + $0x30] sm:$0xff]
      %v4481 = vld [vmem:[#allocation3 + $0x38] sm:$0xff]
      %v4482 = vld [vmem:[#allocation3 + $0x40] sm:$0xff]
      %v4483 = vld [vmem:[#allocation3 + $0x48] sm:$0xff]
      %v4484 = vld [vmem:[#allocation3 + $0x50] sm:$0xff]
      %v4485 = vld [vmem:[#allocation3 + $0x58] sm:$0xff]
      %v4486 = vld [vmem:[#allocation3 + $0x60] sm:$0xff]
      %v4487 = vld [vmem:[#allocation3 + $0x68] sm:$0xff]
      %v4488 = vld [vmem:[#allocation3 + $0x70] sm:$0xff]
      %v4489 = vld [vmem:[#allocation3 + $0x78] sm:$0xff]
      %v4490 = vld [vmem:[#allocation3 + $0x80] sm:$0xff]
      %v4491 = vld [vmem:[#allocation3 + $0x88] sm:$0xff]
      %v4492 = vld [vmem:[#allocation3 + $0x90] sm:$0xff]
      %v4493 = vld [vmem:[#allocation3 + $0x98] sm:$0xff]
      %v4494 = vld [vmem:[#allocation3 + $0xa0] sm:$0xff]
      %v4495 = vld [vmem:[#allocation3 + $0xa8] sm:$0xff]
      %v4496 = vld [vmem:[#allocation3 + $0xb0] sm:$0xff]
      %v4497 = vld [vmem:[#allocation3 + $0xb8] sm:$0xff]
      %v4498 = vld [vmem:[#allocation3 + $0xc0] sm:$0xff]
      %v4499 = vld [vmem:[#allocation3 + $0xc8] sm:$0xff]
      %v4500 = vld [vmem:[#allocation3 + $0xd0] sm:$0xff]
      %v4501 = vld [vmem:[#allocation3 + $0xd8] sm:$0xff]
      %v4502 = vld [vmem:[#allocation3 + $0xe0] sm:$0xff]
      %v4503 = vld [vmem:[#allocation3 + $0xe8] sm:$0xff]
      %v4504 = vld [vmem:[#allocation3 + $0xf0] sm:$0xff]
      %v4505 = vld [vmem:[#allocation3 + $0xf8] sm:$0xff]
      %v4506 = vld [vmem:[#allocation3 + $0x100] sm:$0xff]
      %v4507 = vld [vmem:[#allocation3 + $0x108] sm:$0xff]
      %v4508 = vld [vmem:[#allocation3 + $0x110] sm:$0xff]
      %v4509 = vld [vmem:[#allocation3 + $0x118] sm:$0xff]
      %v4510 = vld [vmem:[#allocation3 + $0x120] sm:$0xff]
      %v4511 = vld [vmem:[#allocation3 + $0x128] sm:$0xff]
      %v4512 = vld [vmem:[#allocation3 + $0x130] sm:$0xff]
      %v4513 = vld [vmem:[#allocation3 + $0x138] sm:$0xff]
      %v4514 = vld [vmem:[#allocation3 + $0x140] sm:$0xff]
      %v4515 = vld [vmem:[#allocation3 + $0x148] sm:$0xff]
      %v4516 = vld [vmem:[#allocation3 + $0x150] sm:$0xff]
      %v4517 = vld [vmem:[#allocation3 + $0x158] sm:$0xff]
      %v4518 = vld [vmem:[#allocation3 + $0x160] sm:$0xff]
      %v4519 = vld [vmem:[#allocation3 + $0x168] sm:$0xff]
      %v4520 = vld [vmem:[#allocation3 + $0x170] sm:$0xff]
      %v4521 = vld [vmem:[#allocation3 + $0x178] sm:$0xff]
      %v4522 = vld [vmem:[#allocation3 + $0x180] sm:$0xff]
      %v4523 = vld [vmem:[#allocation3 + $0x188] sm:$0xff]
      %v4524 = vld [vmem:[#allocation3 + $0x190] sm:$0xff]
      %v4525 = vld [vmem:[#allocation3 + $0x198] sm:$0xff]
      %v4526 = vld [vmem:[#allocation3 + $0x1a0] sm:$0xff]
      %v4527 = vld [vmem:[#allocation3 + $0x1a8] sm:$0xff]
      %v4528 = vld [vmem:[#allocation3 + $0x1b0] sm:$0xff]
      %v4529 = vld [vmem:[#allocation3 + $0x1b8] sm:$0xff]
      %v4530 = vld [vmem:[#allocation3 + $0x1c0] sm:$0xff]
      %v4531 = vld [vmem:[#allocation3 + $0x1c8] sm:$0xff]
      %v4532 = vld [vmem:[#allocation3 + $0x1d0] sm:$0xff]
      %v4533 = vld [vmem:[#allocation3 + $0x1d8] sm:$0xff]
      %v4534 = vld [vmem:[#allocation3 + $0x1e0] sm:$0xff]
      %v4535 = vld [vmem:[#allocation3 + $0x1e8] sm:$0xff]
      %v4536 = vld [vmem:[#allocation3 + $0x1f0] sm:$0xf]
      %v4537 = vpack.c.bf16 %v4475, %v4474
      %v4538 = vpack.c.bf16 %v4477, %v4476
      %v4539 = vpack.c.bf16 %v4479, %v4478
      %v4540 = vpack.c.bf16 %v4481, %v4480
      %v4541 = vpack.c.bf16 %v4483, %v4482
      %v4542 = vpack.c.bf16 %v4485, %v4484
      %v4543 = vpack.c.bf16 %v4487, %v4486
      %v4544 = vpack.c.bf16 %v4489, %v4488
      %v4545 = vpack.c.bf16 %v4491, %v4490
      %v4546 = vpack.c.bf16 %v4493, %v4492
      %v4547 = vpack.c.bf16 %v4495, %v4494
      %v4548 = vpack.c.bf16 %v4497, %v4496
      %v4549 = vpack.c.bf16 %v4499, %v4498
      %v4550 = vpack.c.bf16 %v4501, %v4500
      %v4551 = vpack.c.bf16 %v4503, %v4502
      %v4552 = vpack.c.bf16 %v4505, %v4504
      %v4553 = vpack.c.bf16 %v4507, %v4506
      %v4554 = vpack.c.bf16 %v4509, %v4508
      %v4555 = vpack.c.bf16 %v4511, %v4510
      %v4556 = vpack.c.bf16 %v4513, %v4512
      %v4557 = vpack.c.bf16 %v4515, %v4514
      %v4558 = vpack.c.bf16 %v4517, %v4516
      %v4559 = vpack.c.bf16 %v4519, %v4518
      %v4560 = vpack.c.bf16 %v4521, %v4520
      %v4561 = vpack.c.bf16 %v4523, %v4522
      %v4562 = vpack.c.bf16 %v4525, %v4524
      %v4563 = vpack.c.bf16 %v4527, %v4526
      %v4564 = vpack.c.bf16 %v4529, %v4528
      %v4565 = vpack.c.bf16 %v4531, %v4530
      %v4566 = vpack.c.bf16 %v4533, %v4532
      %v4567 = vpack.c.bf16 %v4535, %v4534
      %v4568 = vpack.c.bf16 %v4536, %v4536
      %v4570 = vsel %vm1867, %v4568, 0
      %4572 = vmatpush.bf16.msra.mxu0 %v4544
      %4573 = vmatpush.bf16.msra.mxu0 %v4543
      %4574 = vmatpush.bf16.msra.mxu0 %v4542
      %4575 = vmatpush.bf16.msra.mxu0 %v4541
      %4576 = vmatpush.bf16.msra.mxu0 %v4540
      %4577 = vmatpush.bf16.msra.mxu0 %v4539
      %4578 = vmatpush.bf16.msra.mxu0 %v4538
      %4579 = vmatpush.bf16.msra.mxu0 %v4537
      %4580 = vmatmul.bf16.gmra.mxu0 %v1827
      %v4581 = vpop.f32.mrf.mxu0
      %v4582 = vadd.f32 %v1753, %v4581
      %v4583 = vpop.f32.mrf.mxu0
      %v4584 = vadd.f32 %v1758, %v4583
      %4585 = vmatmul.bf16.gmra.mxu0 %v1831
      %v4586 = vpop.f32.mrf.mxu0
      %v4587 = vadd.f32 %v1763, %v4586
      %v4588 = vpop.f32.mrf.mxu0
      %v4589 = vadd.f32 %v1768, %v4588
      %4590 = vmatmul.bf16.gmra.mxu0 %v1835
      %v4591 = vpop.f32.mrf.mxu0
      %v4592 = vadd.f32 %v1773, %v4591
      %v4593 = vpop.f32.mrf.mxu0
      %v4594 = vadd.f32 %v1778, %v4593
      %4595 = vmatmul.bf16.gmra.mxu0 %v1839
      %v4596 = vpop.f32.mrf.mxu0
      %v4597 = vadd.f32 %v1783, %v4596
      %v4598 = vpop.f32.mrf.mxu0
      %4599 = vdwg.mxu0
      %4600 = vmatpush.bf16.msra.mxu0 %v4552
      %4601 = vmatpush.bf16.msra.mxu0 %v4551
      %4602 = vmatpush.bf16.msra.mxu0 %v4550
      %4603 = vmatpush.bf16.msra.mxu0 %v4549
      %4604 = vmatpush.bf16.msra.mxu0 %v4548
      %4605 = vmatpush.bf16.msra.mxu0 %v4547
      %4606 = vmatpush.bf16.msra.mxu0 %v4546
      %4607 = vmatpush.bf16.msra.mxu0 %v4545
      %4608 = vmatmul.bf16.gmra.mxu0 %v1828
      %v4609 = vpop.f32.mrf.mxu0
      %v4610 = vadd.f32 %v4582, %v4609
      %v4611 = vpop.f32.mrf.mxu0
      %v4612 = vadd.f32 %v4584, %v4611
      %4613 = vmatmul.bf16.gmra.mxu0 %v1832
      %v4614 = vpop.f32.mrf.mxu0
      %v4615 = vadd.f32 %v4587, %v4614
      %v4616 = vpop.f32.mrf.mxu0
      %v4617 = vadd.f32 %v4589, %v4616
      %4618 = vmatmul.bf16.gmra.mxu0 %v1836
      %v4619 = vpop.f32.mrf.mxu0
      %v4620 = vadd.f32 %v4592, %v4619
      %v4621 = vpop.f32.mrf.mxu0
      %v4622 = vadd.f32 %v4594, %v4621
      %4623 = vmatmul.bf16.gmra.mxu0 %v1840
      %v4624 = vpop.f32.mrf.mxu0
      %v4625 = vadd.f32 %v4597, %v4624
      %v4626 = vpop.f32.mrf.mxu0
      %4627 = vdwg.mxu0
      %4628 = vmatpush.bf16.msra.mxu0 %v4560
      %4629 = vmatpush.bf16.msra.mxu0 %v4559
      %4630 = vmatpush.bf16.msra.mxu0 %v4558
      %4631 = vmatpush.bf16.msra.mxu0 %v4557
      %4632 = vmatpush.bf16.msra.mxu0 %v4556
      %4633 = vmatpush.bf16.msra.mxu0 %v4555
      %4634 = vmatpush.bf16.msra.mxu0 %v4554
      %4635 = vmatpush.bf16.msra.mxu0 %v4553
      %4636 = vmatmul.bf16.gmra.mxu0 %v1829
      %v4637 = vpop.f32.mrf.mxu0
      %v4638 = vadd.f32 %v4610, %v4637
      %v4639 = vpop.f32.mrf.mxu0
      %v4640 = vadd.f32 %v4612, %v4639
      %4641 = vmatmul.bf16.gmra.mxu0 %v1833
      %v4642 = vpop.f32.mrf.mxu0
      %v4643 = vadd.f32 %v4615, %v4642
      %v4644 = vpop.f32.mrf.mxu0
      %v4645 = vadd.f32 %v4617, %v4644
      %4646 = vmatmul.bf16.gmra.mxu0 %v1837
      %v4647 = vpop.f32.mrf.mxu0
      %v4648 = vadd.f32 %v4620, %v4647
      %v4649 = vpop.f32.mrf.mxu0
      %v4650 = vadd.f32 %v4622, %v4649
      %4651 = vmatmul.bf16.gmra.mxu0 %v1841
      %v4652 = vpop.f32.mrf.mxu0
      %v4653 = vadd.f32 %v4625, %v4652
      %v4654 = vpop.f32.mrf.mxu0
      %4655 = vdwg.mxu0
      %4656 = vmatpush.bf16.msra.mxu0 %v4570
      %4657 = vmatpush.bf16.msra.mxu0 %v4567
      %4658 = vmatpush.bf16.msra.mxu0 %v4566
      %4659 = vmatpush.bf16.msra.mxu0 %v4565
      %4660 = vmatpush.bf16.msra.mxu0 %v4564
      %4661 = vmatpush.bf16.msra.mxu0 %v4563
      %4662 = vmatpush.bf16.msra.mxu0 %v4562
      %4663 = vmatpush.bf16.msra.mxu0 %v4561
      %4664 = vmatmul.bf16.gmra.mxu0 %v1856
      %v4665 = vpop.f32.mrf.mxu0
      %v4666 = vadd.f32 %v4638, %v4665
      %v4667 = vpop.f32.mrf.mxu0
      %v4668 = vadd.f32 %v4640, %v4667
      %4669 = vmatmul.bf16.gmra.mxu0 %v1859
      %v4670 = vpop.f32.mrf.mxu0
      %v4671 = vadd.f32 %v4643, %v4670
      %v4672 = vpop.f32.mrf.mxu0
      %v4673 = vadd.f32 %v4645, %v4672
      %4674 = vmatmul.bf16.gmra.mxu0 %v1862
      %v4675 = vpop.f32.mrf.mxu0
      %v4676 = vadd.f32 %v4648, %v4675
      %v4677 = vpop.f32.mrf.mxu0
      %v4678 = vadd.f32 %v4650, %v4677
      %4679 = vmatmul.bf16.gmra.mxu0 %v1865
      %v4680 = vpop.f32.mrf.mxu0
      %v4681 = vadd.f32 %v4653, %v4680
      %v4682 = vpop.f32.mrf.mxu0
      %4683 = vdwg.mxu0
      %v4684 = vmax.f32 %v4666, 0.0
      %v4685 = vmax.f32 %v4668, 0.0
      %v4686 = vmax.f32 %v4671, 0.0
      %v4687 = vmax.f32 %v4673, 0.0
      %v4688 = vmax.f32 %v4676, 0.0
      %v4689 = vmax.f32 %v4678, 0.0
      %v4690 = vmax.f32 %v4681, 0.0
      %4698 = vrot.lane.b32.xlu0 %v4684, 127
      %v4699 = vpop.permute.xlu0 %4698
      %4700 = vrot.lane.b32.xlu0 %v4685, 127
      %v4701 = vpop.permute.xlu0 %4700
      %4702 = vrot.lane.b32.xlu0 %v4686, 127
      %v4703 = vpop.permute.xlu0 %4702
      %4704 = vrot.lane.b32.xlu0 %v4687, 127
      %v4705 = vpop.permute.xlu0 %4704
      %4706 = vrot.lane.b32.xlu0 %v4688, 127
      %v4707 = vpop.permute.xlu0 %4706
      %4708 = vrot.lane.b32.xlu0 %v4689, 127
      %v4709 = vpop.permute.xlu0 %4708
      %4710 = vrot.lane.b32.xlu0 %v4690, 127
      %v4711 = vpop.permute.xlu0 %4710
      %v4719 = vmax.f32 %v4684, %v4699
      %v4720 = vmax.f32 %v4685, %v4701
      %v4721 = vmax.f32 %v4686, %v4703
      %v4722 = vmax.f32 %v4687, %v4705
      %v4723 = vmax.f32 %v4688, %v4707
      %v4724 = vmax.f32 %v4689, %v4709
      %v4725 = vmax.f32 %v4690, %v4711
      %4733 = vrot.lane.b32.xlu0 %v4719, 116
      %v4734 = vpop.permute.xlu0 %4733
      %4735 = vrot.lane.b32.xlu0 %v4720, 116
      %v4736 = vpop.permute.xlu0 %4735
      %4737 = vrot.lane.b32.xlu0 %v4721, 116
      %v4738 = vpop.permute.xlu0 %4737
      %4739 = vrot.lane.b32.xlu0 %v4722, 116
      %v4740 = vpop.permute.xlu0 %4739
      %4741 = vrot.lane.b32.xlu0 %v4723, 116
      %v4742 = vpop.permute.xlu0 %4741
      %4743 = vrot.lane.b32.xlu0 %v4724, 116
      %v4744 = vpop.permute.xlu0 %4743
      %4745 = vrot.lane.b32.xlu0 %v4725, 116
      %v4746 = vpop.permute.xlu0 %4745
      %v4754 = vmax.f32 %v4719, %v4734
      %v4755 = vmax.f32 %v4720, %v4736
      %v4756 = vmax.f32 %v4721, %v4738
      %v4757 = vmax.f32 %v4722, %v4740
      %v4758 = vmax.f32 %v4723, %v4742
      %v4759 = vmax.f32 %v4724, %v4744
      %v4760 = vmax.f32 %v4725, %v4746
      %v4762 = vsel %vm1557, %v4754, 0
      %v4765 = vsel %vm1557, %v4755, 0
      %v4768 = vsel %vm1557, %v4756, 0
      %v4771 = vsel %vm1557, %v4757, 0
      %v4774 = vsel %vm1557, %v4758, 0
      %v4777 = vsel %vm1557, %v4759, 0
      %v4780 = vsel %vm1557, %v4760, 0
      %4782 = vmatpush.msra.mxu0 0.0
      %4783 = vmatpush.msra.mxu0 0.0
      %4784 = vmatpush.msra.mxu0 0.0
      %4785 = vmatpush.msra.mxu0 0.0
      %4786 = vmatpush.msra.mxu0 0.0
      %4787 = vmatpush.msra.mxu0 0.0
      %4788 = vmatpush.msra.mxu0 %v362
      %4789 = vmatpush.msra.mxu0 %v361
      %4790 = vmatpush.msra.mxu0 %v360
      %4791 = vmatpush.msra.mxu0 %v359
      %4792 = vmatpush.msra.mxu0 %v358
      %4793 = vmatpush.msra.mxu0 %v357
      %4794 = vmatpush.msra.mxu0 %v356
      %4795 = vmatpush.msra.mxu0 %v355
      %4796 = vmatpush.msra.mxu0 %v354
      %4797 = vmatpush.msra.mxu0 %v353
      %4798 = vmatmul.f32.gmra.mxu0 %v4762
      %v4799 = vpop.f32.mrf.mxu0
      %v4800 = vadd.f32 0.0, %v4799
      %4801 = vmatmul.f32.gmra.mxu0 %v4765
      %v4802 = vpop.f32.mrf.mxu0
      %v4803 = vadd.f32 0.0, %v4802
      %4804 = vmatmul.f32.gmra.mxu0 %v4768
      %v4805 = vpop.f32.mrf.mxu0
      %v4806 = vadd.f32 0.0, %v4805
      %4807 = vmatmul.f32.gmra.mxu0 %v4771
      %v4808 = vpop.f32.mrf.mxu0
      %v4809 = vadd.f32 0.0, %v4808
      %4810 = vmatmul.f32.gmra.mxu0 %v4774
      %v4811 = vpop.f32.mrf.mxu0
      %v4812 = vadd.f32 0.0, %v4811
      %4813 = vmatmul.f32.gmra.mxu0 %v4777
      %v4814 = vpop.f32.mrf.mxu0
      %v4815 = vadd.f32 0.0, %v4814
      %4816 = vmatmul.f32.gmra.mxu0 %v4780
      %v4817 = vpop.f32.mrf.mxu0
      %v4818 = vadd.f32 0.0, %v4817
      %4819 = vdwg.mxu0
      %s4820 = scalar_lea.vmem %s282, 112
      %4821 = vst.msk [vmem:[%s4820] sm:$0xff] %vm2119, %v4800
      %4822 = vst.msk [vmem:[%s4820 + $0x8] sm:$0xff] %vm2119, %v4803
      %4823 = vst.msk [vmem:[%s4820 + $0x10] sm:$0xff] %vm2119, %v4806
      %4824 = vst.msk [vmem:[%s4820 + $0x18] sm:$0xff] %vm2119, %v4809
      %4825 = vst.msk [vmem:[%s4820 + $0x20] sm:$0xff] %vm2119, %v4812
      %4826 = vst.msk [vmem:[%s4820 + $0x28] sm:$0xff] %vm2119, %v4815
      %4827 = vst.msk [vmem:[%s4820 + $0x30] sm:$0x3] %vm2126, %v4818
      %4828 = vst.msk [vmem:[#allocation2] ss:$8 sm:$0x7] %vm366, %v288
      %4829 = vst.msk [vmem:[#allocation2] ss:$8 sm:$0x0] %vm366, %v288
      %4831 = vrot.lane.b32.xlu0 %v288, 127
      %v4832 = vpop.permute.xlu0 %4831
      %v4833 = vrot.slane %v4832, 1
      %v4834 = vsel %vm373, %v4832, %v4833
      %4836 = vst.msk [vmem:[%s376] ss:$8 sm:$0x7] %vm366, %v4834
      %4837 = vst.msk [vmem:[%s376] ss:$8 sm:$0x0] %vm366, %v4834
      %4838 = vrot.lane.b32.xlu0 %v288, 126
      %v4839 = vpop.permute.xlu0 %4838
      %v4840 = vrot.slane %v4839, 1
      %v4841 = vsel %vm382, %v4839, %v4840
      %4843 = vst.msk [vmem:[%s385] ss:$8 sm:$0x7] %vm366, %v4841
      %4844 = vst.msk [vmem:[%s385] ss:$8 sm:$0x0] %vm366, %v4841
      %4845 = vrot.lane.b32.xlu0 %v288, 125
      %v4846 = vpop.permute.xlu0 %4845
      %v4847 = vrot.slane %v4846, 1
      %v4848 = vsel %vm391, %v4846, %v4847
      %4850 = vst.msk [vmem:[%s394] ss:$8 sm:$0x7] %vm366, %v4848
      %4851 = vst.msk [vmem:[%s394] ss:$8 sm:$0x0] %vm366, %v4848
      %4852 = vrot.lane.b32.xlu0 %v288, 124
      %v4853 = vpop.permute.xlu0 %4852
      %v4854 = vrot.slane %v4853, 1
      %v4855 = vsel %vm400, %v4853, %v4854
      %4857 = vst.msk [vmem:[%s403] ss:$8 sm:$0x7] %vm366, %v4855
      %4858 = vst.msk [vmem:[%s403] ss:$8 sm:$0x0] %vm366, %v4855
      %4859 = vrot.lane.b32.xlu0 %v288, 108
      %v4860 = vpop.permute.xlu0 %4859
      %v4861 = vrot.slane %v4860, 1
      %v4862 = vsel %vm409, %v4860, %v4861
      %4864 = vst.msk [vmem:[%s412] ss:$8 sm:$0x7] %vm366, %v4862
      %4865 = vst.msk [vmem:[%s412] ss:$8 sm:$0x0] %vm366, %v4862
      %4866 = vrot.lane.b32.xlu0 %v288, 107
      %v4867 = vpop.permute.xlu0 %4866
      %v4868 = vrot.slane %v4867, 1
      %v4869 = vsel %vm418, %v4867, %v4868
      %4871 = vst.msk [vmem:[%s421] ss:$8 sm:$0x7] %vm366, %v4869
      %4872 = vst.msk [vmem:[%s421] ss:$8 sm:$0x0] %vm366, %v4869
      %4873 = vrot.lane.b32.xlu0 %v288, 106
      %v4874 = vpop.permute.xlu0 %4873
      %v4875 = vrot.slane %v4874, 1
      %v4876 = vsel %vm427, %v4874, %v4875
      %4878 = vst.msk [vmem:[%s430] ss:$8 sm:$0x7] %vm366, %v4876
      %4879 = vst.msk [vmem:[%s430] ss:$8 sm:$0x0] %vm366, %v4876
      %4880 = vrot.lane.b32.xlu0 %v288, 105
      %v4881 = vpop.permute.xlu0 %4880
      %v4882 = vrot.slane %v4881, 1
      %v4883 = vsel %vm436, %v4881, %v4882
      %4885 = vst.msk [vmem:[%s439] ss:$8 sm:$0x7] %vm366, %v4883
      %4886 = vst.msk [vmem:[%s439] ss:$8 sm:$0x0] %vm366, %v4883
      %4887 = vrot.lane.b32.xlu0 %v288, 104
      %v4888 = vpop.permute.xlu0 %4887
      %v4889 = vrot.slane %v4888, 1
      %v4890 = vsel %vm445, %v4888, %v4889
      %4892 = vst.msk [vmem:[%s448] ss:$8 sm:$0x7] %vm366, %v4890
      %4893 = vst.msk [vmem:[%s448] ss:$8 sm:$0x0] %vm366, %v4890
      %4894 = vrot.lane.b32.xlu0 %v288, 88
      %v4895 = vpop.permute.xlu0 %4894
      %v4896 = vrot.slane %v4895, 1
      %v4897 = vsel %vm454, %v4895, %v4896
      %4899 = vst.msk [vmem:[%s457] ss:$8 sm:$0x7] %vm366, %v4897
      %4900 = vst.msk [vmem:[%s457] ss:$8 sm:$0x0] %vm366, %v4897
      %4901 = vrot.lane.b32.xlu0 %v288, 87
      %v4902 = vpop.permute.xlu0 %4901
      %v4903 = vrot.slane %v4902, 1
      %v4904 = vsel %vm463, %v4902, %v4903
      %4906 = vst.msk [vmem:[%s466] ss:$8 sm:$0x7] %vm366, %v4904
      %4907 = vst.msk [vmem:[%s466] ss:$8 sm:$0x0] %vm366, %v4904
      %4908 = vrot.lane.b32.xlu0 %v288, 86
      %v4909 = vpop.permute.xlu0 %4908
      %v4910 = vrot.slane %v4909, 1
      %v4911 = vsel %vm472, %v4909, %v4910
      %4913 = vst.msk [vmem:[%s475] ss:$8 sm:$0x7] %vm366, %v4911
      %4914 = vst.msk [vmem:[%s475] ss:$8 sm:$0x0] %vm366, %v4911
      %4915 = vrot.lane.b32.xlu0 %v288, 85
      %v4916 = vpop.permute.xlu0 %4915
      %v4917 = vrot.slane %v4916, 1
      %v4918 = vsel %vm481, %v4916, %v4917
      %4920 = vst.msk [vmem:[%s484] ss:$8 sm:$0x7] %vm366, %v4918
      %4921 = vst.msk [vmem:[%s484] ss:$8 sm:$0x0] %vm366, %v4918
      %4922 = vrot.lane.b32.xlu0 %v288, 84
      %v4923 = vpop.permute.xlu0 %4922
      %v4924 = vrot.slane %v4923, 1
      %v4925 = vsel %vm490, %v4923, %v4924
      %4927 = vst.msk [vmem:[%s493] ss:$8 sm:$0x7] %vm366, %v4925
      %4928 = vst.msk [vmem:[%s493] ss:$8 sm:$0x0] %vm366, %v4925
      %4929 = vrot.lane.b32.xlu0 %v288, 68
      %v4930 = vpop.permute.xlu0 %4929
      %v4931 = vrot.slane %v4930, 1
      %v4932 = vsel %vm499, %v4930, %v4931
      %4934 = vst.msk [vmem:[%s502] ss:$8 sm:$0x7] %vm366, %v4932
      %4935 = vst.msk [vmem:[%s502] ss:$8 sm:$0x0] %vm366, %v4932
      %4936 = vrot.lane.b32.xlu0 %v288, 67
      %v4937 = vpop.permute.xlu0 %4936
      %v4938 = vrot.slane %v4937, 1
      %v4939 = vsel %vm508, %v4937, %v4938
      %4941 = vst.msk [vmem:[%s511] ss:$8 sm:$0x7] %vm366, %v4939
      %4942 = vst.msk [vmem:[%s511] ss:$8 sm:$0x0] %vm366, %v4939
      %4943 = vrot.lane.b32.xlu0 %v288, 66
      %v4944 = vpop.permute.xlu0 %4943
      %v4945 = vrot.slane %v4944, 1
      %v4946 = vsel %vm517, %v4944, %v4945
      %4948 = vst.msk [vmem:[%s520] ss:$8 sm:$0x7] %vm366, %v4946
      %4949 = vst.msk [vmem:[%s520] ss:$8 sm:$0x0] %vm366, %v4946
      %4950 = vrot.lane.b32.xlu0 %v288, 65
      %v4951 = vpop.permute.xlu0 %4950
      %v4952 = vrot.slane %v4951, 1
      %v4953 = vsel %vm526, %v4951, %v4952
      %4955 = vst.msk [vmem:[%s529] ss:$8 sm:$0x7] %vm366, %v4953
      %4956 = vst.msk [vmem:[%s529] ss:$8 sm:$0x0] %vm366, %v4953
      %4957 = vrot.lane.b32.xlu0 %v288, 64
      %v4958 = vpop.permute.xlu0 %4957
      %v4959 = vrot.slane %v4958, 1
      %v4960 = vsel %vm535, %v4958, %v4959
      %4962 = vst.msk [vmem:[%s538] ss:$8 sm:$0x7] %vm366, %v4960
      %4963 = vst.msk [vmem:[%s538] ss:$8 sm:$0x0] %vm366, %v4960
      %4964 = vrot.lane.b32.xlu0 %v288, 48
      %v4965 = vpop.permute.xlu0 %4964
      %v4966 = vrot.slane %v4965, 1
      %v4967 = vsel %vm544, %v4965, %v4966
      %4969 = vst.msk [vmem:[%s547] ss:$8 sm:$0x7] %vm366, %v4967
      %4970 = vst.msk [vmem:[%s547] ss:$8 sm:$0x0] %vm366, %v4967
      %4971 = vrot.lane.b32.xlu0 %v288, 47
      %v4972 = vpop.permute.xlu0 %4971
      %v4973 = vrot.slane %v4972, 1
      %v4974 = vsel %vm553, %v4972, %v4973
      %4976 = vst.msk [vmem:[%s556] ss:$8 sm:$0x7] %vm366, %v4974
      %4977 = vst.msk [vmem:[%s556] ss:$8 sm:$0x0] %vm366, %v4974
      %4978 = vrot.lane.b32.xlu0 %v288, 46
      %v4979 = vpop.permute.xlu0 %4978
      %v4980 = vrot.slane %v4979, 1
      %v4981 = vsel %vm562, %v4979, %v4980
      %4983 = vst.msk [vmem:[%s565] ss:$8 sm:$0x7] %vm366, %v4981
      %4984 = vst.msk [vmem:[%s565] ss:$8 sm:$0x0] %vm366, %v4981
      %4985 = vrot.lane.b32.xlu0 %v288, 45
      %v4986 = vpop.permute.xlu0 %4985
      %v4987 = vrot.slane %v4986, 1
      %v4988 = vsel %vm571, %v4986, %v4987
      %4990 = vst.msk [vmem:[%s574] ss:$8 sm:$0x7] %vm366, %v4988
      %4991 = vst.msk [vmem:[%s574] ss:$8 sm:$0x0] %vm366, %v4988
      %4992 = vrot.lane.b32.xlu0 %v288, 44
      %v4993 = vpop.permute.xlu0 %4992
      %v4994 = vrot.slane %v4993, 1
      %v4995 = vsel %vm580, %v4993, %v4994
      %4997 = vst.msk [vmem:[%s583] ss:$8 sm:$0x7] %vm366, %v4995
      %4998 = vst.msk [vmem:[%s583] ss:$8 sm:$0x0] %vm366, %v4995
      %v4999 = vld [vmem:[#allocation2] sm:$0xff]
      %v5000 = vld [vmem:[#allocation2 + $0x8] sm:$0xff]
      %v5001 = vld [vmem:[#allocation2 + $0x10] sm:$0xff]
      %v5002 = vld [vmem:[#allocation2 + $0x18] sm:$0xff]
      %v5003 = vld [vmem:[#allocation2 + $0x20] sm:$0xff]
      %v5004 = vld [vmem:[#allocation2 + $0x28] sm:$0xff]
      %v5005 = vld [vmem:[#allocation2 + $0x30] sm:$0xff]
      %v5006 = vld [vmem:[#allocation2 + $0x38] sm:$0xff]
      %v5007 = vld [vmem:[#allocation2 + $0x40] sm:$0xff]
      %v5008 = vld [vmem:[#allocation2 + $0x48] sm:$0x1]
      %v5009 = vld [vmem:[#allocation2 + $0x50] sm:$0x1]
      %v5010 = vld [vmem:[#allocation2 + $0x58] sm:$0x1]
      %v5011 = vpack.c.bf16 %v5002, %v4999
      %v5012 = vpack.c.bf16 %v5003, %v5000
      %v5013 = vpack.c.bf16 %v5004, %v5001
      %v5014 = vpack.c.bf16 %v5008, %v5005
      %v5015 = vpack.c.bf16 %v5009, %v5006
      %v5016 = vpack.c.bf16 %v5010, %v5007
      %v5018 = vand.u32 %v5014, %v637
      %v5021 = vand.u32 %v5015, %v637
      %v5024 = vand.u32 %v5016, %v637
      %5026 = vmatpush.bf16.msra.mxu0 0
      %5027 = vmatpush.bf16.msra.mxu0 0
      %5028 = vmatpush.bf16.msra.mxu0 0
      %5029 = vmatpush.bf16.msra.mxu0 0
      %5030 = vmatpush.bf16.msra.mxu0 0
      %5031 = vmatpush.bf16.msra.mxu0 0
      %5032 = vmatpush.bf16.msra.mxu0 %v5018
      %5033 = vmatpush.bf16.msra.mxu0 %v5011
      %5034 = vmatmul.bf16.gmra.mxu0 %v629
      %v5035 = vpop.f32.mrf.mxu0
      %v5036 = vadd.f32 %v607, %v5035
      %v5037 = vpop.f32.mrf.mxu0
      %v5038 = vadd.f32 %v612, %v5037
      %5039 = vmatmul.bf16.gmra.mxu0 %v632
      %v5040 = vpop.f32.mrf.mxu0
      %v5041 = vadd.f32 %v617, %v5040
      %v5042 = vpop.f32.mrf.mxu0
      %5043 = vdwg.mxu0
      %5044 = vmatpush.bf16.msra.mxu0 0
      %5045 = vmatpush.bf16.msra.mxu0 0
      %5046 = vmatpush.bf16.msra.mxu0 0
      %5047 = vmatpush.bf16.msra.mxu0 0
      %5048 = vmatpush.bf16.msra.mxu0 0
      %5049 = vmatpush.bf16.msra.mxu0 0
      %5050 = vmatpush.bf16.msra.mxu0 %v5021
      %5051 = vmatpush.bf16.msra.mxu0 %v5012
      %5052 = vmatmul.bf16.gmra.mxu0 %v629
      %v5053 = vpop.f32.mrf.mxu0
      %v5054 = vadd.f32 %v607, %v5053
      %v5055 = vpop.f32.mrf.mxu0
      %v5056 = vadd.f32 %v612, %v5055
      %5057 = vmatmul.bf16.gmra.mxu0 %v632
      %v5058 = vpop.f32.mrf.mxu0
      %v5059 = vadd.f32 %v617, %v5058
      %v5060 = vpop.f32.mrf.mxu0
      %5061 = vdwg.mxu0
      %5062 = vmatpush.bf16.msra.mxu0 0
      %5063 = vmatpush.bf16.msra.mxu0 0
      %5064 = vmatpush.bf16.msra.mxu0 0
      %5065 = vmatpush.bf16.msra.mxu0 0
      %5066 = vmatpush.bf16.msra.mxu0 0
      %5067 = vmatpush.bf16.msra.mxu0 0
      %5068 = vmatpush.bf16.msra.mxu0 %v5024
      %5069 = vmatpush.bf16.msra.mxu0 %v5013
      %5070 = vmatmul.bf16.gmra.mxu0 %v629
      %v5071 = vpop.f32.mrf.mxu0
      %v5072 = vadd.f32 %v607, %v5071
      %v5073 = vpop.f32.mrf.mxu0
      %v5074 = vadd.f32 %v612, %v5073
      %5075 = vmatmul.bf16.gmra.mxu0 %v632
      %v5076 = vpop.f32.mrf.mxu0
      %v5077 = vadd.f32 %v617, %v5076
      %v5078 = vpop.f32.mrf.mxu0
      %5079 = vdwg.mxu0
      %v5080 = vmax.f32 %v5036, 0.0
      %v5081 = vmax.f32 %v5054, 0.0
      %v5082 = vmax.f32 %v5072, 0.0
      %v5083 = vmax.f32 %v5038, 0.0
      %v5084 = vmax.f32 %v5056, 0.0
      %v5085 = vmax.f32 %v5074, 0.0
      %v5086 = vmax.f32 %v5041, 0.0
      %v5087 = vmax.f32 %v5059, 0.0
      %v5088 = vmax.f32 %v5077, 0.0
      %5098 = vrot.lane.b32.xlu0 %v5080, 127
      %v5099 = vpop.permute.xlu0 %5098
      %5100 = vrot.lane.b32.xlu0 %v5081, 127
      %v5101 = vpop.permute.xlu0 %5100
      %5102 = vrot.lane.b32.xlu0 %v5082, 127
      %v5103 = vpop.permute.xlu0 %5102
      %5104 = vrot.lane.b32.xlu0 %v5083, 127
      %v5105 = vpop.permute.xlu0 %5104
      %5106 = vrot.lane.b32.xlu0 %v5084, 127
      %v5107 = vpop.permute.xlu0 %5106
      %5108 = vrot.lane.b32.xlu0 %v5085, 127
      %v5109 = vpop.permute.xlu0 %5108
      %5110 = vrot.lane.b32.xlu0 %v5086, 127
      %v5111 = vpop.permute.xlu0 %5110
      %5112 = vrot.lane.b32.xlu0 %v5087, 127
      %v5113 = vpop.permute.xlu0 %5112
      %5114 = vrot.lane.b32.xlu0 %v5088, 127
      %v5115 = vpop.permute.xlu0 %5114
      %v5116 = vsel %vm373, %v5099, %v5101
      %v5117 = vsel %vm373, %v5101, %v5103
      %v5118 = vsel %vm373, %v5105, %v5107
      %v5119 = vsel %vm373, %v5107, %v5109
      %v5120 = vsel %vm373, %v5111, %v5113
      %v5121 = vsel %vm373, %v5113, %v5115
      %v5131 = vmax.f32 %v5080, %v5116
      %v5132 = vmax.f32 %v5081, %v5117
      %v5133 = vmax.f32 %v5082, %v5103
      %v5134 = vmax.f32 %v5083, %v5118
      %v5135 = vmax.f32 %v5084, %v5119
      %v5136 = vmax.f32 %v5085, %v5109
      %v5137 = vmax.f32 %v5086, %v5120
      %v5138 = vmax.f32 %v5087, %v5121
      %v5139 = vmax.f32 %v5088, %v5115
      %5149 = vrot.lane.b32.xlu0 %v5131, 108
      %v5150 = vpop.permute.xlu0 %5149
      %5151 = vrot.lane.b32.xlu0 %v5132, 108
      %v5152 = vpop.permute.xlu0 %5151
      %5153 = vrot.lane.b32.xlu0 %v5133, 108
      %v5154 = vpop.permute.xlu0 %5153
      %5155 = vrot.lane.b32.xlu0 %v5134, 108
      %v5156 = vpop.permute.xlu0 %5155
      %5157 = vrot.lane.b32.xlu0 %v5135, 108
      %v5158 = vpop.permute.xlu0 %5157
      %5159 = vrot.lane.b32.xlu0 %v5136, 108
      %v5160 = vpop.permute.xlu0 %5159
      %5161 = vrot.lane.b32.xlu0 %v5137, 108
      %v5162 = vpop.permute.xlu0 %5161
      %5163 = vrot.lane.b32.xlu0 %v5138, 108
      %v5164 = vpop.permute.xlu0 %5163
      %5165 = vrot.lane.b32.xlu0 %v5139, 108
      %v5166 = vpop.permute.xlu0 %5165
      %v5167 = vsel %vm409, %v5150, %v5152
      %v5168 = vsel %vm409, %v5152, %v5154
      %v5169 = vsel %vm409, %v5156, %v5158
      %v5170 = vsel %vm409, %v5158, %v5160
      %v5171 = vsel %vm409, %v5162, %v5164
      %v5172 = vsel %vm409, %v5164, %v5166
      %v5182 = vmax.f32 %v5131, %v5167
      %v5183 = vmax.f32 %v5132, %v5168
      %v5184 = vmax.f32 %v5133, %v5154
      %v5185 = vmax.f32 %v5134, %v5169
      %v5186 = vmax.f32 %v5135, %v5170
      %v5187 = vmax.f32 %v5136, %v5160
      %v5188 = vmax.f32 %v5137, %v5171
      %v5189 = vmax.f32 %v5138, %v5172
      %v5190 = vmax.f32 %v5139, %v5166
      %v5191 = vpack.c.bf16 %v5185, %v5182
      %v5192 = vpack.c.bf16 %v5186, %v5183
      %v5193 = vpack.c.bf16 %v5187, %v5184
      %v5194 = vpack.c.bf16 %v5188, %v5188
      %v5195 = vpack.c.bf16 %v5189, %v5189
      %v5196 = vpack.c.bf16 %v5190, %v5190
      %v5198 = vsel %vm1003, %v5193, 0
      %v5201 = vsel %vm1003, %v5196, 0
      %5203 = vmatpush.bf16.msra.mxu0 %v943
      %5204 = vmatpush.bf16.msra.mxu0 %v941
      %5205 = vmatpush.bf16.msra.mxu0 %v939
      %5206 = vmatpush.bf16.msra.mxu0 %v937
      %5207 = vmatpush.bf16.msra.mxu0 %v935
      %5208 = vmatpush.bf16.msra.mxu0 %v933
      %5209 = vmatpush.bf16.msra.mxu0 %v931
      %5210 = vmatpush.bf16.msra.mxu0 %v929
      %5211 = vmatmul.bf16.gmra.mxu0 %v5191
      %v5212 = vpop.f32.mrf.mxu0
      %v5213 = vadd.f32 0.0, %v5212
      %v5214 = vpop.f32.mrf.mxu0
      %v5215 = vadd.f32 0.0, %v5214
      %5216 = vmatmul.bf16.gmra.mxu0 %v5194
      %v5217 = vpop.f32.mrf.mxu0
      %v5218 = vadd.f32 0.0, %v5217
      %v5219 = vpop.f32.mrf.mxu0
      %5220 = vdwg.mxu0
      %5221 = vmatpush.bf16.msra.mxu0 %v959
      %5222 = vmatpush.bf16.msra.mxu0 %v957
      %5223 = vmatpush.bf16.msra.mxu0 %v955
      %5224 = vmatpush.bf16.msra.mxu0 %v953
      %5225 = vmatpush.bf16.msra.mxu0 %v951
      %5226 = vmatpush.bf16.msra.mxu0 %v949
      %5227 = vmatpush.bf16.msra.mxu0 %v947
      %5228 = vmatpush.bf16.msra.mxu0 %v945
      %5229 = vmatmul.bf16.gmra.mxu0 %v5192
      %v5230 = vpop.f32.mrf.mxu0
      %v5231 = vadd.f32 %v5213, %v5230
      %v5232 = vpop.f32.mrf.mxu0
      %v5233 = vadd.f32 %v5215, %v5232
      %5234 = vmatmul.bf16.gmra.mxu0 %v5195
      %v5235 = vpop.f32.mrf.mxu0
      %v5236 = vadd.f32 %v5218, %v5235
      %v5237 = vpop.f32.mrf.mxu0
      %5238 = vdwg.mxu0
      %5239 = vmatpush.bf16.msra.mxu0 0
      %5240 = vmatpush.bf16.msra.mxu0 0
      %5241 = vmatpush.bf16.msra.mxu0 0
      %5242 = vmatpush.bf16.msra.mxu0 0
      %5243 = vmatpush.bf16.msra.mxu0 0
      %5244 = vmatpush.bf16.msra.mxu0 %v1011
      %5245 = vmatpush.bf16.msra.mxu0 %v963
      %5246 = vmatpush.bf16.msra.mxu0 %v961
      %5247 = vmatmul.bf16.gmra.mxu0 %v5198
      %v5248 = vpop.f32.mrf.mxu0
      %v5249 = vadd.f32 %v5231, %v5248
      %v5250 = vpop.f32.mrf.mxu0
      %v5251 = vadd.f32 %v5233, %v5250
      %5252 = vmatmul.bf16.gmra.mxu0 %v5201
      %v5253 = vpop.f32.mrf.mxu0
      %v5254 = vadd.f32 %v5236, %v5253
      %v5255 = vpop.f32.mrf.mxu0
      %5256 = vdwg.mxu0
      %5257 = vmatpush.bf16.msra.mxu0 %v944
      %5258 = vmatpush.bf16.msra.mxu0 %v942
      %5259 = vmatpush.bf16.msra.mxu0 %v940
      %5260 = vmatpush.bf16.msra.mxu0 %v938
      %5261 = vmatpush.bf16.msra.mxu0 %v936
      %5262 = vmatpush.bf16.msra.mxu0 %v934
      %5263 = vmatpush.bf16.msra.mxu0 %v932
      %5264 = vmatpush.bf16.msra.mxu0 %v930
      %5265 = vmatmul.bf16.gmra.mxu0 %v5191
      %v5266 = vpop.f32.mrf.mxu0
      %v5267 = vadd.f32 0.0, %v5266
      %v5268 = vpop.f32.mrf.mxu0
      %v5269 = vadd.f32 0.0, %v5268
      %5270 = vmatmul.bf16.gmra.mxu0 %v5194
      %v5271 = vpop.f32.mrf.mxu0
      %v5272 = vadd.f32 0.0, %v5271
      %v5273 = vpop.f32.mrf.mxu0
      %5274 = vdwg.mxu0
      %5275 = vmatpush.bf16.msra.mxu0 %v960
      %5276 = vmatpush.bf16.msra.mxu0 %v958
      %5277 = vmatpush.bf16.msra.mxu0 %v956
      %5278 = vmatpush.bf16.msra.mxu0 %v954
      %5279 = vmatpush.bf16.msra.mxu0 %v952
      %5280 = vmatpush.bf16.msra.mxu0 %v950
      %5281 = vmatpush.bf16.msra.mxu0 %v948
      %5282 = vmatpush.bf16.msra.mxu0 %v946
      %5283 = vmatmul.bf16.gmra.mxu0 %v5192
      %v5284 = vpop.f32.mrf.mxu0
      %v5285 = vadd.f32 %v5267, %v5284
      %v5286 = vpop.f32.mrf.mxu0
      %v5287 = vadd.f32 %v5269, %v5286
      %5288 = vmatmul.bf16.gmra.mxu0 %v5195
      %v5289 = vpop.f32.mrf.mxu0
      %v5290 = vadd.f32 %v5272, %v5289
      %v5291 = vpop.f32.mrf.mxu0
      %5292 = vdwg.mxu0
      %5293 = vmatpush.bf16.msra.mxu0 0
      %5294 = vmatpush.bf16.msra.mxu0 0
      %5295 = vmatpush.bf16.msra.mxu0 0
      %5296 = vmatpush.bf16.msra.mxu0 0
      %5297 = vmatpush.bf16.msra.mxu0 0
      %5298 = vmatpush.bf16.msra.mxu0 %v1014
      %5299 = vmatpush.bf16.msra.mxu0 %v964
      %5300 = vmatpush.bf16.msra.mxu0 %v962
      %5301 = vmatmul.bf16.gmra.mxu0 %v5198
      %v5302 = vpop.f32.mrf.mxu0
      %v5303 = vadd.f32 %v5285, %v5302
      %v5304 = vpop.f32.mrf.mxu0
      %v5305 = vadd.f32 %v5287, %v5304
      %5306 = vmatmul.bf16.gmra.mxu0 %v5201
      %v5307 = vpop.f32.mrf.mxu0
      %v5308 = vadd.f32 %v5290, %v5307
      %v5309 = vpop.f32.mrf.mxu0
      %5310 = vdwg.mxu0
      %5311 = vst [vmem:[#allocation3] sm:$0xff] %v5249
      %5312 = vst [vmem:[#allocation3 + $0x8] sm:$0xff] %v5251
      %5313 = vst [vmem:[#allocation3 + $0x10] sm:$0xf] %v5254
      %5320 = vrot.lane.b32.xlu0 %v5249, 127
      %v5321 = vpop.permute.xlu0 %5320
      %5322 = vrot.lane.b32.xlu0 %v5303, 127
      %v5323 = vpop.permute.xlu0 %5322
      %5324 = vrot.lane.b32.xlu0 %v5251, 127
      %v5325 = vpop.permute.xlu0 %5324
      %5326 = vrot.lane.b32.xlu0 %v5305, 127
      %v5327 = vpop.permute.xlu0 %5326
      %5328 = vrot.lane.b32.xlu0 %v5254, 127
      %v5329 = vpop.permute.xlu0 %5328
      %5330 = vrot.lane.b32.xlu0 %v5308, 127
      %v5331 = vpop.permute.xlu0 %5330
      %v5332 = vsel %vm373, %v5321, %v5323
      %v5333 = vsel %vm373, %v5325, %v5327
      %v5334 = vsel %vm373, %v5329, %v5331
      %5338 = vst [vmem:[#allocation3 + $0x14] sm:$0xff] %v5332
      %5339 = vst [vmem:[#allocation3 + $0x1c] sm:$0xff] %v5333
      %5340 = vst [vmem:[#allocation3 + $0x24] sm:$0xf] %v5334
      %5341 = vrot.lane.b32.xlu0 %v5249, 126
      %v5342 = vpop.permute.xlu0 %5341
      %5343 = vrot.lane.b32.xlu0 %v5303, 126
      %v5344 = vpop.permute.xlu0 %5343
      %5345 = vrot.lane.b32.xlu0 %v5251, 126
      %v5346 = vpop.permute.xlu0 %5345
      %5347 = vrot.lane.b32.xlu0 %v5305, 126
      %v5348 = vpop.permute.xlu0 %5347
      %5349 = vrot.lane.b32.xlu0 %v5254, 126
      %v5350 = vpop.permute.xlu0 %5349
      %5351 = vrot.lane.b32.xlu0 %v5308, 126
      %v5352 = vpop.permute.xlu0 %5351
      %v5353 = vsel %vm382, %v5342, %v5344
      %v5354 = vsel %vm382, %v5346, %v5348
      %v5355 = vsel %vm382, %v5350, %v5352
      %5359 = vst [vmem:[#allocation3 + $0x28] sm:$0xff] %v5353
      %5360 = vst [vmem:[#allocation3 + $0x30] sm:$0xff] %v5354
      %5361 = vst [vmem:[#allocation3 + $0x38] sm:$0xf] %v5355
      %5362 = vrot.lane.b32.xlu0 %v5249, 125
      %v5363 = vpop.permute.xlu0 %5362
      %5364 = vrot.lane.b32.xlu0 %v5303, 125
      %v5365 = vpop.permute.xlu0 %5364
      %5366 = vrot.lane.b32.xlu0 %v5251, 125
      %v5367 = vpop.permute.xlu0 %5366
      %5368 = vrot.lane.b32.xlu0 %v5305, 125
      %v5369 = vpop.permute.xlu0 %5368
      %5370 = vrot.lane.b32.xlu0 %v5254, 125
      %v5371 = vpop.permute.xlu0 %5370
      %5372 = vrot.lane.b32.xlu0 %v5308, 125
      %v5373 = vpop.permute.xlu0 %5372
      %v5374 = vsel %vm391, %v5363, %v5365
      %v5375 = vsel %vm391, %v5367, %v5369
      %v5376 = vsel %vm391, %v5371, %v5373
      %5380 = vst [vmem:[#allocation3 + $0x3c] sm:$0xff] %v5374
      %5381 = vst [vmem:[#allocation3 + $0x44] sm:$0xff] %v5375
      %5382 = vst [vmem:[#allocation3 + $0x4c] sm:$0xf] %v5376
      %5383 = vrot.lane.b32.xlu0 %v5249, 124
      %v5384 = vpop.permute.xlu0 %5383
      %5385 = vrot.lane.b32.xlu0 %v5303, 124
      %v5386 = vpop.permute.xlu0 %5385
      %5387 = vrot.lane.b32.xlu0 %v5251, 124
      %v5388 = vpop.permute.xlu0 %5387
      %5389 = vrot.lane.b32.xlu0 %v5305, 124
      %v5390 = vpop.permute.xlu0 %5389
      %5391 = vrot.lane.b32.xlu0 %v5254, 124
      %v5392 = vpop.permute.xlu0 %5391
      %5393 = vrot.lane.b32.xlu0 %v5308, 124
      %v5394 = vpop.permute.xlu0 %5393
      %v5395 = vsel %vm400, %v5384, %v5386
      %v5396 = vsel %vm400, %v5388, %v5390
      %v5397 = vsel %vm400, %v5392, %v5394
      %5401 = vst [vmem:[#allocation3 + $0x50] sm:$0xff] %v5395
      %5402 = vst [vmem:[#allocation3 + $0x58] sm:$0xff] %v5396
      %5403 = vst [vmem:[#allocation3 + $0x60] sm:$0xf] %v5397
      %5404 = vrot.lane.b32.xlu0 %v5249, 116
      %v5405 = vpop.permute.xlu0 %5404
      %5406 = vrot.lane.b32.xlu0 %v5303, 116
      %v5407 = vpop.permute.xlu0 %5406
      %5408 = vrot.lane.b32.xlu0 %v5251, 116
      %v5409 = vpop.permute.xlu0 %5408
      %5410 = vrot.lane.b32.xlu0 %v5305, 116
      %v5411 = vpop.permute.xlu0 %5410
      %5412 = vrot.lane.b32.xlu0 %v5254, 116
      %v5413 = vpop.permute.xlu0 %5412
      %5414 = vrot.lane.b32.xlu0 %v5308, 116
      %v5415 = vpop.permute.xlu0 %5414
      %v5416 = vsel %vm1229, %v5405, %v5407
      %v5417 = vsel %vm1229, %v5409, %v5411
      %v5418 = vsel %vm1229, %v5413, %v5415
      %5422 = vst [vmem:[#allocation3 + $0x64] sm:$0xff] %v5416
      %5423 = vst [vmem:[#allocation3 + $0x6c] sm:$0xff] %v5417
      %5424 = vst [vmem:[#allocation3 + $0x74] sm:$0xf] %v5418
      %5425 = vrot.lane.b32.xlu0 %v5249, 115
      %v5426 = vpop.permute.xlu0 %5425
      %5427 = vrot.lane.b32.xlu0 %v5303, 115
      %v5428 = vpop.permute.xlu0 %5427
      %5429 = vrot.lane.b32.xlu0 %v5251, 115
      %v5430 = vpop.permute.xlu0 %5429
      %5431 = vrot.lane.b32.xlu0 %v5305, 115
      %v5432 = vpop.permute.xlu0 %5431
      %5433 = vrot.lane.b32.xlu0 %v5254, 115
      %v5434 = vpop.permute.xlu0 %5433
      %5435 = vrot.lane.b32.xlu0 %v5308, 115
      %v5436 = vpop.permute.xlu0 %5435
      %v5437 = vsel %vm1251, %v5426, %v5428
      %v5438 = vsel %vm1251, %v5430, %v5432
      %v5439 = vsel %vm1251, %v5434, %v5436
      %5443 = vst [vmem:[#allocation3 + $0x78] sm:$0xff] %v5437
      %5444 = vst [vmem:[#allocation3 + $0x80] sm:$0xff] %v5438
      %5445 = vst [vmem:[#allocation3 + $0x88] sm:$0xf] %v5439
      %5446 = vrot.lane.b32.xlu0 %v5249, 114
      %v5447 = vpop.permute.xlu0 %5446
      %5448 = vrot.lane.b32.xlu0 %v5303, 114
      %v5449 = vpop.permute.xlu0 %5448
      %5450 = vrot.lane.b32.xlu0 %v5251, 114
      %v5451 = vpop.permute.xlu0 %5450
      %5452 = vrot.lane.b32.xlu0 %v5305, 114
      %v5453 = vpop.permute.xlu0 %5452
      %5454 = vrot.lane.b32.xlu0 %v5254, 114
      %v5455 = vpop.permute.xlu0 %5454
      %5456 = vrot.lane.b32.xlu0 %v5308, 114
      %v5457 = vpop.permute.xlu0 %5456
      %v5458 = vsel %vm1273, %v5447, %v5449
      %v5459 = vsel %vm1273, %v5451, %v5453
      %v5460 = vsel %vm1273, %v5455, %v5457
      %5464 = vst [vmem:[#allocation3 + $0x8c] sm:$0xff] %v5458
      %5465 = vst [vmem:[#allocation3 + $0x94] sm:$0xff] %v5459
      %5466 = vst [vmem:[#allocation3 + $0x9c] sm:$0xf] %v5460
      %5467 = vrot.lane.b32.xlu0 %v5249, 113
      %v5468 = vpop.permute.xlu0 %5467
      %5469 = vrot.lane.b32.xlu0 %v5303, 113
      %v5470 = vpop.permute.xlu0 %5469
      %5471 = vrot.lane.b32.xlu0 %v5251, 113
      %v5472 = vpop.permute.xlu0 %5471
      %5473 = vrot.lane.b32.xlu0 %v5305, 113
      %v5474 = vpop.permute.xlu0 %5473
      %5475 = vrot.lane.b32.xlu0 %v5254, 113
      %v5476 = vpop.permute.xlu0 %5475
      %5477 = vrot.lane.b32.xlu0 %v5308, 113
      %v5478 = vpop.permute.xlu0 %5477
      %v5479 = vsel %vm1295, %v5468, %v5470
      %v5480 = vsel %vm1295, %v5472, %v5474
      %v5481 = vsel %vm1295, %v5476, %v5478
      %5485 = vst [vmem:[#allocation3 + $0xa0] sm:$0xff] %v5479
      %5486 = vst [vmem:[#allocation3 + $0xa8] sm:$0xff] %v5480
      %5487 = vst [vmem:[#allocation3 + $0xb0] sm:$0xf] %v5481
      %5488 = vrot.lane.b32.xlu0 %v5249, 112
      %v5489 = vpop.permute.xlu0 %5488
      %5490 = vrot.lane.b32.xlu0 %v5303, 112
      %v5491 = vpop.permute.xlu0 %5490
      %5492 = vrot.lane.b32.xlu0 %v5251, 112
      %v5493 = vpop.permute.xlu0 %5492
      %5494 = vrot.lane.b32.xlu0 %v5305, 112
      %v5495 = vpop.permute.xlu0 %5494
      %5496 = vrot.lane.b32.xlu0 %v5254, 112
      %v5497 = vpop.permute.xlu0 %5496
      %5498 = vrot.lane.b32.xlu0 %v5308, 112
      %v5499 = vpop.permute.xlu0 %5498
      %v5500 = vsel %vm1317, %v5489, %v5491
      %v5501 = vsel %vm1317, %v5493, %v5495
      %v5502 = vsel %vm1317, %v5497, %v5499
      %5506 = vst [vmem:[#allocation3 + $0xb4] sm:$0xff] %v5500
      %5507 = vst [vmem:[#allocation3 + $0xbc] sm:$0xff] %v5501
      %5508 = vst [vmem:[#allocation3 + $0xc4] sm:$0xf] %v5502
      %5509 = vrot.lane.b32.xlu0 %v5249, 104
      %v5510 = vpop.permute.xlu0 %5509
      %5511 = vrot.lane.b32.xlu0 %v5303, 104
      %v5512 = vpop.permute.xlu0 %5511
      %5513 = vrot.lane.b32.xlu0 %v5251, 104
      %v5514 = vpop.permute.xlu0 %5513
      %5515 = vrot.lane.b32.xlu0 %v5305, 104
      %v5516 = vpop.permute.xlu0 %5515
      %5517 = vrot.lane.b32.xlu0 %v5254, 104
      %v5518 = vpop.permute.xlu0 %5517
      %5519 = vrot.lane.b32.xlu0 %v5308, 104
      %v5520 = vpop.permute.xlu0 %5519
      %v5521 = vsel %vm445, %v5510, %v5512
      %v5522 = vsel %vm445, %v5514, %v5516
      %v5523 = vsel %vm445, %v5518, %v5520
      %5527 = vst [vmem:[#allocation3 + $0xc8] sm:$0xff] %v5521
      %5528 = vst [vmem:[#allocation3 + $0xd0] sm:$0xff] %v5522
      %5529 = vst [vmem:[#allocation3 + $0xd8] sm:$0xf] %v5523
      %5530 = vrot.lane.b32.xlu0 %v5249, 103
      %v5531 = vpop.permute.xlu0 %5530
      %5532 = vrot.lane.b32.xlu0 %v5303, 103
      %v5533 = vpop.permute.xlu0 %5532
      %5534 = vrot.lane.b32.xlu0 %v5251, 103
      %v5535 = vpop.permute.xlu0 %5534
      %5536 = vrot.lane.b32.xlu0 %v5305, 103
      %v5537 = vpop.permute.xlu0 %5536
      %5538 = vrot.lane.b32.xlu0 %v5254, 103
      %v5539 = vpop.permute.xlu0 %5538
      %5540 = vrot.lane.b32.xlu0 %v5308, 103
      %v5541 = vpop.permute.xlu0 %5540
      %v5542 = vsel %vm1360, %v5531, %v5533
      %v5543 = vsel %vm1360, %v5535, %v5537
      %v5544 = vsel %vm1360, %v5539, %v5541
      %5548 = vst [vmem:[#allocation3 + $0xdc] sm:$0xff] %v5542
      %5549 = vst [vmem:[#allocation3 + $0xe4] sm:$0xff] %v5543
      %5550 = vst [vmem:[#allocation3 + $0xec] sm:$0xf] %v5544
      %5551 = vrot.lane.b32.xlu0 %v5249, 102
      %v5552 = vpop.permute.xlu0 %5551
      %5553 = vrot.lane.b32.xlu0 %v5303, 102
      %v5554 = vpop.permute.xlu0 %5553
      %5555 = vrot.lane.b32.xlu0 %v5251, 102
      %v5556 = vpop.permute.xlu0 %5555
      %5557 = vrot.lane.b32.xlu0 %v5305, 102
      %v5558 = vpop.permute.xlu0 %5557
      %5559 = vrot.lane.b32.xlu0 %v5254, 102
      %v5560 = vpop.permute.xlu0 %5559
      %5561 = vrot.lane.b32.xlu0 %v5308, 102
      %v5562 = vpop.permute.xlu0 %5561
      %v5563 = vsel %vm1382, %v5552, %v5554
      %v5564 = vsel %vm1382, %v5556, %v5558
      %v5565 = vsel %vm1382, %v5560, %v5562
      %5569 = vst [vmem:[#allocation3 + $0xf0] sm:$0xff] %v5563
      %5570 = vst [vmem:[#allocation3 + $0xf8] sm:$0xff] %v5564
      %5571 = vst [vmem:[#allocation3 + $0x100] sm:$0xf] %v5565
      %5572 = vrot.lane.b32.xlu0 %v5249, 101
      %v5573 = vpop.permute.xlu0 %5572
      %5574 = vrot.lane.b32.xlu0 %v5303, 101
      %v5575 = vpop.permute.xlu0 %5574
      %5576 = vrot.lane.b32.xlu0 %v5251, 101
      %v5577 = vpop.permute.xlu0 %5576
      %5578 = vrot.lane.b32.xlu0 %v5305, 101
      %v5579 = vpop.permute.xlu0 %5578
      %5580 = vrot.lane.b32.xlu0 %v5254, 101
      %v5581 = vpop.permute.xlu0 %5580
      %5582 = vrot.lane.b32.xlu0 %v5308, 101
      %v5583 = vpop.permute.xlu0 %5582
      %v5584 = vsel %vm1404, %v5573, %v5575
      %v5585 = vsel %vm1404, %v5577, %v5579
      %v5586 = vsel %vm1404, %v5581, %v5583
      %5590 = vst [vmem:[#allocation3 + $0x104] sm:$0xff] %v5584
      %5591 = vst [vmem:[#allocation3 + $0x10c] sm:$0xff] %v5585
      %5592 = vst [vmem:[#allocation3 + $0x114] sm:$0xf] %v5586
      %5593 = vrot.lane.b32.xlu0 %v5249, 100
      %v5594 = vpop.permute.xlu0 %5593
      %5595 = vrot.lane.b32.xlu0 %v5303, 100
      %v5596 = vpop.permute.xlu0 %5595
      %5597 = vrot.lane.b32.xlu0 %v5251, 100
      %v5598 = vpop.permute.xlu0 %5597
      %5599 = vrot.lane.b32.xlu0 %v5305, 100
      %v5600 = vpop.permute.xlu0 %5599
      %5601 = vrot.lane.b32.xlu0 %v5254, 100
      %v5602 = vpop.permute.xlu0 %5601
      %5603 = vrot.lane.b32.xlu0 %v5308, 100
      %v5604 = vpop.permute.xlu0 %5603
      %v5605 = vsel %vm1426, %v5594, %v5596
      %v5606 = vsel %vm1426, %v5598, %v5600
      %v5607 = vsel %vm1426, %v5602, %v5604
      %5611 = vst [vmem:[#allocation3 + $0x118] sm:$0xff] %v5605
      %5612 = vst [vmem:[#allocation3 + $0x120] sm:$0xff] %v5606
      %5613 = vst [vmem:[#allocation3 + $0x128] sm:$0xf] %v5607
      %5614 = vrot.lane.b32.xlu0 %v5249, 92
      %v5615 = vpop.permute.xlu0 %5614
      %5616 = vrot.lane.b32.xlu0 %v5303, 92
      %v5617 = vpop.permute.xlu0 %5616
      %5618 = vrot.lane.b32.xlu0 %v5251, 92
      %v5619 = vpop.permute.xlu0 %5618
      %5620 = vrot.lane.b32.xlu0 %v5305, 92
      %v5621 = vpop.permute.xlu0 %5620
      %5622 = vrot.lane.b32.xlu0 %v5254, 92
      %v5623 = vpop.permute.xlu0 %5622
      %5624 = vrot.lane.b32.xlu0 %v5308, 92
      %v5625 = vpop.permute.xlu0 %5624
      %v5626 = vsel %vm1448, %v5615, %v5617
      %v5627 = vsel %vm1448, %v5619, %v5621
      %v5628 = vsel %vm1448, %v5623, %v5625
      %5632 = vst [vmem:[#allocation3 + $0x12c] sm:$0xff] %v5626
      %5633 = vst [vmem:[#allocation3 + $0x134] sm:$0xff] %v5627
      %5634 = vst [vmem:[#allocation3 + $0x13c] sm:$0xf] %v5628
      %5635 = vrot.lane.b32.xlu0 %v5249, 91
      %v5636 = vpop.permute.xlu0 %5635
      %5637 = vrot.lane.b32.xlu0 %v5303, 91
      %v5638 = vpop.permute.xlu0 %5637
      %5639 = vrot.lane.b32.xlu0 %v5251, 91
      %v5640 = vpop.permute.xlu0 %5639
      %5641 = vrot.lane.b32.xlu0 %v5305, 91
      %v5642 = vpop.permute.xlu0 %5641
      %5643 = vrot.lane.b32.xlu0 %v5254, 91
      %v5644 = vpop.permute.xlu0 %5643
      %5645 = vrot.lane.b32.xlu0 %v5308, 91
      %v5646 = vpop.permute.xlu0 %5645
      %v5647 = vsel %vm1470, %v5636, %v5638
      %v5648 = vsel %vm1470, %v5640, %v5642
      %v5649 = vsel %vm1470, %v5644, %v5646
      %5653 = vst [vmem:[#allocation3 + $0x140] sm:$0xff] %v5647
      %5654 = vst [vmem:[#allocation3 + $0x148] sm:$0xff] %v5648
      %5655 = vst [vmem:[#allocation3 + $0x150] sm:$0xf] %v5649
      %5656 = vrot.lane.b32.xlu0 %v5249, 90
      %v5657 = vpop.permute.xlu0 %5656
      %5658 = vrot.lane.b32.xlu0 %v5303, 90
      %v5659 = vpop.permute.xlu0 %5658
      %5660 = vrot.lane.b32.xlu0 %v5251, 90
      %v5661 = vpop.permute.xlu0 %5660
      %5662 = vrot.lane.b32.xlu0 %v5305, 90
      %v5663 = vpop.permute.xlu0 %5662
      %5664 = vrot.lane.b32.xlu0 %v5254, 90
      %v5665 = vpop.permute.xlu0 %5664
      %5666 = vrot.lane.b32.xlu0 %v5308, 90
      %v5667 = vpop.permute.xlu0 %5666
      %v5668 = vsel %vm1492, %v5657, %v5659
      %v5669 = vsel %vm1492, %v5661, %v5663
      %v5670 = vsel %vm1492, %v5665, %v5667
      %5674 = vst [vmem:[#allocation3 + $0x154] sm:$0xff] %v5668
      %5675 = vst [vmem:[#allocation3 + $0x15c] sm:$0xff] %v5669
      %5676 = vst [vmem:[#allocation3 + $0x164] sm:$0xf] %v5670
      %5677 = vrot.lane.b32.xlu0 %v5249, 89
      %v5678 = vpop.permute.xlu0 %5677
      %5679 = vrot.lane.b32.xlu0 %v5303, 89
      %v5680 = vpop.permute.xlu0 %5679
      %5681 = vrot.lane.b32.xlu0 %v5251, 89
      %v5682 = vpop.permute.xlu0 %5681
      %5683 = vrot.lane.b32.xlu0 %v5305, 89
      %v5684 = vpop.permute.xlu0 %5683
      %5685 = vrot.lane.b32.xlu0 %v5254, 89
      %v5686 = vpop.permute.xlu0 %5685
      %5687 = vrot.lane.b32.xlu0 %v5308, 89
      %v5688 = vpop.permute.xlu0 %5687
      %v5689 = vsel %vm1514, %v5678, %v5680
      %v5690 = vsel %vm1514, %v5682, %v5684
      %v5691 = vsel %vm1514, %v5686, %v5688
      %5695 = vst [vmem:[#allocation3 + $0x168] sm:$0xff] %v5689
      %5696 = vst [vmem:[#allocation3 + $0x170] sm:$0xff] %v5690
      %5697 = vst [vmem:[#allocation3 + $0x178] sm:$0xf] %v5691
      %5698 = vrot.lane.b32.xlu0 %v5249, 88
      %v5699 = vpop.permute.xlu0 %5698
      %5700 = vrot.lane.b32.xlu0 %v5303, 88
      %v5701 = vpop.permute.xlu0 %5700
      %5702 = vrot.lane.b32.xlu0 %v5251, 88
      %v5703 = vpop.permute.xlu0 %5702
      %5704 = vrot.lane.b32.xlu0 %v5305, 88
      %v5705 = vpop.permute.xlu0 %5704
      %5706 = vrot.lane.b32.xlu0 %v5254, 88
      %v5707 = vpop.permute.xlu0 %5706
      %5708 = vrot.lane.b32.xlu0 %v5308, 88
      %v5709 = vpop.permute.xlu0 %5708
      %v5710 = vsel %vm454, %v5699, %v5701
      %v5711 = vsel %vm454, %v5703, %v5705
      %v5712 = vsel %vm454, %v5707, %v5709
      %5716 = vst [vmem:[#allocation3 + $0x17c] sm:$0xff] %v5710
      %5717 = vst [vmem:[#allocation3 + $0x184] sm:$0xff] %v5711
      %5718 = vst [vmem:[#allocation3 + $0x18c] sm:$0xf] %v5712
      %5719 = vrot.lane.b32.xlu0 %v5249, 80
      %v5720 = vpop.permute.xlu0 %5719
      %5721 = vrot.lane.b32.xlu0 %v5303, 80
      %v5722 = vpop.permute.xlu0 %5721
      %5723 = vrot.lane.b32.xlu0 %v5251, 80
      %v5724 = vpop.permute.xlu0 %5723
      %5725 = vrot.lane.b32.xlu0 %v5305, 80
      %v5726 = vpop.permute.xlu0 %5725
      %5727 = vrot.lane.b32.xlu0 %v5254, 80
      %v5728 = vpop.permute.xlu0 %5727
      %5729 = vrot.lane.b32.xlu0 %v5308, 80
      %v5730 = vpop.permute.xlu0 %5729
      %v5731 = vsel %vm1557, %v5720, %v5722
      %v5732 = vsel %vm1557, %v5724, %v5726
      %v5733 = vsel %vm1557, %v5728, %v5730
      %5737 = vst [vmem:[#allocation3 + $0x190] sm:$0xff] %v5731
      %5738 = vst [vmem:[#allocation3 + $0x198] sm:$0xff] %v5732
      %5739 = vst [vmem:[#allocation3 + $0x1a0] sm:$0xf] %v5733
      %5740 = vrot.lane.b32.xlu0 %v5249, 79
      %v5741 = vpop.permute.xlu0 %5740
      %5742 = vrot.lane.b32.xlu0 %v5303, 79
      %v5743 = vpop.permute.xlu0 %5742
      %5744 = vrot.lane.b32.xlu0 %v5251, 79
      %v5745 = vpop.permute.xlu0 %5744
      %5746 = vrot.lane.b32.xlu0 %v5305, 79
      %v5747 = vpop.permute.xlu0 %5746
      %5748 = vrot.lane.b32.xlu0 %v5254, 79
      %v5749 = vpop.permute.xlu0 %5748
      %5750 = vrot.lane.b32.xlu0 %v5308, 79
      %v5751 = vpop.permute.xlu0 %5750
      %v5752 = vsel %vm1579, %v5741, %v5743
      %v5753 = vsel %vm1579, %v5745, %v5747
      %v5754 = vsel %vm1579, %v5749, %v5751
      %5758 = vst [vmem:[#allocation3 + $0x1a4] sm:$0xff] %v5752
      %5759 = vst [vmem:[#allocation3 + $0x1ac] sm:$0xff] %v5753
      %5760 = vst [vmem:[#allocation3 + $0x1b4] sm:$0xf] %v5754
      %5761 = vrot.lane.b32.xlu0 %v5249, 78
      %v5762 = vpop.permute.xlu0 %5761
      %5763 = vrot.lane.b32.xlu0 %v5303, 78
      %v5764 = vpop.permute.xlu0 %5763
      %5765 = vrot.lane.b32.xlu0 %v5251, 78
      %v5766 = vpop.permute.xlu0 %5765
      %5767 = vrot.lane.b32.xlu0 %v5305, 78
      %v5768 = vpop.permute.xlu0 %5767
      %5769 = vrot.lane.b32.xlu0 %v5254, 78
      %v5770 = vpop.permute.xlu0 %5769
      %5771 = vrot.lane.b32.xlu0 %v5308, 78
      %v5772 = vpop.permute.xlu0 %5771
      %v5773 = vsel %vm1601, %v5762, %v5764
      %v5774 = vsel %vm1601, %v5766, %v5768
      %v5775 = vsel %vm1601, %v5770, %v5772
      %5779 = vst [vmem:[#allocation3 + $0x1b8] sm:$0xff] %v5773
      %5780 = vst [vmem:[#allocation3 + $0x1c0] sm:$0xff] %v5774
      %5781 = vst [vmem:[#allocation3 + $0x1c8] sm:$0xf] %v5775
      %5782 = vrot.lane.b32.xlu0 %v5249, 77
      %v5783 = vpop.permute.xlu0 %5782
      %5784 = vrot.lane.b32.xlu0 %v5303, 77
      %v5785 = vpop.permute.xlu0 %5784
      %5786 = vrot.lane.b32.xlu0 %v5251, 77
      %v5787 = vpop.permute.xlu0 %5786
      %5788 = vrot.lane.b32.xlu0 %v5305, 77
      %v5789 = vpop.permute.xlu0 %5788
      %5790 = vrot.lane.b32.xlu0 %v5254, 77
      %v5791 = vpop.permute.xlu0 %5790
      %5792 = vrot.lane.b32.xlu0 %v5308, 77
      %v5793 = vpop.permute.xlu0 %5792
      %v5794 = vsel %vm1623, %v5783, %v5785
      %v5795 = vsel %vm1623, %v5787, %v5789
      %v5796 = vsel %vm1623, %v5791, %v5793
      %5800 = vst [vmem:[#allocation3 + $0x1cc] sm:$0xff] %v5794
      %5801 = vst [vmem:[#allocation3 + $0x1d4] sm:$0xff] %v5795
      %5802 = vst [vmem:[#allocation3 + $0x1dc] sm:$0xf] %v5796
      %5803 = vrot.lane.b32.xlu0 %v5249, 76
      %v5804 = vpop.permute.xlu0 %5803
      %5805 = vrot.lane.b32.xlu0 %v5303, 76
      %v5806 = vpop.permute.xlu0 %5805
      %5807 = vrot.lane.b32.xlu0 %v5251, 76
      %v5808 = vpop.permute.xlu0 %5807
      %5809 = vrot.lane.b32.xlu0 %v5305, 76
      %v5810 = vpop.permute.xlu0 %5809
      %5811 = vrot.lane.b32.xlu0 %v5254, 76
      %v5812 = vpop.permute.xlu0 %5811
      %5813 = vrot.lane.b32.xlu0 %v5308, 76
      %v5814 = vpop.permute.xlu0 %5813
      %v5815 = vsel %vm1645, %v5804, %v5806
      %v5816 = vsel %vm1645, %v5808, %v5810
      %v5817 = vsel %vm1645, %v5812, %v5814
      %5821 = vst [vmem:[#allocation3 + $0x1e0] sm:$0xff] %v5815
      %5822 = vst [vmem:[#allocation3 + $0x1e8] sm:$0xff] %v5816
      %5823 = vst [vmem:[#allocation3 + $0x1f0] sm:$0xf] %v5817
      %v5824 = vld [vmem:[#allocation3] sm:$0xff]
      %v5825 = vld [vmem:[#allocation3 + $0x8] sm:$0xff]
      %v5826 = vld [vmem:[#allocation3 + $0x10] sm:$0xff]
      %v5827 = vld [vmem:[#allocation3 + $0x18] sm:$0xff]
      %v5828 = vld [vmem:[#allocation3 + $0x20] sm:$0xff]
      %v5829 = vld [vmem:[#allocation3 + $0x28] sm:$0xff]
      %v5830 = vld [vmem:[#allocation3 + $0x30] sm:$0xff]
      %v5831 = vld [vmem:[#allocation3 + $0x38] sm:$0xff]
      %v5832 = vld [vmem:[#allocation3 + $0x40] sm:$0xff]
      %v5833 = vld [vmem:[#allocation3 + $0x48] sm:$0xff]
      %v5834 = vld [vmem:[#allocation3 + $0x50] sm:$0xff]
      %v5835 = vld [vmem:[#allocation3 + $0x58] sm:$0xff]
      %v5836 = vld [vmem:[#allocation3 + $0x60] sm:$0xff]
      %v5837 = vld [vmem:[#allocation3 + $0x68] sm:$0xff]
      %v5838 = vld [vmem:[#allocation3 + $0x70] sm:$0xff]
      %v5839 = vld [vmem:[#allocation3 + $0x78] sm:$0xff]
      %v5840 = vld [vmem:[#allocation3 + $0x80] sm:$0xff]
      %v5841 = vld [vmem:[#allocation3 + $0x88] sm:$0xff]
      %v5842 = vld [vmem:[#allocation3 + $0x90] sm:$0xff]
      %v5843 = vld [vmem:[#allocation3 + $0x98] sm:$0xff]
      %v5844 = vld [vmem:[#allocation3 + $0xa0] sm:$0xff]
      %v5845 = vld [vmem:[#allocation3 + $0xa8] sm:$0xff]
      %v5846 = vld [vmem:[#allocation3 + $0xb0] sm:$0xff]
      %v5847 = vld [vmem:[#allocation3 + $0xb8] sm:$0xff]
      %v5848 = vld [vmem:[#allocation3 + $0xc0] sm:$0xff]
      %v5849 = vld [vmem:[#allocation3 + $0xc8] sm:$0xff]
      %v5850 = vld [vmem:[#allocation3 + $0xd0] sm:$0xff]
      %v5851 = vld [vmem:[#allocation3 + $0xd8] sm:$0xff]
      %v5852 = vld [vmem:[#allocation3 + $0xe0] sm:$0xff]
      %v5853 = vld [vmem:[#allocation3 + $0xe8] sm:$0xff]
      %v5854 = vld [vmem:[#allocation3 + $0xf0] sm:$0xff]
      %v5855 = vld [vmem:[#allocation3 + $0xf8] sm:$0xff]
      %v5856 = vld [vmem:[#allocation3 + $0x100] sm:$0xff]
      %v5857 = vld [vmem:[#allocation3 + $0x108] sm:$0xff]
      %v5858 = vld [vmem:[#allocation3 + $0x110] sm:$0xff]
      %v5859 = vld [vmem:[#allocation3 + $0x118] sm:$0xff]
      %v5860 = vld [vmem:[#allocation3 + $0x120] sm:$0xff]
      %v5861 = vld [vmem:[#allocation3 + $0x128] sm:$0xff]
      %v5862 = vld [vmem:[#allocation3 + $0x130] sm:$0xff]
      %v5863 = vld [vmem:[#allocation3 + $0x138] sm:$0xff]
      %v5864 = vld [vmem:[#allocation3 + $0x140] sm:$0xff]
      %v5865 = vld [vmem:[#allocation3 + $0x148] sm:$0xff]
      %v5866 = vld [vmem:[#allocation3 + $0x150] sm:$0xff]
      %v5867 = vld [vmem:[#allocation3 + $0x158] sm:$0xff]
      %v5868 = vld [vmem:[#allocation3 + $0x160] sm:$0xff]
      %v5869 = vld [vmem:[#allocation3 + $0x168] sm:$0xff]
      %v5870 = vld [vmem:[#allocation3 + $0x170] sm:$0xff]
      %v5871 = vld [vmem:[#allocation3 + $0x178] sm:$0xff]
      %v5872 = vld [vmem:[#allocation3 + $0x180] sm:$0xff]
      %v5873 = vld [vmem:[#allocation3 + $0x188] sm:$0xff]
      %v5874 = vld [vmem:[#allocation3 + $0x190] sm:$0xff]
      %v5875 = vld [vmem:[#allocation3 + $0x198] sm:$0xff]
      %v5876 = vld [vmem:[#allocation3 + $0x1a0] sm:$0xff]
      %v5877 = vld [vmem:[#allocation3 + $0x1a8] sm:$0xff]
      %v5878 = vld [vmem:[#allocation3 + $0x1b0] sm:$0xff]
      %v5879 = vld [vmem:[#allocation3 + $0x1b8] sm:$0xff]
      %v5880 = vld [vmem:[#allocation3 + $0x1c0] sm:$0xff]
      %v5881 = vld [vmem:[#allocation3 + $0x1c8] sm:$0xff]
      %v5882 = vld [vmem:[#allocation3 + $0x1d0] sm:$0xff]
      %v5883 = vld [vmem:[#allocation3 + $0x1d8] sm:$0xff]
      %v5884 = vld [vmem:[#allocation3 + $0x1e0] sm:$0xff]
      %v5885 = vld [vmem:[#allocation3 + $0x1e8] sm:$0xff]
      %v5886 = vld [vmem:[#allocation3 + $0x1f0] sm:$0xf]
      %v5887 = vpack.c.bf16 %v5825, %v5824
      %v5888 = vpack.c.bf16 %v5827, %v5826
      %v5889 = vpack.c.bf16 %v5829, %v5828
      %v5890 = vpack.c.bf16 %v5831, %v5830
      %v5891 = vpack.c.bf16 %v5833, %v5832
      %v5892 = vpack.c.bf16 %v5835, %v5834
      %v5893 = vpack.c.bf16 %v5837, %v5836
      %v5894 = vpack.c.bf16 %v5839, %v5838
      %v5895 = vpack.c.bf16 %v5841, %v5840
      %v5896 = vpack.c.bf16 %v5843, %v5842
      %v5897 = vpack.c.bf16 %v5845, %v5844
      %v5898 = vpack.c.bf16 %v5847, %v5846
      %v5899 = vpack.c.bf16 %v5849, %v5848
      %v5900 = vpack.c.bf16 %v5851, %v5850
      %v5901 = vpack.c.bf16 %v5853, %v5852
      %v5902 = vpack.c.bf16 %v5855, %v5854
      %v5903 = vpack.c.bf16 %v5857, %v5856
      %v5904 = vpack.c.bf16 %v5859, %v5858
      %v5905 = vpack.c.bf16 %v5861, %v5860
      %v5906 = vpack.c.bf16 %v5863, %v5862
      %v5907 = vpack.c.bf16 %v5865, %v5864
      %v5908 = vpack.c.bf16 %v5867, %v5866
      %v5909 = vpack.c.bf16 %v5869, %v5868
      %v5910 = vpack.c.bf16 %v5871, %v5870
      %v5911 = vpack.c.bf16 %v5873, %v5872
      %v5912 = vpack.c.bf16 %v5875, %v5874
      %v5913 = vpack.c.bf16 %v5877, %v5876
      %v5914 = vpack.c.bf16 %v5879, %v5878
      %v5915 = vpack.c.bf16 %v5881, %v5880
      %v5916 = vpack.c.bf16 %v5883, %v5882
      %v5917 = vpack.c.bf16 %v5885, %v5884
      %v5918 = vpack.c.bf16 %v5886, %v5886
      %v5920 = vsel %vm1867, %v5918, 0
      %5922 = vmatpush.bf16.msra.mxu0 %v5894
      %5923 = vmatpush.bf16.msra.mxu0 %v5893
      %5924 = vmatpush.bf16.msra.mxu0 %v5892
      %5925 = vmatpush.bf16.msra.mxu0 %v5891
      %5926 = vmatpush.bf16.msra.mxu0 %v5890
      %5927 = vmatpush.bf16.msra.mxu0 %v5889
      %5928 = vmatpush.bf16.msra.mxu0 %v5888
      %5929 = vmatpush.bf16.msra.mxu0 %v5887
      %5930 = vmatmul.bf16.gmra.mxu0 %v1827
      %v5931 = vpop.f32.mrf.mxu0
      %v5932 = vadd.f32 %v1753, %v5931
      %v5933 = vpop.f32.mrf.mxu0
      %v5934 = vadd.f32 %v1758, %v5933
      %5935 = vmatmul.bf16.gmra.mxu0 %v1831
      %v5936 = vpop.f32.mrf.mxu0
      %v5937 = vadd.f32 %v1763, %v5936
      %v5938 = vpop.f32.mrf.mxu0
      %v5939 = vadd.f32 %v1768, %v5938
      %5940 = vmatmul.bf16.gmra.mxu0 %v1835
      %v5941 = vpop.f32.mrf.mxu0
      %v5942 = vadd.f32 %v1773, %v5941
      %v5943 = vpop.f32.mrf.mxu0
      %v5944 = vadd.f32 %v1778, %v5943
      %5945 = vmatmul.bf16.gmra.mxu0 %v1839
      %v5946 = vpop.f32.mrf.mxu0
      %v5947 = vadd.f32 %v1783, %v5946
      %v5948 = vpop.f32.mrf.mxu0
      %5949 = vdwg.mxu0
      %5950 = vmatpush.bf16.msra.mxu0 %v5902
      %5951 = vmatpush.bf16.msra.mxu0 %v5901
      %5952 = vmatpush.bf16.msra.mxu0 %v5900
      %5953 = vmatpush.bf16.msra.mxu0 %v5899
      %5954 = vmatpush.bf16.msra.mxu0 %v5898
      %5955 = vmatpush.bf16.msra.mxu0 %v5897
      %5956 = vmatpush.bf16.msra.mxu0 %v5896
      %5957 = vmatpush.bf16.msra.mxu0 %v5895
      %5958 = vmatmul.bf16.gmra.mxu0 %v1828
      %v5959 = vpop.f32.mrf.mxu0
      %v5960 = vadd.f32 %v5932, %v5959
      %v5961 = vpop.f32.mrf.mxu0
      %v5962 = vadd.f32 %v5934, %v5961
      %5963 = vmatmul.bf16.gmra.mxu0 %v1832
      %v5964 = vpop.f32.mrf.mxu0
      %v5965 = vadd.f32 %v5937, %v5964
      %v5966 = vpop.f32.mrf.mxu0
      %v5967 = vadd.f32 %v5939, %v5966
      %5968 = vmatmul.bf16.gmra.mxu0 %v1836
      %v5969 = vpop.f32.mrf.mxu0
      %v5970 = vadd.f32 %v5942, %v5969
      %v5971 = vpop.f32.mrf.mxu0
      %v5972 = vadd.f32 %v5944, %v5971
      %5973 = vmatmul.bf16.gmra.mxu0 %v1840
      %v5974 = vpop.f32.mrf.mxu0
      %v5975 = vadd.f32 %v5947, %v5974
      %v5976 = vpop.f32.mrf.mxu0
      %5977 = vdwg.mxu0
      %5978 = vmatpush.bf16.msra.mxu0 %v5910
      %5979 = vmatpush.bf16.msra.mxu0 %v5909
      %5980 = vmatpush.bf16.msra.mxu0 %v5908
      %5981 = vmatpush.bf16.msra.mxu0 %v5907
      %5982 = vmatpush.bf16.msra.mxu0 %v5906
      %5983 = vmatpush.bf16.msra.mxu0 %v5905
      %5984 = vmatpush.bf16.msra.mxu0 %v5904
      %5985 = vmatpush.bf16.msra.mxu0 %v5903
      %5986 = vmatmul.bf16.gmra.mxu0 %v1829
      %v5987 = vpop.f32.mrf.mxu0
      %v5988 = vadd.f32 %v5960, %v5987
      %v5989 = vpop.f32.mrf.mxu0
      %v5990 = vadd.f32 %v5962, %v5989
      %5991 = vmatmul.bf16.gmra.mxu0 %v1833
      %v5992 = vpop.f32.mrf.mxu0
      %v5993 = vadd.f32 %v5965, %v5992
      %v5994 = vpop.f32.mrf.mxu0
      %v5995 = vadd.f32 %v5967, %v5994
      %5996 = vmatmul.bf16.gmra.mxu0 %v1837
      %v5997 = vpop.f32.mrf.mxu0
      %v5998 = vadd.f32 %v5970, %v5997
      %v5999 = vpop.f32.mrf.mxu0
      %v6000 = vadd.f32 %v5972, %v5999
      %6001 = vmatmul.bf16.gmra.mxu0 %v1841
      %v6002 = vpop.f32.mrf.mxu0
      %v6003 = vadd.f32 %v5975, %v6002
      %v6004 = vpop.f32.mrf.mxu0
      %6005 = vdwg.mxu0
      %6006 = vmatpush.bf16.msra.mxu0 %v5920
      %6007 = vmatpush.bf16.msra.mxu0 %v5917
      %6008 = vmatpush.bf16.msra.mxu0 %v5916
      %6009 = vmatpush.bf16.msra.mxu0 %v5915
      %6010 = vmatpush.bf16.msra.mxu0 %v5914
      %6011 = vmatpush.bf16.msra.mxu0 %v5913
      %6012 = vmatpush.bf16.msra.mxu0 %v5912
      %6013 = vmatpush.bf16.msra.mxu0 %v5911
      %6014 = vmatmul.bf16.gmra.mxu0 %v1856
      %v6015 = vpop.f32.mrf.mxu0
      %v6016 = vadd.f32 %v5988, %v6015
      %v6017 = vpop.f32.mrf.mxu0
      %v6018 = vadd.f32 %v5990, %v6017
      %6019 = vmatmul.bf16.gmra.mxu0 %v1859
      %v6020 = vpop.f32.mrf.mxu0
      %v6021 = vadd.f32 %v5993, %v6020
      %v6022 = vpop.f32.mrf.mxu0
      %v6023 = vadd.f32 %v5995, %v6022
      %6024 = vmatmul.bf16.gmra.mxu0 %v1862
      %v6025 = vpop.f32.mrf.mxu0
      %v6026 = vadd.f32 %v5998, %v6025
      %v6027 = vpop.f32.mrf.mxu0
      %v6028 = vadd.f32 %v6000, %v6027
      %6029 = vmatmul.bf16.gmra.mxu0 %v1865
      %v6030 = vpop.f32.mrf.mxu0
      %v6031 = vadd.f32 %v6003, %v6030
      %v6032 = vpop.f32.mrf.mxu0
      %6033 = vdwg.mxu0
      %v6034 = vmax.f32 %v6016, 0.0
      %v6035 = vmax.f32 %v6018, 0.0
      %v6036 = vmax.f32 %v6021, 0.0
      %v6037 = vmax.f32 %v6023, 0.0
      %v6038 = vmax.f32 %v6026, 0.0
      %v6039 = vmax.f32 %v6028, 0.0
      %v6040 = vmax.f32 %v6031, 0.0
      %6048 = vrot.lane.b32.xlu0 %v6034, 127
      %v6049 = vpop.permute.xlu0 %6048
      %6050 = vrot.lane.b32.xlu0 %v6035, 127
      %v6051 = vpop.permute.xlu0 %6050
      %6052 = vrot.lane.b32.xlu0 %v6036, 127
      %v6053 = vpop.permute.xlu0 %6052
      %6054 = vrot.lane.b32.xlu0 %v6037, 127
      %v6055 = vpop.permute.xlu0 %6054
      %6056 = vrot.lane.b32.xlu0 %v6038, 127
      %v6057 = vpop.permute.xlu0 %6056
      %6058 = vrot.lane.b32.xlu0 %v6039, 127
      %v6059 = vpop.permute.xlu0 %6058
      %6060 = vrot.lane.b32.xlu0 %v6040, 127
      %v6061 = vpop.permute.xlu0 %6060
      %v6069 = vmax.f32 %v6034, %v6049
      %v6070 = vmax.f32 %v6035, %v6051
      %v6071 = vmax.f32 %v6036, %v6053
      %v6072 = vmax.f32 %v6037, %v6055
      %v6073 = vmax.f32 %v6038, %v6057
      %v6074 = vmax.f32 %v6039, %v6059
      %v6075 = vmax.f32 %v6040, %v6061
      %6083 = vrot.lane.b32.xlu0 %v6069, 116
      %v6084 = vpop.permute.xlu0 %6083
      %6085 = vrot.lane.b32.xlu0 %v6070, 116
      %v6086 = vpop.permute.xlu0 %6085
      %6087 = vrot.lane.b32.xlu0 %v6071, 116
      %v6088 = vpop.permute.xlu0 %6087
      %6089 = vrot.lane.b32.xlu0 %v6072, 116
      %v6090 = vpop.permute.xlu0 %6089
      %6091 = vrot.lane.b32.xlu0 %v6073, 116
      %v6092 = vpop.permute.xlu0 %6091
      %6093 = vrot.lane.b32.xlu0 %v6074, 116
      %v6094 = vpop.permute.xlu0 %6093
      %6095 = vrot.lane.b32.xlu0 %v6075, 116
      %v6096 = vpop.permute.xlu0 %6095
      %v6104 = vmax.f32 %v6069, %v6084
      %v6105 = vmax.f32 %v6070, %v6086
      %v6106 = vmax.f32 %v6071, %v6088
      %v6107 = vmax.f32 %v6072, %v6090
      %v6108 = vmax.f32 %v6073, %v6092
      %v6109 = vmax.f32 %v6074, %v6094
      %v6110 = vmax.f32 %v6075, %v6096
      %v6112 = vsel %vm1557, %v6104, 0
      %v6115 = vsel %vm1557, %v6105, 0
      %v6118 = vsel %vm1557, %v6106, 0
      %v6121 = vsel %vm1557, %v6107, 0
      %v6124 = vsel %vm1557, %v6108, 0
      %v6127 = vsel %vm1557, %v6109, 0
      %v6130 = vsel %vm1557, %v6110, 0
      %6132 = vmatpush.msra.mxu0 0.0
      %6133 = vmatpush.msra.mxu0 0.0
      %6134 = vmatpush.msra.mxu0 0.0
      %6135 = vmatpush.msra.mxu0 0.0
      %6136 = vmatpush.msra.mxu0 0.0
      %6137 = vmatpush.msra.mxu0 0.0
      %6138 = vmatpush.msra.mxu0 %v362
      %6139 = vmatpush.msra.mxu0 %v361
      %6140 = vmatpush.msra.mxu0 %v360
      %6141 = vmatpush.msra.mxu0 %v359
      %6142 = vmatpush.msra.mxu0 %v358
      %6143 = vmatpush.msra.mxu0 %v357
      %6144 = vmatpush.msra.mxu0 %v356
      %6145 = vmatpush.msra.mxu0 %v355
      %6146 = vmatpush.msra.mxu0 %v354
      %6147 = vmatpush.msra.mxu0 %v353
      %6148 = vmatmul.f32.gmra.mxu0 %v6112
      %v6149 = vpop.f32.mrf.mxu0
      %v6150 = vadd.f32 0.0, %v6149
      %6151 = vmatmul.f32.gmra.mxu0 %v6115
      %v6152 = vpop.f32.mrf.mxu0
      %v6153 = vadd.f32 0.0, %v6152
      %6154 = vmatmul.f32.gmra.mxu0 %v6118
      %v6155 = vpop.f32.mrf.mxu0
      %v6156 = vadd.f32 0.0, %v6155
      %6157 = vmatmul.f32.gmra.mxu0 %v6121
      %v6158 = vpop.f32.mrf.mxu0
      %v6159 = vadd.f32 0.0, %v6158
      %6160 = vmatmul.f32.gmra.mxu0 %v6124
      %v6161 = vpop.f32.mrf.mxu0
      %v6162 = vadd.f32 0.0, %v6161
      %6163 = vmatmul.f32.gmra.mxu0 %v6127
      %v6164 = vpop.f32.mrf.mxu0
      %v6165 = vadd.f32 0.0, %v6164
      %6166 = vmatmul.f32.gmra.mxu0 %v6130
      %v6167 = vpop.f32.mrf.mxu0
      %v6168 = vadd.f32 0.0, %v6167
      %6169 = vdwg.mxu0
      %s6170 = scalar_lea.vmem %s282, 168
      %6171 = vst.msk [vmem:[%s6170] sm:$0xff] %vm2119, %v6150
      %6172 = vst.msk [vmem:[%s6170 + $0x8] sm:$0xff] %vm2119, %v6153
      %6173 = vst.msk [vmem:[%s6170 + $0x10] sm:$0xff] %vm2119, %v6156
      %6174 = vst.msk [vmem:[%s6170 + $0x18] sm:$0xff] %vm2119, %v6159
      %6175 = vst.msk [vmem:[%s6170 + $0x20] sm:$0xff] %vm2119, %v6162
      %6176 = vst.msk [vmem:[%s6170 + $0x28] sm:$0xff] %vm2119, %v6165
      %6177 = vst.msk [vmem:[%s6170 + $0x30] sm:$0x3] %vm2126, %v6168
      %s6178 = smul.u32 4, %s18
      %p6179 = scmp.lt.s32.totalorder %s6178, 7
      %s6180 = scalar_select %p6179, %s6178, 7
      %s6181 = smul.addr %s6180, 7
      %s6182 = smul.addr %s6181, 8
      %s6183 = scalar_lea.vmem %s7, %s6182
      // Predicated region
      $region49: #{mil_forward.1} parent=47 // pred_check
        %p6184 = pneg %p188
      $region50: #{mil_forward.1} parent=47 // pred_check_branch
        %6186 = sbr.rel (%p6184) target = $region52
      $region51: #{mil_forward.1} parent=47 // pred_region
        %s6187 = smul.u32 4, %s18
      $region52: #{mil_forward.1} parent=47 // pred_fallthru
        _
    $region48: #{mil_forward.1} parent=5 // pred_fallthru
      _
    %p6188 = scmp.le.s32.totalorder 2, %s13
    // Predicated region
    $region53: #{mil_forward.1} parent=5 // pred_check
      %p6189 = pneg %p6188
    $region54: #{mil_forward.1} parent=5 // pred_check_branch
      %6191 = sbr.rel (%p6189) target = $region56
    $region55: #{mil_forward.1} parent=5 // pred_region
      %s6192 = ssub.s32 %s13, 2
      // Predicated region
      $region57: #{mil_forward.1} parent=55 // pred_check
        %p6193 = pneg %p194
      $region58: #{mil_forward.1} parent=55 // pred_check_branch
        %6195 = sbr.rel (%p6193) target = $region60
      $region59: #{mil_forward.1} parent=55 // pred_region
        %s6196 = smul.u32 4, %s19
        %p6197 = scmp.lt.s32.totalorder %s6196, 7
        %s6198 = scalar_select %p6197, %s6196, 7
        %s6199 = smul.addr %s6198, 7
        %s6200 = smul.addr %s6199, 8
        %s6201 = scalar_lea.vmem %s7, %s6200
      $region60: #{mil_forward.1} parent=55 // pred_fallthru
        _
    $region56: #{mil_forward.1} parent=5 // pred_fallthru
      _
  $region6: #{mil_forward.1} parent=0 // loop_footer
    %s17 = sadd.s32 1, %s13
  $region7: #{mil_forward.1} parent=0 // loop_footer_branch
    %12 = sbr.rel target = $region3
  $region8: #{mil_forward.1} parent=0 // loop_exit
    _

</llo_original>
